<compile_context>
chip_gen: v6e
topology: v6e:2x2x1
jax: 0.10.0
libtpu: 0.0.40
codegen_flags: <defaults>
</compile_context>

<pallas_src>
import functools

import jax
import jax.numpy as jnp
from jax.experimental import pallas as pl
from jax.experimental.pallas import tpu as pltpu


def _round_up(x, m):
    return (x + m - 1) // m * m


# ----------------------------------------------------------------------------
# Kernel 1: fused conv3x3(pad=1) + bias + ReLU + 2x2 max-pool (stride 2)
# ----------------------------------------------------------------------------
def _conv3x3_relu_pool_kernel(xp_ref, w_ref, b_ref, o_ref, pool_ref,
                              *, H, W, Wp, C_in, C_out):
    """One image per grid step.

    xp_ref:   (1, Hp, Wp, C_in)  zero-padded NHWC input (Wp % 8 == 0, Hp >= H+3)
    w_ref:    (9, C_in, C_out)   taps, tap index = di*3 + dj
    b_ref:    (1, C_out)
    o_ref:    (1, H//2, W//2, C_out) pooled output
    pool_ref: VMEM scratch (H*Wp, C_out) for the strided pool selection
    """
    Hp = xp_ref.shape[1]
    L = H * Wp                      # flat conv-output rows (cols >= W are garbage)
    Ho, Wo = H // 2, W // 2

    # Flatten padded spatial dims; layout preserving because Wp % 8 == 0.
    x2d = xp_ref[0].reshape(Hp * Wp, C_in)

    # conv: accumulate the 9 shifted flat windows (im2col fused in VMEM).
    acc = None
    for di in range(3):
        for dj in range(3):
            off = di * Wp + dj
            win = x2d[off:off + L, :]                    # (L, C_in)
            wk = w_ref[di * 3 + dj]                      # (C_in, C_out)
            if C_in == 1:
                term = win * wk                          # rank-1 -> VPU broadcast
            else:
                term = jnp.dot(win, wk,
                               preferred_element_type=jnp.float32)
            acc = term if acc is None else acc + term

    acc = jnp.maximum(acc + b_ref[...], 0.0)             # bias + ReLU

    # 2x2 / stride-2 max pool, done in the flat layout (row stride == Wp).
    L2 = L - Wp - 1
    v = jnp.maximum(
        jnp.maximum(acc[0:L2, :], acc[1:L2 + 1, :]),
        jnp.maximum(acc[Wp:L2 + Wp, :], acc[Wp + 1:L2 + Wp + 1, :]))
    pool_ref[L2:L, :] = jnp.zeros((L - L2, C_out), jnp.float32)
    pool_ref[0:L2, :] = v
    # every second flat row == (even image row, even image col) top-left corner
    pooled = pool_ref[pl.ds(0, Ho * Wp, stride=2), :]    # (Ho*Wp, C_out)
    y = pooled.reshape(Ho, Wp, C_out)
    o_ref[...] = y[None, :, 0:Wo, :].astype(o_ref.dtype)


def conv3x3_relu_pool(x_nhwc, w9, b2):
    """x: (N,H,W,Cin), w9: (9,Cin,Cout), b2: (1,Cout) -> (N,H//2,W//2,Cout)."""
    N, H, W, C_in = x_nhwc.shape
    C_out = w9.shape[-1]
    Ho, Wo = H // 2, W // 2
    Wp = _round_up(W + 2, 8)
    Hp = H + 3
    L = H * Wp
    xp = jnp.pad(x_nhwc, ((0, 0), (1, Hp - H - 1), (1, Wp - W - 1), (0, 0)))

    kernel = functools.partial(_conv3x3_relu_pool_kernel,
                               H=H, W=W, Wp=Wp, C_in=C_in, C_out=C_out)
    return pl.pallas_call(
        kernel,
        out_shape=jax.ShapeDtypeStruct((N, Ho, Wo, C_out), jnp.float32),
        grid=(N,),
        in_specs=[
            pl.BlockSpec((1, Hp, Wp, C_in), lambda n: (n, 0, 0, 0)),
            pl.BlockSpec((9, C_in, C_out), lambda n: (0, 0, 0)),
            pl.BlockSpec((1, C_out), lambda n: (0, 0)),
        ],
        out_specs=pl.BlockSpec((1, Ho, Wo, C_out), lambda n: (n, 0, 0, 0)),
        scratch_shapes=[pltpu.VMEM((L, C_out), jnp.float32)],
        compiler_params=pltpu.CompilerParams(
            dimension_semantics=("parallel",)),
    )(xp, w9, b2)


# ----------------------------------------------------------------------------
# Kernel 2: fused fc1 + ReLU + fc2 (row-tiled, weights VMEM-resident)
# ----------------------------------------------------------------------------
def _fc_relu_fc_kernel(x_ref, w1_ref, b1_ref, w2_ref, b2_ref, o_ref):
    h = jnp.dot(x_ref[...], w1_ref[...], preferred_element_type=jnp.float32)
    h = jnp.maximum(h + b1_ref[...], 0.0)
    out = jnp.dot(h, w2_ref[...], preferred_element_type=jnp.float32)
    o_ref[...] = (out + b2_ref[...]).astype(o_ref.dtype)


def _pick_row_tile(M, target=256):
    if M <= target:
        return M
    for t in range(target, 7, -1):
        if M % t == 0 and t % 8 == 0:
            return t
    return M


def fc_relu_fc(x, w1, b1, w2p, b2p):
    """x: (M,K); w1: (K,H1); b1: (1,H1); w2p: (H1,NP); b2p: (1,NP) -> (M,NP)."""
    M, K = x.shape
    H1 = w1.shape[1]
    NP = w2p.shape[1]
    TM = _pick_row_tile(M)
    return pl.pallas_call(
        _fc_relu_fc_kernel,
        out_shape=jax.ShapeDtypeStruct((M, NP), jnp.float32),
        grid=(M // TM,),
        in_specs=[
            pl.BlockSpec((TM, K), lambda i: (i, 0)),
            pl.BlockSpec((K, H1), lambda i: (0, 0)),
            pl.BlockSpec((1, H1), lambda i: (0, 0)),
            pl.BlockSpec((H1, NP), lambda i: (0, 0)),
            pl.BlockSpec((1, NP), lambda i: (0, 0)),
        ],
        out_specs=pl.BlockSpec((TM, NP), lambda i: (i, 0)),
        compiler_params=pltpu.CompilerParams(
            dimension_semantics=("parallel",)),
    )(x, w1, b1, w2p, b2p)


# ----------------------------------------------------------------------------
# SimpleCNN forward
# ----------------------------------------------------------------------------
def simple_cnn_forward(x_nchw, p):
    """x_nchw: (N, 1, 28, 28) float32 -> logits (N, 10)."""
    N = x_nchw.shape[0]
    x = jnp.transpose(x_nchw, (0, 2, 3, 1))                  # NCHW -> NHWC (C=1)
    x = conv3x3_relu_pool(x, p["conv1_w9"], p["conv1_b2"])   # (N, 14, 14, 32)
    x = conv3x3_relu_pool(x, p["conv2_w9"], p["conv2_b2"])   # (N, 7, 7, 64)
    # fc1's weight rows were pre-permuted to the NHWC flatten order, so no
    # per-call transpose back to NCHW is needed here.
    x = x.reshape(N, 7 * 7 * 64)                             # (N, 3136)
    logits = fc_relu_fc(x, p["fc1_w"], p["fc1_b2"], p["fc2_wp"], p["fc2_bp"])
    return logits[:, :10]                                    # drop lane padding


# ----------------------------------------------------------------------------
# Parameters (PyTorch layouts) + one-time layout preparation
# ----------------------------------------------------------------------------
def init_params(key):
    ks = jax.random.split(key, 8)
    s = 0.05
    return {
        "conv1_w": s * jax.random.normal(ks[0], (32, 1, 3, 3), jnp.float32),
        "conv1_b": s * jax.random.normal(ks[1], (32,), jnp.float32),
        "conv2_w": s * jax.random.normal(ks[2], (64, 32, 3, 3), jnp.float32),
        "conv2_b": s * jax.random.normal(ks[3], (64,), jnp.float32),
        "fc1_w":   s * jax.random.normal(ks[4], (128, 7 * 7 * 64), jnp.float32),
        "fc1_b":   s * jax.random.normal(ks[5], (128,), jnp.float32),
        "fc2_w":   s * jax.random.normal(ks[6], (10, 128), jnp.float32),
        "fc2_b":   s * jax.random.normal(ks[7], (10,), jnp.float32),
    }


def prepare_params(tp):
    """One-time layout plumbing (kept out of the per-call forward path)."""
    def conv_w(w):                       # (Cout, Cin, 3, 3) -> (9, Cin, Cout)
        c_out, c_in = w.shape[0], w.shape[1]
        return jnp.transpose(w, (2, 3, 1, 0)).reshape(9, c_in, c_out)

    n_cls = tp["fc2_w"].shape[0]
    n_pad = _round_up(n_cls, 128)
    # torch flattens NCHW as c*49 + h*7 + w; our activations are NHWC flattened
    # as h*7*64 + w*64 + c -> permute fc1's input rows once here.
    fc1 = tp["fc1_w"].reshape(128, 64, 7, 7)
    fc1 = jnp.transpose(fc1, (2, 3, 1, 0)).reshape(7 * 7 * 64, 128)
    fc2 = jnp.pad(tp["fc2_w"].T, ((0, 0), (0, n_pad - n_cls)))
    return {
        "conv1_w9": conv_w(tp["conv1_w"]),
        "conv1_b2": tp["conv1_b"].reshape(1, -1),
        "conv2_w9": conv_w(tp["conv2_w"]),
        "conv2_b2": tp["conv2_b"].reshape(1, -1),
        "fc1_w": fc1,
        "fc1_b2": tp["fc1_b"].reshape(1, -1),
        "fc2_wp": fc2,
        "fc2_bp": jnp.pad(tp["fc2_b"], (0, n_pad - n_cls)).reshape(1, -1),
    }


if __name__ == "__main__":
    key = jax.random.PRNGKey(0)
    k_x, k_p = jax.random.split(key)

    # fc1 expects 7*7*64 features => 28x28 single-channel input (MNIST shape).
    x = jax.random.normal(k_x, (2, 1, 28, 28), jnp.float32)
    params = prepare_params(init_params(k_p))

    fwd = jax.jit(simple_cnn_forward)
    logits = fwd(x, params)
    jax.block_until_ready(logits)

    assert logits.shape == (2, 10), logits.shape
    assert logits.dtype == jnp.float32
    print("KERNEL_OK")
</pallas_src>

<mosaic_0001>
module attributes {stable_mosaic.version = 11 : i64} {
  func.func @_conv3x3_relu_pool_kernel(%arg0: i32, %arg1: memref<1x31x32x1xf32, #tpu.memory_space<vmem>>, %arg2: memref<9x1x32xf32, #tpu.memory_space<vmem>>, %arg3: memref<1x32xf32, #tpu.memory_space<vmem>>, %arg4: memref<1x14x14x32xf32, #tpu.memory_space<vmem>>, %arg5: memref<896x32xf32, #tpu.memory_space<vmem>>) attributes {dimension_semantics = [#tpu.dimension_semantics<parallel>], iteration_bounds = array<i64: 2>, scalar_prefetch = 0 : i64, scratch_operands = 1 : i64, tpu.core_type = #tpu.core_type<tc>, window_params = [{transform_indices = @transform_0, window_bounds = array<i64: 1, 31, 32, 1>}, {pipeline_mode = #tpu.pipeline_mode<synchronous>, transform_indices = @transform_1, window_bounds = array<i64: 9, 1, 32>}, {pipeline_mode = #tpu.pipeline_mode<synchronous>, transform_indices = @transform_2, window_bounds = array<i64: 1, 32>}, {transform_indices = @transform_3, window_bounds = array<i64: 1, 14, 14, 32>}]} {
    %c0 = arith.constant 0 : index
    %c0_0 = arith.constant 0 : index
    %c0_1 = arith.constant 0 : index
    %c0_2 = arith.constant 0 : index
    %0 = vector.load %arg1[%c0, %c0_0, %c0_1, %c0_2] : memref<1x31x32x1xf32, #tpu.memory_space<vmem>>, vector<1x31x32x1xf32>
    %1 = vector.shape_cast %0 : vector<1x31x32x1xf32> to vector<31x32x1xf32>
    %2 = vector.shape_cast %1 : vector<31x32x1xf32> to vector<992x1xf32>
    %3 = vector.extract_strided_slice %2 {offsets = [0, 0], sizes = [896, 1], strides = [1, 1]} : vector<992x1xf32> to vector<896x1xf32>
    %c0_3 = arith.constant 0 : index
    %c0_4 = arith.constant 0 : index
    %c0_5 = arith.constant 0 : index
    %4 = vector.load %arg2[%c0_3, %c0_4, %c0_5] : memref<9x1x32xf32, #tpu.memory_space<vmem>>, vector<1x1x32xf32>
    %5 = vector.shape_cast %4 : vector<1x1x32xf32> to vector<1x32xf32>
    %6 = vector.broadcast %3 : vector<896x1xf32> to vector<896x32xf32>
    %7 = vector.broadcast %5 : vector<1x32xf32> to vector<896x32xf32>
    %8 = arith.mulf %6, %7 : vector<896x32xf32>
    %9 = vector.extract_strided_slice %2 {offsets = [1, 0], sizes = [896, 1], strides = [1, 1]} : vector<992x1xf32> to vector<896x1xf32>
    %c1 = arith.constant 1 : index
    %c0_6 = arith.constant 0 : index
    %c0_7 = arith.constant 0 : index
    %10 = vector.load %arg2[%c1, %c0_6, %c0_7] : memref<9x1x32xf32, #tpu.memory_space<vmem>>, vector<1x1x32xf32>
    %11 = vector.shape_cast %10 : vector<1x1x32xf32> to vector<1x32xf32>
    %12 = vector.broadcast %9 : vector<896x1xf32> to vector<896x32xf32>
    %13 = vector.broadcast %11 : vector<1x32xf32> to vector<896x32xf32>
    %14 = arith.mulf %12, %13 : vector<896x32xf32>
    %15 = arith.addf %8, %14 : vector<896x32xf32>
    %16 = vector.extract_strided_slice %2 {offsets = [2, 0], sizes = [896, 1], strides = [1, 1]} : vector<992x1xf32> to vector<896x1xf32>
    %c2 = arith.constant 2 : index
    %c0_8 = arith.constant 0 : index
    %c0_9 = arith.constant 0 : index
    %17 = vector.load %arg2[%c2, %c0_8, %c0_9] : memref<9x1x32xf32, #tpu.memory_space<vmem>>, vector<1x1x32xf32>
    %18 = vector.shape_cast %17 : vector<1x1x32xf32> to vector<1x32xf32>
    %19 = vector.broadcast %16 : vector<896x1xf32> to vector<896x32xf32>
    %20 = vector.broadcast %18 : vector<1x32xf32> to vector<896x32xf32>
    %21 = arith.mulf %19, %20 : vector<896x32xf32>
    %22 = arith.addf %15, %21 : vector<896x32xf32>
    %23 = vector.extract_strided_slice %2 {offsets = [32, 0], sizes = [896, 1], strides = [1, 1]} : vector<992x1xf32> to vector<896x1xf32>
    %c3 = arith.constant 3 : index
    %c0_10 = arith.constant 0 : index
    %c0_11 = arith.constant 0 : index
    %24 = vector.load %arg2[%c3, %c0_10, %c0_11] : memref<9x1x32xf32, #tpu.memory_space<vmem>>, vector<1x1x32xf32>
    %25 = vector.shape_cast %24 : vector<1x1x32xf32> to vector<1x32xf32>
    %26 = vector.broadcast %23 : vector<896x1xf32> to vector<896x32xf32>
    %27 = vector.broadcast %25 : vector<1x32xf32> to vector<896x32xf32>
    %28 = arith.mulf %26, %27 : vector<896x32xf32>
    %29 = arith.addf %22, %28 : vector<896x32xf32>
    %30 = vector.extract_strided_slice %2 {offsets = [33, 0], sizes = [896, 1], strides = [1, 1]} : vector<992x1xf32> to vector<896x1xf32>
    %c4 = arith.constant 4 : index
    %c0_12 = arith.constant 0 : index
    %c0_13 = arith.constant 0 : index
    %31 = vector.load %arg2[%c4, %c0_12, %c0_13] : memref<9x1x32xf32, #tpu.memory_space<vmem>>, vector<1x1x32xf32>
    %32 = vector.shape_cast %31 : vector<1x1x32xf32> to vector<1x32xf32>
    %33 = vector.broadcast %30 : vector<896x1xf32> to vector<896x32xf32>
    %34 = vector.broadcast %32 : vector<1x32xf32> to vector<896x32xf32>
    %35 = arith.mulf %33, %34 : vector<896x32xf32>
    %36 = arith.addf %29, %35 : vector<896x32xf32>
    %37 = vector.extract_strided_slice %2 {offsets = [34, 0], sizes = [896, 1], strides = [1, 1]} : vector<992x1xf32> to vector<896x1xf32>
    %c5 = arith.constant 5 : index
    %c0_14 = arith.constant 0 : index
    %c0_15 = arith.constant 0 : index
    %38 = vector.load %arg2[%c5, %c0_14, %c0_15] : memref<9x1x32xf32, #tpu.memory_space<vmem>>, vector<1x1x32xf32>
    %39 = vector.shape_cast %38 : vector<1x1x32xf32> to vector<1x32xf32>
    %40 = vector.broadcast %37 : vector<896x1xf32> to vector<896x32xf32>
    %41 = vector.broadcast %39 : vector<1x32xf32> to vector<896x32xf32>
    %42 = arith.mulf %40, %41 : vector<896x32xf32>
    %43 = arith.addf %36, %42 : vector<896x32xf32>
    %44 = vector.extract_strided_slice %2 {offsets = [64, 0], sizes = [896, 1], strides = [1, 1]} : vector<992x1xf32> to vector<896x1xf32>
    %c6 = arith.constant 6 : index
    %c0_16 = arith.constant 0 : index
    %c0_17 = arith.constant 0 : index
    %45 = vector.load %arg2[%c6, %c0_16, %c0_17] : memref<9x1x32xf32, #tpu.memory_space<vmem>>, vector<1x1x32xf32>
    %46 = vector.shape_cast %45 : vector<1x1x32xf32> to vector<1x32xf32>
    %47 = vector.broadcast %44 : vector<896x1xf32> to vector<896x32xf32>
    %48 = vector.broadcast %46 : vector<1x32xf32> to vector<896x32xf32>
    %49 = arith.mulf %47, %48 : vector<896x32xf32>
    %50 = arith.addf %43, %49 : vector<896x32xf32>
    %51 = vector.extract_strided_slice %2 {offsets = [65, 0], sizes = [896, 1], strides = [1, 1]} : vector<992x1xf32> to vector<896x1xf32>
    %c7 = arith.constant 7 : index
    %c0_18 = arith.constant 0 : index
    %c0_19 = arith.constant 0 : index
    %52 = vector.load %arg2[%c7, %c0_18, %c0_19] : memref<9x1x32xf32, #tpu.memory_space<vmem>>, vector<1x1x32xf32>
    %53 = vector.shape_cast %52 : vector<1x1x32xf32> to vector<1x32xf32>
    %54 = vector.broadcast %51 : vector<896x1xf32> to vector<896x32xf32>
    %55 = vector.broadcast %53 : vector<1x32xf32> to vector<896x32xf32>
    %56 = arith.mulf %54, %55 : vector<896x32xf32>
    %57 = arith.addf %50, %56 : vector<896x32xf32>
    %58 = vector.extract_strided_slice %2 {offsets = [66, 0], sizes = [896, 1], strides = [1, 1]} : vector<992x1xf32> to vector<896x1xf32>
    %c8 = arith.constant 8 : index
    %c0_20 = arith.constant 0 : index
    %c0_21 = arith.constant 0 : index
    %59 = vector.load %arg2[%c8, %c0_20, %c0_21] : memref<9x1x32xf32, #tpu.memory_space<vmem>>, vector<1x1x32xf32>
    %60 = vector.shape_cast %59 : vector<1x1x32xf32> to vector<1x32xf32>
    %61 = vector.broadcast %58 : vector<896x1xf32> to vector<896x32xf32>
    %62 = vector.broadcast %60 : vector<1x32xf32> to vector<896x32xf32>
    %63 = arith.mulf %61, %62 : vector<896x32xf32>
    %64 = arith.addf %57, %63 : vector<896x32xf32>
    %c0_22 = arith.constant 0 : index
    %c0_23 = arith.constant 0 : index
    %65 = vector.load %arg3[%c0_22, %c0_23] : memref<1x32xf32, #tpu.memory_space<vmem>>, vector<1x32xf32>
    %66 = vector.broadcast %65 : vector<1x32xf32> to vector<896x32xf32>
    %67 = arith.addf %64, %66 : vector<896x32xf32>
    %cst = arith.constant 0.000000e+00 : f32
    %68 = vector.broadcast %cst : f32 to vector<896x32xf32>
    %69 = arith.maximumf %67, %68 : vector<896x32xf32>
    %70 = vector.extract_strided_slice %69 {offsets = [0, 0], sizes = [863, 32], strides = [1, 1]} : vector<896x32xf32> to vector<863x32xf32>
    %71 = vector.extract_strided_slice %69 {offsets = [1, 0], sizes = [863, 32], strides = [1, 1]} : vector<896x32xf32> to vector<863x32xf32>
    %72 = arith.maximumf %70, %71 : vector<863x32xf32>
    %73 = vector.extract_strided_slice %69 {offsets = [32, 0], sizes = [863, 32], strides = [1, 1]} : vector<896x32xf32> to vector<863x32xf32>
    %74 = vector.extract_strided_slice %69 {offsets = [33, 0], sizes = [863, 32], strides = [1, 1]} : vector<896x32xf32> to vector<863x32xf32>
    %75 = arith.maximumf %73, %74 : vector<863x32xf32>
    %76 = arith.maximumf %72, %75 : vector<863x32xf32>
    %cst_24 = arith.constant 0.000000e+00 : f32
    %77 = vector.broadcast %cst_24 : f32 to vector<33x32xf32>
    %c863 = arith.constant 863 : index
    %c0_25 = arith.constant 0 : index
    %78 = vector.load %arg5[%c863, %c0_25] : memref<896x32xf32, #tpu.memory_space<vmem>>, vector<33x32xf32>
    tpu.vector_store %arg5[%c863, %c0_25], %77 {strides = array<i32>} : memref<896x32xf32, #tpu.memory_space<vmem>>, vector<33x32xf32>,
    %c0_26 = arith.constant 0 : index
    %c0_27 = arith.constant 0 : index
    %79 = vector.load %arg5[%c0_26, %c0_27] : memref<896x32xf32, #tpu.memory_space<vmem>>, vector<863x32xf32>
    tpu.vector_store %arg5[%c0_26, %c0_27], %76 {strides = array<i32>} : memref<896x32xf32, #tpu.memory_space<vmem>>, vector<863x32xf32>,
    %c0_28 = arith.constant 0 : index
    %c0_29 = arith.constant 0 : index
    %80 = tpu.strided_load %arg5[%c0_28, %c0_29] {strides = array<i32: 2, 1>} : memref<896x32xf32, #tpu.memory_space<vmem>>, vector<448x32xf32>
    %81 = vector.shape_cast %80 : vector<448x32xf32> to vector<14x32x32xf32>
    %82 = vector.extract_strided_slice %81 {offsets = [0, 0, 0], sizes = [14, 14, 32], strides = [1, 1, 1]} : vector<14x32x32xf32> to vector<14x14x32xf32>
    %83 = vector.shape_cast %82 : vector<14x14x32xf32> to vector<1x14x14x32xf32>
    %c0_30 = arith.constant 0 : index
    %c0_31 = arith.constant 0 : index
    %c0_32 = arith.constant 0 : index
    %c0_33 = arith.constant 0 : index
    %84 = vector.load %arg4[%c0_30, %c0_31, %c0_32, %c0_33] : memref<1x14x14x32xf32, #tpu.memory_space<vmem>>, vector<1x14x14x32xf32>
    tpu.vector_store %arg4[%c0_30, %c0_31, %c0_32, %c0_33], %83 {strides = array<i32>} : memref<1x14x14x32xf32, #tpu.memory_space<vmem>>, vector<1x14x14x32xf32>,
    return
  }
  func.func @transform_0(%arg0: i32) -> (i32, i32, i32, i32) {
    %c0_i32 = arith.constant 0 : i32
    %c0_i32_0 = arith.constant 0 : i32
    %c0_i32_1 = arith.constant 0 : i32
    %c0_i32_2 = arith.constant 0 : i32
    return %arg0, %c0_i32, %c0_i32_0, %c0_i32_1 : i32, i32, i32, i32
  }
  func.func @transform_1(%arg0: i32) -> (i32, i32, i32) {
    %c0_i32 = arith.constant 0 : i32
    %c0_i32_0 = arith.constant 0 : i32
    %c0_i32_1 = arith.constant 0 : i32
    %c0_i32_2 = arith.constant 0 : i32
    return %c0_i32, %c0_i32_0, %c0_i32_1 : i32, i32, i32
  }
  func.func @transform_2(%arg0: i32) -> (i32, i32) {
    %c0_i32 = arith.constant 0 : i32
    %c0_i32_0 = arith.constant 0 : i32
    %c0_i32_1 = arith.constant 0 : i32
    return %c0_i32, %c0_i32_0 : i32, i32
  }
  func.func @transform_3(%arg0: i32) -> (i32, i32, i32, i32) {
    %c0_i32 = arith.constant 0 : i32
    %c0_i32_0 = arith.constant 0 : i32
    %c0_i32_1 = arith.constant 0 : i32
    %c0_i32_2 = arith.constant 0 : i32
    return %arg0, %c0_i32, %c0_i32_0, %c0_i32_1 : i32, i32, i32, i32
  }
}

module attributes {stable_mosaic.version = 11 : i64} {
  func.func @_fc_relu_fc_kernel(%arg0: i32, %arg1: memref<2x3136xf32, #tpu.memory_space<vmem>>, %arg2: memref<3136x128xf32, #tpu.memory_space<vmem>>, %arg3: memref<1x128xf32, #tpu.memory_space<vmem>>, %arg4: memref<128x128xf32, #tpu.memory_space<vmem>>, %arg5: memref<1x128xf32, #tpu.memory_space<vmem>>, %arg6: memref<2x128xf32, #tpu.memory_space<vmem>>) attributes {dimension_semantics = [#tpu.dimension_semantics<parallel>], iteration_bounds = array<i64: 1>, scalar_prefetch = 0 : i64, scratch_operands = 0 : i64, tpu.core_type = #tpu.core_type<tc>, window_params = [{transform_indices = @transform_0, window_bounds = array<i64: 2, 3136>}, {pipeline_mode = #tpu.pipeline_mode<synchronous>, transform_indices = @transform_1, window_bounds = array<i64: 3136, 128>}, {pipeline_mode = #tpu.pipeline_mode<synchronous>, transform_indices = @transform_2, window_bounds = array<i64: 1, 128>}, {pipeline_mode = #tpu.pipeline_mode<synchronous>, transform_indices = @transform_3, window_bounds = array<i64: 128, 128>}, {pipeline_mode = #tpu.pipeline_mode<synchronous>, transform_indices = @transform_4, window_bounds = array<i64: 1, 128>}, {transform_indices = @transform_5, window_bounds = array<i64: 2, 128>}]} {
    %c0 = arith.constant 0 : index
    %c0_0 = arith.constant 0 : index
    %0 = vector.load %arg1[%c0, %c0_0] : memref<2x3136xf32, #tpu.memory_space<vmem>>, vector<2x3136xf32>
    %c0_1 = arith.constant 0 : index
    %c0_2 = arith.constant 0 : index
    %1 = vector.load %arg2[%c0_1, %c0_2] : memref<3136x128xf32, #tpu.memory_space<vmem>>, vector<3136x128xf32>
    %cst = arith.constant dense<0.000000e+00> : vector<2x128xf32>
    %2 = tpu.matmul %0, %1, %cst {dimension_numbers = #tpu.dot_dimension_numbers<[1], [0], [0], [1], [0, 0, 1, 1], [], []>} : vector<2x3136xf32>, vector<3136x128xf32>, vector<2x128xf32> -> vector<2x128xf32>
    %c0_3 = arith.constant 0 : index
    %c0_4 = arith.constant 0 : index
    %3 = vector.load %arg3[%c0_3, %c0_4] : memref<1x128xf32, #tpu.memory_space<vmem>>, vector<1x128xf32>
    %4 = vector.broadcast %3 : vector<1x128xf32> to vector<2x128xf32>
    %5 = arith.addf %2, %4 : vector<2x128xf32>
    %cst_5 = arith.constant 0.000000e+00 : f32
    %6 = vector.broadcast %cst_5 : f32 to vector<2x128xf32>
    %7 = arith.maximumf %5, %6 : vector<2x128xf32>
    %c0_6 = arith.constant 0 : index
    %c0_7 = arith.constant 0 : index
    %8 = vector.load %arg4[%c0_6, %c0_7] : memref<128x128xf32, #tpu.memory_space<vmem>>, vector<128x128xf32>
    %cst_8 = arith.constant dense<0.000000e+00> : vector<2x128xf32>
    %9 = tpu.matmul %7, %8, %cst_8 {dimension_numbers = #tpu.dot_dimension_numbers<[1], [0], [0], [1], [0, 0, 1, 1], [], []>} : vector<2x128xf32>, vector<128x128xf32>, vector<2x128xf32> -> vector<2x128xf32>
    %c0_9 = arith.constant 0 : index
    %c0_10 = arith.constant 0 : index
    %10 = vector.load %arg5[%c0_9, %c0_10] : memref<1x128xf32, #tpu.memory_space<vmem>>, vector<1x128xf32>
    %11 = vector.broadcast %10 : vector<1x128xf32> to vector<2x128xf32>
    %12 = arith.addf %9, %11 : vector<2x128xf32>
    %c0_11 = arith.constant 0 : index
    %c0_12 = arith.constant 0 : index
    %13 = vector.load %arg6[%c0_11, %c0_12] : memref<2x128xf32, #tpu.memory_space<vmem>>, vector<2x128xf32>
    tpu.vector_store %arg6[%c0_11, %c0_12], %12 {strides = array<i32>} : memref<2x128xf32, #tpu.memory_space<vmem>>, vector<2x128xf32>,
    return
  }
  func.func @transform_0(%arg0: i32) -> (i32, i32) {
    %c0_i32 = arith.constant 0 : i32
    %c0_i32_0 = arith.constant 0 : i32
    return %arg0, %c0_i32 : i32, i32
  }
  func.func @transform_1(%arg0: i32) -> (i32, i32) {
    %c0_i32 = arith.constant 0 : i32
    %c0_i32_0 = arith.constant 0 : i32
    %c0_i32_1 = arith.constant 0 : i32
    return %c0_i32, %c0_i32_0 : i32, i32
  }
  func.func @transform_2(%arg0: i32) -> (i32, i32) {
    %c0_i32 = arith.constant 0 : i32
    %c0_i32_0 = arith.constant 0 : i32
    %c0_i32_1 = arith.constant 0 : i32
    return %c0_i32, %c0_i32_0 : i32, i32
  }
  func.func @transform_3(%arg0: i32) -> (i32, i32) {
    %c0_i32 = arith.constant 0 : i32
    %c0_i32_0 = arith.constant 0 : i32
    %c0_i32_1 = arith.constant 0 : i32
    return %c0_i32, %c0_i32_0 : i32, i32
  }
  func.func @transform_4(%arg0: i32) -> (i32, i32) {
    %c0_i32 = arith.constant 0 : i32
    %c0_i32_0 = arith.constant 0 : i32
    %c0_i32_1 = arith.constant 0 : i32
    return %c0_i32, %c0_i32_0 : i32, i32
  }
  func.func @transform_5(%arg0: i32) -> (i32, i32) {
    %c0_i32 = arith.constant 0 : i32
    %c0_i32_0 = arith.constant 0 : i32
    return %arg0, %c0_i32 : i32, i32
  }
}

module attributes {stable_mosaic.version = 11 : i64} {
  func.func @_conv3x3_relu_pool_kernel(%arg0: i32, %arg1: memref<1x17x16x32xf32, #tpu.memory_space<vmem>>, %arg2: memref<9x32x64xf32, #tpu.memory_space<vmem>>, %arg3: memref<1x64xf32, #tpu.memory_space<vmem>>, %arg4: memref<1x7x7x64xf32, #tpu.memory_space<vmem>>, %arg5: memref<224x64xf32, #tpu.memory_space<vmem>>) attributes {dimension_semantics = [#tpu.dimension_semantics<parallel>], iteration_bounds = array<i64: 2>, scalar_prefetch = 0 : i64, scratch_operands = 1 : i64, tpu.core_type = #tpu.core_type<tc>, window_params = [{transform_indices = @transform_0, window_bounds = array<i64: 1, 17, 16, 32>}, {pipeline_mode = #tpu.pipeline_mode<synchronous>, transform_indices = @transform_1, window_bounds = array<i64: 9, 32, 64>}, {pipeline_mode = #tpu.pipeline_mode<synchronous>, transform_indices = @transform_2, window_bounds = array<i64: 1, 64>}, {transform_indices = @transform_3, window_bounds = array<i64: 1, 7, 7, 64>}]} {
    %c0 = arith.constant 0 : index
    %c0_0 = arith.constant 0 : index
    %c0_1 = arith.constant 0 : index
    %c0_2 = arith.constant 0 : index
    %0 = vector.load %arg1[%c0, %c0_0, %c0_1, %c0_2] : memref<1x17x16x32xf32, #tpu.memory_space<vmem>>, vector<1x17x16x32xf32>
    %1 = vector.shape_cast %0 : vector<1x17x16x32xf32> to vector<17x16x32xf32>
    %2 = vector.shape_cast %1 : vector<17x16x32xf32> to vector<272x32xf32>
    %3 = vector.extract_strided_slice %2 {offsets = [0, 0], sizes = [224, 32], strides = [1, 1]} : vector<272x32xf32> to vector<224x32xf32>
    %c0_3 = arith.constant 0 : index
    %c0_4 = arith.constant 0 : index
    %c0_5 = arith.constant 0 : index
    %4 = vector.load %arg2[%c0_3, %c0_4, %c0_5] : memref<9x32x64xf32, #tpu.memory_space<vmem>>, vector<1x32x64xf32>
    %5 = vector.shape_cast %4 : vector<1x32x64xf32> to vector<32x64xf32>
    %cst = arith.constant dense<0.000000e+00> : vector<224x64xf32>
    %6 = tpu.matmul %3, %5, %cst {dimension_numbers = #tpu.dot_dimension_numbers<[1], [0], [0], [1], [0, 0, 1, 1], [], []>} : vector<224x32xf32>, vector<32x64xf32>, vector<224x64xf32> -> vector<224x64xf32>
    %7 = vector.extract_strided_slice %2 {offsets = [1, 0], sizes = [224, 32], strides = [1, 1]} : vector<272x32xf32> to vector<224x32xf32>
    %c1 = arith.constant 1 : index
    %c0_6 = arith.constant 0 : index
    %c0_7 = arith.constant 0 : index
    %8 = vector.load %arg2[%c1, %c0_6, %c0_7] : memref<9x32x64xf32, #tpu.memory_space<vmem>>, vector<1x32x64xf32>
    %9 = vector.shape_cast %8 : vector<1x32x64xf32> to vector<32x64xf32>
    %cst_8 = arith.constant dense<0.000000e+00> : vector<224x64xf32>
    %10 = tpu.matmul %7, %9, %cst_8 {dimension_numbers = #tpu.dot_dimension_numbers<[1], [0], [0], [1], [0, 0, 1, 1], [], []>} : vector<224x32xf32>, vector<32x64xf32>, vector<224x64xf32> -> vector<224x64xf32>
    %11 = arith.addf %6, %10 : vector<224x64xf32>
    %12 = vector.extract_strided_slice %2 {offsets = [2, 0], sizes = [224, 32], strides = [1, 1]} : vector<272x32xf32> to vector<224x32xf32>
    %c2 = arith.constant 2 : index
    %c0_9 = arith.constant 0 : index
    %c0_10 = arith.constant 0 : index
    %13 = vector.load %arg2[%c2, %c0_9, %c0_10] : memref<9x32x64xf32, #tpu.memory_space<vmem>>, vector<1x32x64xf32>
    %14 = vector.shape_cast %13 : vector<1x32x64xf32> to vector<32x64xf32>
    %cst_11 = arith.constant dense<0.000000e+00> : vector<224x64xf32>
    %15 = tpu.matmul %12, %14, %cst_11 {dimension_numbers = #tpu.dot_dimension_numbers<[1], [0], [0], [1], [0, 0, 1, 1], [], []>} : vector<224x32xf32>, vector<32x64xf32>, vector<224x64xf32> -> vector<224x64xf32>
    %16 = arith.addf %11, %15 : vector<224x64xf32>
    %17 = vector.extract_strided_slice %2 {offsets = [16, 0], sizes = [224, 32], strides = [1, 1]} : vector<272x32xf32> to vector<224x32xf32>
    %c3 = arith.constant 3 : index
    %c0_12 = arith.constant 0 : index
    %c0_13 = arith.constant 0 : index
    %18 = vector.load %arg2[%c3, %c0_12, %c0_13] : memref<9x32x64xf32, #tpu.memory_space<vmem>>, vector<1x32x64xf32>
    %19 = vector.shape_cast %18 : vector<1x32x64xf32> to vector<32x64xf32>
    %cst_14 = arith.constant dense<0.000000e+00> : vector<224x64xf32>
    %20 = tpu.matmul %17, %19, %cst_14 {dimension_numbers = #tpu.dot_dimension_numbers<[1], [0], [0], [1], [0, 0, 1, 1], [], []>} : vector<224x32xf32>, vector<32x64xf32>, vector<224x64xf32> -> vector<224x64xf32>
    %21 = arith.addf %16, %20 : vector<224x64xf32>
    %22 = vector.extract_strided_slice %2 {offsets = [17, 0], sizes = [224, 32], strides = [1, 1]} : vector<272x32xf32> to vector<224x32xf32>
    %c4 = arith.constant 4 : index
    %c0_15 = arith.constant 0 : index
    %c0_16 = arith.constant 0 : index
    %23 = vector.load %arg2[%c4, %c0_15, %c0_16] : memref<9x32x64xf32, #tpu.memory_space<vmem>>, vector<1x32x64xf32>
    %24 = vector.shape_cast %23 : vector<1x32x64xf32> to vector<32x64xf32>
    %cst_17 = arith.constant dense<0.000000e+00> : vector<224x64xf32>
    %25 = tpu.matmul %22, %24, %cst_17 {dimension_numbers = #tpu.dot_dimension_numbers<[1], [0], [0], [1], [0, 0, 1, 1], [], []>} : vector<224x32xf32>, vector<32x64xf32>, vector<224x64xf32> -> vector<224x64xf32>
    %26 = arith.addf %21, %25 : vector<224x64xf32>
    %27 = vector.extract_strided_slice %2 {offsets = [18, 0], sizes = [224, 32], strides = [1, 1]} : vector<272x32xf32> to vector<224x32xf32>
    %c5 = arith.constant 5 : index
    %c0_18 = arith.constant 0 : index
    %c0_19 = arith.constant 0 : index
    %28 = vector.load %arg2[%c5, %c0_18, %c0_19] : memref<9x32x64xf32, #tpu.memory_space<vmem>>, vector<1x32x64xf32>
    %29 = vector.shape_cast %28 : vector<1x32x64xf32> to vector<32x64xf32>
    %cst_20 = arith.constant dense<0.000000e+00> : vector<224x64xf32>
    %30 = tpu.matmul %27, %29, %cst_20 {dimension_numbers = #tpu.dot_dimension_numbers<[1], [0], [0], [1], [0, 0, 1, 1], [], []>} : vector<224x32xf32>, vector<32x64xf32>, vector<224x64xf32> -> vector<224x64xf32>
    %31 = arith.addf %26, %30 : vector<224x64xf32>
    %32 = vector.extract_strided_slice %2 {offsets = [32, 0], sizes = [224, 32], strides = [1, 1]} : vector<272x32xf32> to vector<224x32xf32>
    %c6 = arith.constant 6 : index
    %c0_21 = arith.constant 0 : index
    %c0_22 = arith.constant 0 : index
    %33 = vector.load %arg2[%c6, %c0_21, %c0_22] : memref<9x32x64xf32, #tpu.memory_space<vmem>>, vector<1x32x64xf32>
    %34 = vector.shape_cast %33 : vector<1x32x64xf32> to vector<32x64xf32>
    %cst_23 = arith.constant dense<0.000000e+00> : vector<224x64xf32>
    %35 = tpu.matmul %32, %34, %cst_23 {dimension_numbers = #tpu.dot_dimension_numbers<[1], [0], [0], [1], [0, 0, 1, 1], [], []>} : vector<224x32xf32>, vector<32x64xf32>, vector<224x64xf32> -> vector<224x64xf32>
    %36 = arith.addf %31, %35 : vector<224x64xf32>
    %37 = vector.extract_strided_slice %2 {offsets = [33, 0], sizes = [224, 32], strides = [1, 1]} : vector<272x32xf32> to vector<224x32xf32>
    %c7 = arith.constant 7 : index
    %c0_24 = arith.constant 0 : index
    %c0_25 = arith.constant 0 : index
    %38 = vector.load %arg2[%c7, %c0_24, %c0_25] : memref<9x32x64xf32, #tpu.memory_space<vmem>>, vector<1x32x64xf32>
    %39 = vector.shape_cast %38 : vector<1x32x64xf32> to vector<32x64xf32>
    %cst_26 = arith.constant dense<0.000000e+00> : vector<224x64xf32>
    %40 = tpu.matmul %37, %39, %cst_26 {dimension_numbers = #tpu.dot_dimension_numbers<[1], [0], [0], [1], [0, 0, 1, 1], [], []>} : vector<224x32xf32>, vector<32x64xf32>, vector<224x64xf32> -> vector<224x64xf32>
    %41 = arith.addf %36, %40 : vector<224x64xf32>
    %42 = vector.extract_strided_slice %2 {offsets = [34, 0], sizes = [224, 32], strides = [1, 1]} : vector<272x32xf32> to vector<224x32xf32>
    %c8 = arith.constant 8 : index
    %c0_27 = arith.constant 0 : index
    %c0_28 = arith.constant 0 : index
    %43 = vector.load %arg2[%c8, %c0_27, %c0_28] : memref<9x32x64xf32, #tpu.memory_space<vmem>>, vector<1x32x64xf32>
    %44 = vector.shape_cast %43 : vector<1x32x64xf32> to vector<32x64xf32>
    %cst_29 = arith.constant dense<0.000000e+00> : vector<224x64xf32>
    %45 = tpu.matmul %42, %44, %cst_29 {dimension_numbers = #tpu.dot_dimension_numbers<[1], [0], [0], [1], [0, 0, 1, 1], [], []>} : vector<224x32xf32>, vector<32x64xf32>, vector<224x64xf32> -> vector<224x64xf32>
    %46 = arith.addf %41, %45 : vector<224x64xf32>
    %c0_30 = arith.constant 0 : index
    %c0_31 = arith.constant 0 : index
    %47 = vector.load %arg3[%c0_30, %c0_31] : memref<1x64xf32, #tpu.memory_space<vmem>>, vector<1x64xf32>
    %48 = vector.broadcast %47 : vector<1x64xf32> to vector<224x64xf32>
    %49 = arith.addf %46, %48 : vector<224x64xf32>
    %cst_32 = arith.constant 0.000000e+00 : f32
    %50 = vector.broadcast %cst_32 : f32 to vector<224x64xf32>
    %51 = arith.maximumf %49, %50 : vector<224x64xf32>
    %52 = vector.extract_strided_slice %51 {offsets = [0, 0], sizes = [207, 64], strides = [1, 1]} : vector<224x64xf32> to vector<207x64xf32>
    %53 = vector.extract_strided_slice %51 {offsets = [1, 0], sizes = [207, 64], strides = [1, 1]} : vector<224x64xf32> to vector<207x64xf32>
    %54 = arith.maximumf %52, %53 : vector<207x64xf32>
    %55 = vector.extract_strided_slice %51 {offsets = [16, 0], sizes = [207, 64], strides = [1, 1]} : vector<224x64xf32> to vector<207x64xf32>
    %56 = vector.extract_strided_slice %51 {offsets = [17, 0], sizes = [207, 64], strides = [1, 1]} : vector<224x64xf32> to vector<207x64xf32>
    %57 = arith.maximumf %55, %56 : vector<207x64xf32>
    %58 = arith.maximumf %54, %57 : vector<207x64xf32>
    %cst_33 = arith.constant 0.000000e+00 : f32
    %59 = vector.broadcast %cst_33 : f32 to vector<17x64xf32>
    %c207 = arith.constant 207 : index
    %c0_34 = arith.constant 0 : index
    %60 = vector.load %arg5[%c207, %c0_34] : memref<224x64xf32, #tpu.memory_space<vmem>>, vector<17x64xf32>
    tpu.vector_store %arg5[%c207, %c0_34], %59 {strides = array<i32>} : memref<224x64xf32, #tpu.memory_space<vmem>>, vector<17x64xf32>,
    %c0_35 = arith.constant 0 : index
    %c0_36 = arith.constant 0 : index
    %61 = vector.load %arg5[%c0_35, %c0_36] : memref<224x64xf32, #tpu.memory_space<vmem>>, vector<207x64xf32>
    tpu.vector_store %arg5[%c0_35, %c0_36], %58 {strides = array<i32>} : memref<224x64xf32, #tpu.memory_space<vmem>>, vector<207x64xf32>,
    %c0_37 = arith.constant 0 : index
    %c0_38 = arith.constant 0 : index
    %62 = tpu.strided_load %arg5[%c0_37, %c0_38] {strides = array<i32: 2, 1>} : memref<224x64xf32, #tpu.memory_space<vmem>>, vector<112x64xf32>
    %63 = vector.shape_cast %62 : vector<112x64xf32> to vector<7x16x64xf32>
    %64 = vector.extract_strided_slice %63 {offsets = [0, 0, 0], sizes = [7, 7, 64], strides = [1, 1, 1]} : vector<7x16x64xf32> to vector<7x7x64xf32>
    %65 = vector.shape_cast %64 : vector<7x7x64xf32> to vector<1x7x7x64xf32>
    %c0_39 = arith.constant 0 : index
    %c0_40 = arith.constant 0 : index
    %c0_41 = arith.constant 0 : index
    %c0_42 = arith.constant 0 : index
    %66 = vector.load %arg4[%c0_39, %c0_40, %c0_41, %c0_42] : memref<1x7x7x64xf32, #tpu.memory_space<vmem>>, vector<1x7x7x64xf32>
    tpu.vector_store %arg4[%c0_39, %c0_40, %c0_41, %c0_42], %65 {strides = array<i32>} : memref<1x7x7x64xf32, #tpu.memory_space<vmem>>, vector<1x7x7x64xf32>,
    return
  }
  func.func @transform_0(%arg0: i32) -> (i32, i32, i32, i32) {
    %c0_i32 = arith.constant 0 : i32
    %c0_i32_0 = arith.constant 0 : i32
    %c0_i32_1 = arith.constant 0 : i32
    %c0_i32_2 = arith.constant 0 : i32
    return %arg0, %c0_i32, %c0_i32_0, %c0_i32_1 : i32, i32, i32, i32
  }
  func.func @transform_1(%arg0: i32) -> (i32, i32, i32) {
    %c0_i32 = arith.constant 0 : i32
    %c0_i32_0 = arith.constant 0 : i32
    %c0_i32_1 = arith.constant 0 : i32
    %c0_i32_2 = arith.constant 0 : i32
    return %c0_i32, %c0_i32_0, %c0_i32_1 : i32, i32, i32
  }
  func.func @transform_2(%arg0: i32) -> (i32, i32) {
    %c0_i32 = arith.constant 0 : i32
    %c0_i32_0 = arith.constant 0 : i32
    %c0_i32_1 = arith.constant 0 : i32
    return %c0_i32, %c0_i32_0 : i32, i32
  }
  func.func @transform_3(%arg0: i32) -> (i32, i32, i32, i32) {
    %c0_i32 = arith.constant 0 : i32
    %c0_i32_0 = arith.constant 0 : i32
    %c0_i32_1 = arith.constant 0 : i32
    %c0_i32_2 = arith.constant 0 : i32
    return %arg0, %c0_i32, %c0_i32_0, %c0_i32_1 : i32, i32, i32, i32
  }
}

</mosaic_0001>

<llo_original>
// kernel: simple_cnn_forward.5
$region0: #{simple_cnn_forward.5}
  #allocation0 [shape = 'u32[]', space=smem, size = 0x4, offset = 0x4, fixed_abs, tag = 'smem constant byte address 0x4 - core index']
  #allocation1 [shape = 'u32[144,128]{1,0:T(1,128)}', space=vmem, size = 0x12000, scoped, tag = 'internal scratch']
  %s0 = inlined_call_operand.vmem [shape: f32[2,3136], index: 0, kind: input, shape index: {}]
  %s1 = inlined_call_operand.vmem [shape: f32[3136,128], index: 1, kind: input, shape index: {}]
  %s2 = inlined_call_operand.vmem [shape: f32[1,128], index: 2, kind: input, shape index: {}]
  %s3 = inlined_call_operand.vmem [shape: f32[128,128], index: 3, kind: input, shape index: {}]
  %s4 = inlined_call_operand.vmem [shape: f32[1,128], index: 4, kind: input, shape index: {}]
  %s5 = inlined_call_operand.hbm [shape: f32[2,128], index: 5, kind: output, shape index: {}]
  %s6 = sld [smem:[#allocation0]]
  $region30: #{simple_cnn_forward.5} parent=0
    _
  %s8 = ssub.s32 1, %s6
  %s9 = scalar_select 0, %s8, %s6
  $region1: #{simple_cnn_forward.5} parent=0
    #allocation2 [shape = 'u8[1024]{0}', space=vmem, size = 0x400, scoped, tag = 'output window, operand 0, single buffered']
    #allocation3 [shape = 's32[1]{0}', space=sflag, size = 0x4, scoped, tag = 'scoped memory for simple_cnn_forward.5']
    %10 = vsyncpa [#allocation3], 0
    // Predicated region
    $region2: #{simple_cnn_forward.5} parent=1 // pred_check
      _
    $region3: #{simple_cnn_forward.5} parent=1 // pred_check_branch
      %12 = sbr.rel (0) target = $region5
    $region4: #{simple_cnn_forward.5} parent=1 // pred_region
      _
    $region5: #{simple_cnn_forward.5} parent=1 // pred_fallthru
      _
    // Predicated region
    $region6: #{simple_cnn_forward.5} parent=1 // pred_check
      _
    $region7: #{simple_cnn_forward.5} parent=1 // pred_check_branch
      %14 = sbr.rel (0) target = $region9
    $region8: #{simple_cnn_forward.5} parent=1 // pred_region
      _
    $region9: #{simple_cnn_forward.5} parent=1 // pred_fallthru
      _
    // Predicated region
    $region10: #{simple_cnn_forward.5} parent=1 // pred_check
      _
    $region11: #{simple_cnn_forward.5} parent=1 // pred_check_branch
      %16 = sbr.rel (0) target = $region13
    $region12: #{simple_cnn_forward.5} parent=1 // pred_region
      _
    $region13: #{simple_cnn_forward.5} parent=1 // pred_fallthru
      _
    // Predicated region
    $region14: #{simple_cnn_forward.5} parent=1 // pred_check
      _
    $region15: #{simple_cnn_forward.5} parent=1 // pred_check_branch
      %18 = sbr.rel (0) target = $region17
    $region16: #{simple_cnn_forward.5} parent=1 // pred_region
      _
    $region17: #{simple_cnn_forward.5} parent=1 // pred_fallthru
      _
    // Predicated region
    $region18: #{simple_cnn_forward.5} parent=1 // pred_check
      _
    $region19: #{simple_cnn_forward.5} parent=1 // pred_check_branch
      %20 = sbr.rel (0) target = $region21
    $region20: #{simple_cnn_forward.5} parent=1 // pred_region
      _
    $region21: #{simple_cnn_forward.5} parent=1 // pred_fallthru
      _
    %v21 = vld [vmem:[%s0] sm:$0xff]
    %v22 = vld [vmem:[%s0 + $0x8] sm:$0xff]
    %v23 = vld [vmem:[%s0 + $0x10] sm:$0xff]
    %v24 = vld [vmem:[%s0 + $0x18] sm:$0xff]
    %v25 = vld [vmem:[%s0 + $0x20] sm:$0xff]
    %v26 = vld [vmem:[%s0 + $0x28] sm:$0xff]
    %v27 = vld [vmem:[%s0 + $0x30] sm:$0x3]
    %v28 = vld [vmem:[%s1] sm:$0xff]
    %v29 = vld [vmem:[%s1 + $0x8] sm:$0xff]
    %v30 = vld [vmem:[%s1 + $0x10] sm:$0xff]
    %v31 = vld [vmem:[%s1 + $0x18] sm:$0xff]
    %v32 = vld [vmem:[%s1 + $0x20] sm:$0xff]
    %v33 = vld [vmem:[%s1 + $0x28] sm:$0xff]
    %v34 = vld [vmem:[%s1 + $0x30] sm:$0xff]
    %v35 = vld [vmem:[%s1 + $0x38] sm:$0xff]
    %v36 = vld [vmem:[%s1 + $0x40] sm:$0xff]
    %v37 = vld [vmem:[%s1 + $0x48] sm:$0xff]
    %v38 = vld [vmem:[%s1 + $0x50] sm:$0xff]
    %v39 = vld [vmem:[%s1 + $0x58] sm:$0xff]
    %v40 = vld [vmem:[%s1 + $0x60] sm:$0xff]
    %v41 = vld [vmem:[%s1 + $0x68] sm:$0xff]
    %v42 = vld [vmem:[%s1 + $0x70] sm:$0xff]
    %v43 = vld [vmem:[%s1 + $0x78] sm:$0xff]
    %v44 = vld [vmem:[%s1 + $0x80] sm:$0xff]
    %v45 = vld [vmem:[%s1 + $0x88] sm:$0xff]
    %v46 = vld [vmem:[%s1 + $0x90] sm:$0xff]
    %v47 = vld [vmem:[%s1 + $0x98] sm:$0xff]
    %v48 = vld [vmem:[%s1 + $0xa0] sm:$0xff]
    %v49 = vld [vmem:[%s1 + $0xa8] sm:$0xff]
    %v50 = vld [vmem:[%s1 + $0xb0] sm:$0xff]
    %v51 = vld [vmem:[%s1 + $0xb8] sm:$0xff]
    %v52 = vld [vmem:[%s1 + $0xc0] sm:$0xff]
    %v53 = vld [vmem:[%s1 + $0xc8] sm:$0xff]
    %v54 = vld [vmem:[%s1 + $0xd0] sm:$0xff]
    %v55 = vld [vmem:[%s1 + $0xd8] sm:$0xff]
    %v56 = vld [vmem:[%s1 + $0xe0] sm:$0xff]
    %v57 = vld [vmem:[%s1 + $0xe8] sm:$0xff]
    %v58 = vld [vmem:[%s1 + $0xf0] sm:$0xff]
    %v59 = vld [vmem:[%s1 + $0xf8] sm:$0xff]
    %v60 = vld [vmem:[%s1 + $0x100] sm:$0xff]
    %v61 = vld [vmem:[%s1 + $0x108] sm:$0xff]
    %v62 = vld [vmem:[%s1 + $0x110] sm:$0xff]
    %v63 = vld [vmem:[%s1 + $0x118] sm:$0xff]
    %v64 = vld [vmem:[%s1 + $0x120] sm:$0xff]
    %v65 = vld [vmem:[%s1 + $0x128] sm:$0xff]
    %v66 = vld [vmem:[%s1 + $0x130] sm:$0xff]
    %v67 = vld [vmem:[%s1 + $0x138] sm:$0xff]
    %v68 = vld [vmem:[%s1 + $0x140] sm:$0xff]
    %v69 = vld [vmem:[%s1 + $0x148] sm:$0xff]
    %v70 = vld [vmem:[%s1 + $0x150] sm:$0xff]
    %v71 = vld [vmem:[%s1 + $0x158] sm:$0xff]
    %v72 = vld [vmem:[%s1 + $0x160] sm:$0xff]
    %v73 = vld [vmem:[%s1 + $0x168] sm:$0xff]
    %v74 = vld [vmem:[%s1 + $0x170] sm:$0xff]
    %v75 = vld [vmem:[%s1 + $0x178] sm:$0xff]
    %v76 = vld [vmem:[%s1 + $0x180] sm:$0xff]
    %v77 = vld [vmem:[%s1 + $0x188] sm:$0xff]
    %v78 = vld [vmem:[%s1 + $0x190] sm:$0xff]
    %v79 = vld [vmem:[%s1 + $0x198] sm:$0xff]
    %v80 = vld [vmem:[%s1 + $0x1a0] sm:$0xff]
    %v81 = vld [vmem:[%s1 + $0x1a8] sm:$0xff]
    %v82 = vld [vmem:[%s1 + $0x1b0] sm:$0xff]
    %v83 = vld [vmem:[%s1 + $0x1b8] sm:$0xff]
    %v84 = vld [vmem:[%s1 + $0x1c0] sm:$0xff]
    %v85 = vld [vmem:[%s1 + $0x1c8] sm:$0xff]
    %v86 = vld [vmem:[%s1 + $0x1d0] sm:$0xff]
    %v87 = vld [vmem:[%s1 + $0x1d8] sm:$0xff]
    %v88 = vld [vmem:[%s1 + $0x1e0] sm:$0xff]
    %v89 = vld [vmem:[%s1 + $0x1e8] sm:$0xff]
    %v90 = vld [vmem:[%s1 + $0x1f0] sm:$0xff]
    %v91 = vld [vmem:[%s1 + $0x1f8] sm:$0xff]
    %v92 = vld [vmem:[%s1 + $0x200] sm:$0xff]
    %v93 = vld [vmem:[%s1 + $0x208] sm:$0xff]
    %v94 = vld [vmem:[%s1 + $0x210] sm:$0xff]
    %v95 = vld [vmem:[%s1 + $0x218] sm:$0xff]
    %v96 = vld [vmem:[%s1 + $0x220] sm:$0xff]
    %v97 = vld [vmem:[%s1 + $0x228] sm:$0xff]
    %v98 = vld [vmem:[%s1 + $0x230] sm:$0xff]
    %v99 = vld [vmem:[%s1 + $0x238] sm:$0xff]
    %v100 = vld [vmem:[%s1 + $0x240] sm:$0xff]
    %v101 = vld [vmem:[%s1 + $0x248] sm:$0xff]
    %v102 = vld [vmem:[%s1 + $0x250] sm:$0xff]
    %v103 = vld [vmem:[%s1 + $0x258] sm:$0xff]
    %v104 = vld [vmem:[%s1 + $0x260] sm:$0xff]
    %v105 = vld [vmem:[%s1 + $0x268] sm:$0xff]
    %v106 = vld [vmem:[%s1 + $0x270] sm:$0xff]
    %v107 = vld [vmem:[%s1 + $0x278] sm:$0xff]
    %v108 = vld [vmem:[%s1 + $0x280] sm:$0xff]
    %v109 = vld [vmem:[%s1 + $0x288] sm:$0xff]
    %v110 = vld [vmem:[%s1 + $0x290] sm:$0xff]
    %v111 = vld [vmem:[%s1 + $0x298] sm:$0xff]
    %v112 = vld [vmem:[%s1 + $0x2a0] sm:$0xff]
    %v113 = vld [vmem:[%s1 + $0x2a8] sm:$0xff]
    %v114 = vld [vmem:[%s1 + $0x2b0] sm:$0xff]
    %v115 = vld [vmem:[%s1 + $0x2b8] sm:$0xff]
    %v116 = vld [vmem:[%s1 + $0x2c0] sm:$0xff]
    %v117 = vld [vmem:[%s1 + $0x2c8] sm:$0xff]
    %v118 = vld [vmem:[%s1 + $0x2d0] sm:$0xff]
    %v119 = vld [vmem:[%s1 + $0x2d8] sm:$0xff]
    %v120 = vld [vmem:[%s1 + $0x2e0] sm:$0xff]
    %v121 = vld [vmem:[%s1 + $0x2e8] sm:$0xff]
    %v122 = vld [vmem:[%s1 + $0x2f0] sm:$0xff]
    %v123 = vld [vmem:[%s1 + $0x2f8] sm:$0xff]
    %v124 = vld [vmem:[%s1 + $0x300] sm:$0xff]
    %v125 = vld [vmem:[%s1 + $0x308] sm:$0xff]
    %v126 = vld [vmem:[%s1 + $0x310] sm:$0xff]
    %v127 = vld [vmem:[%s1 + $0x318] sm:$0xff]
    %v128 = vld [vmem:[%s1 + $0x320] sm:$0xff]
    %v129 = vld [vmem:[%s1 + $0x328] sm:$0xff]
    %v130 = vld [vmem:[%s1 + $0x330] sm:$0xff]
    %v131 = vld [vmem:[%s1 + $0x338] sm:$0xff]
    %v132 = vld [vmem:[%s1 + $0x340] sm:$0xff]
    %v133 = vld [vmem:[%s1 + $0x348] sm:$0xff]
    %v134 = vld [vmem:[%s1 + $0x350] sm:$0xff]
    %v135 = vld [vmem:[%s1 + $0x358] sm:$0xff]
    %v136 = vld [vmem:[%s1 + $0x360] sm:$0xff]
    %v137 = vld [vmem:[%s1 + $0x368] sm:$0xff]
    %v138 = vld [vmem:[%s1 + $0x370] sm:$0xff]
    %v139 = vld [vmem:[%s1 + $0x378] sm:$0xff]
    %v140 = vld [vmem:[%s1 + $0x380] sm:$0xff]
    %v141 = vld [vmem:[%s1 + $0x388] sm:$0xff]
    %v142 = vld [vmem:[%s1 + $0x390] sm:$0xff]
    %v143 = vld [vmem:[%s1 + $0x398] sm:$0xff]
    %v144 = vld [vmem:[%s1 + $0x3a0] sm:$0xff]
    %v145 = vld [vmem:[%s1 + $0x3a8] sm:$0xff]
    %v146 = vld [vmem:[%s1 + $0x3b0] sm:$0xff]
    %v147 = vld [vmem:[%s1 + $0x3b8] sm:$0xff]
    %v148 = vld [vmem:[%s1 + $0x3c0] sm:$0xff]
    %v149 = vld [vmem:[%s1 + $0x3c8] sm:$0xff]
    %v150 = vld [vmem:[%s1 + $0x3d0] sm:$0xff]
    %v151 = vld [vmem:[%s1 + $0x3d8] sm:$0xff]
    %v152 = vld [vmem:[%s1 + $0x3e0] sm:$0xff]
    %v153 = vld [vmem:[%s1 + $0x3e8] sm:$0xff]
    %v154 = vld [vmem:[%s1 + $0x3f0] sm:$0xff]
    %v155 = vld [vmem:[%s1 + $0x3f8] sm:$0xff]
    %v156 = vld [vmem:[%s1 + $0x400] sm:$0xff]
    %v157 = vld [vmem:[%s1 + $0x408] sm:$0xff]
    %v158 = vld [vmem:[%s1 + $0x410] sm:$0xff]
    %v159 = vld [vmem:[%s1 + $0x418] sm:$0xff]
    %v160 = vld [vmem:[%s1 + $0x420] sm:$0xff]
    %v161 = vld [vmem:[%s1 + $0x428] sm:$0xff]
    %v162 = vld [vmem:[%s1 + $0x430] sm:$0xff]
    %v163 = vld [vmem:[%s1 + $0x438] sm:$0xff]
    %v164 = vld [vmem:[%s1 + $0x440] sm:$0xff]
    %v165 = vld [vmem:[%s1 + $0x448] sm:$0xff]
    %v166 = vld [vmem:[%s1 + $0x450] sm:$0xff]
    %v167 = vld [vmem:[%s1 + $0x458] sm:$0xff]
    %v168 = vld [vmem:[%s1 + $0x460] sm:$0xff]
    %v169 = vld [vmem:[%s1 + $0x468] sm:$0xff]
    %v170 = vld [vmem:[%s1 + $0x470] sm:$0xff]
    %v171 = vld [vmem:[%s1 + $0x478] sm:$0xff]
    %v172 = vld [vmem:[%s1 + $0x480] sm:$0xff]
    %v173 = vld [vmem:[%s1 + $0x488] sm:$0xff]
    %v174 = vld [vmem:[%s1 + $0x490] sm:$0xff]
    %v175 = vld [vmem:[%s1 + $0x498] sm:$0xff]
    %v176 = vld [vmem:[%s1 + $0x4a0] sm:$0xff]
    %v177 = vld [vmem:[%s1 + $0x4a8] sm:$0xff]
    %v178 = vld [vmem:[%s1 + $0x4b0] sm:$0xff]
    %v179 = vld [vmem:[%s1 + $0x4b8] sm:$0xff]
    %v180 = vld [vmem:[%s1 + $0x4c0] sm:$0xff]
    %v181 = vld [vmem:[%s1 + $0x4c8] sm:$0xff]
    %v182 = vld [vmem:[%s1 + $0x4d0] sm:$0xff]
    %v183 = vld [vmem:[%s1 + $0x4d8] sm:$0xff]
    %v184 = vld [vmem:[%s1 + $0x4e0] sm:$0xff]
    %v185 = vld [vmem:[%s1 + $0x4e8] sm:$0xff]
    %v186 = vld [vmem:[%s1 + $0x4f0] sm:$0xff]
    %v187 = vld [vmem:[%s1 + $0x4f8] sm:$0xff]
    %v188 = vld [vmem:[%s1 + $0x500] sm:$0xff]
    %v189 = vld [vmem:[%s1 + $0x508] sm:$0xff]
    %v190 = vld [vmem:[%s1 + $0x510] sm:$0xff]
    %v191 = vld [vmem:[%s1 + $0x518] sm:$0xff]
    %v192 = vld [vmem:[%s1 + $0x520] sm:$0xff]
    %v193 = vld [vmem:[%s1 + $0x528] sm:$0xff]
    %v194 = vld [vmem:[%s1 + $0x530] sm:$0xff]
    %v195 = vld [vmem:[%s1 + $0x538] sm:$0xff]
    %v196 = vld [vmem:[%s1 + $0x540] sm:$0xff]
    %v197 = vld [vmem:[%s1 + $0x548] sm:$0xff]
    %v198 = vld [vmem:[%s1 + $0x550] sm:$0xff]
    %v199 = vld [vmem:[%s1 + $0x558] sm:$0xff]
    %v200 = vld [vmem:[%s1 + $0x560] sm:$0xff]
    %v201 = vld [vmem:[%s1 + $0x568] sm:$0xff]
    %v202 = vld [vmem:[%s1 + $0x570] sm:$0xff]
    %v203 = vld [vmem:[%s1 + $0x578] sm:$0xff]
    %v204 = vld [vmem:[%s1 + $0x580] sm:$0xff]
    %v205 = vld [vmem:[%s1 + $0x588] sm:$0xff]
    %v206 = vld [vmem:[%s1 + $0x590] sm:$0xff]
    %v207 = vld [vmem:[%s1 + $0x598] sm:$0xff]
    %v208 = vld [vmem:[%s1 + $0x5a0] sm:$0xff]
    %v209 = vld [vmem:[%s1 + $0x5a8] sm:$0xff]
    %v210 = vld [vmem:[%s1 + $0x5b0] sm:$0xff]
    %v211 = vld [vmem:[%s1 + $0x5b8] sm:$0xff]
    %v212 = vld [vmem:[%s1 + $0x5c0] sm:$0xff]
    %v213 = vld [vmem:[%s1 + $0x5c8] sm:$0xff]
    %v214 = vld [vmem:[%s1 + $0x5d0] sm:$0xff]
    %v215 = vld [vmem:[%s1 + $0x5d8] sm:$0xff]
    %v216 = vld [vmem:[%s1 + $0x5e0] sm:$0xff]
    %v217 = vld [vmem:[%s1 + $0x5e8] sm:$0xff]
    %v218 = vld [vmem:[%s1 + $0x5f0] sm:$0xff]
    %v219 = vld [vmem:[%s1 + $0x5f8] sm:$0xff]
    %v220 = vld [vmem:[%s1 + $0x600] sm:$0xff]
    %v221 = vld [vmem:[%s1 + $0x608] sm:$0xff]
    %v222 = vld [vmem:[%s1 + $0x610] sm:$0xff]
    %v223 = vld [vmem:[%s1 + $0x618] sm:$0xff]
    %v224 = vld [vmem:[%s1 + $0x620] sm:$0xff]
    %v225 = vld [vmem:[%s1 + $0x628] sm:$0xff]
    %v226 = vld [vmem:[%s1 + $0x630] sm:$0xff]
    %v227 = vld [vmem:[%s1 + $0x638] sm:$0xff]
    %v228 = vld [vmem:[%s1 + $0x640] sm:$0xff]
    %v229 = vld [vmem:[%s1 + $0x648] sm:$0xff]
    %v230 = vld [vmem:[%s1 + $0x650] sm:$0xff]
    %v231 = vld [vmem:[%s1 + $0x658] sm:$0xff]
    %v232 = vld [vmem:[%s1 + $0x660] sm:$0xff]
    %v233 = vld [vmem:[%s1 + $0x668] sm:$0xff]
    %v234 = vld [vmem:[%s1 + $0x670] sm:$0xff]
    %v235 = vld [vmem:[%s1 + $0x678] sm:$0xff]
    %v236 = vld [vmem:[%s1 + $0x680] sm:$0xff]
    %v237 = vld [vmem:[%s1 + $0x688] sm:$0xff]
    %v238 = vld [vmem:[%s1 + $0x690] sm:$0xff]
    %v239 = vld [vmem:[%s1 + $0x698] sm:$0xff]
    %v240 = vld [vmem:[%s1 + $0x6a0] sm:$0xff]
    %v241 = vld [vmem:[%s1 + $0x6a8] sm:$0xff]
    %v242 = vld [vmem:[%s1 + $0x6b0] sm:$0xff]
    %v243 = vld [vmem:[%s1 + $0x6b8] sm:$0xff]
    %v244 = vld [vmem:[%s1 + $0x6c0] sm:$0xff]
    %v245 = vld [vmem:[%s1 + $0x6c8] sm:$0xff]
    %v246 = vld [vmem:[%s1 + $0x6d0] sm:$0xff]
    %v247 = vld [vmem:[%s1 + $0x6d8] sm:$0xff]
    %v248 = vld [vmem:[%s1 + $0x6e0] sm:$0xff]
    %v249 = vld [vmem:[%s1 + $0x6e8] sm:$0xff]
    %v250 = vld [vmem:[%s1 + $0x6f0] sm:$0xff]
    %v251 = vld [vmem:[%s1 + $0x6f8] sm:$0xff]
    %v252 = vld [vmem:[%s1 + $0x700] sm:$0xff]
    %v253 = vld [vmem:[%s1 + $0x708] sm:$0xff]
    %v254 = vld [vmem:[%s1 + $0x710] sm:$0xff]
    %v255 = vld [vmem:[%s1 + $0x718] sm:$0xff]
    %v256 = vld [vmem:[%s1 + $0x720] sm:$0xff]
    %v257 = vld [vmem:[%s1 + $0x728] sm:$0xff]
    %v258 = vld [vmem:[%s1 + $0x730] sm:$0xff]
    %v259 = vld [vmem:[%s1 + $0x738] sm:$0xff]
    %v260 = vld [vmem:[%s1 + $0x740] sm:$0xff]
    %v261 = vld [vmem:[%s1 + $0x748] sm:$0xff]
    %v262 = vld [vmem:[%s1 + $0x750] sm:$0xff]
    %v263 = vld [vmem:[%s1 + $0x758] sm:$0xff]
    %v264 = vld [vmem:[%s1 + $0x760] sm:$0xff]
    %v265 = vld [vmem:[%s1 + $0x768] sm:$0xff]
    %v266 = vld [vmem:[%s1 + $0x770] sm:$0xff]
    %v267 = vld [vmem:[%s1 + $0x778] sm:$0xff]
    %v268 = vld [vmem:[%s1 + $0x780] sm:$0xff]
    %v269 = vld [vmem:[%s1 + $0x788] sm:$0xff]
    %v270 = vld [vmem:[%s1 + $0x790] sm:$0xff]
    %v271 = vld [vmem:[%s1 + $0x798] sm:$0xff]
    %v272 = vld [vmem:[%s1 + $0x7a0] sm:$0xff]
    %v273 = vld [vmem:[%s1 + $0x7a8] sm:$0xff]
    %v274 = vld [vmem:[%s1 + $0x7b0] sm:$0xff]
    %v275 = vld [vmem:[%s1 + $0x7b8] sm:$0xff]
    %v276 = vld [vmem:[%s1 + $0x7c0] sm:$0xff]
    %v277 = vld [vmem:[%s1 + $0x7c8] sm:$0xff]
    %v278 = vld [vmem:[%s1 + $0x7d0] sm:$0xff]
    %v279 = vld [vmem:[%s1 + $0x7d8] sm:$0xff]
    %v280 = vld [vmem:[%s1 + $0x7e0] sm:$0xff]
    %v281 = vld [vmem:[%s1 + $0x7e8] sm:$0xff]
    %v282 = vld [vmem:[%s1 + $0x7f0] sm:$0xff]
    %v283 = vld [vmem:[%s1 + $0x7f8] sm:$0xff]
    %v284 = vld [vmem:[%s1 + $0x800] sm:$0xff]
    %v285 = vld [vmem:[%s1 + $0x808] sm:$0xff]
    %v286 = vld [vmem:[%s1 + $0x810] sm:$0xff]
    %v287 = vld [vmem:[%s1 + $0x818] sm:$0xff]
    %v288 = vld [vmem:[%s1 + $0x820] sm:$0xff]
    %v289 = vld [vmem:[%s1 + $0x828] sm:$0xff]
    %v290 = vld [vmem:[%s1 + $0x830] sm:$0xff]
    %v291 = vld [vmem:[%s1 + $0x838] sm:$0xff]
    %v292 = vld [vmem:[%s1 + $0x840] sm:$0xff]
    %v293 = vld [vmem:[%s1 + $0x848] sm:$0xff]
    %v294 = vld [vmem:[%s1 + $0x850] sm:$0xff]
    %v295 = vld [vmem:[%s1 + $0x858] sm:$0xff]
    %v296 = vld [vmem:[%s1 + $0x860] sm:$0xff]
    %v297 = vld [vmem:[%s1 + $0x868] sm:$0xff]
    %v298 = vld [vmem:[%s1 + $0x870] sm:$0xff]
    %v299 = vld [vmem:[%s1 + $0x878] sm:$0xff]
    %v300 = vld [vmem:[%s1 + $0x880] sm:$0xff]
    %v301 = vld [vmem:[%s1 + $0x888] sm:$0xff]
    %v302 = vld [vmem:[%s1 + $0x890] sm:$0xff]
    %v303 = vld [vmem:[%s1 + $0x898] sm:$0xff]
    %v304 = vld [vmem:[%s1 + $0x8a0] sm:$0xff]
    %v305 = vld [vmem:[%s1 + $0x8a8] sm:$0xff]
    %v306 = vld [vmem:[%s1 + $0x8b0] sm:$0xff]
    %v307 = vld [vmem:[%s1 + $0x8b8] sm:$0xff]
    %v308 = vld [vmem:[%s1 + $0x8c0] sm:$0xff]
    %v309 = vld [vmem:[%s1 + $0x8c8] sm:$0xff]
    %v310 = vld [vmem:[%s1 + $0x8d0] sm:$0xff]
    %v311 = vld [vmem:[%s1 + $0x8d8] sm:$0xff]
    %v312 = vld [vmem:[%s1 + $0x8e0] sm:$0xff]
    %v313 = vld [vmem:[%s1 + $0x8e8] sm:$0xff]
    %v314 = vld [vmem:[%s1 + $0x8f0] sm:$0xff]
    %v315 = vld [vmem:[%s1 + $0x8f8] sm:$0xff]
    %v316 = vld [vmem:[%s1 + $0x900] sm:$0xff]
    %v317 = vld [vmem:[%s1 + $0x908] sm:$0xff]
    %v318 = vld [vmem:[%s1 + $0x910] sm:$0xff]
    %v319 = vld [vmem:[%s1 + $0x918] sm:$0xff]
    %v320 = vld [vmem:[%s1 + $0x920] sm:$0xff]
    %v321 = vld [vmem:[%s1 + $0x928] sm:$0xff]
    %v322 = vld [vmem:[%s1 + $0x930] sm:$0xff]
    %v323 = vld [vmem:[%s1 + $0x938] sm:$0xff]
    %v324 = vld [vmem:[%s1 + $0x940] sm:$0xff]
    %v325 = vld [vmem:[%s1 + $0x948] sm:$0xff]
    %v326 = vld [vmem:[%s1 + $0x950] sm:$0xff]
    %v327 = vld [vmem:[%s1 + $0x958] sm:$0xff]
    %v328 = vld [vmem:[%s1 + $0x960] sm:$0xff]
    %v329 = vld [vmem:[%s1 + $0x968] sm:$0xff]
    %v330 = vld [vmem:[%s1 + $0x970] sm:$0xff]
    %v331 = vld [vmem:[%s1 + $0x978] sm:$0xff]
    %v332 = vld [vmem:[%s1 + $0x980] sm:$0xff]
    %v333 = vld [vmem:[%s1 + $0x988] sm:$0xff]
    %v334 = vld [vmem:[%s1 + $0x990] sm:$0xff]
    %v335 = vld [vmem:[%s1 + $0x998] sm:$0xff]
    %v336 = vld [vmem:[%s1 + $0x9a0] sm:$0xff]
    %v337 = vld [vmem:[%s1 + $0x9a8] sm:$0xff]
    %v338 = vld [vmem:[%s1 + $0x9b0] sm:$0xff]
    %v339 = vld [vmem:[%s1 + $0x9b8] sm:$0xff]
    %v340 = vld [vmem:[%s1 + $0x9c0] sm:$0xff]
    %v341 = vld [vmem:[%s1 + $0x9c8] sm:$0xff]
    %v342 = vld [vmem:[%s1 + $0x9d0] sm:$0xff]
    %v343 = vld [vmem:[%s1 + $0x9d8] sm:$0xff]
    %v344 = vld [vmem:[%s1 + $0x9e0] sm:$0xff]
    %v345 = vld [vmem:[%s1 + $0x9e8] sm:$0xff]
    %v346 = vld [vmem:[%s1 + $0x9f0] sm:$0xff]
    %v347 = vld [vmem:[%s1 + $0x9f8] sm:$0xff]
    %v348 = vld [vmem:[%s1 + $0xa00] sm:$0xff]
    %v349 = vld [vmem:[%s1 + $0xa08] sm:$0xff]
    %v350 = vld [vmem:[%s1 + $0xa10] sm:$0xff]
    %v351 = vld [vmem:[%s1 + $0xa18] sm:$0xff]
    %v352 = vld [vmem:[%s1 + $0xa20] sm:$0xff]
    %v353 = vld [vmem:[%s1 + $0xa28] sm:$0xff]
    %v354 = vld [vmem:[%s1 + $0xa30] sm:$0xff]
    %v355 = vld [vmem:[%s1 + $0xa38] sm:$0xff]
    %v356 = vld [vmem:[%s1 + $0xa40] sm:$0xff]
    %v357 = vld [vmem:[%s1 + $0xa48] sm:$0xff]
    %v358 = vld [vmem:[%s1 + $0xa50] sm:$0xff]
    %v359 = vld [vmem:[%s1 + $0xa58] sm:$0xff]
    %v360 = vld [vmem:[%s1 + $0xa60] sm:$0xff]
    %v361 = vld [vmem:[%s1 + $0xa68] sm:$0xff]
    %v362 = vld [vmem:[%s1 + $0xa70] sm:$0xff]
    %v363 = vld [vmem:[%s1 + $0xa78] sm:$0xff]
    %v364 = vld [vmem:[%s1 + $0xa80] sm:$0xff]
    %v365 = vld [vmem:[%s1 + $0xa88] sm:$0xff]
    %v366 = vld [vmem:[%s1 + $0xa90] sm:$0xff]
    %v367 = vld [vmem:[%s1 + $0xa98] sm:$0xff]
    %v368 = vld [vmem:[%s1 + $0xaa0] sm:$0xff]
    %v369 = vld [vmem:[%s1 + $0xaa8] sm:$0xff]
    %v370 = vld [vmem:[%s1 + $0xab0] sm:$0xff]
    %v371 = vld [vmem:[%s1 + $0xab8] sm:$0xff]
    %v372 = vld [vmem:[%s1 + $0xac0] sm:$0xff]
    %v373 = vld [vmem:[%s1 + $0xac8] sm:$0xff]
    %v374 = vld [vmem:[%s1 + $0xad0] sm:$0xff]
    %v375 = vld [vmem:[%s1 + $0xad8] sm:$0xff]
    %v376 = vld [vmem:[%s1 + $0xae0] sm:$0xff]
    %v377 = vld [vmem:[%s1 + $0xae8] sm:$0xff]
    %v378 = vld [vmem:[%s1 + $0xaf0] sm:$0xff]
    %v379 = vld [vmem:[%s1 + $0xaf8] sm:$0xff]
    %v380 = vld [vmem:[%s1 + $0xb00] sm:$0xff]
    %v381 = vld [vmem:[%s1 + $0xb08] sm:$0xff]
    %v382 = vld [vmem:[%s1 + $0xb10] sm:$0xff]
    %v383 = vld [vmem:[%s1 + $0xb18] sm:$0xff]
    %v384 = vld [vmem:[%s1 + $0xb20] sm:$0xff]
    %v385 = vld [vmem:[%s1 + $0xb28] sm:$0xff]
    %v386 = vld [vmem:[%s1 + $0xb30] sm:$0xff]
    %v387 = vld [vmem:[%s1 + $0xb38] sm:$0xff]
    %v388 = vld [vmem:[%s1 + $0xb40] sm:$0xff]
    %v389 = vld [vmem:[%s1 + $0xb48] sm:$0xff]
    %v390 = vld [vmem:[%s1 + $0xb50] sm:$0xff]
    %v391 = vld [vmem:[%s1 + $0xb58] sm:$0xff]
    %v392 = vld [vmem:[%s1 + $0xb60] sm:$0xff]
    %v393 = vld [vmem:[%s1 + $0xb68] sm:$0xff]
    %v394 = vld [vmem:[%s1 + $0xb70] sm:$0xff]
    %v395 = vld [vmem:[%s1 + $0xb78] sm:$0xff]
    %v396 = vld [vmem:[%s1 + $0xb80] sm:$0xff]
    %v397 = vld [vmem:[%s1 + $0xb88] sm:$0xff]
    %v398 = vld [vmem:[%s1 + $0xb90] sm:$0xff]
    %v399 = vld [vmem:[%s1 + $0xb98] sm:$0xff]
    %v400 = vld [vmem:[%s1 + $0xba0] sm:$0xff]
    %v401 = vld [vmem:[%s1 + $0xba8] sm:$0xff]
    %v402 = vld [vmem:[%s1 + $0xbb0] sm:$0xff]
    %v403 = vld [vmem:[%s1 + $0xbb8] sm:$0xff]
    %v404 = vld [vmem:[%s1 + $0xbc0] sm:$0xff]
    %v405 = vld [vmem:[%s1 + $0xbc8] sm:$0xff]
    %v406 = vld [vmem:[%s1 + $0xbd0] sm:$0xff]
    %v407 = vld [vmem:[%s1 + $0xbd8] sm:$0xff]
    %v408 = vld [vmem:[%s1 + $0xbe0] sm:$0xff]
    %v409 = vld [vmem:[%s1 + $0xbe8] sm:$0xff]
    %v410 = vld [vmem:[%s1 + $0xbf0] sm:$0xff]
    %v411 = vld [vmem:[%s1 + $0xbf8] sm:$0xff]
    %v412 = vld [vmem:[%s1 + $0xc00] sm:$0xff]
    %v413 = vld [vmem:[%s1 + $0xc08] sm:$0xff]
    %v414 = vld [vmem:[%s1 + $0xc10] sm:$0xff]
    %v415 = vld [vmem:[%s1 + $0xc18] sm:$0xff]
    %v416 = vld [vmem:[%s1 + $0xc20] sm:$0xff]
    %v417 = vld [vmem:[%s1 + $0xc28] sm:$0xff]
    %v418 = vld [vmem:[%s1 + $0xc30] sm:$0xff]
    %v419 = vld [vmem:[%s1 + $0xc38] sm:$0xff]
    %v420 = vld [vmem:[%s2] sm:$0x1]
    %v422 = vlaneseq
    %v423 = vshrl.u32 %v422, 7
    %v424 = vsub.s32 0, %v423
    %v425 = vrot.slane %v420, %v424
    %v434 = vcombine.high %v21, %v21
    %v436 = vunpack.c.l.s4 1983009808
    %v437 = vunpack.c.0.s8 %v436
    %v438 = vlaneseq
    %v439 = vshrl.u32 %v438, 7
    %v440 = vsub.s32 %v437, %v439
    %v441 = vrot.slane %v21, %v440
    %v443 = vunpack.c.l.s4 1983009808
    %v444 = vunpack.c.0.s8 %v443
    %v445 = vlaneseq
    %v446 = vshrl.u32 %v445, 7
    %v447 = vsub.s32 %v444, %v446
    %v448 = vrot.slane %v434, %v447
    %v449 = vcombine.high %v441, %v441
    %v450 = vcombine.high %v448, %v448
    %v451 = vcombine.high %v22, %v22
    %v453 = vunpack.c.l.s4 1983009808
    %v454 = vunpack.c.0.s8 %v453
    %v455 = vlaneseq
    %v456 = vshrl.u32 %v455, 7
    %v457 = vsub.s32 %v454, %v456
    %v458 = vrot.slane %v22, %v457
    %v460 = vunpack.c.l.s4 1983009808
    %v461 = vunpack.c.0.s8 %v460
    %v462 = vlaneseq
    %v463 = vshrl.u32 %v462, 7
    %v464 = vsub.s32 %v461, %v463
    %v465 = vrot.slane %v451, %v464
    %v466 = vcombine.high %v458, %v458
    %v467 = vcombine.high %v465, %v465
    %v468 = vcombine.high %v23, %v23
    %v470 = vunpack.c.l.s4 1983009808
    %v471 = vunpack.c.0.s8 %v470
    %v472 = vlaneseq
    %v473 = vshrl.u32 %v472, 7
    %v474 = vsub.s32 %v471, %v473
    %v475 = vrot.slane %v23, %v474
    %v477 = vunpack.c.l.s4 1983009808
    %v478 = vunpack.c.0.s8 %v477
    %v479 = vlaneseq
    %v480 = vshrl.u32 %v479, 7
    %v481 = vsub.s32 %v478, %v480
    %v482 = vrot.slane %v468, %v481
    %v483 = vcombine.high %v475, %v475
    %v484 = vcombine.high %v482, %v482
    %v485 = vcombine.high %v24, %v24
    %v487 = vunpack.c.l.s4 1983009808
    %v488 = vunpack.c.0.s8 %v487
    %v489 = vlaneseq
    %v490 = vshrl.u32 %v489, 7
    %v491 = vsub.s32 %v488, %v490
    %v492 = vrot.slane %v24, %v491
    %v494 = vunpack.c.l.s4 1983009808
    %v495 = vunpack.c.0.s8 %v494
    %v496 = vlaneseq
    %v497 = vshrl.u32 %v496, 7
    %v498 = vsub.s32 %v495, %v497
    %v499 = vrot.slane %v485, %v498
    %v500 = vcombine.high %v492, %v492
    %v501 = vcombine.high %v499, %v499
    %v502 = vcombine.high %v25, %v25
    %v504 = vunpack.c.l.s4 1983009808
    %v505 = vunpack.c.0.s8 %v504
    %v506 = vlaneseq
    %v507 = vshrl.u32 %v506, 7
    %v508 = vsub.s32 %v505, %v507
    %v509 = vrot.slane %v25, %v508
    %v511 = vunpack.c.l.s4 1983009808
    %v512 = vunpack.c.0.s8 %v511
    %v513 = vlaneseq
    %v514 = vshrl.u32 %v513, 7
    %v515 = vsub.s32 %v512, %v514
    %v516 = vrot.slane %v502, %v515
    %v517 = vcombine.high %v509, %v509
    %v518 = vcombine.high %v516, %v516
    %v519 = vcombine.high %v26, %v26
    %v521 = vunpack.c.l.s4 1983009808
    %v522 = vunpack.c.0.s8 %v521
    %v523 = vlaneseq
    %v524 = vshrl.u32 %v523, 7
    %v525 = vsub.s32 %v522, %v524
    %v526 = vrot.slane %v26, %v525
    %v528 = vunpack.c.l.s4 1983009808
    %v529 = vunpack.c.0.s8 %v528
    %v530 = vlaneseq
    %v531 = vshrl.u32 %v530, 7
    %v532 = vsub.s32 %v529, %v531
    %v533 = vrot.slane %v519, %v532
    %v534 = vcombine.high %v526, %v526
    %v535 = vcombine.high %v533, %v533
    %v537 = vunpack.c.l.s4 1983009808
    %v538 = vunpack.c.0.s8 %v537
    %v539 = vlaneseq
    %v540 = vshrl.u32 %v539, 7
    %v541 = vsub.s32 %v538, %v540
    %v542 = vrot.slane %v27, %v541
    %vm567 = vcmask 523264
    %v568 = vsel %vm567, %v542, 0
    %570 = vmatprep.subr.mxu0 0.0
    %571 = vmatpush1.msra.mxu0 %v43
    %572 = vmatprep.subr.mxu0 0.0
    %573 = vmatpush1.msra.mxu0 %v42
    %574 = vmatprep.subr.mxu0 0.0
    %575 = vmatpush1.msra.mxu0 %v41
    %576 = vmatprep.subr.mxu0 0.0
    %577 = vmatpush1.msra.mxu0 %v40
    %578 = vmatprep.subr.mxu0 0.0
    %579 = vmatpush1.msra.mxu0 %v39
    %580 = vmatprep.subr.mxu0 0.0
    %581 = vmatpush1.msra.mxu0 %v38
    %582 = vmatprep.subr.mxu0 0.0
    %583 = vmatpush1.msra.mxu0 %v37
    %584 = vmatprep.subr.mxu0 0.0
    %585 = vmatpush1.msra.mxu0 %v36
    %586 = vmatprep.subr.mxu0 0.0
    %587 = vmatpush1.msra.mxu0 %v35
    %588 = vmatprep.subr.mxu0 0.0
    %589 = vmatpush1.msra.mxu0 %v34
    %590 = vmatprep.subr.mxu0 0.0
    %591 = vmatpush1.msra.mxu0 %v33
    %592 = vmatprep.subr.mxu0 0.0
    %593 = vmatpush1.msra.mxu0 %v32
    %594 = vmatprep.subr.mxu0 0.0
    %595 = vmatpush1.msra.mxu0 %v31
    %596 = vmatprep.subr.mxu0 0.0
    %597 = vmatpush1.msra.mxu0 %v30
    %598 = vmatprep.subr.mxu0 0.0
    %599 = vmatpush1.msra.mxu0 %v29
    %600 = vmatprep.subr.mxu0 0.0
    %601 = vmatpush1.msra.mxu0 %v28
    %602 = vmatprep.subr.mxu0 0.0
    %603 = vmatpush2.msra.mxu0 %v59
    %604 = vmatprep.subr.mxu0 0.0
    %605 = vmatpush2.msra.mxu0 %v58
    %606 = vmatprep.subr.mxu0 0.0
    %607 = vmatpush2.msra.mxu0 %v57
    %608 = vmatprep.subr.mxu0 0.0
    %609 = vmatpush2.msra.mxu0 %v56
    %610 = vmatprep.subr.mxu0 0.0
    %611 = vmatpush2.msra.mxu0 %v55
    %612 = vmatprep.subr.mxu0 0.0
    %613 = vmatpush2.msra.mxu0 %v54
    %614 = vmatprep.subr.mxu0 0.0
    %615 = vmatpush2.msra.mxu0 %v53
    %616 = vmatprep.subr.mxu0 0.0
    %617 = vmatpush2.msra.mxu0 %v52
    %618 = vmatprep.subr.mxu0 0.0
    %619 = vmatpush2.msra.mxu0 %v51
    %620 = vmatprep.subr.mxu0 0.0
    %621 = vmatpush2.msra.mxu0 %v50
    %622 = vmatprep.subr.mxu0 0.0
    %623 = vmatpush2.msra.mxu0 %v49
    %624 = vmatprep.subr.mxu0 0.0
    %625 = vmatpush2.msra.mxu0 %v48
    %626 = vmatprep.subr.mxu0 0.0
    %627 = vmatpush2.msra.mxu0 %v47
    %628 = vmatprep.subr.mxu0 0.0
    %629 = vmatpush2.msra.mxu0 %v46
    %630 = vmatprep.subr.mxu0 0.0
    %631 = vmatpush2.msra.mxu0 %v45
    %632 = vmatprep.subr.mxu0 0.0
    %633 = vmatpush2.msra.mxu0 %v44
    %634 = vmatprep.mubr.f32.mxu0 %v449
    %635 = vmatmul.mubr.f32.gmra.mxu0 %v441
    %v636 = vpop.f32.mrf.mxu0
    %v637 = vadd.f32 %v425, %v636
    %v638 = vpop.f32.mrf.mxu0
    %639 = vdwg.mxu0
    %640 = vmatprep.subr.mxu0 0.0
    %641 = vmatpush1.msra.mxu0 %v75
    %642 = vmatprep.subr.mxu0 0.0
    %643 = vmatpush1.msra.mxu0 %v74
    %644 = vmatprep.subr.mxu0 0.0
    %645 = vmatpush1.msra.mxu0 %v73
    %646 = vmatprep.subr.mxu0 0.0
    %647 = vmatpush1.msra.mxu0 %v72
    %648 = vmatprep.subr.mxu0 0.0
    %649 = vmatpush1.msra.mxu0 %v71
    %650 = vmatprep.subr.mxu0 0.0
    %651 = vmatpush1.msra.mxu0 %v70
    %652 = vmatprep.subr.mxu0 0.0
    %653 = vmatpush1.msra.mxu0 %v69
    %654 = vmatprep.subr.mxu0 0.0
    %655 = vmatpush1.msra.mxu0 %v68
    %656 = vmatprep.subr.mxu0 0.0
    %657 = vmatpush1.msra.mxu0 %v67
    %658 = vmatprep.subr.mxu0 0.0
    %659 = vmatpush1.msra.mxu0 %v66
    %660 = vmatprep.subr.mxu0 0.0
    %661 = vmatpush1.msra.mxu0 %v65
    %662 = vmatprep.subr.mxu0 0.0
    %663 = vmatpush1.msra.mxu0 %v64
    %664 = vmatprep.subr.mxu0 0.0
    %665 = vmatpush1.msra.mxu0 %v63
    %666 = vmatprep.subr.mxu0 0.0
    %667 = vmatpush1.msra.mxu0 %v62
    %668 = vmatprep.subr.mxu0 0.0
    %669 = vmatpush1.msra.mxu0 %v61
    %670 = vmatprep.subr.mxu0 0.0
    %671 = vmatpush1.msra.mxu0 %v60
    %672 = vmatprep.subr.mxu0 0.0
    %673 = vmatpush2.msra.mxu0 %v91
    %674 = vmatprep.subr.mxu0 0.0
    %675 = vmatpush2.msra.mxu0 %v90
    %676 = vmatprep.subr.mxu0 0.0
    %677 = vmatpush2.msra.mxu0 %v89
    %678 = vmatprep.subr.mxu0 0.0
    %679 = vmatpush2.msra.mxu0 %v88
    %680 = vmatprep.subr.mxu0 0.0
    %681 = vmatpush2.msra.mxu0 %v87
    %682 = vmatprep.subr.mxu0 0.0
    %683 = vmatpush2.msra.mxu0 %v86
    %684 = vmatprep.subr.mxu0 0.0
    %685 = vmatpush2.msra.mxu0 %v85
    %686 = vmatprep.subr.mxu0 0.0
    %687 = vmatpush2.msra.mxu0 %v84
    %688 = vmatprep.subr.mxu0 0.0
    %689 = vmatpush2.msra.mxu0 %v83
    %690 = vmatprep.subr.mxu0 0.0
    %691 = vmatpush2.msra.mxu0 %v82
    %692 = vmatprep.subr.mxu0 0.0
    %693 = vmatpush2.msra.mxu0 %v81
    %694 = vmatprep.subr.mxu0 0.0
    %695 = vmatpush2.msra.mxu0 %v80
    %696 = vmatprep.subr.mxu0 0.0
    %697 = vmatpush2.msra.mxu0 %v79
    %698 = vmatprep.subr.mxu0 0.0
    %699 = vmatpush2.msra.mxu0 %v78
    %700 = vmatprep.subr.mxu0 0.0
    %701 = vmatpush2.msra.mxu0 %v77
    %702 = vmatprep.subr.mxu0 0.0
    %703 = vmatpush2.msra.mxu0 %v76
    %704 = vmatprep.mubr.f32.mxu0 %v450
    %705 = vmatmul.mubr.f32.gmra.mxu0 %v448
    %v706 = vpop.f32.mrf.mxu0
    %v707 = vadd.f32 %v637, %v706
    %v708 = vpop.f32.mrf.mxu0
    %709 = vdwg.mxu0
    %710 = vmatprep.subr.mxu0 0.0
    %711 = vmatpush1.msra.mxu0 %v107
    %712 = vmatprep.subr.mxu0 0.0
    %713 = vmatpush1.msra.mxu0 %v106
    %714 = vmatprep.subr.mxu0 0.0
    %715 = vmatpush1.msra.mxu0 %v105
    %716 = vmatprep.subr.mxu0 0.0
    %717 = vmatpush1.msra.mxu0 %v104
    %718 = vmatprep.subr.mxu0 0.0
    %719 = vmatpush1.msra.mxu0 %v103
    %720 = vmatprep.subr.mxu0 0.0
    %721 = vmatpush1.msra.mxu0 %v102
    %722 = vmatprep.subr.mxu0 0.0
    %723 = vmatpush1.msra.mxu0 %v101
    %724 = vmatprep.subr.mxu0 0.0
    %725 = vmatpush1.msra.mxu0 %v100
    %726 = vmatprep.subr.mxu0 0.0
    %727 = vmatpush1.msra.mxu0 %v99
    %728 = vmatprep.subr.mxu0 0.0
    %729 = vmatpush1.msra.mxu0 %v98
    %730 = vmatprep.subr.mxu0 0.0
    %731 = vmatpush1.msra.mxu0 %v97
    %732 = vmatprep.subr.mxu0 0.0
    %733 = vmatpush1.msra.mxu0 %v96
    %734 = vmatprep.subr.mxu0 0.0
    %735 = vmatpush1.msra.mxu0 %v95
    %736 = vmatprep.subr.mxu0 0.0
    %737 = vmatpush1.msra.mxu0 %v94
    %738 = vmatprep.subr.mxu0 0.0
    %739 = vmatpush1.msra.mxu0 %v93
    %740 = vmatprep.subr.mxu0 0.0
    %741 = vmatpush1.msra.mxu0 %v92
    %742 = vmatprep.subr.mxu0 0.0
    %743 = vmatpush2.msra.mxu0 %v123
    %744 = vmatprep.subr.mxu0 0.0
    %745 = vmatpush2.msra.mxu0 %v122
    %746 = vmatprep.subr.mxu0 0.0
    %747 = vmatpush2.msra.mxu0 %v121
    %748 = vmatprep.subr.mxu0 0.0
    %749 = vmatpush2.msra.mxu0 %v120
    %750 = vmatprep.subr.mxu0 0.0
    %751 = vmatpush2.msra.mxu0 %v119
    %752 = vmatprep.subr.mxu0 0.0
    %753 = vmatpush2.msra.mxu0 %v118
    %754 = vmatprep.subr.mxu0 0.0
    %755 = vmatpush2.msra.mxu0 %v117
    %756 = vmatprep.subr.mxu0 0.0
    %757 = vmatpush2.msra.mxu0 %v116
    %758 = vmatprep.subr.mxu0 0.0
    %759 = vmatpush2.msra.mxu0 %v115
    %760 = vmatprep.subr.mxu0 0.0
    %761 = vmatpush2.msra.mxu0 %v114
    %762 = vmatprep.subr.mxu0 0.0
    %763 = vmatpush2.msra.mxu0 %v113
    %764 = vmatprep.subr.mxu0 0.0
    %765 = vmatpush2.msra.mxu0 %v112
    %766 = vmatprep.subr.mxu0 0.0
    %767 = vmatpush2.msra.mxu0 %v111
    %768 = vmatprep.subr.mxu0 0.0
    %769 = vmatpush2.msra.mxu0 %v110
    %770 = vmatprep.subr.mxu0 0.0
    %771 = vmatpush2.msra.mxu0 %v109
    %772 = vmatprep.subr.mxu0 0.0
    %773 = vmatpush2.msra.mxu0 %v108
    %774 = vmatprep.mubr.f32.mxu0 %v466
    %775 = vmatmul.mubr.f32.gmra.mxu0 %v458
    %v776 = vpop.f32.mrf.mxu0
    %v777 = vadd.f32 %v707, %v776
    %v778 = vpop.f32.mrf.mxu0
    %779 = vdwg.mxu0
    %780 = vmatprep.subr.mxu0 0.0
    %781 = vmatpush1.msra.mxu0 %v139
    %782 = vmatprep.subr.mxu0 0.0
    %783 = vmatpush1.msra.mxu0 %v138
    %784 = vmatprep.subr.mxu0 0.0
    %785 = vmatpush1.msra.mxu0 %v137
    %786 = vmatprep.subr.mxu0 0.0
    %787 = vmatpush1.msra.mxu0 %v136
    %788 = vmatprep.subr.mxu0 0.0
    %789 = vmatpush1.msra.mxu0 %v135
    %790 = vmatprep.subr.mxu0 0.0
    %791 = vmatpush1.msra.mxu0 %v134
    %792 = vmatprep.subr.mxu0 0.0
    %793 = vmatpush1.msra.mxu0 %v133
    %794 = vmatprep.subr.mxu0 0.0
    %795 = vmatpush1.msra.mxu0 %v132
    %796 = vmatprep.subr.mxu0 0.0
    %797 = vmatpush1.msra.mxu0 %v131
    %798 = vmatprep.subr.mxu0 0.0
    %799 = vmatpush1.msra.mxu0 %v130
    %800 = vmatprep.subr.mxu0 0.0
    %801 = vmatpush1.msra.mxu0 %v129
    %802 = vmatprep.subr.mxu0 0.0
    %803 = vmatpush1.msra.mxu0 %v128
    %804 = vmatprep.subr.mxu0 0.0
    %805 = vmatpush1.msra.mxu0 %v127
    %806 = vmatprep.subr.mxu0 0.0
    %807 = vmatpush1.msra.mxu0 %v126
    %808 = vmatprep.subr.mxu0 0.0
    %809 = vmatpush1.msra.mxu0 %v125
    %810 = vmatprep.subr.mxu0 0.0
    %811 = vmatpush1.msra.mxu0 %v124
    %812 = vmatprep.subr.mxu0 0.0
    %813 = vmatpush2.msra.mxu0 %v155
    %814 = vmatprep.subr.mxu0 0.0
    %815 = vmatpush2.msra.mxu0 %v154
    %816 = vmatprep.subr.mxu0 0.0
    %817 = vmatpush2.msra.mxu0 %v153
    %818 = vmatprep.subr.mxu0 0.0
    %819 = vmatpush2.msra.mxu0 %v152
    %820 = vmatprep.subr.mxu0 0.0
    %821 = vmatpush2.msra.mxu0 %v151
    %822 = vmatprep.subr.mxu0 0.0
    %823 = vmatpush2.msra.mxu0 %v150
    %824 = vmatprep.subr.mxu0 0.0
    %825 = vmatpush2.msra.mxu0 %v149
    %826 = vmatprep.subr.mxu0 0.0
    %827 = vmatpush2.msra.mxu0 %v148
    %828 = vmatprep.subr.mxu0 0.0
    %829 = vmatpush2.msra.mxu0 %v147
    %830 = vmatprep.subr.mxu0 0.0
    %831 = vmatpush2.msra.mxu0 %v146
    %832 = vmatprep.subr.mxu0 0.0
    %833 = vmatpush2.msra.mxu0 %v145
    %834 = vmatprep.subr.mxu0 0.0
    %835 = vmatpush2.msra.mxu0 %v144
    %836 = vmatprep.subr.mxu0 0.0
    %837 = vmatpush2.msra.mxu0 %v143
    %838 = vmatprep.subr.mxu0 0.0
    %839 = vmatpush2.msra.mxu0 %v142
    %840 = vmatprep.subr.mxu0 0.0
    %841 = vmatpush2.msra.mxu0 %v141
    %842 = vmatprep.subr.mxu0 0.0
    %843 = vmatpush2.msra.mxu0 %v140
    %844 = vmatprep.mubr.f32.mxu0 %v467
    %845 = vmatmul.mubr.f32.gmra.mxu0 %v465
    %v846 = vpop.f32.mrf.mxu0
    %v847 = vadd.f32 %v777, %v846
    %v848 = vpop.f32.mrf.mxu0
    %849 = vdwg.mxu0
    %850 = vmatprep.subr.mxu0 0.0
    %851 = vmatpush1.msra.mxu0 %v171
    %852 = vmatprep.subr.mxu0 0.0
    %853 = vmatpush1.msra.mxu0 %v170
    %854 = vmatprep.subr.mxu0 0.0
    %855 = vmatpush1.msra.mxu0 %v169
    %856 = vmatprep.subr.mxu0 0.0
    %857 = vmatpush1.msra.mxu0 %v168
    %858 = vmatprep.subr.mxu0 0.0
    %859 = vmatpush1.msra.mxu0 %v167
    %860 = vmatprep.subr.mxu0 0.0
    %861 = vmatpush1.msra.mxu0 %v166
    %862 = vmatprep.subr.mxu0 0.0
    %863 = vmatpush1.msra.mxu0 %v165
    %864 = vmatprep.subr.mxu0 0.0
    %865 = vmatpush1.msra.mxu0 %v164
    %866 = vmatprep.subr.mxu0 0.0
    %867 = vmatpush1.msra.mxu0 %v163
    %868 = vmatprep.subr.mxu0 0.0
    %869 = vmatpush1.msra.mxu0 %v162
    %870 = vmatprep.subr.mxu0 0.0
    %871 = vmatpush1.msra.mxu0 %v161
    %872 = vmatprep.subr.mxu0 0.0
    %873 = vmatpush1.msra.mxu0 %v160
    %874 = vmatprep.subr.mxu0 0.0
    %875 = vmatpush1.msra.mxu0 %v159
    %876 = vmatprep.subr.mxu0 0.0
    %877 = vmatpush1.msra.mxu0 %v158
    %878 = vmatprep.subr.mxu0 0.0
    %879 = vmatpush1.msra.mxu0 %v157
    %880 = vmatprep.subr.mxu0 0.0
    %881 = vmatpush1.msra.mxu0 %v156
    %882 = vmatprep.subr.mxu0 0.0
    %883 = vmatpush2.msra.mxu0 %v187
    %884 = vmatprep.subr.mxu0 0.0
    %885 = vmatpush2.msra.mxu0 %v186
    %886 = vmatprep.subr.mxu0 0.0
    %887 = vmatpush2.msra.mxu0 %v185
    %888 = vmatprep.subr.mxu0 0.0
    %889 = vmatpush2.msra.mxu0 %v184
    %890 = vmatprep.subr.mxu0 0.0
    %891 = vmatpush2.msra.mxu0 %v183
    %892 = vmatprep.subr.mxu0 0.0
    %893 = vmatpush2.msra.mxu0 %v182
    %894 = vmatprep.subr.mxu0 0.0
    %895 = vmatpush2.msra.mxu0 %v181
    %896 = vmatprep.subr.mxu0 0.0
    %897 = vmatpush2.msra.mxu0 %v180
    %898 = vmatprep.subr.mxu0 0.0
    %899 = vmatpush2.msra.mxu0 %v179
    %900 = vmatprep.subr.mxu0 0.0
    %901 = vmatpush2.msra.mxu0 %v178
    %902 = vmatprep.subr.mxu0 0.0
    %903 = vmatpush2.msra.mxu0 %v177
    %904 = vmatprep.subr.mxu0 0.0
    %905 = vmatpush2.msra.mxu0 %v176
    %906 = vmatprep.subr.mxu0 0.0
    %907 = vmatpush2.msra.mxu0 %v175
    %908 = vmatprep.subr.mxu0 0.0
    %909 = vmatpush2.msra.mxu0 %v174
    %910 = vmatprep.subr.mxu0 0.0
    %911 = vmatpush2.msra.mxu0 %v173
    %912 = vmatprep.subr.mxu0 0.0
    %913 = vmatpush2.msra.mxu0 %v172
    %914 = vmatprep.mubr.f32.mxu0 %v483
    %915 = vmatmul.mubr.f32.gmra.mxu0 %v475
    %v916 = vpop.f32.mrf.mxu0
    %v917 = vadd.f32 %v847, %v916
    %v918 = vpop.f32.mrf.mxu0
    %919 = vdwg.mxu0
    %920 = vmatprep.subr.mxu0 0.0
    %921 = vmatpush1.msra.mxu0 %v203
    %922 = vmatprep.subr.mxu0 0.0
    %923 = vmatpush1.msra.mxu0 %v202
    %924 = vmatprep.subr.mxu0 0.0
    %925 = vmatpush1.msra.mxu0 %v201
    %926 = vmatprep.subr.mxu0 0.0
    %927 = vmatpush1.msra.mxu0 %v200
    %928 = vmatprep.subr.mxu0 0.0
    %929 = vmatpush1.msra.mxu0 %v199
    %930 = vmatprep.subr.mxu0 0.0
    %931 = vmatpush1.msra.mxu0 %v198
    %932 = vmatprep.subr.mxu0 0.0
    %933 = vmatpush1.msra.mxu0 %v197
    %934 = vmatprep.subr.mxu0 0.0
    %935 = vmatpush1.msra.mxu0 %v196
    %936 = vmatprep.subr.mxu0 0.0
    %937 = vmatpush1.msra.mxu0 %v195
    %938 = vmatprep.subr.mxu0 0.0
    %939 = vmatpush1.msra.mxu0 %v194
    %940 = vmatprep.subr.mxu0 0.0
    %941 = vmatpush1.msra.mxu0 %v193
    %942 = vmatprep.subr.mxu0 0.0
    %943 = vmatpush1.msra.mxu0 %v192
    %944 = vmatprep.subr.mxu0 0.0
    %945 = vmatpush1.msra.mxu0 %v191
    %946 = vmatprep.subr.mxu0 0.0
    %947 = vmatpush1.msra.mxu0 %v190
    %948 = vmatprep.subr.mxu0 0.0
    %949 = vmatpush1.msra.mxu0 %v189
    %950 = vmatprep.subr.mxu0 0.0
    %951 = vmatpush1.msra.mxu0 %v188
    %952 = vmatprep.subr.mxu0 0.0
    %953 = vmatpush2.msra.mxu0 %v219
    %954 = vmatprep.subr.mxu0 0.0
    %955 = vmatpush2.msra.mxu0 %v218
    %956 = vmatprep.subr.mxu0 0.0
    %957 = vmatpush2.msra.mxu0 %v217
    %958 = vmatprep.subr.mxu0 0.0
    %959 = vmatpush2.msra.mxu0 %v216
    %960 = vmatprep.subr.mxu0 0.0
    %961 = vmatpush2.msra.mxu0 %v215
    %962 = vmatprep.subr.mxu0 0.0
    %963 = vmatpush2.msra.mxu0 %v214
    %964 = vmatprep.subr.mxu0 0.0
    %965 = vmatpush2.msra.mxu0 %v213
    %966 = vmatprep.subr.mxu0 0.0
    %967 = vmatpush2.msra.mxu0 %v212
    %968 = vmatprep.subr.mxu0 0.0
    %969 = vmatpush2.msra.mxu0 %v211
    %970 = vmatprep.subr.mxu0 0.0
    %971 = vmatpush2.msra.mxu0 %v210
    %972 = vmatprep.subr.mxu0 0.0
    %973 = vmatpush2.msra.mxu0 %v209
    %974 = vmatprep.subr.mxu0 0.0
    %975 = vmatpush2.msra.mxu0 %v208
    %976 = vmatprep.subr.mxu0 0.0
    %977 = vmatpush2.msra.mxu0 %v207
    %978 = vmatprep.subr.mxu0 0.0
    %979 = vmatpush2.msra.mxu0 %v206
    %980 = vmatprep.subr.mxu0 0.0
    %981 = vmatpush2.msra.mxu0 %v205
    %982 = vmatprep.subr.mxu0 0.0
    %983 = vmatpush2.msra.mxu0 %v204
    %984 = vmatprep.mubr.f32.mxu0 %v484
    %985 = vmatmul.mubr.f32.gmra.mxu0 %v482
    %v986 = vpop.f32.mrf.mxu0
    %v987 = vadd.f32 %v917, %v986
    %v988 = vpop.f32.mrf.mxu0
    %989 = vdwg.mxu0
    %990 = vmatprep.subr.mxu0 0.0
    %991 = vmatpush1.msra.mxu0 %v235
    %992 = vmatprep.subr.mxu0 0.0
    %993 = vmatpush1.msra.mxu0 %v234
    %994 = vmatprep.subr.mxu0 0.0
    %995 = vmatpush1.msra.mxu0 %v233
    %996 = vmatprep.subr.mxu0 0.0
    %997 = vmatpush1.msra.mxu0 %v232
    %998 = vmatprep.subr.mxu0 0.0
    %999 = vmatpush1.msra.mxu0 %v231
    %1000 = vmatprep.subr.mxu0 0.0
    %1001 = vmatpush1.msra.mxu0 %v230
    %1002 = vmatprep.subr.mxu0 0.0
    %1003 = vmatpush1.msra.mxu0 %v229
    %1004 = vmatprep.subr.mxu0 0.0
    %1005 = vmatpush1.msra.mxu0 %v228
    %1006 = vmatprep.subr.mxu0 0.0
    %1007 = vmatpush1.msra.mxu0 %v227
    %1008 = vmatprep.subr.mxu0 0.0
    %1009 = vmatpush1.msra.mxu0 %v226
    %1010 = vmatprep.subr.mxu0 0.0
    %1011 = vmatpush1.msra.mxu0 %v225
    %1012 = vmatprep.subr.mxu0 0.0
    %1013 = vmatpush1.msra.mxu0 %v224
    %1014 = vmatprep.subr.mxu0 0.0
    %1015 = vmatpush1.msra.mxu0 %v223
    %1016 = vmatprep.subr.mxu0 0.0
    %1017 = vmatpush1.msra.mxu0 %v222
    %1018 = vmatprep.subr.mxu0 0.0
    %1019 = vmatpush1.msra.mxu0 %v221
    %1020 = vmatprep.subr.mxu0 0.0
    %1021 = vmatpush1.msra.mxu0 %v220
    %1022 = vmatprep.subr.mxu0 0.0
    %1023 = vmatpush2.msra.mxu0 %v251
    %1024 = vmatprep.subr.mxu0 0.0
    %1025 = vmatpush2.msra.mxu0 %v250
    %1026 = vmatprep.subr.mxu0 0.0
    %1027 = vmatpush2.msra.mxu0 %v249
    %1028 = vmatprep.subr.mxu0 0.0
    %1029 = vmatpush2.msra.mxu0 %v248
    %1030 = vmatprep.subr.mxu0 0.0
    %1031 = vmatpush2.msra.mxu0 %v247
    %1032 = vmatprep.subr.mxu0 0.0
    %1033 = vmatpush2.msra.mxu0 %v246
    %1034 = vmatprep.subr.mxu0 0.0
    %1035 = vmatpush2.msra.mxu0 %v245
    %1036 = vmatprep.subr.mxu0 0.0
    %1037 = vmatpush2.msra.mxu0 %v244
    %1038 = vmatprep.subr.mxu0 0.0
    %1039 = vmatpush2.msra.mxu0 %v243
    %1040 = vmatprep.subr.mxu0 0.0
    %1041 = vmatpush2.msra.mxu0 %v242
    %1042 = vmatprep.subr.mxu0 0.0
    %1043 = vmatpush2.msra.mxu0 %v241
    %1044 = vmatprep.subr.mxu0 0.0
    %1045 = vmatpush2.msra.mxu0 %v240
    %1046 = vmatprep.subr.mxu0 0.0
    %1047 = vmatpush2.msra.mxu0 %v239
    %1048 = vmatprep.subr.mxu0 0.0
    %1049 = vmatpush2.msra.mxu0 %v238
    %1050 = vmatprep.subr.mxu0 0.0
    %1051 = vmatpush2.msra.mxu0 %v237
    %1052 = vmatprep.subr.mxu0 0.0
    %1053 = vmatpush2.msra.mxu0 %v236
    %1054 = vmatprep.mubr.f32.mxu0 %v500
    %1055 = vmatmul.mubr.f32.gmra.mxu0 %v492
    %v1056 = vpop.f32.mrf.mxu0
    %v1057 = vadd.f32 %v987, %v1056
    %v1058 = vpop.f32.mrf.mxu0
    %1059 = vdwg.mxu0
    %1060 = vmatprep.subr.mxu0 0.0
    %1061 = vmatpush1.msra.mxu0 %v267
    %1062 = vmatprep.subr.mxu0 0.0
    %1063 = vmatpush1.msra.mxu0 %v266
    %1064 = vmatprep.subr.mxu0 0.0
    %1065 = vmatpush1.msra.mxu0 %v265
    %1066 = vmatprep.subr.mxu0 0.0
    %1067 = vmatpush1.msra.mxu0 %v264
    %1068 = vmatprep.subr.mxu0 0.0
    %1069 = vmatpush1.msra.mxu0 %v263
    %1070 = vmatprep.subr.mxu0 0.0
    %1071 = vmatpush1.msra.mxu0 %v262
    %1072 = vmatprep.subr.mxu0 0.0
    %1073 = vmatpush1.msra.mxu0 %v261
    %1074 = vmatprep.subr.mxu0 0.0
    %1075 = vmatpush1.msra.mxu0 %v260
    %1076 = vmatprep.subr.mxu0 0.0
    %1077 = vmatpush1.msra.mxu0 %v259
    %1078 = vmatprep.subr.mxu0 0.0
    %1079 = vmatpush1.msra.mxu0 %v258
    %1080 = vmatprep.subr.mxu0 0.0
    %1081 = vmatpush1.msra.mxu0 %v257
    %1082 = vmatprep.subr.mxu0 0.0
    %1083 = vmatpush1.msra.mxu0 %v256
    %1084 = vmatprep.subr.mxu0 0.0
    %1085 = vmatpush1.msra.mxu0 %v255
    %1086 = vmatprep.subr.mxu0 0.0
    %1087 = vmatpush1.msra.mxu0 %v254
    %1088 = vmatprep.subr.mxu0 0.0
    %1089 = vmatpush1.msra.mxu0 %v253
    %1090 = vmatprep.subr.mxu0 0.0
    %1091 = vmatpush1.msra.mxu0 %v252
    %1092 = vmatprep.subr.mxu0 0.0
    %1093 = vmatpush2.msra.mxu0 %v283
    %1094 = vmatprep.subr.mxu0 0.0
    %1095 = vmatpush2.msra.mxu0 %v282
    %1096 = vmatprep.subr.mxu0 0.0
    %1097 = vmatpush2.msra.mxu0 %v281
    %1098 = vmatprep.subr.mxu0 0.0
    %1099 = vmatpush2.msra.mxu0 %v280
    %1100 = vmatprep.subr.mxu0 0.0
    %1101 = vmatpush2.msra.mxu0 %v279
    %1102 = vmatprep.subr.mxu0 0.0
    %1103 = vmatpush2.msra.mxu0 %v278
    %1104 = vmatprep.subr.mxu0 0.0
    %1105 = vmatpush2.msra.mxu0 %v277
    %1106 = vmatprep.subr.mxu0 0.0
    %1107 = vmatpush2.msra.mxu0 %v276
    %1108 = vmatprep.subr.mxu0 0.0
    %1109 = vmatpush2.msra.mxu0 %v275
    %1110 = vmatprep.subr.mxu0 0.0
    %1111 = vmatpush2.msra.mxu0 %v274
    %1112 = vmatprep.subr.mxu0 0.0
    %1113 = vmatpush2.msra.mxu0 %v273
    %1114 = vmatprep.subr.mxu0 0.0
    %1115 = vmatpush2.msra.mxu0 %v272
    %1116 = vmatprep.subr.mxu0 0.0
    %1117 = vmatpush2.msra.mxu0 %v271
    %1118 = vmatprep.subr.mxu0 0.0
    %1119 = vmatpush2.msra.mxu0 %v270
    %1120 = vmatprep.subr.mxu0 0.0
    %1121 = vmatpush2.msra.mxu0 %v269
    %1122 = vmatprep.subr.mxu0 0.0
    %1123 = vmatpush2.msra.mxu0 %v268
    %1124 = vmatprep.mubr.f32.mxu0 %v501
    %1125 = vmatmul.mubr.f32.gmra.mxu0 %v499
    %v1126 = vpop.f32.mrf.mxu0
    %v1127 = vadd.f32 %v1057, %v1126
    %v1128 = vpop.f32.mrf.mxu0
    %1129 = vdwg.mxu0
    %1130 = vmatprep.subr.mxu0 0.0
    %1131 = vmatpush1.msra.mxu0 %v299
    %1132 = vmatprep.subr.mxu0 0.0
    %1133 = vmatpush1.msra.mxu0 %v298
    %1134 = vmatprep.subr.mxu0 0.0
    %1135 = vmatpush1.msra.mxu0 %v297
    %1136 = vmatprep.subr.mxu0 0.0
    %1137 = vmatpush1.msra.mxu0 %v296
    %1138 = vmatprep.subr.mxu0 0.0
    %1139 = vmatpush1.msra.mxu0 %v295
    %1140 = vmatprep.subr.mxu0 0.0
    %1141 = vmatpush1.msra.mxu0 %v294
    %1142 = vmatprep.subr.mxu0 0.0
    %1143 = vmatpush1.msra.mxu0 %v293
    %1144 = vmatprep.subr.mxu0 0.0
    %1145 = vmatpush1.msra.mxu0 %v292
    %1146 = vmatprep.subr.mxu0 0.0
    %1147 = vmatpush1.msra.mxu0 %v291
    %1148 = vmatprep.subr.mxu0 0.0
    %1149 = vmatpush1.msra.mxu0 %v290
    %1150 = vmatprep.subr.mxu0 0.0
    %1151 = vmatpush1.msra.mxu0 %v289
    %1152 = vmatprep.subr.mxu0 0.0
    %1153 = vmatpush1.msra.mxu0 %v288
    %1154 = vmatprep.subr.mxu0 0.0
    %1155 = vmatpush1.msra.mxu0 %v287
    %1156 = vmatprep.subr.mxu0 0.0
    %1157 = vmatpush1.msra.mxu0 %v286
    %1158 = vmatprep.subr.mxu0 0.0
    %1159 = vmatpush1.msra.mxu0 %v285
    %1160 = vmatprep.subr.mxu0 0.0
    %1161 = vmatpush1.msra.mxu0 %v284
    %1162 = vmatprep.subr.mxu0 0.0
    %1163 = vmatpush2.msra.mxu0 %v315
    %1164 = vmatprep.subr.mxu0 0.0
    %1165 = vmatpush2.msra.mxu0 %v314
    %1166 = vmatprep.subr.mxu0 0.0
    %1167 = vmatpush2.msra.mxu0 %v313
    %1168 = vmatprep.subr.mxu0 0.0
    %1169 = vmatpush2.msra.mxu0 %v312
    %1170 = vmatprep.subr.mxu0 0.0
    %1171 = vmatpush2.msra.mxu0 %v311
    %1172 = vmatprep.subr.mxu0 0.0
    %1173 = vmatpush2.msra.mxu0 %v310
    %1174 = vmatprep.subr.mxu0 0.0
    %1175 = vmatpush2.msra.mxu0 %v309
    %1176 = vmatprep.subr.mxu0 0.0
    %1177 = vmatpush2.msra.mxu0 %v308
    %1178 = vmatprep.subr.mxu0 0.0
    %1179 = vmatpush2.msra.mxu0 %v307
    %1180 = vmatprep.subr.mxu0 0.0
    %1181 = vmatpush2.msra.mxu0 %v306
    %1182 = vmatprep.subr.mxu0 0.0
    %1183 = vmatpush2.msra.mxu0 %v305
    %1184 = vmatprep.subr.mxu0 0.0
    %1185 = vmatpush2.msra.mxu0 %v304
    %1186 = vmatprep.subr.mxu0 0.0
    %1187 = vmatpush2.msra.mxu0 %v303
    %1188 = vmatprep.subr.mxu0 0.0
    %1189 = vmatpush2.msra.mxu0 %v302
    %1190 = vmatprep.subr.mxu0 0.0
    %1191 = vmatpush2.msra.mxu0 %v301
    %1192 = vmatprep.subr.mxu0 0.0
    %1193 = vmatpush2.msra.mxu0 %v300
    %1194 = vmatprep.mubr.f32.mxu0 %v517
    %1195 = vmatmul.mubr.f32.gmra.mxu0 %v509
    %v1196 = vpop.f32.mrf.mxu0
    %v1197 = vadd.f32 %v1127, %v1196
    %v1198 = vpop.f32.mrf.mxu0
    %1199 = vdwg.mxu0
    %1200 = vmatprep.subr.mxu0 0.0
    %1201 = vmatpush1.msra.mxu0 %v331
    %1202 = vmatprep.subr.mxu0 0.0
    %1203 = vmatpush1.msra.mxu0 %v330
    %1204 = vmatprep.subr.mxu0 0.0
    %1205 = vmatpush1.msra.mxu0 %v329
    %1206 = vmatprep.subr.mxu0 0.0
    %1207 = vmatpush1.msra.mxu0 %v328
    %1208 = vmatprep.subr.mxu0 0.0
    %1209 = vmatpush1.msra.mxu0 %v327
    %1210 = vmatprep.subr.mxu0 0.0
    %1211 = vmatpush1.msra.mxu0 %v326
    %1212 = vmatprep.subr.mxu0 0.0
    %1213 = vmatpush1.msra.mxu0 %v325
    %1214 = vmatprep.subr.mxu0 0.0
    %1215 = vmatpush1.msra.mxu0 %v324
    %1216 = vmatprep.subr.mxu0 0.0
    %1217 = vmatpush1.msra.mxu0 %v323
    %1218 = vmatprep.subr.mxu0 0.0
    %1219 = vmatpush1.msra.mxu0 %v322
    %1220 = vmatprep.subr.mxu0 0.0
    %1221 = vmatpush1.msra.mxu0 %v321
    %1222 = vmatprep.subr.mxu0 0.0
    %1223 = vmatpush1.msra.mxu0 %v320
    %1224 = vmatprep.subr.mxu0 0.0
    %1225 = vmatpush1.msra.mxu0 %v319
    %1226 = vmatprep.subr.mxu0 0.0
    %1227 = vmatpush1.msra.mxu0 %v318
    %1228 = vmatprep.subr.mxu0 0.0
    %1229 = vmatpush1.msra.mxu0 %v317
    %1230 = vmatprep.subr.mxu0 0.0
    %1231 = vmatpush1.msra.mxu0 %v316
    %1232 = vmatprep.subr.mxu0 0.0
    %1233 = vmatpush2.msra.mxu0 %v347
    %1234 = vmatprep.subr.mxu0 0.0
    %1235 = vmatpush2.msra.mxu0 %v346
    %1236 = vmatprep.subr.mxu0 0.0
    %1237 = vmatpush2.msra.mxu0 %v345
    %1238 = vmatprep.subr.mxu0 0.0
    %1239 = vmatpush2.msra.mxu0 %v344
    %1240 = vmatprep.subr.mxu0 0.0
    %1241 = vmatpush2.msra.mxu0 %v343
    %1242 = vmatprep.subr.mxu0 0.0
    %1243 = vmatpush2.msra.mxu0 %v342
    %1244 = vmatprep.subr.mxu0 0.0
    %1245 = vmatpush2.msra.mxu0 %v341
    %1246 = vmatprep.subr.mxu0 0.0
    %1247 = vmatpush2.msra.mxu0 %v340
    %1248 = vmatprep.subr.mxu0 0.0
    %1249 = vmatpush2.msra.mxu0 %v339
    %1250 = vmatprep.subr.mxu0 0.0
    %1251 = vmatpush2.msra.mxu0 %v338
    %1252 = vmatprep.subr.mxu0 0.0
    %1253 = vmatpush2.msra.mxu0 %v337
    %1254 = vmatprep.subr.mxu0 0.0
    %1255 = vmatpush2.msra.mxu0 %v336
    %1256 = vmatprep.subr.mxu0 0.0
    %1257 = vmatpush2.msra.mxu0 %v335
    %1258 = vmatprep.subr.mxu0 0.0
    %1259 = vmatpush2.msra.mxu0 %v334
    %1260 = vmatprep.subr.mxu0 0.0
    %1261 = vmatpush2.msra.mxu0 %v333
    %1262 = vmatprep.subr.mxu0 0.0
    %1263 = vmatpush2.msra.mxu0 %v332
    %1264 = vmatprep.mubr.f32.mxu0 %v518
    %1265 = vmatmul.mubr.f32.gmra.mxu0 %v516
    %v1266 = vpop.f32.mrf.mxu0
    %v1267 = vadd.f32 %v1197, %v1266
    %v1268 = vpop.f32.mrf.mxu0
    %1269 = vdwg.mxu0
    %1270 = vmatprep.subr.mxu0 0.0
    %1271 = vmatpush1.msra.mxu0 %v363
    %1272 = vmatprep.subr.mxu0 0.0
    %1273 = vmatpush1.msra.mxu0 %v362
    %1274 = vmatprep.subr.mxu0 0.0
    %1275 = vmatpush1.msra.mxu0 %v361
    %1276 = vmatprep.subr.mxu0 0.0
    %1277 = vmatpush1.msra.mxu0 %v360
    %1278 = vmatprep.subr.mxu0 0.0
    %1279 = vmatpush1.msra.mxu0 %v359
    %1280 = vmatprep.subr.mxu0 0.0
    %1281 = vmatpush1.msra.mxu0 %v358
    %1282 = vmatprep.subr.mxu0 0.0
    %1283 = vmatpush1.msra.mxu0 %v357
    %1284 = vmatprep.subr.mxu0 0.0
    %1285 = vmatpush1.msra.mxu0 %v356
    %1286 = vmatprep.subr.mxu0 0.0
    %1287 = vmatpush1.msra.mxu0 %v355
    %1288 = vmatprep.subr.mxu0 0.0
    %1289 = vmatpush1.msra.mxu0 %v354
    %1290 = vmatprep.subr.mxu0 0.0
    %1291 = vmatpush1.msra.mxu0 %v353
    %1292 = vmatprep.subr.mxu0 0.0
    %1293 = vmatpush1.msra.mxu0 %v352
    %1294 = vmatprep.subr.mxu0 0.0
    %1295 = vmatpush1.msra.mxu0 %v351
    %1296 = vmatprep.subr.mxu0 0.0
    %1297 = vmatpush1.msra.mxu0 %v350
    %1298 = vmatprep.subr.mxu0 0.0
    %1299 = vmatpush1.msra.mxu0 %v349
    %1300 = vmatprep.subr.mxu0 0.0
    %1301 = vmatpush1.msra.mxu0 %v348
    %1302 = vmatprep.subr.mxu0 0.0
    %1303 = vmatpush2.msra.mxu0 %v379
    %1304 = vmatprep.subr.mxu0 0.0
    %1305 = vmatpush2.msra.mxu0 %v378
    %1306 = vmatprep.subr.mxu0 0.0
    %1307 = vmatpush2.msra.mxu0 %v377
    %1308 = vmatprep.subr.mxu0 0.0
    %1309 = vmatpush2.msra.mxu0 %v376
    %1310 = vmatprep.subr.mxu0 0.0
    %1311 = vmatpush2.msra.mxu0 %v375
    %1312 = vmatprep.subr.mxu0 0.0
    %1313 = vmatpush2.msra.mxu0 %v374
    %1314 = vmatprep.subr.mxu0 0.0
    %1315 = vmatpush2.msra.mxu0 %v373
    %1316 = vmatprep.subr.mxu0 0.0
    %1317 = vmatpush2.msra.mxu0 %v372
    %1318 = vmatprep.subr.mxu0 0.0
    %1319 = vmatpush2.msra.mxu0 %v371
    %1320 = vmatprep.subr.mxu0 0.0
    %1321 = vmatpush2.msra.mxu0 %v370
    %1322 = vmatprep.subr.mxu0 0.0
    %1323 = vmatpush2.msra.mxu0 %v369
    %1324 = vmatprep.subr.mxu0 0.0
    %1325 = vmatpush2.msra.mxu0 %v368
    %1326 = vmatprep.subr.mxu0 0.0
    %1327 = vmatpush2.msra.mxu0 %v367
    %1328 = vmatprep.subr.mxu0 0.0
    %1329 = vmatpush2.msra.mxu0 %v366
    %1330 = vmatprep.subr.mxu0 0.0
    %1331 = vmatpush2.msra.mxu0 %v365
    %1332 = vmatprep.subr.mxu0 0.0
    %1333 = vmatpush2.msra.mxu0 %v364
    %1334 = vmatprep.mubr.f32.mxu0 %v534
    %1335 = vmatmul.mubr.f32.gmra.mxu0 %v526
    %v1336 = vpop.f32.mrf.mxu0
    %v1337 = vadd.f32 %v1267, %v1336
    %v1338 = vpop.f32.mrf.mxu0
    %1339 = vdwg.mxu0
    %1340 = vmatprep.subr.mxu0 0.0
    %1341 = vmatpush1.msra.mxu0 %v395
    %1342 = vmatprep.subr.mxu0 0.0
    %1343 = vmatpush1.msra.mxu0 %v394
    %1344 = vmatprep.subr.mxu0 0.0
    %1345 = vmatpush1.msra.mxu0 %v393
    %1346 = vmatprep.subr.mxu0 0.0
    %1347 = vmatpush1.msra.mxu0 %v392
    %1348 = vmatprep.subr.mxu0 0.0
    %1349 = vmatpush1.msra.mxu0 %v391
    %1350 = vmatprep.subr.mxu0 0.0
    %1351 = vmatpush1.msra.mxu0 %v390
    %1352 = vmatprep.subr.mxu0 0.0
    %1353 = vmatpush1.msra.mxu0 %v389
    %1354 = vmatprep.subr.mxu0 0.0
    %1355 = vmatpush1.msra.mxu0 %v388
    %1356 = vmatprep.subr.mxu0 0.0
    %1357 = vmatpush1.msra.mxu0 %v387
    %1358 = vmatprep.subr.mxu0 0.0
    %1359 = vmatpush1.msra.mxu0 %v386
    %1360 = vmatprep.subr.mxu0 0.0
    %1361 = vmatpush1.msra.mxu0 %v385
    %1362 = vmatprep.subr.mxu0 0.0
    %1363 = vmatpush1.msra.mxu0 %v384
    %1364 = vmatprep.subr.mxu0 0.0
    %1365 = vmatpush1.msra.mxu0 %v383
    %1366 = vmatprep.subr.mxu0 0.0
    %1367 = vmatpush1.msra.mxu0 %v382
    %1368 = vmatprep.subr.mxu0 0.0
    %1369 = vmatpush1.msra.mxu0 %v381
    %1370 = vmatprep.subr.mxu0 0.0
    %1371 = vmatpush1.msra.mxu0 %v380
    %1372 = vmatprep.subr.mxu0 0.0
    %1373 = vmatpush2.msra.mxu0 %v411
    %1374 = vmatprep.subr.mxu0 0.0
    %1375 = vmatpush2.msra.mxu0 %v410
    %1376 = vmatprep.subr.mxu0 0.0
    %1377 = vmatpush2.msra.mxu0 %v409
    %1378 = vmatprep.subr.mxu0 0.0
    %1379 = vmatpush2.msra.mxu0 %v408
    %1380 = vmatprep.subr.mxu0 0.0
    %1381 = vmatpush2.msra.mxu0 %v407
    %1382 = vmatprep.subr.mxu0 0.0
    %1383 = vmatpush2.msra.mxu0 %v406
    %1384 = vmatprep.subr.mxu0 0.0
    %1385 = vmatpush2.msra.mxu0 %v405
    %1386 = vmatprep.subr.mxu0 0.0
    %1387 = vmatpush2.msra.mxu0 %v404
    %1388 = vmatprep.subr.mxu0 0.0
    %1389 = vmatpush2.msra.mxu0 %v403
    %1390 = vmatprep.subr.mxu0 0.0
    %1391 = vmatpush2.msra.mxu0 %v402
    %1392 = vmatprep.subr.mxu0 0.0
    %1393 = vmatpush2.msra.mxu0 %v401
    %1394 = vmatprep.subr.mxu0 0.0
    %1395 = vmatpush2.msra.mxu0 %v400
    %1396 = vmatprep.subr.mxu0 0.0
    %1397 = vmatpush2.msra.mxu0 %v399
    %1398 = vmatprep.subr.mxu0 0.0
    %1399 = vmatpush2.msra.mxu0 %v398
    %1400 = vmatprep.subr.mxu0 0.0
    %1401 = vmatpush2.msra.mxu0 %v397
    %1402 = vmatprep.subr.mxu0 0.0
    %1403 = vmatpush2.msra.mxu0 %v396
    %1404 = vmatprep.mubr.f32.mxu0 %v535
    %1405 = vmatmul.mubr.f32.gmra.mxu0 %v533
    %v1406 = vpop.f32.mrf.mxu0
    %v1407 = vadd.f32 %v1337, %v1406
    %v1408 = vpop.f32.mrf.mxu0
    %1409 = vdwg.mxu0
    %1410 = vmatprep.subr.mxu0 0.0
    %1411 = vmatpush1.msra.mxu0 0.0
    %1412 = vmatprep.subr.mxu0 0.0
    %1413 = vmatpush1.msra.mxu0 0.0
    %1414 = vmatprep.subr.mxu0 0.0
    %1415 = vmatpush1.msra.mxu0 0.0
    %1416 = vmatprep.subr.mxu0 0.0
    %1417 = vmatpush1.msra.mxu0 0.0
    %1418 = vmatprep.subr.mxu0 0.0
    %1419 = vmatpush1.msra.mxu0 0.0
    %1420 = vmatprep.subr.mxu0 0.0
    %1421 = vmatpush1.msra.mxu0 0.0
    %1422 = vmatprep.subr.mxu0 0.0
    %1423 = vmatpush1.msra.mxu0 0.0
    %1424 = vmatprep.subr.mxu0 0.0
    %1425 = vmatpush1.msra.mxu0 0.0
    %1426 = vmatprep.subr.mxu0 0.0
    %1427 = vmatpush1.msra.mxu0 %v419
    %1428 = vmatprep.subr.mxu0 0.0
    %1429 = vmatpush1.msra.mxu0 %v418
    %1430 = vmatprep.subr.mxu0 0.0
    %1431 = vmatpush1.msra.mxu0 %v417
    %1432 = vmatprep.subr.mxu0 0.0
    %1433 = vmatpush1.msra.mxu0 %v416
    %1434 = vmatprep.subr.mxu0 0.0
    %1435 = vmatpush1.msra.mxu0 %v415
    %1436 = vmatprep.subr.mxu0 0.0
    %1437 = vmatpush1.msra.mxu0 %v414
    %1438 = vmatprep.subr.mxu0 0.0
    %1439 = vmatpush1.msra.mxu0 %v413
    %1440 = vmatprep.subr.mxu0 0.0
    %1441 = vmatpush1.msra.mxu0 %v412
    %1442 = vmatprep.subr.mxu0 0.0
    %1443 = vmatpush2.msra.mxu0 0.0
    %1444 = vmatprep.subr.mxu0 0.0
    %1445 = vmatpush2.msra.mxu0 0.0
    %1446 = vmatprep.subr.mxu0 0.0
    %1447 = vmatpush2.msra.mxu0 0.0
    %1448 = vmatprep.subr.mxu0 0.0
    %1449 = vmatpush2.msra.mxu0 0.0
    %1450 = vmatprep.subr.mxu0 0.0
    %1451 = vmatpush2.msra.mxu0 0.0
    %1452 = vmatprep.subr.mxu0 0.0
    %1453 = vmatpush2.msra.mxu0 0.0
    %1454 = vmatprep.subr.mxu0 0.0
    %1455 = vmatpush2.msra.mxu0 0.0
    %1456 = vmatprep.subr.mxu0 0.0
    %1457 = vmatpush2.msra.mxu0 0.0
    %1458 = vmatprep.subr.mxu0 0.0
    %1459 = vmatpush2.msra.mxu0 0.0
    %1460 = vmatprep.subr.mxu0 0.0
    %1461 = vmatpush2.msra.mxu0 0.0
    %1462 = vmatprep.subr.mxu0 0.0
    %1463 = vmatpush2.msra.mxu0 0.0
    %1464 = vmatprep.subr.mxu0 0.0
    %1465 = vmatpush2.msra.mxu0 0.0
    %1466 = vmatprep.subr.mxu0 0.0
    %1467 = vmatpush2.msra.mxu0 0.0
    %1468 = vmatprep.subr.mxu0 0.0
    %1469 = vmatpush2.msra.mxu0 0.0
    %1470 = vmatprep.subr.mxu0 0.0
    %1471 = vmatpush2.msra.mxu0 0.0
    %1472 = vmatprep.subr.mxu0 0.0
    %1473 = vmatpush2.msra.mxu0 0.0
    %1474 = vmatprep.mubr.f32.mxu0 0.0
    %1475 = vmatmul.mubr.f32.gmra.mxu0 %v568
    %v1476 = vpop.f32.mrf.mxu0
    %v1477 = vadd.f32 %v1407, %v1476
    %v1478 = vpop.f32.mrf.mxu0
    %1479 = vdwg.mxu0
    %v1480 = vmax.f32 %v1477, 0.0
    %v1481 = vld [vmem:[%s3] sm:$0xff]
    %v1482 = vld [vmem:[%s3 + $0x8] sm:$0xff]
    %v1483 = vld [vmem:[%s3 + $0x10] sm:$0xff]
    %v1484 = vld [vmem:[%s3 + $0x18] sm:$0xff]
    %v1485 = vld [vmem:[%s3 + $0x20] sm:$0xff]
    %v1486 = vld [vmem:[%s3 + $0x28] sm:$0xff]
    %v1487 = vld [vmem:[%s3 + $0x30] sm:$0xff]
    %v1488 = vld [vmem:[%s3 + $0x38] sm:$0xff]
    %v1489 = vld [vmem:[%s3 + $0x40] sm:$0xff]
    %v1490 = vld [vmem:[%s3 + $0x48] sm:$0xff]
    %v1491 = vld [vmem:[%s3 + $0x50] sm:$0xff]
    %v1492 = vld [vmem:[%s3 + $0x58] sm:$0xff]
    %v1493 = vld [vmem:[%s3 + $0x60] sm:$0xff]
    %v1494 = vld [vmem:[%s3 + $0x68] sm:$0xff]
    %v1495 = vld [vmem:[%s3 + $0x70] sm:$0xff]
    %v1496 = vld [vmem:[%s3 + $0x78] sm:$0xff]
    %v1497 = vld [vmem:[%s4] sm:$0x1]
    %v1499 = vlaneseq
    %v1500 = vshrl.u32 %v1499, 7
    %v1501 = vsub.s32 0, %v1500
    %v1502 = vrot.slane %v1497, %v1501
    %1504 = vmatprep.subr.mxu0 0.0
    %1505 = vmatpush1.msra.mxu0 %v1496
    %1506 = vmatprep.subr.mxu0 0.0
    %1507 = vmatpush1.msra.mxu0 %v1495
    %1508 = vmatprep.subr.mxu0 0.0
    %1509 = vmatpush1.msra.mxu0 %v1494
    %1510 = vmatprep.subr.mxu0 0.0
    %1511 = vmatpush1.msra.mxu0 %v1493
    %1512 = vmatprep.subr.mxu0 0.0
    %1513 = vmatpush1.msra.mxu0 %v1492
    %1514 = vmatprep.subr.mxu0 0.0
    %1515 = vmatpush1.msra.mxu0 %v1491
    %1516 = vmatprep.subr.mxu0 0.0
    %1517 = vmatpush1.msra.mxu0 %v1490
    %1518 = vmatprep.subr.mxu0 0.0
    %1519 = vmatpush1.msra.mxu0 %v1489
    %1520 = vmatprep.subr.mxu0 0.0
    %1521 = vmatpush1.msra.mxu0 %v1488
    %1522 = vmatprep.subr.mxu0 0.0
    %1523 = vmatpush1.msra.mxu0 %v1487
    %1524 = vmatprep.subr.mxu0 0.0
    %1525 = vmatpush1.msra.mxu0 %v1486
    %1526 = vmatprep.subr.mxu0 0.0
    %1527 = vmatpush1.msra.mxu0 %v1485
    %1528 = vmatprep.subr.mxu0 0.0
    %1529 = vmatpush1.msra.mxu0 %v1484
    %1530 = vmatprep.subr.mxu0 0.0
    %1531 = vmatpush1.msra.mxu0 %v1483
    %1532 = vmatprep.subr.mxu0 0.0
    %1533 = vmatpush1.msra.mxu0 %v1482
    %1534 = vmatprep.subr.mxu0 0.0
    %1535 = vmatpush1.msra.mxu0 %v1481
    %1536 = vmatprep.subr.mxu0 0.0
    %1537 = vmatpush2.msra.mxu0 0.0
    %1538 = vmatprep.subr.mxu0 0.0
    %1539 = vmatpush2.msra.mxu0 0.0
    %1540 = vmatprep.subr.mxu0 0.0
    %1541 = vmatpush2.msra.mxu0 0.0
    %1542 = vmatprep.subr.mxu0 0.0
    %1543 = vmatpush2.msra.mxu0 0.0
    %1544 = vmatprep.subr.mxu0 0.0
    %1545 = vmatpush2.msra.mxu0 0.0
    %1546 = vmatprep.subr.mxu0 0.0
    %1547 = vmatpush2.msra.mxu0 0.0
    %1548 = vmatprep.subr.mxu0 0.0
    %1549 = vmatpush2.msra.mxu0 0.0
    %1550 = vmatprep.subr.mxu0 0.0
    %1551 = vmatpush2.msra.mxu0 0.0
    %1552 = vmatprep.subr.mxu0 0.0
    %1553 = vmatpush2.msra.mxu0 0.0
    %1554 = vmatprep.subr.mxu0 0.0
    %1555 = vmatpush2.msra.mxu0 0.0
    %1556 = vmatprep.subr.mxu0 0.0
    %1557 = vmatpush2.msra.mxu0 0.0
    %1558 = vmatprep.subr.mxu0 0.0
    %1559 = vmatpush2.msra.mxu0 0.0
    %1560 = vmatprep.subr.mxu0 0.0
    %1561 = vmatpush2.msra.mxu0 0.0
    %1562 = vmatprep.subr.mxu0 0.0
    %1563 = vmatpush2.msra.mxu0 0.0
    %1564 = vmatprep.subr.mxu0 0.0
    %1565 = vmatpush2.msra.mxu0 0.0
    %1566 = vmatprep.subr.mxu0 0.0
    %1567 = vmatpush2.msra.mxu0 0.0
    %1568 = vmatprep.mubr.f32.mxu0 0.0
    %1569 = vmatmul.mubr.f32.gmra.mxu0 %v1480
    %v1570 = vpop.f32.mrf.mxu0
    %v1571 = vadd.f32 %v1502, %v1570
    %v1572 = vpop.f32.mrf.mxu0
    %1573 = vdwg.mxu0
    %1574 = vst [vmem:[#allocation2] sm:$0x3] %v1571
    // Predicated region
    $region22: #{simple_cnn_forward.5} parent=1 // pred_check
      _
    $region23: #{simple_cnn_forward.5} parent=1 // pred_check_branch
      %1576 = sbr.rel (0) target = $region25
    $region24: #{simple_cnn_forward.5} parent=1 // pred_region
      %s1578 = ssub.s32 32, 32
      %1579 = vsyncadd [#allocation3], %s1578
      %s1581 = sshll.u32 [#allocation2], 4
      %s1582 = int_to_ptr.vmem [resolvable:$true] %s1581
      %1584 = dma.vmem_to_hbm [thread:$0]  %s1582, 32, %s5, [#allocation3]
    $region25: #{simple_cnn_forward.5} parent=1 // pred_fallthru
      _
    // Predicated region
    $region26: #{simple_cnn_forward.5} parent=1 // pred_check
      _
    $region27: #{simple_cnn_forward.5} parent=1 // pred_check_branch
      %1586 = sbr.rel (0) target = $region29
    $region28: #{simple_cnn_forward.5} parent=1 // pred_region
      %1587 = dma.done [#allocation3], 32
    $region29: #{simple_cnn_forward.5} parent=1 // pred_fallthru
      _
    %1588 = vsyncpa [#allocation3], 1

// kernel: simple_cnn_forward.4
$region0: #{simple_cnn_forward.4}
  #allocation0 [shape = 'u32[]', space=smem, size = 0x4, offset = 0x4, fixed_abs, tag = 'smem constant byte address 0x4 - core index']
  #allocation1 [shape = 'u32[144,128]{1,0:T(1,128)}', space=vmem, size = 0x12000, scoped, tag = 'internal scratch']
  #allocation2 [shape = 'f32[224,64]{1,0:T(8,128)}', space=vmem, size = 0x1c000, scoped, tag = 'scratch operand']
  %s0 = inlined_call_operand.vmem [shape: f32[2,17,16,32], index: 0, kind: input, shape index: {}]
  %s1 = inlined_call_operand.vmem [shape: f32[9,32,64], index: 1, kind: input, shape index: {}]
  %s2 = inlined_call_operand.vmem [shape: f32[1,64], index: 2, kind: input, shape index: {}]
  %s3 = inlined_call_operand.vmem [shape: f32[2,7,7,64], index: 3, kind: output, shape index: {}]
  %s4 = sld [smem:[#allocation0]]
  $region45: #{simple_cnn_forward.4} parent=0
    _
  %s6 = ssub.s32 1, %s4
  %s7 = scalar_select 0, %s6, %s4
  loop: start=0, step=1, limit=4
  $region2: #{simple_cnn_forward.4} parent=0 // loop_pre_header
    _
  $region3: #{simple_cnn_forward.4} parent=0 // loop_header
    %s9 = sphi 0, %s13
    %p10 = scmp.ge.s32.totalorder %s9, 4
    %s19 = sphi 0, %s21
    %s22 = sphi 0, %s19
    %s23 = sphi 0, %s22
    %s39 = sphi 0, %s23
    %s43 = sphi 0, %s43
    %s45 = sphi 0, %s43
    %s46 = sphi 0, %s45
    %s60 = sphi 0, %s46
    %s64 = sphi 0, %s64
    %s66 = sphi 0, %s64
    %s67 = sphi 0, %s66
    %s81 = sphi 0, %s67
    %s87 = sphi 0, %s89
    %s90 = sphi 0, %s87
    %s91 = sphi 0, %s90
    %s107 = sphi 0, %s91
  $region4: #{simple_cnn_forward.4} parent=0 // loop_header_branch
    %12 = sbr.rel (%p10) target = $region8
  $region5: #{simple_cnn_forward.4} parent=0 // loop_body
    %s14 = ssub.s32 %s9, 1
    %s15 = ssub.s32 %s9, 2
    %s16 = sadd.s32 %s9, 1
    %s17 = ssub.s32 %s9, %s16
    %p18 = scmp.eq.s32.totalorder %s17, 0
    %s20 = sadd.s32 %s19, 1
    %s21 = scalar_select %p18, %s19, %s20
    %p24 = pneg %p18
    %p25 = scmp.eq.s32.totalorder %s9, 1
    %p26 = por %p24, %p25
    %p27 = scmp.ne.s32.totalorder %s19, %s22
    %p28 = scmp.eq.s32.totalorder %s9, 0
    %p29 = por %p27, %p28
    %p30 = scmp.ne.s32.totalorder %s19, %s22
    %p31 = scmp.eq.s32.totalorder %s14, 1
    %p32 = por %p30, %p31
    %p33 = scmp.ne.s32.totalorder %s22, %s23
    %p34 = scmp.eq.s32.totalorder %s14, 0
    %p35 = por %p33, %p34
    %p36 = scmp.ne.s32.totalorder %s22, %s23
    %p37 = scmp.eq.s32.totalorder %s15, 1
    %p38 = por %p36, %p37
    %p40 = scmp.ne.s32.totalorder %s23, %s39
    %p41 = scmp.eq.s32.totalorder %s15, 0
    %p42 = por %p40, %p41
    %s44 = sadd.s32 %s43, 1
    %p47 = scmp.eq.s32.totalorder %s9, 1
    %p48 = scmp.ne.s32.totalorder %s43, %s45
    %p49 = scmp.eq.s32.totalorder %s9, 0
    %p50 = por %p48, %p49
    %p51 = scmp.ne.s32.totalorder %s43, %s45
    %p52 = scmp.eq.s32.totalorder %s14, 1
    %p53 = por %p51, %p52
    %p54 = scmp.ne.s32.totalorder %s45, %s46
    %p55 = scmp.eq.s32.totalorder %s14, 0
    %p56 = por %p54, %p55
    %p57 = scmp.ne.s32.totalorder %s45, %s46
    %p58 = scmp.eq.s32.totalorder %s15, 1
    %p59 = por %p57, %p58
    %p61 = scmp.ne.s32.totalorder %s46, %s60
    %p62 = scmp.eq.s32.totalorder %s15, 0
    %p63 = por %p61, %p62
    %s65 = sadd.s32 %s64, 1
    %p68 = scmp.eq.s32.totalorder %s9, 1
    %p69 = scmp.ne.s32.totalorder %s64, %s66
    %p70 = scmp.eq.s32.totalorder %s9, 0
    %p71 = por %p69, %p70
    %p72 = scmp.ne.s32.totalorder %s64, %s66
    %p73 = scmp.eq.s32.totalorder %s14, 1
    %p74 = por %p72, %p73
    %p75 = scmp.ne.s32.totalorder %s66, %s67
    %p76 = scmp.eq.s32.totalorder %s14, 0
    %p77 = por %p75, %p76
    %p78 = scmp.ne.s32.totalorder %s66, %s67
    %p79 = scmp.eq.s32.totalorder %s15, 1
    %p80 = por %p78, %p79
    %p82 = scmp.ne.s32.totalorder %s67, %s81
    %p83 = scmp.eq.s32.totalorder %s15, 0
    %p84 = por %p82, %p83
    %s85 = ssub.s32 %s9, %s16
    %p86 = scmp.eq.s32.totalorder %s85, 0
    %s88 = sadd.s32 %s87, 1
    %s89 = scalar_select %p86, %s87, %s88
    %p92 = pneg %p86
    %p93 = scmp.eq.s32.totalorder %s9, 1
    %p94 = por %p92, %p93
    %p95 = scmp.ne.s32.totalorder %s87, %s90
    %p96 = scmp.eq.s32.totalorder %s9, 0
    %p97 = por %p95, %p96
    %p98 = scmp.ne.s32.totalorder %s87, %s90
    %p99 = scmp.eq.s32.totalorder %s14, 1
    %p100 = por %p98, %p99
    %p101 = scmp.ne.s32.totalorder %s90, %s91
    %p102 = scmp.eq.s32.totalorder %s14, 0
    %p103 = por %p101, %p102
    %p104 = scmp.ne.s32.totalorder %s90, %s91
    %p105 = scmp.eq.s32.totalorder %s15, 1
    %p106 = por %p104, %p105
    %p108 = scmp.ne.s32.totalorder %s91, %s107
    %p109 = scmp.eq.s32.totalorder %s15, 0
    %p110 = por %p108, %p109
    %p111 = scmp.le.s32.totalorder 1, %s9
    %p112 = scmp.lt.s32.totalorder %s9, 3
    %p113 = pnand %p111, %p112
    %p114 = pneg %p113
    // Predicated region
    $region9: #{simple_cnn_forward.4} parent=5 // pred_check
      _
    $region10: #{simple_cnn_forward.4} parent=5 // pred_check_branch
      %116 = sbr.rel (%p113) target = $region12
    $region11: #{simple_cnn_forward.4} parent=5 // pred_region
      %s117 = ssub.s32 %s9, 1
      // Predicated region
      $region13: #{simple_cnn_forward.4} parent=11 // pred_check
        %p118 = pneg %p56
      $region14: #{simple_cnn_forward.4} parent=11 // pred_check_branch
        %120 = sbr.rel (%p118) target = $region16
      $region15: #{simple_cnn_forward.4} parent=11 // pred_region
        _
      $region16: #{simple_cnn_forward.4} parent=11 // pred_fallthru
        _
      // Predicated region
      $region17: #{simple_cnn_forward.4} parent=11 // pred_check
        %p121 = pneg %p77
      $region18: #{simple_cnn_forward.4} parent=11 // pred_check_branch
        %123 = sbr.rel (%p121) target = $region20
      $region19: #{simple_cnn_forward.4} parent=11 // pred_region
        _
      $region20: #{simple_cnn_forward.4} parent=11 // pred_fallthru
        _
    $region12: #{simple_cnn_forward.4} parent=5 // pred_fallthru
      _
    %p124 = scmp.lt.s32.totalorder %s9, 2
    // Predicated region
    $region21: #{simple_cnn_forward.4} parent=5 // pred_check
      %p125 = pneg %p124
    $region22: #{simple_cnn_forward.4} parent=5 // pred_check_branch
      %127 = sbr.rel (%p125) target = $region24
    $region23: #{simple_cnn_forward.4} parent=5 // pred_region
      // Predicated region
      $region25: #{simple_cnn_forward.4} parent=23 // pred_check
        %p128 = pneg %p29
      $region26: #{simple_cnn_forward.4} parent=23 // pred_check_branch
        %130 = sbr.rel (%p128) target = $region28
      $region27: #{simple_cnn_forward.4} parent=23 // pred_region
        %p131 = scmp.lt.s32.totalorder %s9, 1
        %s132 = scalar_select %p131, %s9, 1
        %s133 = smul.addr %s132, 34
        %s134 = smul.addr %s133, 8
        %s135 = scalar_lea.vmem %s0, %s134
      $region28: #{simple_cnn_forward.4} parent=23 // pred_fallthru
        _
    $region24: #{simple_cnn_forward.4} parent=5 // pred_fallthru
      _
    %p136 = scmp.le.s32.totalorder 1, %s9
    %p137 = scmp.lt.s32.totalorder %s9, 3
    %p138 = pnand %p136, %p137
    %p139 = pneg %p138
    // Predicated region
    $region29: #{simple_cnn_forward.4} parent=5 // pred_check
      _
    $region30: #{simple_cnn_forward.4} parent=5 // pred_check_branch
      %141 = sbr.rel (%p138) target = $region32
    $region31: #{simple_cnn_forward.4} parent=5 // pred_region
      %s142 = ssub.s32 %s9, 1
      %p143 = scmp.lt.s32.totalorder %s14, 1
      %s144 = scalar_select %p143, %s14, 1
      %s145 = smul.addr %s144, 34
      %s146 = smul.addr %s145, 8
      %s147 = scalar_lea.vmem %s0, %s146
      %p148 = pneg %p35
      %p149 = pneg %p32
      %p150 = pneg %p56
      %p151 = pneg %p53
      %p152 = pneg %p77
      %p153 = pneg %p74
      %p154 = pneg %p103
      %p155 = pneg %p100
      %p156 = scmp.lt.s32.totalorder %s14, 1
      %s157 = scalar_select %p156, %s14, 1
      %s158 = smul.addr %s157, 7
      %s159 = smul.addr %s158, 8
      %s160 = scalar_lea.vmem %s3, %s159
      %p161 = scmp.lt.s32.totalorder %s14, 1
      %s162 = scalar_select %p161, %s14, 1
      %s163 = smul.addr %s162, 34
      %s164 = smul.addr %s163, 8
      %s165 = scalar_lea.vmem %s0, %s164
      %p166 = scmp.lt.s32.totalorder %s14, 1
      %s167 = scalar_select %p166, %s14, 1
      %s168 = smul.addr %s167, 7
      %s169 = smul.addr %s168, 8
      %s170 = scalar_lea.vmem %s3, %s169
      %v171 = vld [vmem:[%s165] sm:$0xff]
      %v172 = vld [vmem:[%s165 + $0x8] sm:$0xff]
      %v173 = vld [vmem:[%s165 + $0x10] sm:$0xff]
      %v174 = vld [vmem:[%s165 + $0x18] sm:$0xff]
      %v175 = vld [vmem:[%s165 + $0x20] sm:$0xff]
      %v176 = vld [vmem:[%s165 + $0x28] sm:$0xff]
      %v177 = vld [vmem:[%s165 + $0x30] sm:$0xff]
      %v178 = vld [vmem:[%s165 + $0x38] sm:$0xff]
      %v179 = vld [vmem:[%s165 + $0x40] sm:$0xff]
      %v180 = vld [vmem:[%s165 + $0x48] sm:$0xff]
      %v181 = vld [vmem:[%s165 + $0x50] sm:$0xff]
      %v182 = vld [vmem:[%s165 + $0x58] sm:$0xff]
      %v183 = vld [vmem:[%s165 + $0x60] sm:$0xff]
      %v184 = vld [vmem:[%s165 + $0x68] sm:$0xff]
      %v185 = vld [vmem:[%s165 + $0x70] sm:$0xff]
      %v186 = vld [vmem:[%s165 + $0x78] sm:$0xff]
      %v187 = vld [vmem:[%s165 + $0x80] sm:$0xff]
      %v188 = vld [vmem:[%s165 + $0x88] sm:$0xff]
      %v189 = vld [vmem:[%s165 + $0x90] sm:$0xff]
      %v190 = vld [vmem:[%s165 + $0x98] sm:$0xff]
      %v191 = vld [vmem:[%s165 + $0xa0] sm:$0xff]
      %v192 = vld [vmem:[%s165 + $0xa8] sm:$0xff]
      %v193 = vld [vmem:[%s165 + $0xb0] sm:$0xff]
      %v194 = vld [vmem:[%s165 + $0xb8] sm:$0xff]
      %v195 = vld [vmem:[%s165 + $0xc0] sm:$0xff]
      %v196 = vld [vmem:[%s165 + $0xc8] sm:$0xff]
      %v197 = vld [vmem:[%s165 + $0xd0] sm:$0xff]
      %v198 = vld [vmem:[%s165 + $0xd8] sm:$0xff]
      %v199 = vld [vmem:[%s165 + $0xe0] sm:$0xff]
      %v200 = vld [vmem:[%s165 + $0xe8] sm:$0xff]
      %v201 = vld [vmem:[%s165 + $0xf0] sm:$0xff]
      %v202 = vld [vmem:[%s165 + $0xf8] sm:$0xff]
      %v203 = vld [vmem:[%s165 + $0x100] sm:$0xff]
      %v204 = vld [vmem:[%s1] sm:$0xff]
      %v205 = vld [vmem:[%s1 + $0x8] sm:$0xff]
      %v206 = vld [vmem:[%s1 + $0x10] sm:$0xff]
      %v207 = vld [vmem:[%s1 + $0x18] sm:$0xff]
      %s208 = scalar_lea.vmem %s1, 32
      %v209 = vld [vmem:[%s208] sm:$0xff]
      %v210 = vld [vmem:[%s208 + $0x8] sm:$0xff]
      %v211 = vld [vmem:[%s208 + $0x10] sm:$0xff]
      %v212 = vld [vmem:[%s208 + $0x18] sm:$0xff]
      %vm242 = vcmask 1046528
      %v243 = vrot.slane %v171, 1
      %v244 = vrot.slane %v172, 1
      %v245 = vsel %vm242, %v243, %v244
      %v246 = vrot.slane %v173, 1
      %v247 = vsel %vm242, %v244, %v246
      %v248 = vrot.slane %v174, 1
      %v249 = vsel %vm242, %v246, %v248
      %v250 = vrot.slane %v175, 1
      %v251 = vsel %vm242, %v248, %v250
      %v252 = vrot.slane %v176, 1
      %v253 = vsel %vm242, %v250, %v252
      %v254 = vrot.slane %v177, 1
      %v255 = vsel %vm242, %v252, %v254
      %v256 = vrot.slane %v178, 1
      %v257 = vsel %vm242, %v254, %v256
      %v258 = vrot.slane %v179, 1
      %v259 = vsel %vm242, %v256, %v258
      %v260 = vrot.slane %v180, 1
      %v261 = vsel %vm242, %v258, %v260
      %v262 = vrot.slane %v181, 1
      %v263 = vsel %vm242, %v260, %v262
      %v264 = vrot.slane %v182, 1
      %v265 = vsel %vm242, %v262, %v264
      %v266 = vrot.slane %v183, 1
      %v267 = vsel %vm242, %v264, %v266
      %v268 = vrot.slane %v184, 1
      %v269 = vsel %vm242, %v266, %v268
      %v270 = vrot.slane %v185, 1
      %v271 = vsel %vm242, %v268, %v270
      %v272 = vrot.slane %v186, 1
      %v273 = vsel %vm242, %v270, %v272
      %v274 = vrot.slane %v187, 1
      %v275 = vsel %vm242, %v272, %v274
      %v276 = vrot.slane %v188, 1
      %v277 = vsel %vm242, %v274, %v276
      %v278 = vrot.slane %v189, 1
      %v279 = vsel %vm242, %v276, %v278
      %v280 = vrot.slane %v190, 1
      %v281 = vsel %vm242, %v278, %v280
      %v282 = vrot.slane %v191, 1
      %v283 = vsel %vm242, %v280, %v282
      %v284 = vrot.slane %v192, 1
      %v285 = vsel %vm242, %v282, %v284
      %v286 = vrot.slane %v193, 1
      %v287 = vsel %vm242, %v284, %v286
      %v288 = vrot.slane %v194, 1
      %v289 = vsel %vm242, %v286, %v288
      %v290 = vrot.slane %v195, 1
      %v291 = vsel %vm242, %v288, %v290
      %v292 = vrot.slane %v196, 1
      %v293 = vsel %vm242, %v290, %v292
      %v294 = vrot.slane %v197, 1
      %v295 = vsel %vm242, %v292, %v294
      %v296 = vrot.slane %v198, 1
      %v297 = vsel %vm242, %v294, %v296
      %v298 = vrot.slane %v199, 1
      %v299 = vsel %vm242, %v296, %v298
      %vm300 = vcmask 261120
      %v301 = vsel %vm300, %v245, 0
      %v303 = vsel %vm300, %v247, 0
      %v305 = vsel %vm300, %v249, 0
      %v307 = vsel %vm300, %v251, 0
      %v309 = vsel %vm300, %v253, 0
      %v311 = vsel %vm300, %v255, 0
      %v313 = vsel %vm300, %v257, 0
      %v315 = vsel %vm300, %v259, 0
      %v317 = vsel %vm300, %v261, 0
      %v319 = vsel %vm300, %v263, 0
      %v321 = vsel %vm300, %v265, 0
      %v323 = vsel %vm300, %v267, 0
      %v325 = vsel %vm300, %v269, 0
      %v327 = vsel %vm300, %v271, 0
      %v329 = vsel %vm300, %v273, 0
      %v331 = vsel %vm300, %v275, 0
      %v333 = vsel %vm300, %v277, 0
      %v335 = vsel %vm300, %v279, 0
      %v337 = vsel %vm300, %v281, 0
      %v339 = vsel %vm300, %v283, 0
      %v341 = vsel %vm300, %v285, 0
      %v343 = vsel %vm300, %v287, 0
      %v345 = vsel %vm300, %v289, 0
      %v347 = vsel %vm300, %v291, 0
      %v349 = vsel %vm300, %v293, 0
      %v351 = vsel %vm300, %v295, 0
      %v353 = vsel %vm300, %v297, 0
      %v355 = vsel %vm300, %v299, 0
      %357 = vmatprep.subr.mxu0 0.0
      %358 = vmatpush1.msra.mxu0 0.0
      %359 = vmatprep.subr.mxu0 0.0
      %360 = vmatpush1.msra.mxu0 0.0
      %361 = vmatprep.subr.mxu0 0.0
      %362 = vmatpush1.msra.mxu0 0.0
      %363 = vmatprep.subr.mxu0 0.0
      %364 = vmatpush1.msra.mxu0 0.0
      %365 = vmatprep.subr.mxu0 0.0
      %366 = vmatpush1.msra.mxu0 0.0
      %367 = vmatprep.subr.mxu0 0.0
      %368 = vmatpush1.msra.mxu0 0.0
      %369 = vmatprep.subr.mxu0 0.0
      %370 = vmatpush1.msra.mxu0 0.0
      %371 = vmatprep.subr.mxu0 0.0
      %372 = vmatpush1.msra.mxu0 0.0
      %373 = vmatprep.subr.mxu0 0.0
      %374 = vmatpush1.msra.mxu0 0.0
      %375 = vmatprep.subr.mxu0 0.0
      %376 = vmatpush1.msra.mxu0 0.0
      %377 = vmatprep.subr.mxu0 0.0
      %378 = vmatpush1.msra.mxu0 0.0
      %379 = vmatprep.subr.mxu0 0.0
      %380 = vmatpush1.msra.mxu0 0.0
      %381 = vmatprep.subr.mxu0 0.0
      %382 = vmatpush1.msra.mxu0 %v212
      %383 = vmatprep.subr.mxu0 0.0
      %384 = vmatpush1.msra.mxu0 %v211
      %385 = vmatprep.subr.mxu0 0.0
      %386 = vmatpush1.msra.mxu0 %v210
      %387 = vmatprep.subr.mxu0 0.0
      %388 = vmatpush1.msra.mxu0 %v209
      %389 = vmatprep.subr.mxu0 0.0
      %390 = vmatpush2.msra.mxu0 0.0
      %391 = vmatprep.subr.mxu0 0.0
      %392 = vmatpush2.msra.mxu0 0.0
      %393 = vmatprep.subr.mxu0 0.0
      %394 = vmatpush2.msra.mxu0 0.0
      %395 = vmatprep.subr.mxu0 0.0
      %396 = vmatpush2.msra.mxu0 0.0
      %397 = vmatprep.subr.mxu0 0.0
      %398 = vmatpush2.msra.mxu0 0.0
      %399 = vmatprep.subr.mxu0 0.0
      %400 = vmatpush2.msra.mxu0 0.0
      %401 = vmatprep.subr.mxu0 0.0
      %402 = vmatpush2.msra.mxu0 0.0
      %403 = vmatprep.subr.mxu0 0.0
      %404 = vmatpush2.msra.mxu0 0.0
      %405 = vmatprep.subr.mxu0 0.0
      %406 = vmatpush2.msra.mxu0 0.0
      %407 = vmatprep.subr.mxu0 0.0
      %408 = vmatpush2.msra.mxu0 0.0
      %409 = vmatprep.subr.mxu0 0.0
      %410 = vmatpush2.msra.mxu0 0.0
      %411 = vmatprep.subr.mxu0 0.0
      %412 = vmatpush2.msra.mxu0 0.0
      %413 = vmatprep.subr.mxu0 0.0
      %414 = vmatpush2.msra.mxu0 0.0
      %415 = vmatprep.subr.mxu0 0.0
      %416 = vmatpush2.msra.mxu0 0.0
      %417 = vmatprep.subr.mxu0 0.0
      %418 = vmatpush2.msra.mxu0 0.0
      %419 = vmatprep.subr.mxu0 0.0
      %420 = vmatpush2.msra.mxu0 0.0
      %421 = vmatprep.mubr.f32.mxu0 0.0
      %422 = vmatmul.mubr.f32.gmra.mxu0 %v301
      %v423 = vpop.f32.mrf.mxu0
      %v424 = vadd.f32 0.0, %v423
      %v425 = vpop.f32.mrf.mxu0
      %426 = vmatprep.mubr.f32.mxu0 0.0
      %427 = vmatmul.mubr.f32.gmra.mxu0 %v303
      %v428 = vpop.f32.mrf.mxu0
      %v429 = vadd.f32 0.0, %v428
      %v430 = vpop.f32.mrf.mxu0
      %431 = vmatprep.mubr.f32.mxu0 0.0
      %432 = vmatmul.mubr.f32.gmra.mxu0 %v305
      %v433 = vpop.f32.mrf.mxu0
      %v434 = vadd.f32 0.0, %v433
      %v435 = vpop.f32.mrf.mxu0
      %436 = vmatprep.mubr.f32.mxu0 0.0
      %437 = vmatmul.mubr.f32.gmra.mxu0 %v307
      %v438 = vpop.f32.mrf.mxu0
      %v439 = vadd.f32 0.0, %v438
      %v440 = vpop.f32.mrf.mxu0
      %441 = vmatprep.mubr.f32.mxu0 0.0
      %442 = vmatmul.mubr.f32.gmra.mxu0 %v309
      %v443 = vpop.f32.mrf.mxu0
      %v444 = vadd.f32 0.0, %v443
      %v445 = vpop.f32.mrf.mxu0
      %446 = vmatprep.mubr.f32.mxu0 0.0
      %447 = vmatmul.mubr.f32.gmra.mxu0 %v311
      %v448 = vpop.f32.mrf.mxu0
      %v449 = vadd.f32 0.0, %v448
      %v450 = vpop.f32.mrf.mxu0
      %451 = vmatprep.mubr.f32.mxu0 0.0
      %452 = vmatmul.mubr.f32.gmra.mxu0 %v313
      %v453 = vpop.f32.mrf.mxu0
      %v454 = vadd.f32 0.0, %v453
      %v455 = vpop.f32.mrf.mxu0
      %456 = vmatprep.mubr.f32.mxu0 0.0
      %457 = vmatmul.mubr.f32.gmra.mxu0 %v315
      %v458 = vpop.f32.mrf.mxu0
      %v459 = vadd.f32 0.0, %v458
      %v460 = vpop.f32.mrf.mxu0
      %461 = vmatprep.mubr.f32.mxu0 0.0
      %462 = vmatmul.mubr.f32.gmra.mxu0 %v317
      %v463 = vpop.f32.mrf.mxu0
      %v464 = vadd.f32 0.0, %v463
      %v465 = vpop.f32.mrf.mxu0
      %466 = vmatprep.mubr.f32.mxu0 0.0
      %467 = vmatmul.mubr.f32.gmra.mxu0 %v319
      %v468 = vpop.f32.mrf.mxu0
      %v469 = vadd.f32 0.0, %v468
      %v470 = vpop.f32.mrf.mxu0
      %471 = vmatprep.mubr.f32.mxu0 0.0
      %472 = vmatmul.mubr.f32.gmra.mxu0 %v321
      %v473 = vpop.f32.mrf.mxu0
      %v474 = vadd.f32 0.0, %v473
      %v475 = vpop.f32.mrf.mxu0
      %476 = vmatprep.mubr.f32.mxu0 0.0
      %477 = vmatmul.mubr.f32.gmra.mxu0 %v323
      %v478 = vpop.f32.mrf.mxu0
      %v479 = vadd.f32 0.0, %v478
      %v480 = vpop.f32.mrf.mxu0
      %481 = vmatprep.mubr.f32.mxu0 0.0
      %482 = vmatmul.mubr.f32.gmra.mxu0 %v325
      %v483 = vpop.f32.mrf.mxu0
      %v484 = vadd.f32 0.0, %v483
      %v485 = vpop.f32.mrf.mxu0
      %486 = vmatprep.mubr.f32.mxu0 0.0
      %487 = vmatmul.mubr.f32.gmra.mxu0 %v327
      %v488 = vpop.f32.mrf.mxu0
      %v489 = vadd.f32 0.0, %v488
      %v490 = vpop.f32.mrf.mxu0
      %491 = vmatprep.mubr.f32.mxu0 0.0
      %492 = vmatmul.mubr.f32.gmra.mxu0 %v329
      %v493 = vpop.f32.mrf.mxu0
      %v494 = vadd.f32 0.0, %v493
      %v495 = vpop.f32.mrf.mxu0
      %496 = vmatprep.mubr.f32.mxu0 0.0
      %497 = vmatmul.mubr.f32.gmra.mxu0 %v331
      %v498 = vpop.f32.mrf.mxu0
      %v499 = vadd.f32 0.0, %v498
      %v500 = vpop.f32.mrf.mxu0
      %501 = vmatprep.mubr.f32.mxu0 0.0
      %502 = vmatmul.mubr.f32.gmra.mxu0 %v333
      %v503 = vpop.f32.mrf.mxu0
      %v504 = vadd.f32 0.0, %v503
      %v505 = vpop.f32.mrf.mxu0
      %506 = vmatprep.mubr.f32.mxu0 0.0
      %507 = vmatmul.mubr.f32.gmra.mxu0 %v335
      %v508 = vpop.f32.mrf.mxu0
      %v509 = vadd.f32 0.0, %v508
      %v510 = vpop.f32.mrf.mxu0
      %511 = vmatprep.mubr.f32.mxu0 0.0
      %512 = vmatmul.mubr.f32.gmra.mxu0 %v337
      %v513 = vpop.f32.mrf.mxu0
      %v514 = vadd.f32 0.0, %v513
      %v515 = vpop.f32.mrf.mxu0
      %516 = vmatprep.mubr.f32.mxu0 0.0
      %517 = vmatmul.mubr.f32.gmra.mxu0 %v339
      %v518 = vpop.f32.mrf.mxu0
      %v519 = vadd.f32 0.0, %v518
      %v520 = vpop.f32.mrf.mxu0
      %521 = vmatprep.mubr.f32.mxu0 0.0
      %522 = vmatmul.mubr.f32.gmra.mxu0 %v341
      %v523 = vpop.f32.mrf.mxu0
      %v524 = vadd.f32 0.0, %v523
      %v525 = vpop.f32.mrf.mxu0
      %526 = vmatprep.mubr.f32.mxu0 0.0
      %527 = vmatmul.mubr.f32.gmra.mxu0 %v343
      %v528 = vpop.f32.mrf.mxu0
      %v529 = vadd.f32 0.0, %v528
      %v530 = vpop.f32.mrf.mxu0
      %531 = vmatprep.mubr.f32.mxu0 0.0
      %532 = vmatmul.mubr.f32.gmra.mxu0 %v345
      %v533 = vpop.f32.mrf.mxu0
      %v534 = vadd.f32 0.0, %v533
      %v535 = vpop.f32.mrf.mxu0
      %536 = vmatprep.mubr.f32.mxu0 0.0
      %537 = vmatmul.mubr.f32.gmra.mxu0 %v347
      %v538 = vpop.f32.mrf.mxu0
      %v539 = vadd.f32 0.0, %v538
      %v540 = vpop.f32.mrf.mxu0
      %541 = vmatprep.mubr.f32.mxu0 0.0
      %542 = vmatmul.mubr.f32.gmra.mxu0 %v349
      %v543 = vpop.f32.mrf.mxu0
      %v544 = vadd.f32 0.0, %v543
      %v545 = vpop.f32.mrf.mxu0
      %546 = vmatprep.mubr.f32.mxu0 0.0
      %547 = vmatmul.mubr.f32.gmra.mxu0 %v351
      %v548 = vpop.f32.mrf.mxu0
      %v549 = vadd.f32 0.0, %v548
      %v550 = vpop.f32.mrf.mxu0
      %551 = vmatprep.mubr.f32.mxu0 0.0
      %552 = vmatmul.mubr.f32.gmra.mxu0 %v353
      %v553 = vpop.f32.mrf.mxu0
      %v554 = vadd.f32 0.0, %v553
      %v555 = vpop.f32.mrf.mxu0
      %556 = vmatprep.mubr.f32.mxu0 0.0
      %557 = vmatmul.mubr.f32.gmra.mxu0 %v355
      %v558 = vpop.f32.mrf.mxu0
      %v559 = vadd.f32 0.0, %v558
      %v560 = vpop.f32.mrf.mxu0
      %561 = vdwg.mxu0
      %v562 = vsel %vm300, %v171, 0
      %v564 = vsel %vm300, %v172, 0
      %v566 = vsel %vm300, %v173, 0
      %v568 = vsel %vm300, %v174, 0
      %v570 = vsel %vm300, %v175, 0
      %v572 = vsel %vm300, %v176, 0
      %v574 = vsel %vm300, %v177, 0
      %v576 = vsel %vm300, %v178, 0
      %v578 = vsel %vm300, %v179, 0
      %v580 = vsel %vm300, %v180, 0
      %v582 = vsel %vm300, %v181, 0
      %v584 = vsel %vm300, %v182, 0
      %v586 = vsel %vm300, %v183, 0
      %v588 = vsel %vm300, %v184, 0
      %v590 = vsel %vm300, %v185, 0
      %v592 = vsel %vm300, %v186, 0
      %v594 = vsel %vm300, %v187, 0
      %v596 = vsel %vm300, %v188, 0
      %v598 = vsel %vm300, %v189, 0
      %v600 = vsel %vm300, %v190, 0
      %v602 = vsel %vm300, %v191, 0
      %v604 = vsel %vm300, %v192, 0
      %v606 = vsel %vm300, %v193, 0
      %v608 = vsel %vm300, %v194, 0
      %v610 = vsel %vm300, %v195, 0
      %v612 = vsel %vm300, %v196, 0
      %v614 = vsel %vm300, %v197, 0
      %v616 = vsel %vm300, %v198, 0
      %618 = vmatprep.subr.mxu0 0.0
      %619 = vmatpush1.msra.mxu0 0.0
      %620 = vmatprep.subr.mxu0 0.0
      %621 = vmatpush1.msra.mxu0 0.0
      %622 = vmatprep.subr.mxu0 0.0
      %623 = vmatpush1.msra.mxu0 0.0
      %624 = vmatprep.subr.mxu0 0.0
      %625 = vmatpush1.msra.mxu0 0.0
      %626 = vmatprep.subr.mxu0 0.0
      %627 = vmatpush1.msra.mxu0 0.0
      %628 = vmatprep.subr.mxu0 0.0
      %629 = vmatpush1.msra.mxu0 0.0
      %630 = vmatprep.subr.mxu0 0.0
      %631 = vmatpush1.msra.mxu0 0.0
      %632 = vmatprep.subr.mxu0 0.0
      %633 = vmatpush1.msra.mxu0 0.0
      %634 = vmatprep.subr.mxu0 0.0
      %635 = vmatpush1.msra.mxu0 0.0
      %636 = vmatprep.subr.mxu0 0.0
      %637 = vmatpush1.msra.mxu0 0.0
      %638 = vmatprep.subr.mxu0 0.0
      %639 = vmatpush1.msra.mxu0 0.0
      %640 = vmatprep.subr.mxu0 0.0
      %641 = vmatpush1.msra.mxu0 0.0
      %642 = vmatprep.subr.mxu0 0.0
      %643 = vmatpush1.msra.mxu0 %v207
      %644 = vmatprep.subr.mxu0 0.0
      %645 = vmatpush1.msra.mxu0 %v206
      %646 = vmatprep.subr.mxu0 0.0
      %647 = vmatpush1.msra.mxu0 %v205
      %648 = vmatprep.subr.mxu0 0.0
      %649 = vmatpush1.msra.mxu0 %v204
      %650 = vmatprep.subr.mxu0 0.0
      %651 = vmatpush2.msra.mxu0 0.0
      %652 = vmatprep.subr.mxu0 0.0
      %653 = vmatpush2.msra.mxu0 0.0
      %654 = vmatprep.subr.mxu0 0.0
      %655 = vmatpush2.msra.mxu0 0.0
      %656 = vmatprep.subr.mxu0 0.0
      %657 = vmatpush2.msra.mxu0 0.0
      %658 = vmatprep.subr.mxu0 0.0
      %659 = vmatpush2.msra.mxu0 0.0
      %660 = vmatprep.subr.mxu0 0.0
      %661 = vmatpush2.msra.mxu0 0.0
      %662 = vmatprep.subr.mxu0 0.0
      %663 = vmatpush2.msra.mxu0 0.0
      %664 = vmatprep.subr.mxu0 0.0
      %665 = vmatpush2.msra.mxu0 0.0
      %666 = vmatprep.subr.mxu0 0.0
      %667 = vmatpush2.msra.mxu0 0.0
      %668 = vmatprep.subr.mxu0 0.0
      %669 = vmatpush2.msra.mxu0 0.0
      %670 = vmatprep.subr.mxu0 0.0
      %671 = vmatpush2.msra.mxu0 0.0
      %672 = vmatprep.subr.mxu0 0.0
      %673 = vmatpush2.msra.mxu0 0.0
      %674 = vmatprep.subr.mxu0 0.0
      %675 = vmatpush2.msra.mxu0 0.0
      %676 = vmatprep.subr.mxu0 0.0
      %677 = vmatpush2.msra.mxu0 0.0
      %678 = vmatprep.subr.mxu0 0.0
      %679 = vmatpush2.msra.mxu0 0.0
      %680 = vmatprep.subr.mxu0 0.0
      %681 = vmatpush2.msra.mxu0 0.0
      %682 = vmatprep.mubr.f32.mxu0 0.0
      %683 = vmatmul.mubr.f32.gmra.mxu0 %v562
      %v684 = vpop.f32.mrf.mxu0
      %v685 = vadd.f32 %v424, %v684
      %v686 = vpop.f32.mrf.mxu0
      %687 = vmatprep.mubr.f32.mxu0 0.0
      %688 = vmatmul.mubr.f32.gmra.mxu0 %v564
      %v689 = vpop.f32.mrf.mxu0
      %v690 = vadd.f32 %v429, %v689
      %v691 = vpop.f32.mrf.mxu0
      %692 = vmatprep.mubr.f32.mxu0 0.0
      %693 = vmatmul.mubr.f32.gmra.mxu0 %v566
      %v694 = vpop.f32.mrf.mxu0
      %v695 = vadd.f32 %v434, %v694
      %v696 = vpop.f32.mrf.mxu0
      %697 = vmatprep.mubr.f32.mxu0 0.0
      %698 = vmatmul.mubr.f32.gmra.mxu0 %v568
      %v699 = vpop.f32.mrf.mxu0
      %v700 = vadd.f32 %v439, %v699
      %v701 = vpop.f32.mrf.mxu0
      %702 = vmatprep.mubr.f32.mxu0 0.0
      %703 = vmatmul.mubr.f32.gmra.mxu0 %v570
      %v704 = vpop.f32.mrf.mxu0
      %v705 = vadd.f32 %v444, %v704
      %v706 = vpop.f32.mrf.mxu0
      %707 = vmatprep.mubr.f32.mxu0 0.0
      %708 = vmatmul.mubr.f32.gmra.mxu0 %v572
      %v709 = vpop.f32.mrf.mxu0
      %v710 = vadd.f32 %v449, %v709
      %v711 = vpop.f32.mrf.mxu0
      %712 = vmatprep.mubr.f32.mxu0 0.0
      %713 = vmatmul.mubr.f32.gmra.mxu0 %v574
      %v714 = vpop.f32.mrf.mxu0
      %v715 = vadd.f32 %v454, %v714
      %v716 = vpop.f32.mrf.mxu0
      %717 = vmatprep.mubr.f32.mxu0 0.0
      %718 = vmatmul.mubr.f32.gmra.mxu0 %v576
      %v719 = vpop.f32.mrf.mxu0
      %v720 = vadd.f32 %v459, %v719
      %v721 = vpop.f32.mrf.mxu0
      %722 = vmatprep.mubr.f32.mxu0 0.0
      %723 = vmatmul.mubr.f32.gmra.mxu0 %v578
      %v724 = vpop.f32.mrf.mxu0
      %v725 = vadd.f32 %v464, %v724
      %v726 = vpop.f32.mrf.mxu0
      %727 = vmatprep.mubr.f32.mxu0 0.0
      %728 = vmatmul.mubr.f32.gmra.mxu0 %v580
      %v729 = vpop.f32.mrf.mxu0
      %v730 = vadd.f32 %v469, %v729
      %v731 = vpop.f32.mrf.mxu0
      %732 = vmatprep.mubr.f32.mxu0 0.0
      %733 = vmatmul.mubr.f32.gmra.mxu0 %v582
      %v734 = vpop.f32.mrf.mxu0
      %v735 = vadd.f32 %v474, %v734
      %v736 = vpop.f32.mrf.mxu0
      %737 = vmatprep.mubr.f32.mxu0 0.0
      %738 = vmatmul.mubr.f32.gmra.mxu0 %v584
      %v739 = vpop.f32.mrf.mxu0
      %v740 = vadd.f32 %v479, %v739
      %v741 = vpop.f32.mrf.mxu0
      %742 = vmatprep.mubr.f32.mxu0 0.0
      %743 = vmatmul.mubr.f32.gmra.mxu0 %v586
      %v744 = vpop.f32.mrf.mxu0
      %v745 = vadd.f32 %v484, %v744
      %v746 = vpop.f32.mrf.mxu0
      %747 = vmatprep.mubr.f32.mxu0 0.0
      %748 = vmatmul.mubr.f32.gmra.mxu0 %v588
      %v749 = vpop.f32.mrf.mxu0
      %v750 = vadd.f32 %v489, %v749
      %v751 = vpop.f32.mrf.mxu0
      %752 = vmatprep.mubr.f32.mxu0 0.0
      %753 = vmatmul.mubr.f32.gmra.mxu0 %v590
      %v754 = vpop.f32.mrf.mxu0
      %v755 = vadd.f32 %v494, %v754
      %v756 = vpop.f32.mrf.mxu0
      %757 = vmatprep.mubr.f32.mxu0 0.0
      %758 = vmatmul.mubr.f32.gmra.mxu0 %v592
      %v759 = vpop.f32.mrf.mxu0
      %v760 = vadd.f32 %v499, %v759
      %v761 = vpop.f32.mrf.mxu0
      %762 = vmatprep.mubr.f32.mxu0 0.0
      %763 = vmatmul.mubr.f32.gmra.mxu0 %v594
      %v764 = vpop.f32.mrf.mxu0
      %v765 = vadd.f32 %v504, %v764
      %v766 = vpop.f32.mrf.mxu0
      %767 = vmatprep.mubr.f32.mxu0 0.0
      %768 = vmatmul.mubr.f32.gmra.mxu0 %v596
      %v769 = vpop.f32.mrf.mxu0
      %v770 = vadd.f32 %v509, %v769
      %v771 = vpop.f32.mrf.mxu0
      %772 = vmatprep.mubr.f32.mxu0 0.0
      %773 = vmatmul.mubr.f32.gmra.mxu0 %v598
      %v774 = vpop.f32.mrf.mxu0
      %v775 = vadd.f32 %v514, %v774
      %v776 = vpop.f32.mrf.mxu0
      %777 = vmatprep.mubr.f32.mxu0 0.0
      %778 = vmatmul.mubr.f32.gmra.mxu0 %v600
      %v779 = vpop.f32.mrf.mxu0
      %v780 = vadd.f32 %v519, %v779
      %v781 = vpop.f32.mrf.mxu0
      %782 = vmatprep.mubr.f32.mxu0 0.0
      %783 = vmatmul.mubr.f32.gmra.mxu0 %v602
      %v784 = vpop.f32.mrf.mxu0
      %v785 = vadd.f32 %v524, %v784
      %v786 = vpop.f32.mrf.mxu0
      %787 = vmatprep.mubr.f32.mxu0 0.0
      %788 = vmatmul.mubr.f32.gmra.mxu0 %v604
      %v789 = vpop.f32.mrf.mxu0
      %v790 = vadd.f32 %v529, %v789
      %v791 = vpop.f32.mrf.mxu0
      %792 = vmatprep.mubr.f32.mxu0 0.0
      %793 = vmatmul.mubr.f32.gmra.mxu0 %v606
      %v794 = vpop.f32.mrf.mxu0
      %v795 = vadd.f32 %v534, %v794
      %v796 = vpop.f32.mrf.mxu0
      %797 = vmatprep.mubr.f32.mxu0 0.0
      %798 = vmatmul.mubr.f32.gmra.mxu0 %v608
      %v799 = vpop.f32.mrf.mxu0
      %v800 = vadd.f32 %v539, %v799
      %v801 = vpop.f32.mrf.mxu0
      %802 = vmatprep.mubr.f32.mxu0 0.0
      %803 = vmatmul.mubr.f32.gmra.mxu0 %v610
      %v804 = vpop.f32.mrf.mxu0
      %v805 = vadd.f32 %v544, %v804
      %v806 = vpop.f32.mrf.mxu0
      %807 = vmatprep.mubr.f32.mxu0 0.0
      %808 = vmatmul.mubr.f32.gmra.mxu0 %v612
      %v809 = vpop.f32.mrf.mxu0
      %v810 = vadd.f32 %v549, %v809
      %v811 = vpop.f32.mrf.mxu0
      %812 = vmatprep.mubr.f32.mxu0 0.0
      %813 = vmatmul.mubr.f32.gmra.mxu0 %v614
      %v814 = vpop.f32.mrf.mxu0
      %v815 = vadd.f32 %v554, %v814
      %v816 = vpop.f32.mrf.mxu0
      %817 = vmatprep.mubr.f32.mxu0 0.0
      %818 = vmatmul.mubr.f32.gmra.mxu0 %v616
      %v819 = vpop.f32.mrf.mxu0
      %v820 = vadd.f32 %v559, %v819
      %v821 = vpop.f32.mrf.mxu0
      %822 = vdwg.mxu0
      %s823 = scalar_lea.vmem %s1, 64
      %v824 = vld [vmem:[%s823] sm:$0xff]
      %v825 = vld [vmem:[%s823 + $0x8] sm:$0xff]
      %v826 = vld [vmem:[%s823 + $0x10] sm:$0xff]
      %v827 = vld [vmem:[%s823 + $0x18] sm:$0xff]
      %vm828 = vcmask 1045504
      %v829 = vrot.slane %v171, 2
      %v830 = vrot.slane %v172, 2
      %v831 = vsel %vm828, %v829, %v830
      %v832 = vrot.slane %v173, 2
      %v833 = vsel %vm828, %v830, %v832
      %v834 = vrot.slane %v174, 2
      %v835 = vsel %vm828, %v832, %v834
      %v836 = vrot.slane %v175, 2
      %v837 = vsel %vm828, %v834, %v836
      %v838 = vrot.slane %v176, 2
      %v839 = vsel %vm828, %v836, %v838
      %v840 = vrot.slane %v177, 2
      %v841 = vsel %vm828, %v838, %v840
      %v842 = vrot.slane %v178, 2
      %v843 = vsel %vm828, %v840, %v842
      %v844 = vrot.slane %v179, 2
      %v845 = vsel %vm828, %v842, %v844
      %v846 = vrot.slane %v180, 2
      %v847 = vsel %vm828, %v844, %v846
      %v848 = vrot.slane %v181, 2
      %v849 = vsel %vm828, %v846, %v848
      %v850 = vrot.slane %v182, 2
      %v851 = vsel %vm828, %v848, %v850
      %v852 = vrot.slane %v183, 2
      %v853 = vsel %vm828, %v850, %v852
      %v854 = vrot.slane %v184, 2
      %v855 = vsel %vm828, %v852, %v854
      %v856 = vrot.slane %v185, 2
      %v857 = vsel %vm828, %v854, %v856
      %v858 = vrot.slane %v186, 2
      %v859 = vsel %vm828, %v856, %v858
      %v860 = vrot.slane %v187, 2
      %v861 = vsel %vm828, %v858, %v860
      %v862 = vrot.slane %v188, 2
      %v863 = vsel %vm828, %v860, %v862
      %v864 = vrot.slane %v189, 2
      %v865 = vsel %vm828, %v862, %v864
      %v866 = vrot.slane %v190, 2
      %v867 = vsel %vm828, %v864, %v866
      %v868 = vrot.slane %v191, 2
      %v869 = vsel %vm828, %v866, %v868
      %v870 = vrot.slane %v192, 2
      %v871 = vsel %vm828, %v868, %v870
      %v872 = vrot.slane %v193, 2
      %v873 = vsel %vm828, %v870, %v872
      %v874 = vrot.slane %v194, 2
      %v875 = vsel %vm828, %v872, %v874
      %v876 = vrot.slane %v195, 2
      %v877 = vsel %vm828, %v874, %v876
      %v878 = vrot.slane %v196, 2
      %v879 = vsel %vm828, %v876, %v878
      %v880 = vrot.slane %v197, 2
      %v881 = vsel %vm828, %v878, %v880
      %v882 = vrot.slane %v198, 2
      %v883 = vsel %vm828, %v880, %v882
      %v884 = vrot.slane %v199, 2
      %v885 = vsel %vm828, %v882, %v884
      %v886 = vsel %vm300, %v831, 0
      %v888 = vsel %vm300, %v833, 0
      %v890 = vsel %vm300, %v835, 0
      %v892 = vsel %vm300, %v837, 0
      %v894 = vsel %vm300, %v839, 0
      %v896 = vsel %vm300, %v841, 0
      %v898 = vsel %vm300, %v843, 0
      %v900 = vsel %vm300, %v845, 0
      %v902 = vsel %vm300, %v847, 0
      %v904 = vsel %vm300, %v849, 0
      %v906 = vsel %vm300, %v851, 0
      %v908 = vsel %vm300, %v853, 0
      %v910 = vsel %vm300, %v855, 0
      %v912 = vsel %vm300, %v857, 0
      %v914 = vsel %vm300, %v859, 0
      %v916 = vsel %vm300, %v861, 0
      %v918 = vsel %vm300, %v863, 0
      %v920 = vsel %vm300, %v865, 0
      %v922 = vsel %vm300, %v867, 0
      %v924 = vsel %vm300, %v869, 0
      %v926 = vsel %vm300, %v871, 0
      %v928 = vsel %vm300, %v873, 0
      %v930 = vsel %vm300, %v875, 0
      %v932 = vsel %vm300, %v877, 0
      %v934 = vsel %vm300, %v879, 0
      %v936 = vsel %vm300, %v881, 0
      %v938 = vsel %vm300, %v883, 0
      %v940 = vsel %vm300, %v885, 0
      %942 = vmatprep.subr.mxu0 0.0
      %943 = vmatpush1.msra.mxu0 0.0
      %944 = vmatprep.subr.mxu0 0.0
      %945 = vmatpush1.msra.mxu0 0.0
      %946 = vmatprep.subr.mxu0 0.0
      %947 = vmatpush1.msra.mxu0 0.0
      %948 = vmatprep.subr.mxu0 0.0
      %949 = vmatpush1.msra.mxu0 0.0
      %950 = vmatprep.subr.mxu0 0.0
      %951 = vmatpush1.msra.mxu0 0.0
      %952 = vmatprep.subr.mxu0 0.0
      %953 = vmatpush1.msra.mxu0 0.0
      %954 = vmatprep.subr.mxu0 0.0
      %955 = vmatpush1.msra.mxu0 0.0
      %956 = vmatprep.subr.mxu0 0.0
      %957 = vmatpush1.msra.mxu0 0.0
      %958 = vmatprep.subr.mxu0 0.0
      %959 = vmatpush1.msra.mxu0 0.0
      %960 = vmatprep.subr.mxu0 0.0
      %961 = vmatpush1.msra.mxu0 0.0
      %962 = vmatprep.subr.mxu0 0.0
      %963 = vmatpush1.msra.mxu0 0.0
      %964 = vmatprep.subr.mxu0 0.0
      %965 = vmatpush1.msra.mxu0 0.0
      %966 = vmatprep.subr.mxu0 0.0
      %967 = vmatpush1.msra.mxu0 %v827
      %968 = vmatprep.subr.mxu0 0.0
      %969 = vmatpush1.msra.mxu0 %v826
      %970 = vmatprep.subr.mxu0 0.0
      %971 = vmatpush1.msra.mxu0 %v825
      %972 = vmatprep.subr.mxu0 0.0
      %973 = vmatpush1.msra.mxu0 %v824
      %974 = vmatprep.subr.mxu0 0.0
      %975 = vmatpush2.msra.mxu0 0.0
      %976 = vmatprep.subr.mxu0 0.0
      %977 = vmatpush2.msra.mxu0 0.0
      %978 = vmatprep.subr.mxu0 0.0
      %979 = vmatpush2.msra.mxu0 0.0
      %980 = vmatprep.subr.mxu0 0.0
      %981 = vmatpush2.msra.mxu0 0.0
      %982 = vmatprep.subr.mxu0 0.0
      %983 = vmatpush2.msra.mxu0 0.0
      %984 = vmatprep.subr.mxu0 0.0
      %985 = vmatpush2.msra.mxu0 0.0
      %986 = vmatprep.subr.mxu0 0.0
      %987 = vmatpush2.msra.mxu0 0.0
      %988 = vmatprep.subr.mxu0 0.0
      %989 = vmatpush2.msra.mxu0 0.0
      %990 = vmatprep.subr.mxu0 0.0
      %991 = vmatpush2.msra.mxu0 0.0
      %992 = vmatprep.subr.mxu0 0.0
      %993 = vmatpush2.msra.mxu0 0.0
      %994 = vmatprep.subr.mxu0 0.0
      %995 = vmatpush2.msra.mxu0 0.0
      %996 = vmatprep.subr.mxu0 0.0
      %997 = vmatpush2.msra.mxu0 0.0
      %998 = vmatprep.subr.mxu0 0.0
      %999 = vmatpush2.msra.mxu0 0.0
      %1000 = vmatprep.subr.mxu0 0.0
      %1001 = vmatpush2.msra.mxu0 0.0
      %1002 = vmatprep.subr.mxu0 0.0
      %1003 = vmatpush2.msra.mxu0 0.0
      %1004 = vmatprep.subr.mxu0 0.0
      %1005 = vmatpush2.msra.mxu0 0.0
      %1006 = vmatprep.mubr.f32.mxu0 0.0
      %1007 = vmatmul.mubr.f32.gmra.mxu0 %v886
      %v1008 = vpop.f32.mrf.mxu0
      %v1009 = vadd.f32 0.0, %v1008
      %v1010 = vpop.f32.mrf.mxu0
      %1011 = vmatprep.mubr.f32.mxu0 0.0
      %1012 = vmatmul.mubr.f32.gmra.mxu0 %v888
      %v1013 = vpop.f32.mrf.mxu0
      %v1014 = vadd.f32 0.0, %v1013
      %v1015 = vpop.f32.mrf.mxu0
      %1016 = vmatprep.mubr.f32.mxu0 0.0
      %1017 = vmatmul.mubr.f32.gmra.mxu0 %v890
      %v1018 = vpop.f32.mrf.mxu0
      %v1019 = vadd.f32 0.0, %v1018
      %v1020 = vpop.f32.mrf.mxu0
      %1021 = vmatprep.mubr.f32.mxu0 0.0
      %1022 = vmatmul.mubr.f32.gmra.mxu0 %v892
      %v1023 = vpop.f32.mrf.mxu0
      %v1024 = vadd.f32 0.0, %v1023
      %v1025 = vpop.f32.mrf.mxu0
      %1026 = vmatprep.mubr.f32.mxu0 0.0
      %1027 = vmatmul.mubr.f32.gmra.mxu0 %v894
      %v1028 = vpop.f32.mrf.mxu0
      %v1029 = vadd.f32 0.0, %v1028
      %v1030 = vpop.f32.mrf.mxu0
      %1031 = vmatprep.mubr.f32.mxu0 0.0
      %1032 = vmatmul.mubr.f32.gmra.mxu0 %v896
      %v1033 = vpop.f32.mrf.mxu0
      %v1034 = vadd.f32 0.0, %v1033
      %v1035 = vpop.f32.mrf.mxu0
      %1036 = vmatprep.mubr.f32.mxu0 0.0
      %1037 = vmatmul.mubr.f32.gmra.mxu0 %v898
      %v1038 = vpop.f32.mrf.mxu0
      %v1039 = vadd.f32 0.0, %v1038
      %v1040 = vpop.f32.mrf.mxu0
      %1041 = vmatprep.mubr.f32.mxu0 0.0
      %1042 = vmatmul.mubr.f32.gmra.mxu0 %v900
      %v1043 = vpop.f32.mrf.mxu0
      %v1044 = vadd.f32 0.0, %v1043
      %v1045 = vpop.f32.mrf.mxu0
      %1046 = vmatprep.mubr.f32.mxu0 0.0
      %1047 = vmatmul.mubr.f32.gmra.mxu0 %v902
      %v1048 = vpop.f32.mrf.mxu0
      %v1049 = vadd.f32 0.0, %v1048
      %v1050 = vpop.f32.mrf.mxu0
      %1051 = vmatprep.mubr.f32.mxu0 0.0
      %1052 = vmatmul.mubr.f32.gmra.mxu0 %v904
      %v1053 = vpop.f32.mrf.mxu0
      %v1054 = vadd.f32 0.0, %v1053
      %v1055 = vpop.f32.mrf.mxu0
      %1056 = vmatprep.mubr.f32.mxu0 0.0
      %1057 = vmatmul.mubr.f32.gmra.mxu0 %v906
      %v1058 = vpop.f32.mrf.mxu0
      %v1059 = vadd.f32 0.0, %v1058
      %v1060 = vpop.f32.mrf.mxu0
      %1061 = vmatprep.mubr.f32.mxu0 0.0
      %1062 = vmatmul.mubr.f32.gmra.mxu0 %v908
      %v1063 = vpop.f32.mrf.mxu0
      %v1064 = vadd.f32 0.0, %v1063
      %v1065 = vpop.f32.mrf.mxu0
      %1066 = vmatprep.mubr.f32.mxu0 0.0
      %1067 = vmatmul.mubr.f32.gmra.mxu0 %v910
      %v1068 = vpop.f32.mrf.mxu0
      %v1069 = vadd.f32 0.0, %v1068
      %v1070 = vpop.f32.mrf.mxu0
      %1071 = vmatprep.mubr.f32.mxu0 0.0
      %1072 = vmatmul.mubr.f32.gmra.mxu0 %v912
      %v1073 = vpop.f32.mrf.mxu0
      %v1074 = vadd.f32 0.0, %v1073
      %v1075 = vpop.f32.mrf.mxu0
      %1076 = vmatprep.mubr.f32.mxu0 0.0
      %1077 = vmatmul.mubr.f32.gmra.mxu0 %v914
      %v1078 = vpop.f32.mrf.mxu0
      %v1079 = vadd.f32 0.0, %v1078
      %v1080 = vpop.f32.mrf.mxu0
      %1081 = vmatprep.mubr.f32.mxu0 0.0
      %1082 = vmatmul.mubr.f32.gmra.mxu0 %v916
      %v1083 = vpop.f32.mrf.mxu0
      %v1084 = vadd.f32 0.0, %v1083
      %v1085 = vpop.f32.mrf.mxu0
      %1086 = vmatprep.mubr.f32.mxu0 0.0
      %1087 = vmatmul.mubr.f32.gmra.mxu0 %v918
      %v1088 = vpop.f32.mrf.mxu0
      %v1089 = vadd.f32 0.0, %v1088
      %v1090 = vpop.f32.mrf.mxu0
      %1091 = vmatprep.mubr.f32.mxu0 0.0
      %1092 = vmatmul.mubr.f32.gmra.mxu0 %v920
      %v1093 = vpop.f32.mrf.mxu0
      %v1094 = vadd.f32 0.0, %v1093
      %v1095 = vpop.f32.mrf.mxu0
      %1096 = vmatprep.mubr.f32.mxu0 0.0
      %1097 = vmatmul.mubr.f32.gmra.mxu0 %v922
      %v1098 = vpop.f32.mrf.mxu0
      %v1099 = vadd.f32 0.0, %v1098
      %v1100 = vpop.f32.mrf.mxu0
      %1101 = vmatprep.mubr.f32.mxu0 0.0
      %1102 = vmatmul.mubr.f32.gmra.mxu0 %v924
      %v1103 = vpop.f32.mrf.mxu0
      %v1104 = vadd.f32 0.0, %v1103
      %v1105 = vpop.f32.mrf.mxu0
      %1106 = vmatprep.mubr.f32.mxu0 0.0
      %1107 = vmatmul.mubr.f32.gmra.mxu0 %v926
      %v1108 = vpop.f32.mrf.mxu0
      %v1109 = vadd.f32 0.0, %v1108
      %v1110 = vpop.f32.mrf.mxu0
      %1111 = vmatprep.mubr.f32.mxu0 0.0
      %1112 = vmatmul.mubr.f32.gmra.mxu0 %v928
      %v1113 = vpop.f32.mrf.mxu0
      %v1114 = vadd.f32 0.0, %v1113
      %v1115 = vpop.f32.mrf.mxu0
      %1116 = vmatprep.mubr.f32.mxu0 0.0
      %1117 = vmatmul.mubr.f32.gmra.mxu0 %v930
      %v1118 = vpop.f32.mrf.mxu0
      %v1119 = vadd.f32 0.0, %v1118
      %v1120 = vpop.f32.mrf.mxu0
      %1121 = vmatprep.mubr.f32.mxu0 0.0
      %1122 = vmatmul.mubr.f32.gmra.mxu0 %v932
      %v1123 = vpop.f32.mrf.mxu0
      %v1124 = vadd.f32 0.0, %v1123
      %v1125 = vpop.f32.mrf.mxu0
      %1126 = vmatprep.mubr.f32.mxu0 0.0
      %1127 = vmatmul.mubr.f32.gmra.mxu0 %v934
      %v1128 = vpop.f32.mrf.mxu0
      %v1129 = vadd.f32 0.0, %v1128
      %v1130 = vpop.f32.mrf.mxu0
      %1131 = vmatprep.mubr.f32.mxu0 0.0
      %1132 = vmatmul.mubr.f32.gmra.mxu0 %v936
      %v1133 = vpop.f32.mrf.mxu0
      %v1134 = vadd.f32 0.0, %v1133
      %v1135 = vpop.f32.mrf.mxu0
      %1136 = vmatprep.mubr.f32.mxu0 0.0
      %1137 = vmatmul.mubr.f32.gmra.mxu0 %v938
      %v1138 = vpop.f32.mrf.mxu0
      %v1139 = vadd.f32 0.0, %v1138
      %v1140 = vpop.f32.mrf.mxu0
      %1141 = vmatprep.mubr.f32.mxu0 0.0
      %1142 = vmatmul.mubr.f32.gmra.mxu0 %v940
      %v1143 = vpop.f32.mrf.mxu0
      %v1144 = vadd.f32 0.0, %v1143
      %v1145 = vpop.f32.mrf.mxu0
      %1146 = vdwg.mxu0
      %v1147 = vadd.f32 %v685, %v1009
      %v1148 = vadd.f32 %v690, %v1014
      %v1149 = vadd.f32 %v695, %v1019
      %v1150 = vadd.f32 %v700, %v1024
      %v1151 = vadd.f32 %v705, %v1029
      %v1152 = vadd.f32 %v710, %v1034
      %v1153 = vadd.f32 %v715, %v1039
      %v1154 = vadd.f32 %v720, %v1044
      %v1155 = vadd.f32 %v725, %v1049
      %v1156 = vadd.f32 %v730, %v1054
      %v1157 = vadd.f32 %v735, %v1059
      %v1158 = vadd.f32 %v740, %v1064
      %v1159 = vadd.f32 %v745, %v1069
      %v1160 = vadd.f32 %v750, %v1074
      %v1161 = vadd.f32 %v755, %v1079
      %v1162 = vadd.f32 %v760, %v1084
      %v1163 = vadd.f32 %v765, %v1089
      %v1164 = vadd.f32 %v770, %v1094
      %v1165 = vadd.f32 %v775, %v1099
      %v1166 = vadd.f32 %v780, %v1104
      %v1167 = vadd.f32 %v785, %v1109
      %v1168 = vadd.f32 %v790, %v1114
      %v1169 = vadd.f32 %v795, %v1119
      %v1170 = vadd.f32 %v800, %v1124
      %v1171 = vadd.f32 %v805, %v1129
      %v1172 = vadd.f32 %v810, %v1134
      %v1173 = vadd.f32 %v815, %v1139
      %v1174 = vadd.f32 %v820, %v1144
      %s1175 = scalar_lea.vmem %s1, 96
      %v1176 = vld [vmem:[%s1175] sm:$0xff]
      %v1177 = vld [vmem:[%s1175 + $0x8] sm:$0xff]
      %v1178 = vld [vmem:[%s1175 + $0x10] sm:$0xff]
      %v1179 = vld [vmem:[%s1175 + $0x18] sm:$0xff]
      %v1180 = vsel %vm300, %v199, 0
      %v1183 = vsel %vm300, %v200, 0
      %1185 = vmatprep.subr.mxu0 0.0
      %1186 = vmatpush1.msra.mxu0 0.0
      %1187 = vmatprep.subr.mxu0 0.0
      %1188 = vmatpush1.msra.mxu0 0.0
      %1189 = vmatprep.subr.mxu0 0.0
      %1190 = vmatpush1.msra.mxu0 0.0
      %1191 = vmatprep.subr.mxu0 0.0
      %1192 = vmatpush1.msra.mxu0 0.0
      %1193 = vmatprep.subr.mxu0 0.0
      %1194 = vmatpush1.msra.mxu0 0.0
      %1195 = vmatprep.subr.mxu0 0.0
      %1196 = vmatpush1.msra.mxu0 0.0
      %1197 = vmatprep.subr.mxu0 0.0
      %1198 = vmatpush1.msra.mxu0 0.0
      %1199 = vmatprep.subr.mxu0 0.0
      %1200 = vmatpush1.msra.mxu0 0.0
      %1201 = vmatprep.subr.mxu0 0.0
      %1202 = vmatpush1.msra.mxu0 0.0
      %1203 = vmatprep.subr.mxu0 0.0
      %1204 = vmatpush1.msra.mxu0 0.0
      %1205 = vmatprep.subr.mxu0 0.0
      %1206 = vmatpush1.msra.mxu0 0.0
      %1207 = vmatprep.subr.mxu0 0.0
      %1208 = vmatpush1.msra.mxu0 0.0
      %1209 = vmatprep.subr.mxu0 0.0
      %1210 = vmatpush1.msra.mxu0 %v1179
      %1211 = vmatprep.subr.mxu0 0.0
      %1212 = vmatpush1.msra.mxu0 %v1178
      %1213 = vmatprep.subr.mxu0 0.0
      %1214 = vmatpush1.msra.mxu0 %v1177
      %1215 = vmatprep.subr.mxu0 0.0
      %1216 = vmatpush1.msra.mxu0 %v1176
      %1217 = vmatprep.subr.mxu0 0.0
      %1218 = vmatpush2.msra.mxu0 0.0
      %1219 = vmatprep.subr.mxu0 0.0
      %1220 = vmatpush2.msra.mxu0 0.0
      %1221 = vmatprep.subr.mxu0 0.0
      %1222 = vmatpush2.msra.mxu0 0.0
      %1223 = vmatprep.subr.mxu0 0.0
      %1224 = vmatpush2.msra.mxu0 0.0
      %1225 = vmatprep.subr.mxu0 0.0
      %1226 = vmatpush2.msra.mxu0 0.0
      %1227 = vmatprep.subr.mxu0 0.0
      %1228 = vmatpush2.msra.mxu0 0.0
      %1229 = vmatprep.subr.mxu0 0.0
      %1230 = vmatpush2.msra.mxu0 0.0
      %1231 = vmatprep.subr.mxu0 0.0
      %1232 = vmatpush2.msra.mxu0 0.0
      %1233 = vmatprep.subr.mxu0 0.0
      %1234 = vmatpush2.msra.mxu0 0.0
      %1235 = vmatprep.subr.mxu0 0.0
      %1236 = vmatpush2.msra.mxu0 0.0
      %1237 = vmatprep.subr.mxu0 0.0
      %1238 = vmatpush2.msra.mxu0 0.0
      %1239 = vmatprep.subr.mxu0 0.0
      %1240 = vmatpush2.msra.mxu0 0.0
      %1241 = vmatprep.subr.mxu0 0.0
      %1242 = vmatpush2.msra.mxu0 0.0
      %1243 = vmatprep.subr.mxu0 0.0
      %1244 = vmatpush2.msra.mxu0 0.0
      %1245 = vmatprep.subr.mxu0 0.0
      %1246 = vmatpush2.msra.mxu0 0.0
      %1247 = vmatprep.subr.mxu0 0.0
      %1248 = vmatpush2.msra.mxu0 0.0
      %1249 = vmatprep.mubr.f32.mxu0 0.0
      %1250 = vmatmul.mubr.f32.gmra.mxu0 %v566
      %v1251 = vpop.f32.mrf.mxu0
      %v1252 = vadd.f32 0.0, %v1251
      %v1253 = vpop.f32.mrf.mxu0
      %1254 = vmatprep.mubr.f32.mxu0 0.0
      %1255 = vmatmul.mubr.f32.gmra.mxu0 %v568
      %v1256 = vpop.f32.mrf.mxu0
      %v1257 = vadd.f32 0.0, %v1256
      %v1258 = vpop.f32.mrf.mxu0
      %1259 = vmatprep.mubr.f32.mxu0 0.0
      %1260 = vmatmul.mubr.f32.gmra.mxu0 %v570
      %v1261 = vpop.f32.mrf.mxu0
      %v1262 = vadd.f32 0.0, %v1261
      %v1263 = vpop.f32.mrf.mxu0
      %1264 = vmatprep.mubr.f32.mxu0 0.0
      %1265 = vmatmul.mubr.f32.gmra.mxu0 %v572
      %v1266 = vpop.f32.mrf.mxu0
      %v1267 = vadd.f32 0.0, %v1266
      %v1268 = vpop.f32.mrf.mxu0
      %1269 = vmatprep.mubr.f32.mxu0 0.0
      %1270 = vmatmul.mubr.f32.gmra.mxu0 %v574
      %v1271 = vpop.f32.mrf.mxu0
      %v1272 = vadd.f32 0.0, %v1271
      %v1273 = vpop.f32.mrf.mxu0
      %1274 = vmatprep.mubr.f32.mxu0 0.0
      %1275 = vmatmul.mubr.f32.gmra.mxu0 %v576
      %v1276 = vpop.f32.mrf.mxu0
      %v1277 = vadd.f32 0.0, %v1276
      %v1278 = vpop.f32.mrf.mxu0
      %1279 = vmatprep.mubr.f32.mxu0 0.0
      %1280 = vmatmul.mubr.f32.gmra.mxu0 %v578
      %v1281 = vpop.f32.mrf.mxu0
      %v1282 = vadd.f32 0.0, %v1281
      %v1283 = vpop.f32.mrf.mxu0
      %1284 = vmatprep.mubr.f32.mxu0 0.0
      %1285 = vmatmul.mubr.f32.gmra.mxu0 %v580
      %v1286 = vpop.f32.mrf.mxu0
      %v1287 = vadd.f32 0.0, %v1286
      %v1288 = vpop.f32.mrf.mxu0
      %1289 = vmatprep.mubr.f32.mxu0 0.0
      %1290 = vmatmul.mubr.f32.gmra.mxu0 %v582
      %v1291 = vpop.f32.mrf.mxu0
      %v1292 = vadd.f32 0.0, %v1291
      %v1293 = vpop.f32.mrf.mxu0
      %1294 = vmatprep.mubr.f32.mxu0 0.0
      %1295 = vmatmul.mubr.f32.gmra.mxu0 %v584
      %v1296 = vpop.f32.mrf.mxu0
      %v1297 = vadd.f32 0.0, %v1296
      %v1298 = vpop.f32.mrf.mxu0
      %1299 = vmatprep.mubr.f32.mxu0 0.0
      %1300 = vmatmul.mubr.f32.gmra.mxu0 %v586
      %v1301 = vpop.f32.mrf.mxu0
      %v1302 = vadd.f32 0.0, %v1301
      %v1303 = vpop.f32.mrf.mxu0
      %1304 = vmatprep.mubr.f32.mxu0 0.0
      %1305 = vmatmul.mubr.f32.gmra.mxu0 %v588
      %v1306 = vpop.f32.mrf.mxu0
      %v1307 = vadd.f32 0.0, %v1306
      %v1308 = vpop.f32.mrf.mxu0
      %1309 = vmatprep.mubr.f32.mxu0 0.0
      %1310 = vmatmul.mubr.f32.gmra.mxu0 %v590
      %v1311 = vpop.f32.mrf.mxu0
      %v1312 = vadd.f32 0.0, %v1311
      %v1313 = vpop.f32.mrf.mxu0
      %1314 = vmatprep.mubr.f32.mxu0 0.0
      %1315 = vmatmul.mubr.f32.gmra.mxu0 %v592
      %v1316 = vpop.f32.mrf.mxu0
      %v1317 = vadd.f32 0.0, %v1316
      %v1318 = vpop.f32.mrf.mxu0
      %1319 = vmatprep.mubr.f32.mxu0 0.0
      %1320 = vmatmul.mubr.f32.gmra.mxu0 %v594
      %v1321 = vpop.f32.mrf.mxu0
      %v1322 = vadd.f32 0.0, %v1321
      %v1323 = vpop.f32.mrf.mxu0
      %1324 = vmatprep.mubr.f32.mxu0 0.0
      %1325 = vmatmul.mubr.f32.gmra.mxu0 %v596
      %v1326 = vpop.f32.mrf.mxu0
      %v1327 = vadd.f32 0.0, %v1326
      %v1328 = vpop.f32.mrf.mxu0
      %1329 = vmatprep.mubr.f32.mxu0 0.0
      %1330 = vmatmul.mubr.f32.gmra.mxu0 %v598
      %v1331 = vpop.f32.mrf.mxu0
      %v1332 = vadd.f32 0.0, %v1331
      %v1333 = vpop.f32.mrf.mxu0
      %1334 = vmatprep.mubr.f32.mxu0 0.0
      %1335 = vmatmul.mubr.f32.gmra.mxu0 %v600
      %v1336 = vpop.f32.mrf.mxu0
      %v1337 = vadd.f32 0.0, %v1336
      %v1338 = vpop.f32.mrf.mxu0
      %1339 = vmatprep.mubr.f32.mxu0 0.0
      %1340 = vmatmul.mubr.f32.gmra.mxu0 %v602
      %v1341 = vpop.f32.mrf.mxu0
      %v1342 = vadd.f32 0.0, %v1341
      %v1343 = vpop.f32.mrf.mxu0
      %1344 = vmatprep.mubr.f32.mxu0 0.0
      %1345 = vmatmul.mubr.f32.gmra.mxu0 %v604
      %v1346 = vpop.f32.mrf.mxu0
      %v1347 = vadd.f32 0.0, %v1346
      %v1348 = vpop.f32.mrf.mxu0
      %1349 = vmatprep.mubr.f32.mxu0 0.0
      %1350 = vmatmul.mubr.f32.gmra.mxu0 %v606
      %v1351 = vpop.f32.mrf.mxu0
      %v1352 = vadd.f32 0.0, %v1351
      %v1353 = vpop.f32.mrf.mxu0
      %1354 = vmatprep.mubr.f32.mxu0 0.0
      %1355 = vmatmul.mubr.f32.gmra.mxu0 %v608
      %v1356 = vpop.f32.mrf.mxu0
      %v1357 = vadd.f32 0.0, %v1356
      %v1358 = vpop.f32.mrf.mxu0
      %1359 = vmatprep.mubr.f32.mxu0 0.0
      %1360 = vmatmul.mubr.f32.gmra.mxu0 %v610
      %v1361 = vpop.f32.mrf.mxu0
      %v1362 = vadd.f32 0.0, %v1361
      %v1363 = vpop.f32.mrf.mxu0
      %1364 = vmatprep.mubr.f32.mxu0 0.0
      %1365 = vmatmul.mubr.f32.gmra.mxu0 %v612
      %v1366 = vpop.f32.mrf.mxu0
      %v1367 = vadd.f32 0.0, %v1366
      %v1368 = vpop.f32.mrf.mxu0
      %1369 = vmatprep.mubr.f32.mxu0 0.0
      %1370 = vmatmul.mubr.f32.gmra.mxu0 %v614
      %v1371 = vpop.f32.mrf.mxu0
      %v1372 = vadd.f32 0.0, %v1371
      %v1373 = vpop.f32.mrf.mxu0
      %1374 = vmatprep.mubr.f32.mxu0 0.0
      %1375 = vmatmul.mubr.f32.gmra.mxu0 %v616
      %v1376 = vpop.f32.mrf.mxu0
      %v1377 = vadd.f32 0.0, %v1376
      %v1378 = vpop.f32.mrf.mxu0
      %1379 = vmatprep.mubr.f32.mxu0 0.0
      %1380 = vmatmul.mubr.f32.gmra.mxu0 %v1180
      %v1381 = vpop.f32.mrf.mxu0
      %v1382 = vadd.f32 0.0, %v1381
      %v1383 = vpop.f32.mrf.mxu0
      %1384 = vmatprep.mubr.f32.mxu0 0.0
      %1385 = vmatmul.mubr.f32.gmra.mxu0 %v1183
      %v1386 = vpop.f32.mrf.mxu0
      %v1387 = vadd.f32 0.0, %v1386
      %v1388 = vpop.f32.mrf.mxu0
      %1389 = vdwg.mxu0
      %v1390 = vadd.f32 %v1147, %v1252
      %v1391 = vadd.f32 %v1148, %v1257
      %v1392 = vadd.f32 %v1149, %v1262
      %v1393 = vadd.f32 %v1150, %v1267
      %v1394 = vadd.f32 %v1151, %v1272
      %v1395 = vadd.f32 %v1152, %v1277
      %v1396 = vadd.f32 %v1153, %v1282
      %v1397 = vadd.f32 %v1154, %v1287
      %v1398 = vadd.f32 %v1155, %v1292
      %v1399 = vadd.f32 %v1156, %v1297
      %v1400 = vadd.f32 %v1157, %v1302
      %v1401 = vadd.f32 %v1158, %v1307
      %v1402 = vadd.f32 %v1159, %v1312
      %v1403 = vadd.f32 %v1160, %v1317
      %v1404 = vadd.f32 %v1161, %v1322
      %v1405 = vadd.f32 %v1162, %v1327
      %v1406 = vadd.f32 %v1163, %v1332
      %v1407 = vadd.f32 %v1164, %v1337
      %v1408 = vadd.f32 %v1165, %v1342
      %v1409 = vadd.f32 %v1166, %v1347
      %v1410 = vadd.f32 %v1167, %v1352
      %v1411 = vadd.f32 %v1168, %v1357
      %v1412 = vadd.f32 %v1169, %v1362
      %v1413 = vadd.f32 %v1170, %v1367
      %v1414 = vadd.f32 %v1171, %v1372
      %v1415 = vadd.f32 %v1172, %v1377
      %v1416 = vadd.f32 %v1173, %v1382
      %v1417 = vadd.f32 %v1174, %v1387
      %s1418 = scalar_lea.vmem %s1, 128
      %v1419 = vld [vmem:[%s1418] sm:$0xff]
      %v1420 = vld [vmem:[%s1418 + $0x8] sm:$0xff]
      %v1421 = vld [vmem:[%s1418 + $0x10] sm:$0xff]
      %v1422 = vld [vmem:[%s1418 + $0x18] sm:$0xff]
      %v1424 = vrot.slane %v200, 1
      %v1425 = vsel %vm242, %v298, %v1424
      %v1426 = vrot.slane %v201, 1
      %v1427 = vsel %vm242, %v1424, %v1426
      %v1428 = vsel %vm300, %v1425, 0
      %v1430 = vsel %vm300, %v1427, 0
      %1432 = vmatprep.subr.mxu0 0.0
      %1433 = vmatpush1.msra.mxu0 0.0
      %1434 = vmatprep.subr.mxu0 0.0
      %1435 = vmatpush1.msra.mxu0 0.0
      %1436 = vmatprep.subr.mxu0 0.0
      %1437 = vmatpush1.msra.mxu0 0.0
      %1438 = vmatprep.subr.mxu0 0.0
      %1439 = vmatpush1.msra.mxu0 0.0
      %1440 = vmatprep.subr.mxu0 0.0
      %1441 = vmatpush1.msra.mxu0 0.0
      %1442 = vmatprep.subr.mxu0 0.0
      %1443 = vmatpush1.msra.mxu0 0.0
      %1444 = vmatprep.subr.mxu0 0.0
      %1445 = vmatpush1.msra.mxu0 0.0
      %1446 = vmatprep.subr.mxu0 0.0
      %1447 = vmatpush1.msra.mxu0 0.0
      %1448 = vmatprep.subr.mxu0 0.0
      %1449 = vmatpush1.msra.mxu0 0.0
      %1450 = vmatprep.subr.mxu0 0.0
      %1451 = vmatpush1.msra.mxu0 0.0
      %1452 = vmatprep.subr.mxu0 0.0
      %1453 = vmatpush1.msra.mxu0 0.0
      %1454 = vmatprep.subr.mxu0 0.0
      %1455 = vmatpush1.msra.mxu0 0.0
      %1456 = vmatprep.subr.mxu0 0.0
      %1457 = vmatpush1.msra.mxu0 %v1422
      %1458 = vmatprep.subr.mxu0 0.0
      %1459 = vmatpush1.msra.mxu0 %v1421
      %1460 = vmatprep.subr.mxu0 0.0
      %1461 = vmatpush1.msra.mxu0 %v1420
      %1462 = vmatprep.subr.mxu0 0.0
      %1463 = vmatpush1.msra.mxu0 %v1419
      %1464 = vmatprep.subr.mxu0 0.0
      %1465 = vmatpush2.msra.mxu0 0.0
      %1466 = vmatprep.subr.mxu0 0.0
      %1467 = vmatpush2.msra.mxu0 0.0
      %1468 = vmatprep.subr.mxu0 0.0
      %1469 = vmatpush2.msra.mxu0 0.0
      %1470 = vmatprep.subr.mxu0 0.0
      %1471 = vmatpush2.msra.mxu0 0.0
      %1472 = vmatprep.subr.mxu0 0.0
      %1473 = vmatpush2.msra.mxu0 0.0
      %1474 = vmatprep.subr.mxu0 0.0
      %1475 = vmatpush2.msra.mxu0 0.0
      %1476 = vmatprep.subr.mxu0 0.0
      %1477 = vmatpush2.msra.mxu0 0.0
      %1478 = vmatprep.subr.mxu0 0.0
      %1479 = vmatpush2.msra.mxu0 0.0
      %1480 = vmatprep.subr.mxu0 0.0
      %1481 = vmatpush2.msra.mxu0 0.0
      %1482 = vmatprep.subr.mxu0 0.0
      %1483 = vmatpush2.msra.mxu0 0.0
      %1484 = vmatprep.subr.mxu0 0.0
      %1485 = vmatpush2.msra.mxu0 0.0
      %1486 = vmatprep.subr.mxu0 0.0
      %1487 = vmatpush2.msra.mxu0 0.0
      %1488 = vmatprep.subr.mxu0 0.0
      %1489 = vmatpush2.msra.mxu0 0.0
      %1490 = vmatprep.subr.mxu0 0.0
      %1491 = vmatpush2.msra.mxu0 0.0
      %1492 = vmatprep.subr.mxu0 0.0
      %1493 = vmatpush2.msra.mxu0 0.0
      %1494 = vmatprep.subr.mxu0 0.0
      %1495 = vmatpush2.msra.mxu0 0.0
      %1496 = vmatprep.mubr.f32.mxu0 0.0
      %1497 = vmatmul.mubr.f32.gmra.mxu0 %v305
      %v1498 = vpop.f32.mrf.mxu0
      %v1499 = vadd.f32 0.0, %v1498
      %v1500 = vpop.f32.mrf.mxu0
      %1501 = vmatprep.mubr.f32.mxu0 0.0
      %1502 = vmatmul.mubr.f32.gmra.mxu0 %v307
      %v1503 = vpop.f32.mrf.mxu0
      %v1504 = vadd.f32 0.0, %v1503
      %v1505 = vpop.f32.mrf.mxu0
      %1506 = vmatprep.mubr.f32.mxu0 0.0
      %1507 = vmatmul.mubr.f32.gmra.mxu0 %v309
      %v1508 = vpop.f32.mrf.mxu0
      %v1509 = vadd.f32 0.0, %v1508
      %v1510 = vpop.f32.mrf.mxu0
      %1511 = vmatprep.mubr.f32.mxu0 0.0
      %1512 = vmatmul.mubr.f32.gmra.mxu0 %v311
      %v1513 = vpop.f32.mrf.mxu0
      %v1514 = vadd.f32 0.0, %v1513
      %v1515 = vpop.f32.mrf.mxu0
      %1516 = vmatprep.mubr.f32.mxu0 0.0
      %1517 = vmatmul.mubr.f32.gmra.mxu0 %v313
      %v1518 = vpop.f32.mrf.mxu0
      %v1519 = vadd.f32 0.0, %v1518
      %v1520 = vpop.f32.mrf.mxu0
      %1521 = vmatprep.mubr.f32.mxu0 0.0
      %1522 = vmatmul.mubr.f32.gmra.mxu0 %v315
      %v1523 = vpop.f32.mrf.mxu0
      %v1524 = vadd.f32 0.0, %v1523
      %v1525 = vpop.f32.mrf.mxu0
      %1526 = vmatprep.mubr.f32.mxu0 0.0
      %1527 = vmatmul.mubr.f32.gmra.mxu0 %v317
      %v1528 = vpop.f32.mrf.mxu0
      %v1529 = vadd.f32 0.0, %v1528
      %v1530 = vpop.f32.mrf.mxu0
      %1531 = vmatprep.mubr.f32.mxu0 0.0
      %1532 = vmatmul.mubr.f32.gmra.mxu0 %v319
      %v1533 = vpop.f32.mrf.mxu0
      %v1534 = vadd.f32 0.0, %v1533
      %v1535 = vpop.f32.mrf.mxu0
      %1536 = vmatprep.mubr.f32.mxu0 0.0
      %1537 = vmatmul.mubr.f32.gmra.mxu0 %v321
      %v1538 = vpop.f32.mrf.mxu0
      %v1539 = vadd.f32 0.0, %v1538
      %v1540 = vpop.f32.mrf.mxu0
      %1541 = vmatprep.mubr.f32.mxu0 0.0
      %1542 = vmatmul.mubr.f32.gmra.mxu0 %v323
      %v1543 = vpop.f32.mrf.mxu0
      %v1544 = vadd.f32 0.0, %v1543
      %v1545 = vpop.f32.mrf.mxu0
      %1546 = vmatprep.mubr.f32.mxu0 0.0
      %1547 = vmatmul.mubr.f32.gmra.mxu0 %v325
      %v1548 = vpop.f32.mrf.mxu0
      %v1549 = vadd.f32 0.0, %v1548
      %v1550 = vpop.f32.mrf.mxu0
      %1551 = vmatprep.mubr.f32.mxu0 0.0
      %1552 = vmatmul.mubr.f32.gmra.mxu0 %v327
      %v1553 = vpop.f32.mrf.mxu0
      %v1554 = vadd.f32 0.0, %v1553
      %v1555 = vpop.f32.mrf.mxu0
      %1556 = vmatprep.mubr.f32.mxu0 0.0
      %1557 = vmatmul.mubr.f32.gmra.mxu0 %v329
      %v1558 = vpop.f32.mrf.mxu0
      %v1559 = vadd.f32 0.0, %v1558
      %v1560 = vpop.f32.mrf.mxu0
      %1561 = vmatprep.mubr.f32.mxu0 0.0
      %1562 = vmatmul.mubr.f32.gmra.mxu0 %v331
      %v1563 = vpop.f32.mrf.mxu0
      %v1564 = vadd.f32 0.0, %v1563
      %v1565 = vpop.f32.mrf.mxu0
      %1566 = vmatprep.mubr.f32.mxu0 0.0
      %1567 = vmatmul.mubr.f32.gmra.mxu0 %v333
      %v1568 = vpop.f32.mrf.mxu0
      %v1569 = vadd.f32 0.0, %v1568
      %v1570 = vpop.f32.mrf.mxu0
      %1571 = vmatprep.mubr.f32.mxu0 0.0
      %1572 = vmatmul.mubr.f32.gmra.mxu0 %v335
      %v1573 = vpop.f32.mrf.mxu0
      %v1574 = vadd.f32 0.0, %v1573
      %v1575 = vpop.f32.mrf.mxu0
      %1576 = vmatprep.mubr.f32.mxu0 0.0
      %1577 = vmatmul.mubr.f32.gmra.mxu0 %v337
      %v1578 = vpop.f32.mrf.mxu0
      %v1579 = vadd.f32 0.0, %v1578
      %v1580 = vpop.f32.mrf.mxu0
      %1581 = vmatprep.mubr.f32.mxu0 0.0
      %1582 = vmatmul.mubr.f32.gmra.mxu0 %v339
      %v1583 = vpop.f32.mrf.mxu0
      %v1584 = vadd.f32 0.0, %v1583
      %v1585 = vpop.f32.mrf.mxu0
      %1586 = vmatprep.mubr.f32.mxu0 0.0
      %1587 = vmatmul.mubr.f32.gmra.mxu0 %v341
      %v1588 = vpop.f32.mrf.mxu0
      %v1589 = vadd.f32 0.0, %v1588
      %v1590 = vpop.f32.mrf.mxu0
      %1591 = vmatprep.mubr.f32.mxu0 0.0
      %1592 = vmatmul.mubr.f32.gmra.mxu0 %v343
      %v1593 = vpop.f32.mrf.mxu0
      %v1594 = vadd.f32 0.0, %v1593
      %v1595 = vpop.f32.mrf.mxu0
      %1596 = vmatprep.mubr.f32.mxu0 0.0
      %1597 = vmatmul.mubr.f32.gmra.mxu0 %v345
      %v1598 = vpop.f32.mrf.mxu0
      %v1599 = vadd.f32 0.0, %v1598
      %v1600 = vpop.f32.mrf.mxu0
      %1601 = vmatprep.mubr.f32.mxu0 0.0
      %1602 = vmatmul.mubr.f32.gmra.mxu0 %v347
      %v1603 = vpop.f32.mrf.mxu0
      %v1604 = vadd.f32 0.0, %v1603
      %v1605 = vpop.f32.mrf.mxu0
      %1606 = vmatprep.mubr.f32.mxu0 0.0
      %1607 = vmatmul.mubr.f32.gmra.mxu0 %v349
      %v1608 = vpop.f32.mrf.mxu0
      %v1609 = vadd.f32 0.0, %v1608
      %v1610 = vpop.f32.mrf.mxu0
      %1611 = vmatprep.mubr.f32.mxu0 0.0
      %1612 = vmatmul.mubr.f32.gmra.mxu0 %v351
      %v1613 = vpop.f32.mrf.mxu0
      %v1614 = vadd.f32 0.0, %v1613
      %v1615 = vpop.f32.mrf.mxu0
      %1616 = vmatprep.mubr.f32.mxu0 0.0
      %1617 = vmatmul.mubr.f32.gmra.mxu0 %v353
      %v1618 = vpop.f32.mrf.mxu0
      %v1619 = vadd.f32 0.0, %v1618
      %v1620 = vpop.f32.mrf.mxu0
      %1621 = vmatprep.mubr.f32.mxu0 0.0
      %1622 = vmatmul.mubr.f32.gmra.mxu0 %v355
      %v1623 = vpop.f32.mrf.mxu0
      %v1624 = vadd.f32 0.0, %v1623
      %v1625 = vpop.f32.mrf.mxu0
      %1626 = vmatprep.mubr.f32.mxu0 0.0
      %1627 = vmatmul.mubr.f32.gmra.mxu0 %v1428
      %v1628 = vpop.f32.mrf.mxu0
      %v1629 = vadd.f32 0.0, %v1628
      %v1630 = vpop.f32.mrf.mxu0
      %1631 = vmatprep.mubr.f32.mxu0 0.0
      %1632 = vmatmul.mubr.f32.gmra.mxu0 %v1430
      %v1633 = vpop.f32.mrf.mxu0
      %v1634 = vadd.f32 0.0, %v1633
      %v1635 = vpop.f32.mrf.mxu0
      %1636 = vdwg.mxu0
      %v1637 = vadd.f32 %v1390, %v1499
      %v1638 = vadd.f32 %v1391, %v1504
      %v1639 = vadd.f32 %v1392, %v1509
      %v1640 = vadd.f32 %v1393, %v1514
      %v1641 = vadd.f32 %v1394, %v1519
      %v1642 = vadd.f32 %v1395, %v1524
      %v1643 = vadd.f32 %v1396, %v1529
      %v1644 = vadd.f32 %v1397, %v1534
      %v1645 = vadd.f32 %v1398, %v1539
      %v1646 = vadd.f32 %v1399, %v1544
      %v1647 = vadd.f32 %v1400, %v1549
      %v1648 = vadd.f32 %v1401, %v1554
      %v1649 = vadd.f32 %v1402, %v1559
      %v1650 = vadd.f32 %v1403, %v1564
      %v1651 = vadd.f32 %v1404, %v1569
      %v1652 = vadd.f32 %v1405, %v1574
      %v1653 = vadd.f32 %v1406, %v1579
      %v1654 = vadd.f32 %v1407, %v1584
      %v1655 = vadd.f32 %v1408, %v1589
      %v1656 = vadd.f32 %v1409, %v1594
      %v1657 = vadd.f32 %v1410, %v1599
      %v1658 = vadd.f32 %v1411, %v1604
      %v1659 = vadd.f32 %v1412, %v1609
      %v1660 = vadd.f32 %v1413, %v1614
      %v1661 = vadd.f32 %v1414, %v1619
      %v1662 = vadd.f32 %v1415, %v1624
      %v1663 = vadd.f32 %v1416, %v1629
      %v1664 = vadd.f32 %v1417, %v1634
      %s1665 = scalar_lea.vmem %s1, 160
      %v1666 = vld [vmem:[%s1665] sm:$0xff]
      %v1667 = vld [vmem:[%s1665 + $0x8] sm:$0xff]
      %v1668 = vld [vmem:[%s1665 + $0x10] sm:$0xff]
      %v1669 = vld [vmem:[%s1665 + $0x18] sm:$0xff]
      %v1670 = vrot.slane %v200, 2
      %v1671 = vsel %vm828, %v884, %v1670
      %v1672 = vrot.slane %v201, 2
      %v1673 = vsel %vm828, %v1670, %v1672
      %v1674 = vsel %vm300, %v1671, 0
      %v1676 = vsel %vm300, %v1673, 0
      %1678 = vmatprep.subr.mxu0 0.0
      %1679 = vmatpush1.msra.mxu0 0.0
      %1680 = vmatprep.subr.mxu0 0.0
      %1681 = vmatpush1.msra.mxu0 0.0
      %1682 = vmatprep.subr.mxu0 0.0
      %1683 = vmatpush1.msra.mxu0 0.0
      %1684 = vmatprep.subr.mxu0 0.0
      %1685 = vmatpush1.msra.mxu0 0.0
      %1686 = vmatprep.subr.mxu0 0.0
      %1687 = vmatpush1.msra.mxu0 0.0
      %1688 = vmatprep.subr.mxu0 0.0
      %1689 = vmatpush1.msra.mxu0 0.0
      %1690 = vmatprep.subr.mxu0 0.0
      %1691 = vmatpush1.msra.mxu0 0.0
      %1692 = vmatprep.subr.mxu0 0.0
      %1693 = vmatpush1.msra.mxu0 0.0
      %1694 = vmatprep.subr.mxu0 0.0
      %1695 = vmatpush1.msra.mxu0 0.0
      %1696 = vmatprep.subr.mxu0 0.0
      %1697 = vmatpush1.msra.mxu0 0.0
      %1698 = vmatprep.subr.mxu0 0.0
      %1699 = vmatpush1.msra.mxu0 0.0
      %1700 = vmatprep.subr.mxu0 0.0
      %1701 = vmatpush1.msra.mxu0 0.0
      %1702 = vmatprep.subr.mxu0 0.0
      %1703 = vmatpush1.msra.mxu0 %v1669
      %1704 = vmatprep.subr.mxu0 0.0
      %1705 = vmatpush1.msra.mxu0 %v1668
      %1706 = vmatprep.subr.mxu0 0.0
      %1707 = vmatpush1.msra.mxu0 %v1667
      %1708 = vmatprep.subr.mxu0 0.0
      %1709 = vmatpush1.msra.mxu0 %v1666
      %1710 = vmatprep.subr.mxu0 0.0
      %1711 = vmatpush2.msra.mxu0 0.0
      %1712 = vmatprep.subr.mxu0 0.0
      %1713 = vmatpush2.msra.mxu0 0.0
      %1714 = vmatprep.subr.mxu0 0.0
      %1715 = vmatpush2.msra.mxu0 0.0
      %1716 = vmatprep.subr.mxu0 0.0
      %1717 = vmatpush2.msra.mxu0 0.0
      %1718 = vmatprep.subr.mxu0 0.0
      %1719 = vmatpush2.msra.mxu0 0.0
      %1720 = vmatprep.subr.mxu0 0.0
      %1721 = vmatpush2.msra.mxu0 0.0
      %1722 = vmatprep.subr.mxu0 0.0
      %1723 = vmatpush2.msra.mxu0 0.0
      %1724 = vmatprep.subr.mxu0 0.0
      %1725 = vmatpush2.msra.mxu0 0.0
      %1726 = vmatprep.subr.mxu0 0.0
      %1727 = vmatpush2.msra.mxu0 0.0
      %1728 = vmatprep.subr.mxu0 0.0
      %1729 = vmatpush2.msra.mxu0 0.0
      %1730 = vmatprep.subr.mxu0 0.0
      %1731 = vmatpush2.msra.mxu0 0.0
      %1732 = vmatprep.subr.mxu0 0.0
      %1733 = vmatpush2.msra.mxu0 0.0
      %1734 = vmatprep.subr.mxu0 0.0
      %1735 = vmatpush2.msra.mxu0 0.0
      %1736 = vmatprep.subr.mxu0 0.0
      %1737 = vmatpush2.msra.mxu0 0.0
      %1738 = vmatprep.subr.mxu0 0.0
      %1739 = vmatpush2.msra.mxu0 0.0
      %1740 = vmatprep.subr.mxu0 0.0
      %1741 = vmatpush2.msra.mxu0 0.0
      %1742 = vmatprep.mubr.f32.mxu0 0.0
      %1743 = vmatmul.mubr.f32.gmra.mxu0 %v890
      %v1744 = vpop.f32.mrf.mxu0
      %v1745 = vadd.f32 0.0, %v1744
      %v1746 = vpop.f32.mrf.mxu0
      %1747 = vmatprep.mubr.f32.mxu0 0.0
      %1748 = vmatmul.mubr.f32.gmra.mxu0 %v892
      %v1749 = vpop.f32.mrf.mxu0
      %v1750 = vadd.f32 0.0, %v1749
      %v1751 = vpop.f32.mrf.mxu0
      %1752 = vmatprep.mubr.f32.mxu0 0.0
      %1753 = vmatmul.mubr.f32.gmra.mxu0 %v894
      %v1754 = vpop.f32.mrf.mxu0
      %v1755 = vadd.f32 0.0, %v1754
      %v1756 = vpop.f32.mrf.mxu0
      %1757 = vmatprep.mubr.f32.mxu0 0.0
      %1758 = vmatmul.mubr.f32.gmra.mxu0 %v896
      %v1759 = vpop.f32.mrf.mxu0
      %v1760 = vadd.f32 0.0, %v1759
      %v1761 = vpop.f32.mrf.mxu0
      %1762 = vmatprep.mubr.f32.mxu0 0.0
      %1763 = vmatmul.mubr.f32.gmra.mxu0 %v898
      %v1764 = vpop.f32.mrf.mxu0
      %v1765 = vadd.f32 0.0, %v1764
      %v1766 = vpop.f32.mrf.mxu0
      %1767 = vmatprep.mubr.f32.mxu0 0.0
      %1768 = vmatmul.mubr.f32.gmra.mxu0 %v900
      %v1769 = vpop.f32.mrf.mxu0
      %v1770 = vadd.f32 0.0, %v1769
      %v1771 = vpop.f32.mrf.mxu0
      %1772 = vmatprep.mubr.f32.mxu0 0.0
      %1773 = vmatmul.mubr.f32.gmra.mxu0 %v902
      %v1774 = vpop.f32.mrf.mxu0
      %v1775 = vadd.f32 0.0, %v1774
      %v1776 = vpop.f32.mrf.mxu0
      %1777 = vmatprep.mubr.f32.mxu0 0.0
      %1778 = vmatmul.mubr.f32.gmra.mxu0 %v904
      %v1779 = vpop.f32.mrf.mxu0
      %v1780 = vadd.f32 0.0, %v1779
      %v1781 = vpop.f32.mrf.mxu0
      %1782 = vmatprep.mubr.f32.mxu0 0.0
      %1783 = vmatmul.mubr.f32.gmra.mxu0 %v906
      %v1784 = vpop.f32.mrf.mxu0
      %v1785 = vadd.f32 0.0, %v1784
      %v1786 = vpop.f32.mrf.mxu0
      %1787 = vmatprep.mubr.f32.mxu0 0.0
      %1788 = vmatmul.mubr.f32.gmra.mxu0 %v908
      %v1789 = vpop.f32.mrf.mxu0
      %v1790 = vadd.f32 0.0, %v1789
      %v1791 = vpop.f32.mrf.mxu0
      %1792 = vmatprep.mubr.f32.mxu0 0.0
      %1793 = vmatmul.mubr.f32.gmra.mxu0 %v910
      %v1794 = vpop.f32.mrf.mxu0
      %v1795 = vadd.f32 0.0, %v1794
      %v1796 = vpop.f32.mrf.mxu0
      %1797 = vmatprep.mubr.f32.mxu0 0.0
      %1798 = vmatmul.mubr.f32.gmra.mxu0 %v912
      %v1799 = vpop.f32.mrf.mxu0
      %v1800 = vadd.f32 0.0, %v1799
      %v1801 = vpop.f32.mrf.mxu0
      %1802 = vmatprep.mubr.f32.mxu0 0.0
      %1803 = vmatmul.mubr.f32.gmra.mxu0 %v914
      %v1804 = vpop.f32.mrf.mxu0
      %v1805 = vadd.f32 0.0, %v1804
      %v1806 = vpop.f32.mrf.mxu0
      %1807 = vmatprep.mubr.f32.mxu0 0.0
      %1808 = vmatmul.mubr.f32.gmra.mxu0 %v916
      %v1809 = vpop.f32.mrf.mxu0
      %v1810 = vadd.f32 0.0, %v1809
      %v1811 = vpop.f32.mrf.mxu0
      %1812 = vmatprep.mubr.f32.mxu0 0.0
      %1813 = vmatmul.mubr.f32.gmra.mxu0 %v918
      %v1814 = vpop.f32.mrf.mxu0
      %v1815 = vadd.f32 0.0, %v1814
      %v1816 = vpop.f32.mrf.mxu0
      %1817 = vmatprep.mubr.f32.mxu0 0.0
      %1818 = vmatmul.mubr.f32.gmra.mxu0 %v920
      %v1819 = vpop.f32.mrf.mxu0
      %v1820 = vadd.f32 0.0, %v1819
      %v1821 = vpop.f32.mrf.mxu0
      %1822 = vmatprep.mubr.f32.mxu0 0.0
      %1823 = vmatmul.mubr.f32.gmra.mxu0 %v922
      %v1824 = vpop.f32.mrf.mxu0
      %v1825 = vadd.f32 0.0, %v1824
      %v1826 = vpop.f32.mrf.mxu0
      %1827 = vmatprep.mubr.f32.mxu0 0.0
      %1828 = vmatmul.mubr.f32.gmra.mxu0 %v924
      %v1829 = vpop.f32.mrf.mxu0
      %v1830 = vadd.f32 0.0, %v1829
      %v1831 = vpop.f32.mrf.mxu0
      %1832 = vmatprep.mubr.f32.mxu0 0.0
      %1833 = vmatmul.mubr.f32.gmra.mxu0 %v926
      %v1834 = vpop.f32.mrf.mxu0
      %v1835 = vadd.f32 0.0, %v1834
      %v1836 = vpop.f32.mrf.mxu0
      %1837 = vmatprep.mubr.f32.mxu0 0.0
      %1838 = vmatmul.mubr.f32.gmra.mxu0 %v928
      %v1839 = vpop.f32.mrf.mxu0
      %v1840 = vadd.f32 0.0, %v1839
      %v1841 = vpop.f32.mrf.mxu0
      %1842 = vmatprep.mubr.f32.mxu0 0.0
      %1843 = vmatmul.mubr.f32.gmra.mxu0 %v930
      %v1844 = vpop.f32.mrf.mxu0
      %v1845 = vadd.f32 0.0, %v1844
      %v1846 = vpop.f32.mrf.mxu0
      %1847 = vmatprep.mubr.f32.mxu0 0.0
      %1848 = vmatmul.mubr.f32.gmra.mxu0 %v932
      %v1849 = vpop.f32.mrf.mxu0
      %v1850 = vadd.f32 0.0, %v1849
      %v1851 = vpop.f32.mrf.mxu0
      %1852 = vmatprep.mubr.f32.mxu0 0.0
      %1853 = vmatmul.mubr.f32.gmra.mxu0 %v934
      %v1854 = vpop.f32.mrf.mxu0
      %v1855 = vadd.f32 0.0, %v1854
      %v1856 = vpop.f32.mrf.mxu0
      %1857 = vmatprep.mubr.f32.mxu0 0.0
      %1858 = vmatmul.mubr.f32.gmra.mxu0 %v936
      %v1859 = vpop.f32.mrf.mxu0
      %v1860 = vadd.f32 0.0, %v1859
      %v1861 = vpop.f32.mrf.mxu0
      %1862 = vmatprep.mubr.f32.mxu0 0.0
      %1863 = vmatmul.mubr.f32.gmra.mxu0 %v938
      %v1864 = vpop.f32.mrf.mxu0
      %v1865 = vadd.f32 0.0, %v1864
      %v1866 = vpop.f32.mrf.mxu0
      %1867 = vmatprep.mubr.f32.mxu0 0.0
      %1868 = vmatmul.mubr.f32.gmra.mxu0 %v940
      %v1869 = vpop.f32.mrf.mxu0
      %v1870 = vadd.f32 0.0, %v1869
      %v1871 = vpop.f32.mrf.mxu0
      %1872 = vmatprep.mubr.f32.mxu0 0.0
      %1873 = vmatmul.mubr.f32.gmra.mxu0 %v1674
      %v1874 = vpop.f32.mrf.mxu0
      %v1875 = vadd.f32 0.0, %v1874
      %v1876 = vpop.f32.mrf.mxu0
      %1877 = vmatprep.mubr.f32.mxu0 0.0
      %1878 = vmatmul.mubr.f32.gmra.mxu0 %v1676
      %v1879 = vpop.f32.mrf.mxu0
      %v1880 = vadd.f32 0.0, %v1879
      %v1881 = vpop.f32.mrf.mxu0
      %1882 = vdwg.mxu0
      %v1883 = vadd.f32 %v1637, %v1745
      %v1884 = vadd.f32 %v1638, %v1750
      %v1885 = vadd.f32 %v1639, %v1755
      %v1886 = vadd.f32 %v1640, %v1760
      %v1887 = vadd.f32 %v1641, %v1765
      %v1888 = vadd.f32 %v1642, %v1770
      %v1889 = vadd.f32 %v1643, %v1775
      %v1890 = vadd.f32 %v1644, %v1780
      %v1891 = vadd.f32 %v1645, %v1785
      %v1892 = vadd.f32 %v1646, %v1790
      %v1893 = vadd.f32 %v1647, %v1795
      %v1894 = vadd.f32 %v1648, %v1800
      %v1895 = vadd.f32 %v1649, %v1805
      %v1896 = vadd.f32 %v1650, %v1810
      %v1897 = vadd.f32 %v1651, %v1815
      %v1898 = vadd.f32 %v1652, %v1820
      %v1899 = vadd.f32 %v1653, %v1825
      %v1900 = vadd.f32 %v1654, %v1830
      %v1901 = vadd.f32 %v1655, %v1835
      %v1902 = vadd.f32 %v1656, %v1840
      %v1903 = vadd.f32 %v1657, %v1845
      %v1904 = vadd.f32 %v1658, %v1850
      %v1905 = vadd.f32 %v1659, %v1855
      %v1906 = vadd.f32 %v1660, %v1860
      %v1907 = vadd.f32 %v1661, %v1865
      %v1908 = vadd.f32 %v1662, %v1870
      %v1909 = vadd.f32 %v1663, %v1875
      %v1910 = vadd.f32 %v1664, %v1880
      %s1911 = scalar_lea.vmem %s1, 192
      %v1912 = vld [vmem:[%s1911] sm:$0xff]
      %v1913 = vld [vmem:[%s1911 + $0x8] sm:$0xff]
      %v1914 = vld [vmem:[%s1911 + $0x10] sm:$0xff]
      %v1915 = vld [vmem:[%s1911 + $0x18] sm:$0xff]
      %v1916 = vsel %vm300, %v201, 0
      %v1919 = vsel %vm300, %v202, 0
      %1921 = vmatprep.subr.mxu0 0.0
      %1922 = vmatpush1.msra.mxu0 0.0
      %1923 = vmatprep.subr.mxu0 0.0
      %1924 = vmatpush1.msra.mxu0 0.0
      %1925 = vmatprep.subr.mxu0 0.0
      %1926 = vmatpush1.msra.mxu0 0.0
      %1927 = vmatprep.subr.mxu0 0.0
      %1928 = vmatpush1.msra.mxu0 0.0
      %1929 = vmatprep.subr.mxu0 0.0
      %1930 = vmatpush1.msra.mxu0 0.0
      %1931 = vmatprep.subr.mxu0 0.0
      %1932 = vmatpush1.msra.mxu0 0.0
      %1933 = vmatprep.subr.mxu0 0.0
      %1934 = vmatpush1.msra.mxu0 0.0
      %1935 = vmatprep.subr.mxu0 0.0
      %1936 = vmatpush1.msra.mxu0 0.0
      %1937 = vmatprep.subr.mxu0 0.0
      %1938 = vmatpush1.msra.mxu0 0.0
      %1939 = vmatprep.subr.mxu0 0.0
      %1940 = vmatpush1.msra.mxu0 0.0
      %1941 = vmatprep.subr.mxu0 0.0
      %1942 = vmatpush1.msra.mxu0 0.0
      %1943 = vmatprep.subr.mxu0 0.0
      %1944 = vmatpush1.msra.mxu0 0.0
      %1945 = vmatprep.subr.mxu0 0.0
      %1946 = vmatpush1.msra.mxu0 %v1915
      %1947 = vmatprep.subr.mxu0 0.0
      %1948 = vmatpush1.msra.mxu0 %v1914
      %1949 = vmatprep.subr.mxu0 0.0
      %1950 = vmatpush1.msra.mxu0 %v1913
      %1951 = vmatprep.subr.mxu0 0.0
      %1952 = vmatpush1.msra.mxu0 %v1912
      %1953 = vmatprep.subr.mxu0 0.0
      %1954 = vmatpush2.msra.mxu0 0.0
      %1955 = vmatprep.subr.mxu0 0.0
      %1956 = vmatpush2.msra.mxu0 0.0
      %1957 = vmatprep.subr.mxu0 0.0
      %1958 = vmatpush2.msra.mxu0 0.0
      %1959 = vmatprep.subr.mxu0 0.0
      %1960 = vmatpush2.msra.mxu0 0.0
      %1961 = vmatprep.subr.mxu0 0.0
      %1962 = vmatpush2.msra.mxu0 0.0
      %1963 = vmatprep.subr.mxu0 0.0
      %1964 = vmatpush2.msra.mxu0 0.0
      %1965 = vmatprep.subr.mxu0 0.0
      %1966 = vmatpush2.msra.mxu0 0.0
      %1967 = vmatprep.subr.mxu0 0.0
      %1968 = vmatpush2.msra.mxu0 0.0
      %1969 = vmatprep.subr.mxu0 0.0
      %1970 = vmatpush2.msra.mxu0 0.0
      %1971 = vmatprep.subr.mxu0 0.0
      %1972 = vmatpush2.msra.mxu0 0.0
      %1973 = vmatprep.subr.mxu0 0.0
      %1974 = vmatpush2.msra.mxu0 0.0
      %1975 = vmatprep.subr.mxu0 0.0
      %1976 = vmatpush2.msra.mxu0 0.0
      %1977 = vmatprep.subr.mxu0 0.0
      %1978 = vmatpush2.msra.mxu0 0.0
      %1979 = vmatprep.subr.mxu0 0.0
      %1980 = vmatpush2.msra.mxu0 0.0
      %1981 = vmatprep.subr.mxu0 0.0
      %1982 = vmatpush2.msra.mxu0 0.0
      %1983 = vmatprep.subr.mxu0 0.0
      %1984 = vmatpush2.msra.mxu0 0.0
      %1985 = vmatprep.mubr.f32.mxu0 0.0
      %1986 = vmatmul.mubr.f32.gmra.mxu0 %v570
      %v1987 = vpop.f32.mrf.mxu0
      %v1988 = vadd.f32 0.0, %v1987
      %v1989 = vpop.f32.mrf.mxu0
      %1990 = vmatprep.mubr.f32.mxu0 0.0
      %1991 = vmatmul.mubr.f32.gmra.mxu0 %v572
      %v1992 = vpop.f32.mrf.mxu0
      %v1993 = vadd.f32 0.0, %v1992
      %v1994 = vpop.f32.mrf.mxu0
      %1995 = vmatprep.mubr.f32.mxu0 0.0
      %1996 = vmatmul.mubr.f32.gmra.mxu0 %v574
      %v1997 = vpop.f32.mrf.mxu0
      %v1998 = vadd.f32 0.0, %v1997
      %v1999 = vpop.f32.mrf.mxu0
      %2000 = vmatprep.mubr.f32.mxu0 0.0
      %2001 = vmatmul.mubr.f32.gmra.mxu0 %v576
      %v2002 = vpop.f32.mrf.mxu0
      %v2003 = vadd.f32 0.0, %v2002
      %v2004 = vpop.f32.mrf.mxu0
      %2005 = vmatprep.mubr.f32.mxu0 0.0
      %2006 = vmatmul.mubr.f32.gmra.mxu0 %v578
      %v2007 = vpop.f32.mrf.mxu0
      %v2008 = vadd.f32 0.0, %v2007
      %v2009 = vpop.f32.mrf.mxu0
      %2010 = vmatprep.mubr.f32.mxu0 0.0
      %2011 = vmatmul.mubr.f32.gmra.mxu0 %v580
      %v2012 = vpop.f32.mrf.mxu0
      %v2013 = vadd.f32 0.0, %v2012
      %v2014 = vpop.f32.mrf.mxu0
      %2015 = vmatprep.mubr.f32.mxu0 0.0
      %2016 = vmatmul.mubr.f32.gmra.mxu0 %v582
      %v2017 = vpop.f32.mrf.mxu0
      %v2018 = vadd.f32 0.0, %v2017
      %v2019 = vpop.f32.mrf.mxu0
      %2020 = vmatprep.mubr.f32.mxu0 0.0
      %2021 = vmatmul.mubr.f32.gmra.mxu0 %v584
      %v2022 = vpop.f32.mrf.mxu0
      %v2023 = vadd.f32 0.0, %v2022
      %v2024 = vpop.f32.mrf.mxu0
      %2025 = vmatprep.mubr.f32.mxu0 0.0
      %2026 = vmatmul.mubr.f32.gmra.mxu0 %v586
      %v2027 = vpop.f32.mrf.mxu0
      %v2028 = vadd.f32 0.0, %v2027
      %v2029 = vpop.f32.mrf.mxu0
      %2030 = vmatprep.mubr.f32.mxu0 0.0
      %2031 = vmatmul.mubr.f32.gmra.mxu0 %v588
      %v2032 = vpop.f32.mrf.mxu0
      %v2033 = vadd.f32 0.0, %v2032
      %v2034 = vpop.f32.mrf.mxu0
      %2035 = vmatprep.mubr.f32.mxu0 0.0
      %2036 = vmatmul.mubr.f32.gmra.mxu0 %v590
      %v2037 = vpop.f32.mrf.mxu0
      %v2038 = vadd.f32 0.0, %v2037
      %v2039 = vpop.f32.mrf.mxu0
      %2040 = vmatprep.mubr.f32.mxu0 0.0
      %2041 = vmatmul.mubr.f32.gmra.mxu0 %v592
      %v2042 = vpop.f32.mrf.mxu0
      %v2043 = vadd.f32 0.0, %v2042
      %v2044 = vpop.f32.mrf.mxu0
      %2045 = vmatprep.mubr.f32.mxu0 0.0
      %2046 = vmatmul.mubr.f32.gmra.mxu0 %v594
      %v2047 = vpop.f32.mrf.mxu0
      %v2048 = vadd.f32 0.0, %v2047
      %v2049 = vpop.f32.mrf.mxu0
      %2050 = vmatprep.mubr.f32.mxu0 0.0
      %2051 = vmatmul.mubr.f32.gmra.mxu0 %v596
      %v2052 = vpop.f32.mrf.mxu0
      %v2053 = vadd.f32 0.0, %v2052
      %v2054 = vpop.f32.mrf.mxu0
      %2055 = vmatprep.mubr.f32.mxu0 0.0
      %2056 = vmatmul.mubr.f32.gmra.mxu0 %v598
      %v2057 = vpop.f32.mrf.mxu0
      %v2058 = vadd.f32 0.0, %v2057
      %v2059 = vpop.f32.mrf.mxu0
      %2060 = vmatprep.mubr.f32.mxu0 0.0
      %2061 = vmatmul.mubr.f32.gmra.mxu0 %v600
      %v2062 = vpop.f32.mrf.mxu0
      %v2063 = vadd.f32 0.0, %v2062
      %v2064 = vpop.f32.mrf.mxu0
      %2065 = vmatprep.mubr.f32.mxu0 0.0
      %2066 = vmatmul.mubr.f32.gmra.mxu0 %v602
      %v2067 = vpop.f32.mrf.mxu0
      %v2068 = vadd.f32 0.0, %v2067
      %v2069 = vpop.f32.mrf.mxu0
      %2070 = vmatprep.mubr.f32.mxu0 0.0
      %2071 = vmatmul.mubr.f32.gmra.mxu0 %v604
      %v2072 = vpop.f32.mrf.mxu0
      %v2073 = vadd.f32 0.0, %v2072
      %v2074 = vpop.f32.mrf.mxu0
      %2075 = vmatprep.mubr.f32.mxu0 0.0
      %2076 = vmatmul.mubr.f32.gmra.mxu0 %v606
      %v2077 = vpop.f32.mrf.mxu0
      %v2078 = vadd.f32 0.0, %v2077
      %v2079 = vpop.f32.mrf.mxu0
      %2080 = vmatprep.mubr.f32.mxu0 0.0
      %2081 = vmatmul.mubr.f32.gmra.mxu0 %v608
      %v2082 = vpop.f32.mrf.mxu0
      %v2083 = vadd.f32 0.0, %v2082
      %v2084 = vpop.f32.mrf.mxu0
      %2085 = vmatprep.mubr.f32.mxu0 0.0
      %2086 = vmatmul.mubr.f32.gmra.mxu0 %v610
      %v2087 = vpop.f32.mrf.mxu0
      %v2088 = vadd.f32 0.0, %v2087
      %v2089 = vpop.f32.mrf.mxu0
      %2090 = vmatprep.mubr.f32.mxu0 0.0
      %2091 = vmatmul.mubr.f32.gmra.mxu0 %v612
      %v2092 = vpop.f32.mrf.mxu0
      %v2093 = vadd.f32 0.0, %v2092
      %v2094 = vpop.f32.mrf.mxu0
      %2095 = vmatprep.mubr.f32.mxu0 0.0
      %2096 = vmatmul.mubr.f32.gmra.mxu0 %v614
      %v2097 = vpop.f32.mrf.mxu0
      %v2098 = vadd.f32 0.0, %v2097
      %v2099 = vpop.f32.mrf.mxu0
      %2100 = vmatprep.mubr.f32.mxu0 0.0
      %2101 = vmatmul.mubr.f32.gmra.mxu0 %v616
      %v2102 = vpop.f32.mrf.mxu0
      %v2103 = vadd.f32 0.0, %v2102
      %v2104 = vpop.f32.mrf.mxu0
      %2105 = vmatprep.mubr.f32.mxu0 0.0
      %2106 = vmatmul.mubr.f32.gmra.mxu0 %v1180
      %v2107 = vpop.f32.mrf.mxu0
      %v2108 = vadd.f32 0.0, %v2107
      %v2109 = vpop.f32.mrf.mxu0
      %2110 = vmatprep.mubr.f32.mxu0 0.0
      %2111 = vmatmul.mubr.f32.gmra.mxu0 %v1183
      %v2112 = vpop.f32.mrf.mxu0
      %v2113 = vadd.f32 0.0, %v2112
      %v2114 = vpop.f32.mrf.mxu0
      %2115 = vmatprep.mubr.f32.mxu0 0.0
      %2116 = vmatmul.mubr.f32.gmra.mxu0 %v1916
      %v2117 = vpop.f32.mrf.mxu0
      %v2118 = vadd.f32 0.0, %v2117
      %v2119 = vpop.f32.mrf.mxu0
      %2120 = vmatprep.mubr.f32.mxu0 0.0
      %2121 = vmatmul.mubr.f32.gmra.mxu0 %v1919
      %v2122 = vpop.f32.mrf.mxu0
      %v2123 = vadd.f32 0.0, %v2122
      %v2124 = vpop.f32.mrf.mxu0
      %2125 = vdwg.mxu0
      %v2126 = vadd.f32 %v1883, %v1988
      %v2127 = vadd.f32 %v1884, %v1993
      %v2128 = vadd.f32 %v1885, %v1998
      %v2129 = vadd.f32 %v1886, %v2003
      %v2130 = vadd.f32 %v1887, %v2008
      %v2131 = vadd.f32 %v1888, %v2013
      %v2132 = vadd.f32 %v1889, %v2018
      %v2133 = vadd.f32 %v1890, %v2023
      %v2134 = vadd.f32 %v1891, %v2028
      %v2135 = vadd.f32 %v1892, %v2033
      %v2136 = vadd.f32 %v1893, %v2038
      %v2137 = vadd.f32 %v1894, %v2043
      %v2138 = vadd.f32 %v1895, %v2048
      %v2139 = vadd.f32 %v1896, %v2053
      %v2140 = vadd.f32 %v1897, %v2058
      %v2141 = vadd.f32 %v1898, %v2063
      %v2142 = vadd.f32 %v1899, %v2068
      %v2143 = vadd.f32 %v1900, %v2073
      %v2144 = vadd.f32 %v1901, %v2078
      %v2145 = vadd.f32 %v1902, %v2083
      %v2146 = vadd.f32 %v1903, %v2088
      %v2147 = vadd.f32 %v1904, %v2093
      %v2148 = vadd.f32 %v1905, %v2098
      %v2149 = vadd.f32 %v1906, %v2103
      %v2150 = vadd.f32 %v1907, %v2108
      %v2151 = vadd.f32 %v1908, %v2113
      %v2152 = vadd.f32 %v1909, %v2118
      %v2153 = vadd.f32 %v1910, %v2123
      %s2154 = scalar_lea.vmem %s1, 224
      %v2155 = vld [vmem:[%s2154] sm:$0xff]
      %v2156 = vld [vmem:[%s2154 + $0x8] sm:$0xff]
      %v2157 = vld [vmem:[%s2154 + $0x10] sm:$0xff]
      %v2158 = vld [vmem:[%s2154 + $0x18] sm:$0xff]
      %v2160 = vrot.slane %v202, 1
      %v2161 = vsel %vm242, %v1426, %v2160
      %v2162 = vrot.slane %v203, 1
      %v2163 = vsel %vm242, %v2160, %v2162
      %v2164 = vsel %vm300, %v2161, 0
      %v2166 = vsel %vm300, %v2163, 0
      %2168 = vmatprep.subr.mxu0 0.0
      %2169 = vmatpush1.msra.mxu0 0.0
      %2170 = vmatprep.subr.mxu0 0.0
      %2171 = vmatpush1.msra.mxu0 0.0
      %2172 = vmatprep.subr.mxu0 0.0
      %2173 = vmatpush1.msra.mxu0 0.0
      %2174 = vmatprep.subr.mxu0 0.0
      %2175 = vmatpush1.msra.mxu0 0.0
      %2176 = vmatprep.subr.mxu0 0.0
      %2177 = vmatpush1.msra.mxu0 0.0
      %2178 = vmatprep.subr.mxu0 0.0
      %2179 = vmatpush1.msra.mxu0 0.0
      %2180 = vmatprep.subr.mxu0 0.0
      %2181 = vmatpush1.msra.mxu0 0.0
      %2182 = vmatprep.subr.mxu0 0.0
      %2183 = vmatpush1.msra.mxu0 0.0
      %2184 = vmatprep.subr.mxu0 0.0
      %2185 = vmatpush1.msra.mxu0 0.0
      %2186 = vmatprep.subr.mxu0 0.0
      %2187 = vmatpush1.msra.mxu0 0.0
      %2188 = vmatprep.subr.mxu0 0.0
      %2189 = vmatpush1.msra.mxu0 0.0
      %2190 = vmatprep.subr.mxu0 0.0
      %2191 = vmatpush1.msra.mxu0 0.0
      %2192 = vmatprep.subr.mxu0 0.0
      %2193 = vmatpush1.msra.mxu0 %v2158
      %2194 = vmatprep.subr.mxu0 0.0
      %2195 = vmatpush1.msra.mxu0 %v2157
      %2196 = vmatprep.subr.mxu0 0.0
      %2197 = vmatpush1.msra.mxu0 %v2156
      %2198 = vmatprep.subr.mxu0 0.0
      %2199 = vmatpush1.msra.mxu0 %v2155
      %2200 = vmatprep.subr.mxu0 0.0
      %2201 = vmatpush2.msra.mxu0 0.0
      %2202 = vmatprep.subr.mxu0 0.0
      %2203 = vmatpush2.msra.mxu0 0.0
      %2204 = vmatprep.subr.mxu0 0.0
      %2205 = vmatpush2.msra.mxu0 0.0
      %2206 = vmatprep.subr.mxu0 0.0
      %2207 = vmatpush2.msra.mxu0 0.0
      %2208 = vmatprep.subr.mxu0 0.0
      %2209 = vmatpush2.msra.mxu0 0.0
      %2210 = vmatprep.subr.mxu0 0.0
      %2211 = vmatpush2.msra.mxu0 0.0
      %2212 = vmatprep.subr.mxu0 0.0
      %2213 = vmatpush2.msra.mxu0 0.0
      %2214 = vmatprep.subr.mxu0 0.0
      %2215 = vmatpush2.msra.mxu0 0.0
      %2216 = vmatprep.subr.mxu0 0.0
      %2217 = vmatpush2.msra.mxu0 0.0
      %2218 = vmatprep.subr.mxu0 0.0
      %2219 = vmatpush2.msra.mxu0 0.0
      %2220 = vmatprep.subr.mxu0 0.0
      %2221 = vmatpush2.msra.mxu0 0.0
      %2222 = vmatprep.subr.mxu0 0.0
      %2223 = vmatpush2.msra.mxu0 0.0
      %2224 = vmatprep.subr.mxu0 0.0
      %2225 = vmatpush2.msra.mxu0 0.0
      %2226 = vmatprep.subr.mxu0 0.0
      %2227 = vmatpush2.msra.mxu0 0.0
      %2228 = vmatprep.subr.mxu0 0.0
      %2229 = vmatpush2.msra.mxu0 0.0
      %2230 = vmatprep.subr.mxu0 0.0
      %2231 = vmatpush2.msra.mxu0 0.0
      %2232 = vmatprep.mubr.f32.mxu0 0.0
      %2233 = vmatmul.mubr.f32.gmra.mxu0 %v309
      %v2234 = vpop.f32.mrf.mxu0
      %v2235 = vadd.f32 0.0, %v2234
      %v2236 = vpop.f32.mrf.mxu0
      %2237 = vmatprep.mubr.f32.mxu0 0.0
      %2238 = vmatmul.mubr.f32.gmra.mxu0 %v311
      %v2239 = vpop.f32.mrf.mxu0
      %v2240 = vadd.f32 0.0, %v2239
      %v2241 = vpop.f32.mrf.mxu0
      %2242 = vmatprep.mubr.f32.mxu0 0.0
      %2243 = vmatmul.mubr.f32.gmra.mxu0 %v313
      %v2244 = vpop.f32.mrf.mxu0
      %v2245 = vadd.f32 0.0, %v2244
      %v2246 = vpop.f32.mrf.mxu0
      %2247 = vmatprep.mubr.f32.mxu0 0.0
      %2248 = vmatmul.mubr.f32.gmra.mxu0 %v315
      %v2249 = vpop.f32.mrf.mxu0
      %v2250 = vadd.f32 0.0, %v2249
      %v2251 = vpop.f32.mrf.mxu0
      %2252 = vmatprep.mubr.f32.mxu0 0.0
      %2253 = vmatmul.mubr.f32.gmra.mxu0 %v317
      %v2254 = vpop.f32.mrf.mxu0
      %v2255 = vadd.f32 0.0, %v2254
      %v2256 = vpop.f32.mrf.mxu0
      %2257 = vmatprep.mubr.f32.mxu0 0.0
      %2258 = vmatmul.mubr.f32.gmra.mxu0 %v319
      %v2259 = vpop.f32.mrf.mxu0
      %v2260 = vadd.f32 0.0, %v2259
      %v2261 = vpop.f32.mrf.mxu0
      %2262 = vmatprep.mubr.f32.mxu0 0.0
      %2263 = vmatmul.mubr.f32.gmra.mxu0 %v321
      %v2264 = vpop.f32.mrf.mxu0
      %v2265 = vadd.f32 0.0, %v2264
      %v2266 = vpop.f32.mrf.mxu0
      %2267 = vmatprep.mubr.f32.mxu0 0.0
      %2268 = vmatmul.mubr.f32.gmra.mxu0 %v323
      %v2269 = vpop.f32.mrf.mxu0
      %v2270 = vadd.f32 0.0, %v2269
      %v2271 = vpop.f32.mrf.mxu0
      %2272 = vmatprep.mubr.f32.mxu0 0.0
      %2273 = vmatmul.mubr.f32.gmra.mxu0 %v325
      %v2274 = vpop.f32.mrf.mxu0
      %v2275 = vadd.f32 0.0, %v2274
      %v2276 = vpop.f32.mrf.mxu0
      %2277 = vmatprep.mubr.f32.mxu0 0.0
      %2278 = vmatmul.mubr.f32.gmra.mxu0 %v327
      %v2279 = vpop.f32.mrf.mxu0
      %v2280 = vadd.f32 0.0, %v2279
      %v2281 = vpop.f32.mrf.mxu0
      %2282 = vmatprep.mubr.f32.mxu0 0.0
      %2283 = vmatmul.mubr.f32.gmra.mxu0 %v329
      %v2284 = vpop.f32.mrf.mxu0
      %v2285 = vadd.f32 0.0, %v2284
      %v2286 = vpop.f32.mrf.mxu0
      %2287 = vmatprep.mubr.f32.mxu0 0.0
      %2288 = vmatmul.mubr.f32.gmra.mxu0 %v331
      %v2289 = vpop.f32.mrf.mxu0
      %v2290 = vadd.f32 0.0, %v2289
      %v2291 = vpop.f32.mrf.mxu0
      %2292 = vmatprep.mubr.f32.mxu0 0.0
      %2293 = vmatmul.mubr.f32.gmra.mxu0 %v333
      %v2294 = vpop.f32.mrf.mxu0
      %v2295 = vadd.f32 0.0, %v2294
      %v2296 = vpop.f32.mrf.mxu0
      %2297 = vmatprep.mubr.f32.mxu0 0.0
      %2298 = vmatmul.mubr.f32.gmra.mxu0 %v335
      %v2299 = vpop.f32.mrf.mxu0
      %v2300 = vadd.f32 0.0, %v2299
      %v2301 = vpop.f32.mrf.mxu0
      %2302 = vmatprep.mubr.f32.mxu0 0.0
      %2303 = vmatmul.mubr.f32.gmra.mxu0 %v337
      %v2304 = vpop.f32.mrf.mxu0
      %v2305 = vadd.f32 0.0, %v2304
      %v2306 = vpop.f32.mrf.mxu0
      %2307 = vmatprep.mubr.f32.mxu0 0.0
      %2308 = vmatmul.mubr.f32.gmra.mxu0 %v339
      %v2309 = vpop.f32.mrf.mxu0
      %v2310 = vadd.f32 0.0, %v2309
      %v2311 = vpop.f32.mrf.mxu0
      %2312 = vmatprep.mubr.f32.mxu0 0.0
      %2313 = vmatmul.mubr.f32.gmra.mxu0 %v341
      %v2314 = vpop.f32.mrf.mxu0
      %v2315 = vadd.f32 0.0, %v2314
      %v2316 = vpop.f32.mrf.mxu0
      %2317 = vmatprep.mubr.f32.mxu0 0.0
      %2318 = vmatmul.mubr.f32.gmra.mxu0 %v343
      %v2319 = vpop.f32.mrf.mxu0
      %v2320 = vadd.f32 0.0, %v2319
      %v2321 = vpop.f32.mrf.mxu0
      %2322 = vmatprep.mubr.f32.mxu0 0.0
      %2323 = vmatmul.mubr.f32.gmra.mxu0 %v345
      %v2324 = vpop.f32.mrf.mxu0
      %v2325 = vadd.f32 0.0, %v2324
      %v2326 = vpop.f32.mrf.mxu0
      %2327 = vmatprep.mubr.f32.mxu0 0.0
      %2328 = vmatmul.mubr.f32.gmra.mxu0 %v347
      %v2329 = vpop.f32.mrf.mxu0
      %v2330 = vadd.f32 0.0, %v2329
      %v2331 = vpop.f32.mrf.mxu0
      %2332 = vmatprep.mubr.f32.mxu0 0.0
      %2333 = vmatmul.mubr.f32.gmra.mxu0 %v349
      %v2334 = vpop.f32.mrf.mxu0
      %v2335 = vadd.f32 0.0, %v2334
      %v2336 = vpop.f32.mrf.mxu0
      %2337 = vmatprep.mubr.f32.mxu0 0.0
      %2338 = vmatmul.mubr.f32.gmra.mxu0 %v351
      %v2339 = vpop.f32.mrf.mxu0
      %v2340 = vadd.f32 0.0, %v2339
      %v2341 = vpop.f32.mrf.mxu0
      %2342 = vmatprep.mubr.f32.mxu0 0.0
      %2343 = vmatmul.mubr.f32.gmra.mxu0 %v353
      %v2344 = vpop.f32.mrf.mxu0
      %v2345 = vadd.f32 0.0, %v2344
      %v2346 = vpop.f32.mrf.mxu0
      %2347 = vmatprep.mubr.f32.mxu0 0.0
      %2348 = vmatmul.mubr.f32.gmra.mxu0 %v355
      %v2349 = vpop.f32.mrf.mxu0
      %v2350 = vadd.f32 0.0, %v2349
      %v2351 = vpop.f32.mrf.mxu0
      %2352 = vmatprep.mubr.f32.mxu0 0.0
      %2353 = vmatmul.mubr.f32.gmra.mxu0 %v1428
      %v2354 = vpop.f32.mrf.mxu0
      %v2355 = vadd.f32 0.0, %v2354
      %v2356 = vpop.f32.mrf.mxu0
      %2357 = vmatprep.mubr.f32.mxu0 0.0
      %2358 = vmatmul.mubr.f32.gmra.mxu0 %v1430
      %v2359 = vpop.f32.mrf.mxu0
      %v2360 = vadd.f32 0.0, %v2359
      %v2361 = vpop.f32.mrf.mxu0
      %2362 = vmatprep.mubr.f32.mxu0 0.0
      %2363 = vmatmul.mubr.f32.gmra.mxu0 %v2164
      %v2364 = vpop.f32.mrf.mxu0
      %v2365 = vadd.f32 0.0, %v2364
      %v2366 = vpop.f32.mrf.mxu0
      %2367 = vmatprep.mubr.f32.mxu0 0.0
      %2368 = vmatmul.mubr.f32.gmra.mxu0 %v2166
      %v2369 = vpop.f32.mrf.mxu0
      %v2370 = vadd.f32 0.0, %v2369
      %v2371 = vpop.f32.mrf.mxu0
      %2372 = vdwg.mxu0
      %v2373 = vadd.f32 %v2126, %v2235
      %v2374 = vadd.f32 %v2127, %v2240
      %v2375 = vadd.f32 %v2128, %v2245
      %v2376 = vadd.f32 %v2129, %v2250
      %v2377 = vadd.f32 %v2130, %v2255
      %v2378 = vadd.f32 %v2131, %v2260
      %v2379 = vadd.f32 %v2132, %v2265
      %v2380 = vadd.f32 %v2133, %v2270
      %v2381 = vadd.f32 %v2134, %v2275
      %v2382 = vadd.f32 %v2135, %v2280
      %v2383 = vadd.f32 %v2136, %v2285
      %v2384 = vadd.f32 %v2137, %v2290
      %v2385 = vadd.f32 %v2138, %v2295
      %v2386 = vadd.f32 %v2139, %v2300
      %v2387 = vadd.f32 %v2140, %v2305
      %v2388 = vadd.f32 %v2141, %v2310
      %v2389 = vadd.f32 %v2142, %v2315
      %v2390 = vadd.f32 %v2143, %v2320
      %v2391 = vadd.f32 %v2144, %v2325
      %v2392 = vadd.f32 %v2145, %v2330
      %v2393 = vadd.f32 %v2146, %v2335
      %v2394 = vadd.f32 %v2147, %v2340
      %v2395 = vadd.f32 %v2148, %v2345
      %v2396 = vadd.f32 %v2149, %v2350
      %v2397 = vadd.f32 %v2150, %v2355
      %v2398 = vadd.f32 %v2151, %v2360
      %v2399 = vadd.f32 %v2152, %v2365
      %v2400 = vadd.f32 %v2153, %v2370
      %s2401 = scalar_lea.vmem %s1, 256
      %v2402 = vld [vmem:[%s2401] sm:$0xff]
      %v2403 = vld [vmem:[%s2401 + $0x8] sm:$0xff]
      %v2404 = vld [vmem:[%s2401 + $0x10] sm:$0xff]
      %v2405 = vld [vmem:[%s2401 + $0x18] sm:$0xff]
      %v2406 = vrot.slane %v202, 2
      %v2407 = vsel %vm828, %v1672, %v2406
      %v2408 = vrot.slane %v203, 2
      %v2409 = vsel %vm828, %v2406, %v2408
      %v2410 = vsel %vm300, %v2407, 0
      %v2412 = vsel %vm300, %v2409, 0
      %2414 = vmatprep.subr.mxu0 0.0
      %2415 = vmatpush1.msra.mxu0 0.0
      %2416 = vmatprep.subr.mxu0 0.0
      %2417 = vmatpush1.msra.mxu0 0.0
      %2418 = vmatprep.subr.mxu0 0.0
      %2419 = vmatpush1.msra.mxu0 0.0
      %2420 = vmatprep.subr.mxu0 0.0
      %2421 = vmatpush1.msra.mxu0 0.0
      %2422 = vmatprep.subr.mxu0 0.0
      %2423 = vmatpush1.msra.mxu0 0.0
      %2424 = vmatprep.subr.mxu0 0.0
      %2425 = vmatpush1.msra.mxu0 0.0
      %2426 = vmatprep.subr.mxu0 0.0
      %2427 = vmatpush1.msra.mxu0 0.0
      %2428 = vmatprep.subr.mxu0 0.0
      %2429 = vmatpush1.msra.mxu0 0.0
      %2430 = vmatprep.subr.mxu0 0.0
      %2431 = vmatpush1.msra.mxu0 0.0
      %2432 = vmatprep.subr.mxu0 0.0
      %2433 = vmatpush1.msra.mxu0 0.0
      %2434 = vmatprep.subr.mxu0 0.0
      %2435 = vmatpush1.msra.mxu0 0.0
      %2436 = vmatprep.subr.mxu0 0.0
      %2437 = vmatpush1.msra.mxu0 0.0
      %2438 = vmatprep.subr.mxu0 0.0
      %2439 = vmatpush1.msra.mxu0 %v2405
      %2440 = vmatprep.subr.mxu0 0.0
      %2441 = vmatpush1.msra.mxu0 %v2404
      %2442 = vmatprep.subr.mxu0 0.0
      %2443 = vmatpush1.msra.mxu0 %v2403
      %2444 = vmatprep.subr.mxu0 0.0
      %2445 = vmatpush1.msra.mxu0 %v2402
      %2446 = vmatprep.subr.mxu0 0.0
      %2447 = vmatpush2.msra.mxu0 0.0
      %2448 = vmatprep.subr.mxu0 0.0
      %2449 = vmatpush2.msra.mxu0 0.0
      %2450 = vmatprep.subr.mxu0 0.0
      %2451 = vmatpush2.msra.mxu0 0.0
      %2452 = vmatprep.subr.mxu0 0.0
      %2453 = vmatpush2.msra.mxu0 0.0
      %2454 = vmatprep.subr.mxu0 0.0
      %2455 = vmatpush2.msra.mxu0 0.0
      %2456 = vmatprep.subr.mxu0 0.0
      %2457 = vmatpush2.msra.mxu0 0.0
      %2458 = vmatprep.subr.mxu0 0.0
      %2459 = vmatpush2.msra.mxu0 0.0
      %2460 = vmatprep.subr.mxu0 0.0
      %2461 = vmatpush2.msra.mxu0 0.0
      %2462 = vmatprep.subr.mxu0 0.0
      %2463 = vmatpush2.msra.mxu0 0.0
      %2464 = vmatprep.subr.mxu0 0.0
      %2465 = vmatpush2.msra.mxu0 0.0
      %2466 = vmatprep.subr.mxu0 0.0
      %2467 = vmatpush2.msra.mxu0 0.0
      %2468 = vmatprep.subr.mxu0 0.0
      %2469 = vmatpush2.msra.mxu0 0.0
      %2470 = vmatprep.subr.mxu0 0.0
      %2471 = vmatpush2.msra.mxu0 0.0
      %2472 = vmatprep.subr.mxu0 0.0
      %2473 = vmatpush2.msra.mxu0 0.0
      %2474 = vmatprep.subr.mxu0 0.0
      %2475 = vmatpush2.msra.mxu0 0.0
      %2476 = vmatprep.subr.mxu0 0.0
      %2477 = vmatpush2.msra.mxu0 0.0
      %2478 = vmatprep.mubr.f32.mxu0 0.0
      %2479 = vmatmul.mubr.f32.gmra.mxu0 %v894
      %v2480 = vpop.f32.mrf.mxu0
      %v2481 = vadd.f32 0.0, %v2480
      %v2482 = vpop.f32.mrf.mxu0
      %2483 = vmatprep.mubr.f32.mxu0 0.0
      %2484 = vmatmul.mubr.f32.gmra.mxu0 %v896
      %v2485 = vpop.f32.mrf.mxu0
      %v2486 = vadd.f32 0.0, %v2485
      %v2487 = vpop.f32.mrf.mxu0
      %2488 = vmatprep.mubr.f32.mxu0 0.0
      %2489 = vmatmul.mubr.f32.gmra.mxu0 %v898
      %v2490 = vpop.f32.mrf.mxu0
      %v2491 = vadd.f32 0.0, %v2490
      %v2492 = vpop.f32.mrf.mxu0
      %2493 = vmatprep.mubr.f32.mxu0 0.0
      %2494 = vmatmul.mubr.f32.gmra.mxu0 %v900
      %v2495 = vpop.f32.mrf.mxu0
      %v2496 = vadd.f32 0.0, %v2495
      %v2497 = vpop.f32.mrf.mxu0
      %2498 = vmatprep.mubr.f32.mxu0 0.0
      %2499 = vmatmul.mubr.f32.gmra.mxu0 %v902
      %v2500 = vpop.f32.mrf.mxu0
      %v2501 = vadd.f32 0.0, %v2500
      %v2502 = vpop.f32.mrf.mxu0
      %2503 = vmatprep.mubr.f32.mxu0 0.0
      %2504 = vmatmul.mubr.f32.gmra.mxu0 %v904
      %v2505 = vpop.f32.mrf.mxu0
      %v2506 = vadd.f32 0.0, %v2505
      %v2507 = vpop.f32.mrf.mxu0
      %2508 = vmatprep.mubr.f32.mxu0 0.0
      %2509 = vmatmul.mubr.f32.gmra.mxu0 %v906
      %v2510 = vpop.f32.mrf.mxu0
      %v2511 = vadd.f32 0.0, %v2510
      %v2512 = vpop.f32.mrf.mxu0
      %2513 = vmatprep.mubr.f32.mxu0 0.0
      %2514 = vmatmul.mubr.f32.gmra.mxu0 %v908
      %v2515 = vpop.f32.mrf.mxu0
      %v2516 = vadd.f32 0.0, %v2515
      %v2517 = vpop.f32.mrf.mxu0
      %2518 = vmatprep.mubr.f32.mxu0 0.0
      %2519 = vmatmul.mubr.f32.gmra.mxu0 %v910
      %v2520 = vpop.f32.mrf.mxu0
      %v2521 = vadd.f32 0.0, %v2520
      %v2522 = vpop.f32.mrf.mxu0
      %2523 = vmatprep.mubr.f32.mxu0 0.0
      %2524 = vmatmul.mubr.f32.gmra.mxu0 %v912
      %v2525 = vpop.f32.mrf.mxu0
      %v2526 = vadd.f32 0.0, %v2525
      %v2527 = vpop.f32.mrf.mxu0
      %2528 = vmatprep.mubr.f32.mxu0 0.0
      %2529 = vmatmul.mubr.f32.gmra.mxu0 %v914
      %v2530 = vpop.f32.mrf.mxu0
      %v2531 = vadd.f32 0.0, %v2530
      %v2532 = vpop.f32.mrf.mxu0
      %2533 = vmatprep.mubr.f32.mxu0 0.0
      %2534 = vmatmul.mubr.f32.gmra.mxu0 %v916
      %v2535 = vpop.f32.mrf.mxu0
      %v2536 = vadd.f32 0.0, %v2535
      %v2537 = vpop.f32.mrf.mxu0
      %2538 = vmatprep.mubr.f32.mxu0 0.0
      %2539 = vmatmul.mubr.f32.gmra.mxu0 %v918
      %v2540 = vpop.f32.mrf.mxu0
      %v2541 = vadd.f32 0.0, %v2540
      %v2542 = vpop.f32.mrf.mxu0
      %2543 = vmatprep.mubr.f32.mxu0 0.0
      %2544 = vmatmul.mubr.f32.gmra.mxu0 %v920
      %v2545 = vpop.f32.mrf.mxu0
      %v2546 = vadd.f32 0.0, %v2545
      %v2547 = vpop.f32.mrf.mxu0
      %2548 = vmatprep.mubr.f32.mxu0 0.0
      %2549 = vmatmul.mubr.f32.gmra.mxu0 %v922
      %v2550 = vpop.f32.mrf.mxu0
      %v2551 = vadd.f32 0.0, %v2550
      %v2552 = vpop.f32.mrf.mxu0
      %2553 = vmatprep.mubr.f32.mxu0 0.0
      %2554 = vmatmul.mubr.f32.gmra.mxu0 %v924
      %v2555 = vpop.f32.mrf.mxu0
      %v2556 = vadd.f32 0.0, %v2555
      %v2557 = vpop.f32.mrf.mxu0
      %2558 = vmatprep.mubr.f32.mxu0 0.0
      %2559 = vmatmul.mubr.f32.gmra.mxu0 %v926
      %v2560 = vpop.f32.mrf.mxu0
      %v2561 = vadd.f32 0.0, %v2560
      %v2562 = vpop.f32.mrf.mxu0
      %2563 = vmatprep.mubr.f32.mxu0 0.0
      %2564 = vmatmul.mubr.f32.gmra.mxu0 %v928
      %v2565 = vpop.f32.mrf.mxu0
      %v2566 = vadd.f32 0.0, %v2565
      %v2567 = vpop.f32.mrf.mxu0
      %2568 = vmatprep.mubr.f32.mxu0 0.0
      %2569 = vmatmul.mubr.f32.gmra.mxu0 %v930
      %v2570 = vpop.f32.mrf.mxu0
      %v2571 = vadd.f32 0.0, %v2570
      %v2572 = vpop.f32.mrf.mxu0
      %2573 = vmatprep.mubr.f32.mxu0 0.0
      %2574 = vmatmul.mubr.f32.gmra.mxu0 %v932
      %v2575 = vpop.f32.mrf.mxu0
      %v2576 = vadd.f32 0.0, %v2575
      %v2577 = vpop.f32.mrf.mxu0
      %2578 = vmatprep.mubr.f32.mxu0 0.0
      %2579 = vmatmul.mubr.f32.gmra.mxu0 %v934
      %v2580 = vpop.f32.mrf.mxu0
      %v2581 = vadd.f32 0.0, %v2580
      %v2582 = vpop.f32.mrf.mxu0
      %2583 = vmatprep.mubr.f32.mxu0 0.0
      %2584 = vmatmul.mubr.f32.gmra.mxu0 %v936
      %v2585 = vpop.f32.mrf.mxu0
      %v2586 = vadd.f32 0.0, %v2585
      %v2587 = vpop.f32.mrf.mxu0
      %2588 = vmatprep.mubr.f32.mxu0 0.0
      %2589 = vmatmul.mubr.f32.gmra.mxu0 %v938
      %v2590 = vpop.f32.mrf.mxu0
      %v2591 = vadd.f32 0.0, %v2590
      %v2592 = vpop.f32.mrf.mxu0
      %2593 = vmatprep.mubr.f32.mxu0 0.0
      %2594 = vmatmul.mubr.f32.gmra.mxu0 %v940
      %v2595 = vpop.f32.mrf.mxu0
      %v2596 = vadd.f32 0.0, %v2595
      %v2597 = vpop.f32.mrf.mxu0
      %2598 = vmatprep.mubr.f32.mxu0 0.0
      %2599 = vmatmul.mubr.f32.gmra.mxu0 %v1674
      %v2600 = vpop.f32.mrf.mxu0
      %v2601 = vadd.f32 0.0, %v2600
      %v2602 = vpop.f32.mrf.mxu0
      %2603 = vmatprep.mubr.f32.mxu0 0.0
      %2604 = vmatmul.mubr.f32.gmra.mxu0 %v1676
      %v2605 = vpop.f32.mrf.mxu0
      %v2606 = vadd.f32 0.0, %v2605
      %v2607 = vpop.f32.mrf.mxu0
      %2608 = vmatprep.mubr.f32.mxu0 0.0
      %2609 = vmatmul.mubr.f32.gmra.mxu0 %v2410
      %v2610 = vpop.f32.mrf.mxu0
      %v2611 = vadd.f32 0.0, %v2610
      %v2612 = vpop.f32.mrf.mxu0
      %2613 = vmatprep.mubr.f32.mxu0 0.0
      %2614 = vmatmul.mubr.f32.gmra.mxu0 %v2412
      %v2615 = vpop.f32.mrf.mxu0
      %v2616 = vadd.f32 0.0, %v2615
      %v2617 = vpop.f32.mrf.mxu0
      %2618 = vdwg.mxu0
      %v2619 = vadd.f32 %v2373, %v2481
      %v2620 = vadd.f32 %v2374, %v2486
      %v2621 = vadd.f32 %v2375, %v2491
      %v2622 = vadd.f32 %v2376, %v2496
      %v2623 = vadd.f32 %v2377, %v2501
      %v2624 = vadd.f32 %v2378, %v2506
      %v2625 = vadd.f32 %v2379, %v2511
      %v2626 = vadd.f32 %v2380, %v2516
      %v2627 = vadd.f32 %v2381, %v2521
      %v2628 = vadd.f32 %v2382, %v2526
      %v2629 = vadd.f32 %v2383, %v2531
      %v2630 = vadd.f32 %v2384, %v2536
      %v2631 = vadd.f32 %v2385, %v2541
      %v2632 = vadd.f32 %v2386, %v2546
      %v2633 = vadd.f32 %v2387, %v2551
      %v2634 = vadd.f32 %v2388, %v2556
      %v2635 = vadd.f32 %v2389, %v2561
      %v2636 = vadd.f32 %v2390, %v2566
      %v2637 = vadd.f32 %v2391, %v2571
      %v2638 = vadd.f32 %v2392, %v2576
      %v2639 = vadd.f32 %v2393, %v2581
      %v2640 = vadd.f32 %v2394, %v2586
      %v2641 = vadd.f32 %v2395, %v2591
      %v2642 = vadd.f32 %v2396, %v2596
      %v2643 = vadd.f32 %v2397, %v2601
      %v2644 = vadd.f32 %v2398, %v2606
      %v2645 = vadd.f32 %v2399, %v2611
      %v2646 = vadd.f32 %v2400, %v2616
      %v2647 = vld [vmem:[%s2] sm:$0x1]
      %v2649 = vlaneseq
      %v2650 = vshrl.u32 %v2649, 7
      %v2651 = vsub.s32 0, %v2650
      %v2652 = vrot.slane %v2647, %v2651
      %v2654 = vadd.f32 %v2619, %v2652
      %v2655 = vadd.f32 %v2620, %v2652
      %v2656 = vadd.f32 %v2621, %v2652
      %v2657 = vadd.f32 %v2622, %v2652
      %v2658 = vadd.f32 %v2623, %v2652
      %v2659 = vadd.f32 %v2624, %v2652
      %v2660 = vadd.f32 %v2625, %v2652
      %v2661 = vadd.f32 %v2626, %v2652
      %v2662 = vadd.f32 %v2627, %v2652
      %v2663 = vadd.f32 %v2628, %v2652
      %v2664 = vadd.f32 %v2629, %v2652
      %v2665 = vadd.f32 %v2630, %v2652
      %v2666 = vadd.f32 %v2631, %v2652
      %v2667 = vadd.f32 %v2632, %v2652
      %v2668 = vadd.f32 %v2633, %v2652
      %v2669 = vadd.f32 %v2634, %v2652
      %v2670 = vadd.f32 %v2635, %v2652
      %v2671 = vadd.f32 %v2636, %v2652
      %v2672 = vadd.f32 %v2637, %v2652
      %v2673 = vadd.f32 %v2638, %v2652
      %v2674 = vadd.f32 %v2639, %v2652
      %v2675 = vadd.f32 %v2640, %v2652
      %v2676 = vadd.f32 %v2641, %v2652
      %v2677 = vadd.f32 %v2642, %v2652
      %v2678 = vadd.f32 %v2643, %v2652
      %v2679 = vadd.f32 %v2644, %v2652
      %v2680 = vadd.f32 %v2645, %v2652
      %v2681 = vadd.f32 %v2646, %v2652
      %v2682 = vmax.f32 %v2654, 0.0
      %v2683 = vmax.f32 %v2655, 0.0
      %v2684 = vmax.f32 %v2656, 0.0
      %v2685 = vmax.f32 %v2657, 0.0
      %v2686 = vmax.f32 %v2658, 0.0
      %v2687 = vmax.f32 %v2659, 0.0
      %v2688 = vmax.f32 %v2660, 0.0
      %v2689 = vmax.f32 %v2661, 0.0
      %v2690 = vmax.f32 %v2662, 0.0
      %v2691 = vmax.f32 %v2663, 0.0
      %v2692 = vmax.f32 %v2664, 0.0
      %v2693 = vmax.f32 %v2665, 0.0
      %v2694 = vmax.f32 %v2666, 0.0
      %v2695 = vmax.f32 %v2667, 0.0
      %v2696 = vmax.f32 %v2668, 0.0
      %v2697 = vmax.f32 %v2669, 0.0
      %v2698 = vmax.f32 %v2670, 0.0
      %v2699 = vmax.f32 %v2671, 0.0
      %v2700 = vmax.f32 %v2672, 0.0
      %v2701 = vmax.f32 %v2673, 0.0
      %v2702 = vmax.f32 %v2674, 0.0
      %v2703 = vmax.f32 %v2675, 0.0
      %v2704 = vmax.f32 %v2676, 0.0
      %v2705 = vmax.f32 %v2677, 0.0
      %v2706 = vmax.f32 %v2678, 0.0
      %v2707 = vmax.f32 %v2679, 0.0
      %v2708 = vmax.f32 %v2680, 0.0
      %v2709 = vmax.f32 %v2681, 0.0
      %v2736 = vrot.slane %v2682, 1
      %v2737 = vrot.slane %v2683, 1
      %v2738 = vsel %vm242, %v2736, %v2737
      %v2739 = vrot.slane %v2684, 1
      %v2740 = vsel %vm242, %v2737, %v2739
      %v2741 = vrot.slane %v2685, 1
      %v2742 = vsel %vm242, %v2739, %v2741
      %v2743 = vrot.slane %v2686, 1
      %v2744 = vsel %vm242, %v2741, %v2743
      %v2745 = vrot.slane %v2687, 1
      %v2746 = vsel %vm242, %v2743, %v2745
      %v2747 = vrot.slane %v2688, 1
      %v2748 = vsel %vm242, %v2745, %v2747
      %v2749 = vrot.slane %v2689, 1
      %v2750 = vsel %vm242, %v2747, %v2749
      %v2751 = vrot.slane %v2690, 1
      %v2752 = vsel %vm242, %v2749, %v2751
      %v2753 = vrot.slane %v2691, 1
      %v2754 = vsel %vm242, %v2751, %v2753
      %v2755 = vrot.slane %v2692, 1
      %v2756 = vsel %vm242, %v2753, %v2755
      %v2757 = vrot.slane %v2693, 1
      %v2758 = vsel %vm242, %v2755, %v2757
      %v2759 = vrot.slane %v2694, 1
      %v2760 = vsel %vm242, %v2757, %v2759
      %v2761 = vrot.slane %v2695, 1
      %v2762 = vsel %vm242, %v2759, %v2761
      %v2763 = vrot.slane %v2696, 1
      %v2764 = vsel %vm242, %v2761, %v2763
      %v2765 = vrot.slane %v2697, 1
      %v2766 = vsel %vm242, %v2763, %v2765
      %v2767 = vrot.slane %v2698, 1
      %v2768 = vsel %vm242, %v2765, %v2767
      %v2769 = vrot.slane %v2699, 1
      %v2770 = vsel %vm242, %v2767, %v2769
      %v2771 = vrot.slane %v2700, 1
      %v2772 = vsel %vm242, %v2769, %v2771
      %v2773 = vrot.slane %v2701, 1
      %v2774 = vsel %vm242, %v2771, %v2773
      %v2775 = vrot.slane %v2702, 1
      %v2776 = vsel %vm242, %v2773, %v2775
      %v2777 = vrot.slane %v2703, 1
      %v2778 = vsel %vm242, %v2775, %v2777
      %v2779 = vrot.slane %v2704, 1
      %v2780 = vsel %vm242, %v2777, %v2779
      %v2781 = vrot.slane %v2705, 1
      %v2782 = vsel %vm242, %v2779, %v2781
      %v2783 = vrot.slane %v2706, 1
      %v2784 = vsel %vm242, %v2781, %v2783
      %v2785 = vrot.slane %v2707, 1
      %v2786 = vsel %vm242, %v2783, %v2785
      %v2813 = vmax.f32 %v2682, %v2738
      %v2814 = vmax.f32 %v2683, %v2740
      %v2815 = vmax.f32 %v2684, %v2742
      %v2816 = vmax.f32 %v2685, %v2744
      %v2817 = vmax.f32 %v2686, %v2746
      %v2818 = vmax.f32 %v2687, %v2748
      %v2819 = vmax.f32 %v2688, %v2750
      %v2820 = vmax.f32 %v2689, %v2752
      %v2821 = vmax.f32 %v2690, %v2754
      %v2822 = vmax.f32 %v2691, %v2756
      %v2823 = vmax.f32 %v2692, %v2758
      %v2824 = vmax.f32 %v2693, %v2760
      %v2825 = vmax.f32 %v2694, %v2762
      %v2826 = vmax.f32 %v2695, %v2764
      %v2827 = vmax.f32 %v2696, %v2766
      %v2828 = vmax.f32 %v2697, %v2768
      %v2829 = vmax.f32 %v2698, %v2770
      %v2830 = vmax.f32 %v2699, %v2772
      %v2831 = vmax.f32 %v2700, %v2774
      %v2832 = vmax.f32 %v2701, %v2776
      %v2833 = vmax.f32 %v2702, %v2778
      %v2834 = vmax.f32 %v2703, %v2780
      %v2835 = vmax.f32 %v2704, %v2782
      %v2836 = vmax.f32 %v2705, %v2784
      %v2837 = vmax.f32 %v2706, %v2786
      %v2838 = vmax.f32 %v2707, %v2785
      %v2841 = vrot.slane %v2708, 1
      %v2842 = vsel %vm242, %v2785, %v2841
      %v2843 = vrot.slane %v2709, 1
      %v2844 = vsel %vm242, %v2841, %v2843
      %v2848 = vmax.f32 %v2707, %v2842
      %v2849 = vmax.f32 %v2708, %v2844
      %v2850 = vmax.f32 %v2709, %v2843
      %v2851 = vmax.f32 %v2813, %v2815
      %v2852 = vmax.f32 %v2814, %v2816
      %v2853 = vmax.f32 %v2815, %v2817
      %v2854 = vmax.f32 %v2816, %v2818
      %v2855 = vmax.f32 %v2817, %v2819
      %v2856 = vmax.f32 %v2818, %v2820
      %v2857 = vmax.f32 %v2819, %v2821
      %v2858 = vmax.f32 %v2820, %v2822
      %v2859 = vmax.f32 %v2821, %v2823
      %v2860 = vmax.f32 %v2822, %v2824
      %v2861 = vmax.f32 %v2823, %v2825
      %v2862 = vmax.f32 %v2824, %v2826
      %v2863 = vmax.f32 %v2825, %v2827
      %v2864 = vmax.f32 %v2826, %v2828
      %v2865 = vmax.f32 %v2827, %v2829
      %v2866 = vmax.f32 %v2828, %v2830
      %v2867 = vmax.f32 %v2829, %v2831
      %v2868 = vmax.f32 %v2830, %v2832
      %v2869 = vmax.f32 %v2831, %v2833
      %v2870 = vmax.f32 %v2832, %v2834
      %v2871 = vmax.f32 %v2833, %v2835
      %v2872 = vmax.f32 %v2834, %v2836
      %v2873 = vmax.f32 %v2835, %v2837
      %v2874 = vmax.f32 %v2836, %v2848
      %v2875 = vmax.f32 %v2837, %v2849
      %v2876 = vmax.f32 %v2838, %v2850
      %vm2877 = vcmask 523264
      %2878 = vst.msk [vmem:[#allocation2 + $0xcf] sm:$0xff] %vm2877, 0.0
      %2879 = vst.msk [vmem:[#allocation2 + $0xd7] sm:$0xff] %vm2877, 0.0
      %vm2880 = vcmask 516096
      %2881 = vst.msk [vmem:[#allocation2 + $0xdf] sm:$0x1] %vm2880, 0.0
      %2882 = vst.msk [vmem:[#allocation2] sm:$0xff] %vm2877, %v2851
      %2883 = vst.msk [vmem:[#allocation2 + $0x8] sm:$0xff] %vm2877, %v2852
      %2884 = vst.msk [vmem:[#allocation2 + $0x10] sm:$0xff] %vm2877, %v2853
      %2885 = vst.msk [vmem:[#allocation2 + $0x18] sm:$0xff] %vm2877, %v2854
      %2886 = vst.msk [vmem:[#allocation2 + $0x20] sm:$0xff] %vm2877, %v2855
      %2887 = vst.msk [vmem:[#allocation2 + $0x28] sm:$0xff] %vm2877, %v2856
      %2888 = vst.msk [vmem:[#allocation2 + $0x30] sm:$0xff] %vm2877, %v2857
      %2889 = vst.msk [vmem:[#allocation2 + $0x38] sm:$0xff] %vm2877, %v2858
      %2890 = vst.msk [vmem:[#allocation2 + $0x40] sm:$0xff] %vm2877, %v2859
      %2891 = vst.msk [vmem:[#allocation2 + $0x48] sm:$0xff] %vm2877, %v2860
      %2892 = vst.msk [vmem:[#allocation2 + $0x50] sm:$0xff] %vm2877, %v2861
      %2893 = vst.msk [vmem:[#allocation2 + $0x58] sm:$0xff] %vm2877, %v2862
      %2894 = vst.msk [vmem:[#allocation2 + $0x60] sm:$0xff] %vm2877, %v2863
      %2895 = vst.msk [vmem:[#allocation2 + $0x68] sm:$0xff] %vm2877, %v2864
      %2896 = vst.msk [vmem:[#allocation2 + $0x70] sm:$0xff] %vm2877, %v2865
      %2897 = vst.msk [vmem:[#allocation2 + $0x78] sm:$0xff] %vm2877, %v2866
      %2898 = vst.msk [vmem:[#allocation2 + $0x80] sm:$0xff] %vm2877, %v2867
      %2899 = vst.msk [vmem:[#allocation2 + $0x88] sm:$0xff] %vm2877, %v2868
      %2900 = vst.msk [vmem:[#allocation2 + $0x90] sm:$0xff] %vm2877, %v2869
      %2901 = vst.msk [vmem:[#allocation2 + $0x98] sm:$0xff] %vm2877, %v2870
      %2902 = vst.msk [vmem:[#allocation2 + $0xa0] sm:$0xff] %vm2877, %v2871
      %2903 = vst.msk [vmem:[#allocation2 + $0xa8] sm:$0xff] %vm2877, %v2872
      %2904 = vst.msk [vmem:[#allocation2 + $0xb0] sm:$0xff] %vm2877, %v2873
      %2905 = vst.msk [vmem:[#allocation2 + $0xb8] sm:$0xff] %vm2877, %v2874
      %2906 = vst.msk [vmem:[#allocation2 + $0xc0] sm:$0xff] %vm2877, %v2875
      %vm2907 = vcmask 522240
      %2908 = vst.msk [vmem:[#allocation2 + $0xc8] sm:$0x7f] %vm2907, %v2876
      %v2909 = vld [vmem:[#allocation2] ss:$2 sm:$0xff]
      %s2910 = scalar_lea.vmem [#allocation2], 32
      %v2911 = vld [vmem:[%s2910] ss:$2 sm:$0xff]
      %s2912 = scalar_lea.vmem [#allocation2], 64
      %v2913 = vld [vmem:[%s2912] ss:$2 sm:$0xff]
      %s2914 = scalar_lea.vmem [#allocation2], 96
      %v2915 = vld [vmem:[%s2914] ss:$2 sm:$0xff]
      %s2916 = scalar_lea.vmem [#allocation2], 128
      %v2917 = vld [vmem:[%s2916] ss:$2 sm:$0xff]
      %s2918 = scalar_lea.vmem [#allocation2], 160
      %v2919 = vld [vmem:[%s2918] ss:$2 sm:$0xff]
      %s2920 = scalar_lea.vmem [#allocation2], 192
      %v2921 = vld [vmem:[%s2920] ss:$2 sm:$0xff]
      %2922 = vst.msk [vmem:[%s170] sm:$0x7f] %vm2907, %v2909
      %2923 = vst.msk [vmem:[%s170 + $0x8] sm:$0x7f] %vm2907, %v2911
      %2924 = vst.msk [vmem:[%s170 + $0x10] sm:$0x7f] %vm2907, %v2913
      %2925 = vst.msk [vmem:[%s170 + $0x18] sm:$0x7f] %vm2907, %v2915
      %2926 = vst.msk [vmem:[%s170 + $0x20] sm:$0x7f] %vm2907, %v2917
      %2927 = vst.msk [vmem:[%s170 + $0x28] sm:$0x7f] %vm2907, %v2919
      %2928 = vst.msk [vmem:[%s170 + $0x30] sm:$0x7f] %vm2907, %v2921
      %p2929 = scmp.lt.s32.totalorder %s14, 1
      %s2930 = scalar_select %p2929, %s14, 1
      %s2931 = smul.addr %s2930, 7
      %s2932 = smul.addr %s2931, 8
      %s2933 = scalar_lea.vmem %s3, %s2932
      // Predicated region
      $region33: #{simple_cnn_forward.4} parent=31 // pred_check
        %p2934 = pneg %p100
      $region34: #{simple_cnn_forward.4} parent=31 // pred_check_branch
        %2936 = sbr.rel (%p2934) target = $region36
      $region35: #{simple_cnn_forward.4} parent=31 // pred_region
        _
      $region36: #{simple_cnn_forward.4} parent=31 // pred_fallthru
        _
    $region32: #{simple_cnn_forward.4} parent=5 // pred_fallthru
      _
    %p2937 = scmp.le.s32.totalorder 2, %s9
    // Predicated region
    $region37: #{simple_cnn_forward.4} parent=5 // pred_check
      %p2938 = pneg %p2937
    $region38: #{simple_cnn_forward.4} parent=5 // pred_check_branch
      %2940 = sbr.rel (%p2938) target = $region40
    $region39: #{simple_cnn_forward.4} parent=5 // pred_region
      %s2941 = ssub.s32 %s9, 2
      // Predicated region
      $region41: #{simple_cnn_forward.4} parent=39 // pred_check
        %p2942 = pneg %p106
      $region42: #{simple_cnn_forward.4} parent=39 // pred_check_branch
        %2944 = sbr.rel (%p2942) target = $region44
      $region43: #{simple_cnn_forward.4} parent=39 // pred_region
        %p2945 = scmp.lt.s32.totalorder %s15, 1
        %s2946 = scalar_select %p2945, %s15, 1
        %s2947 = smul.addr %s2946, 7
        %s2948 = smul.addr %s2947, 8
        %s2949 = scalar_lea.vmem %s3, %s2948
      $region44: #{simple_cnn_forward.4} parent=39 // pred_fallthru
        _
    $region40: #{simple_cnn_forward.4} parent=5 // pred_fallthru
      _
  $region6: #{simple_cnn_forward.4} parent=0 // loop_footer
    %s13 = sadd.s32 1, %s9
  $region7: #{simple_cnn_forward.4} parent=0 // loop_footer_branch
    %8 = sbr.rel target = $region3
  $region8: #{simple_cnn_forward.4} parent=0 // loop_exit
    _

// kernel: simple_cnn_forward.3
$region0: #{simple_cnn_forward.3}
  #allocation0 [shape = 'u32[]', space=smem, size = 0x4, offset = 0x4, fixed_abs, tag = 'smem constant byte address 0x4 - core index']
  #allocation1 [shape = 'u32[144,128]{1,0:T(1,128)}', space=vmem, size = 0x12000, scoped, tag = 'internal scratch']
  #allocation2 [shape = 'f32[896,32]{1,0:T(8,128)}', space=vmem, size = 0x70000, scoped, tag = 'scratch operand']
  %s0 = inlined_call_operand.vmem [shape: f32[2,31,32,1], index: 0, kind: input, shape index: {}]
  %s1 = inlined_call_operand.vmem [shape: f32[9,1,32], index: 1, kind: input, shape index: {}]
  %s2 = inlined_call_operand.vmem [shape: f32[1,32], index: 2, kind: input, shape index: {}]
  %s3 = inlined_call_operand.vmem [shape: f32[2,14,14,32], index: 3, kind: output, shape index: {}]
  %s4 = sld [smem:[#allocation0]]
  $region45: #{simple_cnn_forward.3} parent=0
    _
  %s6 = ssub.s32 1, %s4
  %s7 = scalar_select 0, %s6, %s4
  loop: start=0, step=1, limit=4
  $region2: #{simple_cnn_forward.3} parent=0 // loop_pre_header
    _
  $region3: #{simple_cnn_forward.3} parent=0 // loop_header
    %s9 = sphi 0, %s13
    %p10 = scmp.ge.s32.totalorder %s9, 4
    %s19 = sphi 0, %s21
    %s22 = sphi 0, %s19
    %s23 = sphi 0, %s22
    %s39 = sphi 0, %s23
    %s43 = sphi 0, %s43
    %s45 = sphi 0, %s43
    %s46 = sphi 0, %s45
    %s60 = sphi 0, %s46
    %s64 = sphi 0, %s64
    %s66 = sphi 0, %s64
    %s67 = sphi 0, %s66
    %s81 = sphi 0, %s67
    %s87 = sphi 0, %s89
    %s90 = sphi 0, %s87
    %s91 = sphi 0, %s90
    %s107 = sphi 0, %s91
  $region4: #{simple_cnn_forward.3} parent=0 // loop_header_branch
    %12 = sbr.rel (%p10) target = $region8
  $region5: #{simple_cnn_forward.3} parent=0 // loop_body
    %s14 = ssub.s32 %s9, 1
    %s15 = ssub.s32 %s9, 2
    %s16 = sadd.s32 %s9, 1
    %s17 = ssub.s32 %s9, %s16
    %p18 = scmp.eq.s32.totalorder %s17, 0
    %s20 = sadd.s32 %s19, 1
    %s21 = scalar_select %p18, %s19, %s20
    %p24 = pneg %p18
    %p25 = scmp.eq.s32.totalorder %s9, 1
    %p26 = por %p24, %p25
    %p27 = scmp.ne.s32.totalorder %s19, %s22
    %p28 = scmp.eq.s32.totalorder %s9, 0
    %p29 = por %p27, %p28
    %p30 = scmp.ne.s32.totalorder %s19, %s22
    %p31 = scmp.eq.s32.totalorder %s14, 1
    %p32 = por %p30, %p31
    %p33 = scmp.ne.s32.totalorder %s22, %s23
    %p34 = scmp.eq.s32.totalorder %s14, 0
    %p35 = por %p33, %p34
    %p36 = scmp.ne.s32.totalorder %s22, %s23
    %p37 = scmp.eq.s32.totalorder %s15, 1
    %p38 = por %p36, %p37
    %p40 = scmp.ne.s32.totalorder %s23, %s39
    %p41 = scmp.eq.s32.totalorder %s15, 0
    %p42 = por %p40, %p41
    %s44 = sadd.s32 %s43, 1
    %p47 = scmp.eq.s32.totalorder %s9, 1
    %p48 = scmp.ne.s32.totalorder %s43, %s45
    %p49 = scmp.eq.s32.totalorder %s9, 0
    %p50 = por %p48, %p49
    %p51 = scmp.ne.s32.totalorder %s43, %s45
    %p52 = scmp.eq.s32.totalorder %s14, 1
    %p53 = por %p51, %p52
    %p54 = scmp.ne.s32.totalorder %s45, %s46
    %p55 = scmp.eq.s32.totalorder %s14, 0
    %p56 = por %p54, %p55
    %p57 = scmp.ne.s32.totalorder %s45, %s46
    %p58 = scmp.eq.s32.totalorder %s15, 1
    %p59 = por %p57, %p58
    %p61 = scmp.ne.s32.totalorder %s46, %s60
    %p62 = scmp.eq.s32.totalorder %s15, 0
    %p63 = por %p61, %p62
    %s65 = sadd.s32 %s64, 1
    %p68 = scmp.eq.s32.totalorder %s9, 1
    %p69 = scmp.ne.s32.totalorder %s64, %s66
    %p70 = scmp.eq.s32.totalorder %s9, 0
    %p71 = por %p69, %p70
    %p72 = scmp.ne.s32.totalorder %s64, %s66
    %p73 = scmp.eq.s32.totalorder %s14, 1
    %p74 = por %p72, %p73
    %p75 = scmp.ne.s32.totalorder %s66, %s67
    %p76 = scmp.eq.s32.totalorder %s14, 0
    %p77 = por %p75, %p76
    %p78 = scmp.ne.s32.totalorder %s66, %s67
    %p79 = scmp.eq.s32.totalorder %s15, 1
    %p80 = por %p78, %p79
    %p82 = scmp.ne.s32.totalorder %s67, %s81
    %p83 = scmp.eq.s32.totalorder %s15, 0
    %p84 = por %p82, %p83
    %s85 = ssub.s32 %s9, %s16
    %p86 = scmp.eq.s32.totalorder %s85, 0
    %s88 = sadd.s32 %s87, 1
    %s89 = scalar_select %p86, %s87, %s88
    %p92 = pneg %p86
    %p93 = scmp.eq.s32.totalorder %s9, 1
    %p94 = por %p92, %p93
    %p95 = scmp.ne.s32.totalorder %s87, %s90
    %p96 = scmp.eq.s32.totalorder %s9, 0
    %p97 = por %p95, %p96
    %p98 = scmp.ne.s32.totalorder %s87, %s90
    %p99 = scmp.eq.s32.totalorder %s14, 1
    %p100 = por %p98, %p99
    %p101 = scmp.ne.s32.totalorder %s90, %s91
    %p102 = scmp.eq.s32.totalorder %s14, 0
    %p103 = por %p101, %p102
    %p104 = scmp.ne.s32.totalorder %s90, %s91
    %p105 = scmp.eq.s32.totalorder %s15, 1
    %p106 = por %p104, %p105
    %p108 = scmp.ne.s32.totalorder %s91, %s107
    %p109 = scmp.eq.s32.totalorder %s15, 0
    %p110 = por %p108, %p109
    %p111 = scmp.le.s32.totalorder 1, %s9
    %p112 = scmp.lt.s32.totalorder %s9, 3
    %p113 = pnand %p111, %p112
    %p114 = pneg %p113
    // Predicated region
    $region9: #{simple_cnn_forward.3} parent=5 // pred_check
      _
    $region10: #{simple_cnn_forward.3} parent=5 // pred_check_branch
      %116 = sbr.rel (%p113) target = $region12
    $region11: #{simple_cnn_forward.3} parent=5 // pred_region
      %s117 = ssub.s32 %s9, 1
      // Predicated region
      $region13: #{simple_cnn_forward.3} parent=11 // pred_check
        %p118 = pneg %p56
      $region14: #{simple_cnn_forward.3} parent=11 // pred_check_branch
        %120 = sbr.rel (%p118) target = $region16
      $region15: #{simple_cnn_forward.3} parent=11 // pred_region
        _
      $region16: #{simple_cnn_forward.3} parent=11 // pred_fallthru
        _
      // Predicated region
      $region17: #{simple_cnn_forward.3} parent=11 // pred_check
        %p121 = pneg %p77
      $region18: #{simple_cnn_forward.3} parent=11 // pred_check_branch
        %123 = sbr.rel (%p121) target = $region20
      $region19: #{simple_cnn_forward.3} parent=11 // pred_region
        _
      $region20: #{simple_cnn_forward.3} parent=11 // pred_fallthru
        _
    $region12: #{simple_cnn_forward.3} parent=5 // pred_fallthru
      _
    %p124 = scmp.lt.s32.totalorder %s9, 2
    // Predicated region
    $region21: #{simple_cnn_forward.3} parent=5 // pred_check
      %p125 = pneg %p124
    $region22: #{simple_cnn_forward.3} parent=5 // pred_check_branch
      %127 = sbr.rel (%p125) target = $region24
    $region23: #{simple_cnn_forward.3} parent=5 // pred_region
      // Predicated region
      $region25: #{simple_cnn_forward.3} parent=23 // pred_check
        %p128 = pneg %p29
      $region26: #{simple_cnn_forward.3} parent=23 // pred_check_branch
        %130 = sbr.rel (%p128) target = $region28
      $region27: #{simple_cnn_forward.3} parent=23 // pred_region
        %p131 = scmp.lt.s32.totalorder %s9, 1
        %s132 = scalar_select %p131, %s9, 1
        %s133 = smul.addr %s132, 124
        %s134 = smul.addr %s133, 8
        %s135 = scalar_lea.vmem %s0, %s134
      $region28: #{simple_cnn_forward.3} parent=23 // pred_fallthru
        _
    $region24: #{simple_cnn_forward.3} parent=5 // pred_fallthru
      _
    %p136 = scmp.le.s32.totalorder 1, %s9
    %p137 = scmp.lt.s32.totalorder %s9, 3
    %p138 = pnand %p136, %p137
    %p139 = pneg %p138
    // Predicated region
    $region29: #{simple_cnn_forward.3} parent=5 // pred_check
      _
    $region30: #{simple_cnn_forward.3} parent=5 // pred_check_branch
      %141 = sbr.rel (%p138) target = $region32
    $region31: #{simple_cnn_forward.3} parent=5 // pred_region
      %s142 = ssub.s32 %s9, 1
      %p143 = scmp.lt.s32.totalorder %s14, 1
      %s144 = scalar_select %p143, %s14, 1
      %s145 = smul.addr %s144, 124
      %s146 = smul.addr %s145, 8
      %s147 = scalar_lea.vmem %s0, %s146
      %p148 = pneg %p35
      %p149 = pneg %p32
      %p150 = pneg %p56
      %p151 = pneg %p53
      %p152 = pneg %p77
      %p153 = pneg %p74
      %p154 = pneg %p103
      %p155 = pneg %p100
      %p156 = scmp.lt.s32.totalorder %s14, 1
      %s157 = scalar_select %p156, %s14, 1
      %s158 = smul.addr %s157, 28
      %s159 = smul.addr %s158, 8
      %s160 = scalar_lea.vmem %s3, %s159
      %p161 = scmp.lt.s32.totalorder %s14, 1
      %s162 = scalar_select %p161, %s14, 1
      %s163 = smul.addr %s162, 124
      %s164 = smul.addr %s163, 8
      %s165 = scalar_lea.vmem %s0, %s164
      %p166 = scmp.lt.s32.totalorder %s14, 1
      %s167 = scalar_select %p166, %s14, 1
      %s168 = smul.addr %s167, 28
      %s169 = smul.addr %s168, 8
      %s170 = scalar_lea.vmem %s3, %s169
      %v171 = vld [vmem:[%s165] sm:$0xff]
      %v172 = vld [vmem:[%s165 + $0x8] sm:$0xff]
      %v173 = vld [vmem:[%s165 + $0x10] sm:$0xff]
      %v174 = vld [vmem:[%s165 + $0x18] sm:$0xff]
      %v175 = vld [vmem:[%s165 + $0x20] sm:$0xff]
      %v176 = vld [vmem:[%s165 + $0x28] sm:$0xff]
      %v177 = vld [vmem:[%s165 + $0x30] sm:$0xff]
      %v178 = vld [vmem:[%s165 + $0x38] sm:$0xff]
      %v179 = vld [vmem:[%s165 + $0x40] sm:$0xff]
      %v180 = vld [vmem:[%s165 + $0x48] sm:$0xff]
      %v181 = vld [vmem:[%s165 + $0x50] sm:$0xff]
      %v182 = vld [vmem:[%s165 + $0x58] sm:$0xff]
      %v183 = vld [vmem:[%s165 + $0x60] sm:$0xff]
      %v184 = vld [vmem:[%s165 + $0x68] sm:$0xff]
      %v185 = vld [vmem:[%s165 + $0x70] sm:$0xff]
      %v186 = vld [vmem:[%s165 + $0x78] sm:$0xff]
      %v187 = vld [vmem:[%s165 + $0x80] sm:$0xff]
      %v188 = vld [vmem:[%s165 + $0x88] sm:$0xff]
      %v189 = vld [vmem:[%s165 + $0x90] sm:$0xff]
      %v190 = vld [vmem:[%s165 + $0x98] sm:$0xff]
      %v191 = vld [vmem:[%s165 + $0xa0] sm:$0xff]
      %v192 = vld [vmem:[%s165 + $0xa8] sm:$0xff]
      %v193 = vld [vmem:[%s165 + $0xb0] sm:$0xff]
      %v194 = vld [vmem:[%s165 + $0xb8] sm:$0xff]
      %v195 = vld [vmem:[%s165 + $0xc0] sm:$0xff]
      %v196 = vld [vmem:[%s165 + $0xc8] sm:$0xff]
      %v197 = vld [vmem:[%s165 + $0xd0] sm:$0xff]
      %v198 = vld [vmem:[%s165 + $0xd8] sm:$0xff]
      %v199 = vld [vmem:[%s165 + $0xe0] sm:$0xff]
      %v200 = vld [vmem:[%s165 + $0xe8] sm:$0xff]
      %v201 = vld [vmem:[%s165 + $0xf0] sm:$0xff]
      %v202 = vld [vmem:[%s165 + $0xf8] sm:$0xff]
      %v203 = vld [vmem:[%s165 + $0x100] sm:$0xff]
      %v204 = vld [vmem:[%s165 + $0x108] sm:$0xff]
      %v205 = vld [vmem:[%s165 + $0x110] sm:$0xff]
      %v206 = vld [vmem:[%s165 + $0x118] sm:$0xff]
      %v207 = vld [vmem:[%s165 + $0x120] sm:$0xff]
      %v208 = vld [vmem:[%s165 + $0x128] sm:$0xff]
      %v209 = vld [vmem:[%s165 + $0x130] sm:$0xff]
      %v210 = vld [vmem:[%s165 + $0x138] sm:$0xff]
      %v211 = vld [vmem:[%s165 + $0x140] sm:$0xff]
      %v212 = vld [vmem:[%s165 + $0x148] sm:$0xff]
      %v213 = vld [vmem:[%s165 + $0x150] sm:$0xff]
      %v214 = vld [vmem:[%s165 + $0x158] sm:$0xff]
      %v215 = vld [vmem:[%s165 + $0x160] sm:$0xff]
      %v216 = vld [vmem:[%s165 + $0x168] sm:$0xff]
      %v217 = vld [vmem:[%s165 + $0x170] sm:$0xff]
      %v218 = vld [vmem:[%s165 + $0x178] sm:$0xff]
      %v219 = vld [vmem:[%s165 + $0x180] sm:$0xff]
      %v220 = vld [vmem:[%s165 + $0x188] sm:$0xff]
      %v221 = vld [vmem:[%s165 + $0x190] sm:$0xff]
      %v222 = vld [vmem:[%s165 + $0x198] sm:$0xff]
      %v223 = vld [vmem:[%s165 + $0x1a0] sm:$0xff]
      %v224 = vld [vmem:[%s165 + $0x1a8] sm:$0xff]
      %v225 = vld [vmem:[%s165 + $0x1b0] sm:$0xff]
      %v226 = vld [vmem:[%s165 + $0x1b8] sm:$0xff]
      %v227 = vld [vmem:[%s165 + $0x1c0] sm:$0xff]
      %v228 = vld [vmem:[%s165 + $0x1c8] sm:$0xff]
      %v229 = vld [vmem:[%s165 + $0x1d0] sm:$0xff]
      %v230 = vld [vmem:[%s165 + $0x1d8] sm:$0xff]
      %v231 = vld [vmem:[%s165 + $0x1e0] sm:$0xff]
      %v232 = vld [vmem:[%s165 + $0x1e8] sm:$0xff]
      %v233 = vld [vmem:[%s165 + $0x1f0] sm:$0xff]
      %v234 = vld [vmem:[%s165 + $0x1f8] sm:$0xff]
      %v235 = vld [vmem:[%s165 + $0x200] sm:$0xff]
      %v236 = vld [vmem:[%s165 + $0x208] sm:$0xff]
      %v237 = vld [vmem:[%s165 + $0x210] sm:$0xff]
      %v238 = vld [vmem:[%s165 + $0x218] sm:$0xff]
      %v239 = vld [vmem:[%s165 + $0x220] sm:$0xff]
      %v240 = vld [vmem:[%s165 + $0x228] sm:$0xff]
      %v241 = vld [vmem:[%s165 + $0x230] sm:$0xff]
      %v242 = vld [vmem:[%s165 + $0x238] sm:$0xff]
      %v243 = vld [vmem:[%s165 + $0x240] sm:$0xff]
      %v244 = vld [vmem:[%s165 + $0x248] sm:$0xff]
      %v245 = vld [vmem:[%s165 + $0x250] sm:$0xff]
      %v246 = vld [vmem:[%s165 + $0x258] sm:$0xff]
      %v247 = vld [vmem:[%s165 + $0x260] sm:$0xff]
      %v248 = vld [vmem:[%s165 + $0x268] sm:$0xff]
      %v249 = vld [vmem:[%s165 + $0x270] sm:$0xff]
      %v250 = vld [vmem:[%s165 + $0x278] sm:$0xff]
      %v251 = vld [vmem:[%s165 + $0x280] sm:$0xff]
      %v252 = vld [vmem:[%s165 + $0x288] sm:$0xff]
      %v253 = vld [vmem:[%s165 + $0x290] sm:$0xff]
      %v254 = vld [vmem:[%s165 + $0x298] sm:$0xff]
      %v255 = vld [vmem:[%s165 + $0x2a0] sm:$0xff]
      %v256 = vld [vmem:[%s165 + $0x2a8] sm:$0xff]
      %v257 = vld [vmem:[%s165 + $0x2b0] sm:$0xff]
      %v258 = vld [vmem:[%s165 + $0x2b8] sm:$0xff]
      %v259 = vld [vmem:[%s165 + $0x2c0] sm:$0xff]
      %v260 = vld [vmem:[%s165 + $0x2c8] sm:$0xff]
      %v261 = vld [vmem:[%s165 + $0x2d0] sm:$0xff]
      %v262 = vld [vmem:[%s165 + $0x2d8] sm:$0xff]
      %v263 = vld [vmem:[%s165 + $0x2e0] sm:$0xff]
      %v264 = vld [vmem:[%s165 + $0x2e8] sm:$0xff]
      %v265 = vld [vmem:[%s165 + $0x2f0] sm:$0xff]
      %v266 = vld [vmem:[%s165 + $0x2f8] sm:$0xff]
      %v267 = vld [vmem:[%s165 + $0x300] sm:$0xff]
      %v268 = vld [vmem:[%s165 + $0x308] sm:$0xff]
      %v269 = vld [vmem:[%s165 + $0x310] sm:$0xff]
      %v270 = vld [vmem:[%s165 + $0x318] sm:$0xff]
      %v271 = vld [vmem:[%s165 + $0x320] sm:$0xff]
      %v272 = vld [vmem:[%s165 + $0x328] sm:$0xff]
      %v273 = vld [vmem:[%s165 + $0x330] sm:$0xff]
      %v274 = vld [vmem:[%s165 + $0x338] sm:$0xff]
      %v275 = vld [vmem:[%s165 + $0x340] sm:$0xff]
      %v276 = vld [vmem:[%s165 + $0x348] sm:$0xff]
      %v277 = vld [vmem:[%s165 + $0x350] sm:$0xff]
      %v278 = vld [vmem:[%s165 + $0x358] sm:$0xff]
      %v279 = vld [vmem:[%s165 + $0x360] sm:$0xff]
      %v280 = vld [vmem:[%s165 + $0x368] sm:$0xff]
      %v281 = vld [vmem:[%s165 + $0x370] sm:$0xff]
      %v282 = vld [vmem:[%s165 + $0x378] sm:$0xff]
      %v283 = vld [vmem:[%s165 + $0x380] sm:$0xff]
      %v284 = vld [vmem:[%s165 + $0x388] sm:$0xff]
      %v285 = vld [vmem:[%s165 + $0x390] sm:$0xff]
      %v286 = vld [vmem:[%s165 + $0x398] sm:$0xff]
      %v287 = vld [vmem:[%s165 + $0x3a0] sm:$0xff]
      %v288 = vld [vmem:[%s165 + $0x3a8] sm:$0xff]
      %v289 = vld [vmem:[%s165 + $0x3b0] sm:$0xff]
      %v290 = vld [vmem:[%s165 + $0x3b8] sm:$0xff]
      %v291 = vld [vmem:[%s165 + $0x3c0] sm:$0xff]
      %v292 = vld [vmem:[%s1] sm:$0x1]
      %294 = vset.pattern.permute.xlu0 0
      %295 = vperm.xlu0 %294, %v171
      %v296 = vpop.permute.xlu0 %295
      %299 = vset.pattern.permute.xlu0 0
      %300 = vperm.xlu0 %299, %v172
      %v301 = vpop.permute.xlu0 %300
      %304 = vset.pattern.permute.xlu0 0
      %305 = vperm.xlu0 %304, %v173
      %v306 = vpop.permute.xlu0 %305
      %309 = vset.pattern.permute.xlu0 0
      %310 = vperm.xlu0 %309, %v174
      %v311 = vpop.permute.xlu0 %310
      %314 = vset.pattern.permute.xlu0 0
      %315 = vperm.xlu0 %314, %v175
      %v316 = vpop.permute.xlu0 %315
      %319 = vset.pattern.permute.xlu0 0
      %320 = vperm.xlu0 %319, %v176
      %v321 = vpop.permute.xlu0 %320
      %324 = vset.pattern.permute.xlu0 0
      %325 = vperm.xlu0 %324, %v177
      %v326 = vpop.permute.xlu0 %325
      %329 = vset.pattern.permute.xlu0 0
      %330 = vperm.xlu0 %329, %v178
      %v331 = vpop.permute.xlu0 %330
      %334 = vset.pattern.permute.xlu0 0
      %335 = vperm.xlu0 %334, %v179
      %v336 = vpop.permute.xlu0 %335
      %339 = vset.pattern.permute.xlu0 0
      %340 = vperm.xlu0 %339, %v180
      %v341 = vpop.permute.xlu0 %340
      %344 = vset.pattern.permute.xlu0 0
      %345 = vperm.xlu0 %344, %v181
      %v346 = vpop.permute.xlu0 %345
      %349 = vset.pattern.permute.xlu0 0
      %350 = vperm.xlu0 %349, %v182
      %v351 = vpop.permute.xlu0 %350
      %354 = vset.pattern.permute.xlu0 0
      %355 = vperm.xlu0 %354, %v183
      %v356 = vpop.permute.xlu0 %355
      %359 = vset.pattern.permute.xlu0 0
      %360 = vperm.xlu0 %359, %v184
      %v361 = vpop.permute.xlu0 %360
      %364 = vset.pattern.permute.xlu0 0
      %365 = vperm.xlu0 %364, %v185
      %v366 = vpop.permute.xlu0 %365
      %369 = vset.pattern.permute.xlu0 0
      %370 = vperm.xlu0 %369, %v186
      %v371 = vpop.permute.xlu0 %370
      %374 = vset.pattern.permute.xlu0 0
      %375 = vperm.xlu0 %374, %v187
      %v376 = vpop.permute.xlu0 %375
      %379 = vset.pattern.permute.xlu0 0
      %380 = vperm.xlu0 %379, %v188
      %v381 = vpop.permute.xlu0 %380
      %384 = vset.pattern.permute.xlu0 0
      %385 = vperm.xlu0 %384, %v189
      %v386 = vpop.permute.xlu0 %385
      %389 = vset.pattern.permute.xlu0 0
      %390 = vperm.xlu0 %389, %v190
      %v391 = vpop.permute.xlu0 %390
      %394 = vset.pattern.permute.xlu0 0
      %395 = vperm.xlu0 %394, %v191
      %v396 = vpop.permute.xlu0 %395
      %399 = vset.pattern.permute.xlu0 0
      %400 = vperm.xlu0 %399, %v192
      %v401 = vpop.permute.xlu0 %400
      %404 = vset.pattern.permute.xlu0 0
      %405 = vperm.xlu0 %404, %v193
      %v406 = vpop.permute.xlu0 %405
      %409 = vset.pattern.permute.xlu0 0
      %410 = vperm.xlu0 %409, %v194
      %v411 = vpop.permute.xlu0 %410
      %414 = vset.pattern.permute.xlu0 0
      %415 = vperm.xlu0 %414, %v195
      %v416 = vpop.permute.xlu0 %415
      %419 = vset.pattern.permute.xlu0 0
      %420 = vperm.xlu0 %419, %v196
      %v421 = vpop.permute.xlu0 %420
      %424 = vset.pattern.permute.xlu0 0
      %425 = vperm.xlu0 %424, %v197
      %v426 = vpop.permute.xlu0 %425
      %429 = vset.pattern.permute.xlu0 0
      %430 = vperm.xlu0 %429, %v198
      %v431 = vpop.permute.xlu0 %430
      %434 = vset.pattern.permute.xlu0 0
      %435 = vperm.xlu0 %434, %v199
      %v436 = vpop.permute.xlu0 %435
      %439 = vset.pattern.permute.xlu0 0
      %440 = vperm.xlu0 %439, %v200
      %v441 = vpop.permute.xlu0 %440
      %444 = vset.pattern.permute.xlu0 0
      %445 = vperm.xlu0 %444, %v201
      %v446 = vpop.permute.xlu0 %445
      %449 = vset.pattern.permute.xlu0 0
      %450 = vperm.xlu0 %449, %v202
      %v451 = vpop.permute.xlu0 %450
      %454 = vset.pattern.permute.xlu0 0
      %455 = vperm.xlu0 %454, %v203
      %v456 = vpop.permute.xlu0 %455
      %459 = vset.pattern.permute.xlu0 0
      %460 = vperm.xlu0 %459, %v204
      %v461 = vpop.permute.xlu0 %460
      %464 = vset.pattern.permute.xlu0 0
      %465 = vperm.xlu0 %464, %v205
      %v466 = vpop.permute.xlu0 %465
      %469 = vset.pattern.permute.xlu0 0
      %470 = vperm.xlu0 %469, %v206
      %v471 = vpop.permute.xlu0 %470
      %474 = vset.pattern.permute.xlu0 0
      %475 = vperm.xlu0 %474, %v207
      %v476 = vpop.permute.xlu0 %475
      %479 = vset.pattern.permute.xlu0 0
      %480 = vperm.xlu0 %479, %v208
      %v481 = vpop.permute.xlu0 %480
      %484 = vset.pattern.permute.xlu0 0
      %485 = vperm.xlu0 %484, %v209
      %v486 = vpop.permute.xlu0 %485
      %489 = vset.pattern.permute.xlu0 0
      %490 = vperm.xlu0 %489, %v210
      %v491 = vpop.permute.xlu0 %490
      %494 = vset.pattern.permute.xlu0 0
      %495 = vperm.xlu0 %494, %v211
      %v496 = vpop.permute.xlu0 %495
      %499 = vset.pattern.permute.xlu0 0
      %500 = vperm.xlu0 %499, %v212
      %v501 = vpop.permute.xlu0 %500
      %504 = vset.pattern.permute.xlu0 0
      %505 = vperm.xlu0 %504, %v213
      %v506 = vpop.permute.xlu0 %505
      %509 = vset.pattern.permute.xlu0 0
      %510 = vperm.xlu0 %509, %v214
      %v511 = vpop.permute.xlu0 %510
      %514 = vset.pattern.permute.xlu0 0
      %515 = vperm.xlu0 %514, %v215
      %v516 = vpop.permute.xlu0 %515
      %519 = vset.pattern.permute.xlu0 0
      %520 = vperm.xlu0 %519, %v216
      %v521 = vpop.permute.xlu0 %520
      %524 = vset.pattern.permute.xlu0 0
      %525 = vperm.xlu0 %524, %v217
      %v526 = vpop.permute.xlu0 %525
      %529 = vset.pattern.permute.xlu0 0
      %530 = vperm.xlu0 %529, %v218
      %v531 = vpop.permute.xlu0 %530
      %534 = vset.pattern.permute.xlu0 0
      %535 = vperm.xlu0 %534, %v219
      %v536 = vpop.permute.xlu0 %535
      %539 = vset.pattern.permute.xlu0 0
      %540 = vperm.xlu0 %539, %v220
      %v541 = vpop.permute.xlu0 %540
      %544 = vset.pattern.permute.xlu0 0
      %545 = vperm.xlu0 %544, %v221
      %v546 = vpop.permute.xlu0 %545
      %549 = vset.pattern.permute.xlu0 0
      %550 = vperm.xlu0 %549, %v222
      %v551 = vpop.permute.xlu0 %550
      %554 = vset.pattern.permute.xlu0 0
      %555 = vperm.xlu0 %554, %v223
      %v556 = vpop.permute.xlu0 %555
      %559 = vset.pattern.permute.xlu0 0
      %560 = vperm.xlu0 %559, %v224
      %v561 = vpop.permute.xlu0 %560
      %564 = vset.pattern.permute.xlu0 0
      %565 = vperm.xlu0 %564, %v225
      %v566 = vpop.permute.xlu0 %565
      %569 = vset.pattern.permute.xlu0 0
      %570 = vperm.xlu0 %569, %v226
      %v571 = vpop.permute.xlu0 %570
      %574 = vset.pattern.permute.xlu0 0
      %575 = vperm.xlu0 %574, %v227
      %v576 = vpop.permute.xlu0 %575
      %579 = vset.pattern.permute.xlu0 0
      %580 = vperm.xlu0 %579, %v228
      %v581 = vpop.permute.xlu0 %580
      %584 = vset.pattern.permute.xlu0 0
      %585 = vperm.xlu0 %584, %v229
      %v586 = vpop.permute.xlu0 %585
      %589 = vset.pattern.permute.xlu0 0
      %590 = vperm.xlu0 %589, %v230
      %v591 = vpop.permute.xlu0 %590
      %594 = vset.pattern.permute.xlu0 0
      %595 = vperm.xlu0 %594, %v231
      %v596 = vpop.permute.xlu0 %595
      %599 = vset.pattern.permute.xlu0 0
      %600 = vperm.xlu0 %599, %v232
      %v601 = vpop.permute.xlu0 %600
      %604 = vset.pattern.permute.xlu0 0
      %605 = vperm.xlu0 %604, %v233
      %v606 = vpop.permute.xlu0 %605
      %609 = vset.pattern.permute.xlu0 0
      %610 = vperm.xlu0 %609, %v234
      %v611 = vpop.permute.xlu0 %610
      %614 = vset.pattern.permute.xlu0 0
      %615 = vperm.xlu0 %614, %v235
      %v616 = vpop.permute.xlu0 %615
      %619 = vset.pattern.permute.xlu0 0
      %620 = vperm.xlu0 %619, %v236
      %v621 = vpop.permute.xlu0 %620
      %624 = vset.pattern.permute.xlu0 0
      %625 = vperm.xlu0 %624, %v237
      %v626 = vpop.permute.xlu0 %625
      %629 = vset.pattern.permute.xlu0 0
      %630 = vperm.xlu0 %629, %v238
      %v631 = vpop.permute.xlu0 %630
      %634 = vset.pattern.permute.xlu0 0
      %635 = vperm.xlu0 %634, %v239
      %v636 = vpop.permute.xlu0 %635
      %639 = vset.pattern.permute.xlu0 0
      %640 = vperm.xlu0 %639, %v240
      %v641 = vpop.permute.xlu0 %640
      %644 = vset.pattern.permute.xlu0 0
      %645 = vperm.xlu0 %644, %v241
      %v646 = vpop.permute.xlu0 %645
      %649 = vset.pattern.permute.xlu0 0
      %650 = vperm.xlu0 %649, %v242
      %v651 = vpop.permute.xlu0 %650
      %654 = vset.pattern.permute.xlu0 0
      %655 = vperm.xlu0 %654, %v243
      %v656 = vpop.permute.xlu0 %655
      %659 = vset.pattern.permute.xlu0 0
      %660 = vperm.xlu0 %659, %v244
      %v661 = vpop.permute.xlu0 %660
      %664 = vset.pattern.permute.xlu0 0
      %665 = vperm.xlu0 %664, %v245
      %v666 = vpop.permute.xlu0 %665
      %669 = vset.pattern.permute.xlu0 0
      %670 = vperm.xlu0 %669, %v246
      %v671 = vpop.permute.xlu0 %670
      %674 = vset.pattern.permute.xlu0 0
      %675 = vperm.xlu0 %674, %v247
      %v676 = vpop.permute.xlu0 %675
      %679 = vset.pattern.permute.xlu0 0
      %680 = vperm.xlu0 %679, %v248
      %v681 = vpop.permute.xlu0 %680
      %684 = vset.pattern.permute.xlu0 0
      %685 = vperm.xlu0 %684, %v249
      %v686 = vpop.permute.xlu0 %685
      %689 = vset.pattern.permute.xlu0 0
      %690 = vperm.xlu0 %689, %v250
      %v691 = vpop.permute.xlu0 %690
      %694 = vset.pattern.permute.xlu0 0
      %695 = vperm.xlu0 %694, %v251
      %v696 = vpop.permute.xlu0 %695
      %699 = vset.pattern.permute.xlu0 0
      %700 = vperm.xlu0 %699, %v252
      %v701 = vpop.permute.xlu0 %700
      %704 = vset.pattern.permute.xlu0 0
      %705 = vperm.xlu0 %704, %v253
      %v706 = vpop.permute.xlu0 %705
      %709 = vset.pattern.permute.xlu0 0
      %710 = vperm.xlu0 %709, %v254
      %v711 = vpop.permute.xlu0 %710
      %714 = vset.pattern.permute.xlu0 0
      %715 = vperm.xlu0 %714, %v255
      %v716 = vpop.permute.xlu0 %715
      %719 = vset.pattern.permute.xlu0 0
      %720 = vperm.xlu0 %719, %v256
      %v721 = vpop.permute.xlu0 %720
      %724 = vset.pattern.permute.xlu0 0
      %725 = vperm.xlu0 %724, %v257
      %v726 = vpop.permute.xlu0 %725
      %729 = vset.pattern.permute.xlu0 0
      %730 = vperm.xlu0 %729, %v258
      %v731 = vpop.permute.xlu0 %730
      %734 = vset.pattern.permute.xlu0 0
      %735 = vperm.xlu0 %734, %v259
      %v736 = vpop.permute.xlu0 %735
      %739 = vset.pattern.permute.xlu0 0
      %740 = vperm.xlu0 %739, %v260
      %v741 = vpop.permute.xlu0 %740
      %744 = vset.pattern.permute.xlu0 0
      %745 = vperm.xlu0 %744, %v261
      %v746 = vpop.permute.xlu0 %745
      %749 = vset.pattern.permute.xlu0 0
      %750 = vperm.xlu0 %749, %v262
      %v751 = vpop.permute.xlu0 %750
      %754 = vset.pattern.permute.xlu0 0
      %755 = vperm.xlu0 %754, %v263
      %v756 = vpop.permute.xlu0 %755
      %759 = vset.pattern.permute.xlu0 0
      %760 = vperm.xlu0 %759, %v264
      %v761 = vpop.permute.xlu0 %760
      %764 = vset.pattern.permute.xlu0 0
      %765 = vperm.xlu0 %764, %v265
      %v766 = vpop.permute.xlu0 %765
      %769 = vset.pattern.permute.xlu0 0
      %770 = vperm.xlu0 %769, %v266
      %v771 = vpop.permute.xlu0 %770
      %774 = vset.pattern.permute.xlu0 0
      %775 = vperm.xlu0 %774, %v267
      %v776 = vpop.permute.xlu0 %775
      %779 = vset.pattern.permute.xlu0 0
      %780 = vperm.xlu0 %779, %v268
      %v781 = vpop.permute.xlu0 %780
      %784 = vset.pattern.permute.xlu0 0
      %785 = vperm.xlu0 %784, %v269
      %v786 = vpop.permute.xlu0 %785
      %789 = vset.pattern.permute.xlu0 0
      %790 = vperm.xlu0 %789, %v270
      %v791 = vpop.permute.xlu0 %790
      %794 = vset.pattern.permute.xlu0 0
      %795 = vperm.xlu0 %794, %v271
      %v796 = vpop.permute.xlu0 %795
      %799 = vset.pattern.permute.xlu0 0
      %800 = vperm.xlu0 %799, %v272
      %v801 = vpop.permute.xlu0 %800
      %804 = vset.pattern.permute.xlu0 0
      %805 = vperm.xlu0 %804, %v273
      %v806 = vpop.permute.xlu0 %805
      %809 = vset.pattern.permute.xlu0 0
      %810 = vperm.xlu0 %809, %v274
      %v811 = vpop.permute.xlu0 %810
      %814 = vset.pattern.permute.xlu0 0
      %815 = vperm.xlu0 %814, %v275
      %v816 = vpop.permute.xlu0 %815
      %819 = vset.pattern.permute.xlu0 0
      %820 = vperm.xlu0 %819, %v276
      %v821 = vpop.permute.xlu0 %820
      %824 = vset.pattern.permute.xlu0 0
      %825 = vperm.xlu0 %824, %v277
      %v826 = vpop.permute.xlu0 %825
      %829 = vset.pattern.permute.xlu0 0
      %830 = vperm.xlu0 %829, %v278
      %v831 = vpop.permute.xlu0 %830
      %834 = vset.pattern.permute.xlu0 0
      %835 = vperm.xlu0 %834, %v279
      %v836 = vpop.permute.xlu0 %835
      %839 = vset.pattern.permute.xlu0 0
      %840 = vperm.xlu0 %839, %v280
      %v841 = vpop.permute.xlu0 %840
      %844 = vset.pattern.permute.xlu0 0
      %845 = vperm.xlu0 %844, %v281
      %v846 = vpop.permute.xlu0 %845
      %849 = vset.pattern.permute.xlu0 0
      %850 = vperm.xlu0 %849, %v282
      %v851 = vpop.permute.xlu0 %850
      %v854 = vlaneseq
      %v855 = vshrl.u32 %v854, 7
      %v856 = vsub.s32 0, %v855
      %v857 = vrot.slane %v292, %v856
      %v859 = vmul.f32 %v296, %v857
      %v860 = vmul.f32 %v301, %v857
      %v861 = vmul.f32 %v306, %v857
      %v862 = vmul.f32 %v311, %v857
      %v863 = vmul.f32 %v316, %v857
      %v864 = vmul.f32 %v321, %v857
      %v865 = vmul.f32 %v326, %v857
      %v866 = vmul.f32 %v331, %v857
      %v867 = vmul.f32 %v336, %v857
      %v868 = vmul.f32 %v341, %v857
      %v869 = vmul.f32 %v346, %v857
      %v870 = vmul.f32 %v351, %v857
      %v871 = vmul.f32 %v356, %v857
      %v872 = vmul.f32 %v361, %v857
      %v873 = vmul.f32 %v366, %v857
      %v874 = vmul.f32 %v371, %v857
      %v875 = vmul.f32 %v376, %v857
      %v876 = vmul.f32 %v381, %v857
      %v877 = vmul.f32 %v386, %v857
      %v878 = vmul.f32 %v391, %v857
      %v879 = vmul.f32 %v396, %v857
      %v880 = vmul.f32 %v401, %v857
      %v881 = vmul.f32 %v406, %v857
      %v882 = vmul.f32 %v411, %v857
      %v883 = vmul.f32 %v416, %v857
      %v884 = vmul.f32 %v421, %v857
      %v885 = vmul.f32 %v426, %v857
      %v886 = vmul.f32 %v431, %v857
      %v887 = vmul.f32 %v436, %v857
      %v888 = vmul.f32 %v441, %v857
      %v889 = vmul.f32 %v446, %v857
      %v890 = vmul.f32 %v451, %v857
      %v891 = vmul.f32 %v456, %v857
      %v892 = vmul.f32 %v461, %v857
      %v893 = vmul.f32 %v466, %v857
      %v894 = vmul.f32 %v471, %v857
      %v895 = vmul.f32 %v476, %v857
      %v896 = vmul.f32 %v481, %v857
      %v897 = vmul.f32 %v486, %v857
      %v898 = vmul.f32 %v491, %v857
      %v899 = vmul.f32 %v496, %v857
      %v900 = vmul.f32 %v501, %v857
      %v901 = vmul.f32 %v506, %v857
      %v902 = vmul.f32 %v511, %v857
      %v903 = vmul.f32 %v516, %v857
      %v904 = vmul.f32 %v521, %v857
      %v905 = vmul.f32 %v526, %v857
      %v906 = vmul.f32 %v531, %v857
      %v907 = vmul.f32 %v536, %v857
      %v908 = vmul.f32 %v541, %v857
      %v909 = vmul.f32 %v546, %v857
      %v910 = vmul.f32 %v551, %v857
      %v911 = vmul.f32 %v556, %v857
      %v912 = vmul.f32 %v561, %v857
      %v913 = vmul.f32 %v566, %v857
      %v914 = vmul.f32 %v571, %v857
      %v915 = vmul.f32 %v576, %v857
      %v916 = vmul.f32 %v581, %v857
      %v917 = vmul.f32 %v586, %v857
      %v918 = vmul.f32 %v591, %v857
      %v919 = vmul.f32 %v596, %v857
      %v920 = vmul.f32 %v601, %v857
      %v921 = vmul.f32 %v606, %v857
      %v922 = vmul.f32 %v611, %v857
      %v923 = vmul.f32 %v616, %v857
      %v924 = vmul.f32 %v621, %v857
      %v925 = vmul.f32 %v626, %v857
      %v926 = vmul.f32 %v631, %v857
      %v927 = vmul.f32 %v636, %v857
      %v928 = vmul.f32 %v641, %v857
      %v929 = vmul.f32 %v646, %v857
      %v930 = vmul.f32 %v651, %v857
      %v931 = vmul.f32 %v656, %v857
      %v932 = vmul.f32 %v661, %v857
      %v933 = vmul.f32 %v666, %v857
      %v934 = vmul.f32 %v671, %v857
      %v935 = vmul.f32 %v676, %v857
      %v936 = vmul.f32 %v681, %v857
      %v937 = vmul.f32 %v686, %v857
      %v938 = vmul.f32 %v691, %v857
      %v939 = vmul.f32 %v696, %v857
      %v940 = vmul.f32 %v701, %v857
      %v941 = vmul.f32 %v706, %v857
      %v942 = vmul.f32 %v711, %v857
      %v943 = vmul.f32 %v716, %v857
      %v944 = vmul.f32 %v721, %v857
      %v945 = vmul.f32 %v726, %v857
      %v946 = vmul.f32 %v731, %v857
      %v947 = vmul.f32 %v736, %v857
      %v948 = vmul.f32 %v741, %v857
      %v949 = vmul.f32 %v746, %v857
      %v950 = vmul.f32 %v751, %v857
      %v951 = vmul.f32 %v756, %v857
      %v952 = vmul.f32 %v761, %v857
      %v953 = vmul.f32 %v766, %v857
      %v954 = vmul.f32 %v771, %v857
      %v955 = vmul.f32 %v776, %v857
      %v956 = vmul.f32 %v781, %v857
      %v957 = vmul.f32 %v786, %v857
      %v958 = vmul.f32 %v791, %v857
      %v959 = vmul.f32 %v796, %v857
      %v960 = vmul.f32 %v801, %v857
      %v961 = vmul.f32 %v806, %v857
      %v962 = vmul.f32 %v811, %v857
      %v963 = vmul.f32 %v816, %v857
      %v964 = vmul.f32 %v821, %v857
      %v965 = vmul.f32 %v826, %v857
      %v966 = vmul.f32 %v831, %v857
      %v967 = vmul.f32 %v836, %v857
      %v968 = vmul.f32 %v841, %v857
      %v969 = vmul.f32 %v846, %v857
      %v970 = vmul.f32 %v851, %v857
      %s971 = scalar_lea.vmem %s1, 1
      %v972 = vld [vmem:[%s971] sm:$0x1]
      %974 = vset.pattern.permute.xlu0 0
      %975 = vperm.xlu0 %974, %v283
      %v976 = vpop.permute.xlu0 %975
      %v979 = vlaneseq
      %v980 = vshrl.u32 %v979, 7
      %v981 = vsub.s32 0, %v980
      %v982 = vrot.slane %v972, %v981
      %v984 = vmul.f32 %v296, %v982
      %v985 = vmul.f32 %v301, %v982
      %v986 = vmul.f32 %v306, %v982
      %v987 = vmul.f32 %v311, %v982
      %v988 = vmul.f32 %v316, %v982
      %v989 = vmul.f32 %v321, %v982
      %v990 = vmul.f32 %v326, %v982
      %v991 = vmul.f32 %v331, %v982
      %v992 = vmul.f32 %v336, %v982
      %v993 = vmul.f32 %v341, %v982
      %v994 = vmul.f32 %v346, %v982
      %v995 = vmul.f32 %v351, %v982
      %v996 = vmul.f32 %v356, %v982
      %v997 = vmul.f32 %v361, %v982
      %v998 = vmul.f32 %v366, %v982
      %v999 = vmul.f32 %v371, %v982
      %v1000 = vmul.f32 %v376, %v982
      %v1001 = vmul.f32 %v381, %v982
      %v1002 = vmul.f32 %v386, %v982
      %v1003 = vmul.f32 %v391, %v982
      %v1004 = vmul.f32 %v396, %v982
      %v1005 = vmul.f32 %v401, %v982
      %v1006 = vmul.f32 %v406, %v982
      %v1007 = vmul.f32 %v411, %v982
      %v1008 = vmul.f32 %v416, %v982
      %v1009 = vmul.f32 %v421, %v982
      %v1010 = vmul.f32 %v426, %v982
      %v1011 = vmul.f32 %v431, %v982
      %v1012 = vmul.f32 %v436, %v982
      %v1013 = vmul.f32 %v441, %v982
      %v1014 = vmul.f32 %v446, %v982
      %v1015 = vmul.f32 %v451, %v982
      %v1016 = vmul.f32 %v456, %v982
      %v1017 = vmul.f32 %v461, %v982
      %v1018 = vmul.f32 %v466, %v982
      %v1019 = vmul.f32 %v471, %v982
      %v1020 = vmul.f32 %v476, %v982
      %v1021 = vmul.f32 %v481, %v982
      %v1022 = vmul.f32 %v486, %v982
      %v1023 = vmul.f32 %v491, %v982
      %v1024 = vmul.f32 %v496, %v982
      %v1025 = vmul.f32 %v501, %v982
      %v1026 = vmul.f32 %v506, %v982
      %v1027 = vmul.f32 %v511, %v982
      %v1028 = vmul.f32 %v516, %v982
      %v1029 = vmul.f32 %v521, %v982
      %v1030 = vmul.f32 %v526, %v982
      %v1031 = vmul.f32 %v531, %v982
      %v1032 = vmul.f32 %v536, %v982
      %v1033 = vmul.f32 %v541, %v982
      %v1034 = vmul.f32 %v546, %v982
      %v1035 = vmul.f32 %v551, %v982
      %v1036 = vmul.f32 %v556, %v982
      %v1037 = vmul.f32 %v561, %v982
      %v1038 = vmul.f32 %v566, %v982
      %v1039 = vmul.f32 %v571, %v982
      %v1040 = vmul.f32 %v576, %v982
      %v1041 = vmul.f32 %v581, %v982
      %v1042 = vmul.f32 %v586, %v982
      %v1043 = vmul.f32 %v591, %v982
      %v1044 = vmul.f32 %v596, %v982
      %v1045 = vmul.f32 %v601, %v982
      %v1046 = vmul.f32 %v606, %v982
      %v1047 = vmul.f32 %v611, %v982
      %v1048 = vmul.f32 %v616, %v982
      %v1049 = vmul.f32 %v621, %v982
      %v1050 = vmul.f32 %v626, %v982
      %v1051 = vmul.f32 %v631, %v982
      %v1052 = vmul.f32 %v636, %v982
      %v1053 = vmul.f32 %v641, %v982
      %v1054 = vmul.f32 %v646, %v982
      %v1055 = vmul.f32 %v651, %v982
      %v1056 = vmul.f32 %v656, %v982
      %v1057 = vmul.f32 %v661, %v982
      %v1058 = vmul.f32 %v666, %v982
      %v1059 = vmul.f32 %v671, %v982
      %v1060 = vmul.f32 %v676, %v982
      %v1061 = vmul.f32 %v681, %v982
      %v1062 = vmul.f32 %v686, %v982
      %v1063 = vmul.f32 %v691, %v982
      %v1064 = vmul.f32 %v696, %v982
      %v1065 = vmul.f32 %v701, %v982
      %v1066 = vmul.f32 %v706, %v982
      %v1067 = vmul.f32 %v711, %v982
      %v1068 = vmul.f32 %v716, %v982
      %v1069 = vmul.f32 %v721, %v982
      %v1070 = vmul.f32 %v726, %v982
      %v1071 = vmul.f32 %v731, %v982
      %v1072 = vmul.f32 %v736, %v982
      %v1073 = vmul.f32 %v741, %v982
      %v1074 = vmul.f32 %v746, %v982
      %v1075 = vmul.f32 %v751, %v982
      %v1076 = vmul.f32 %v756, %v982
      %v1077 = vmul.f32 %v761, %v982
      %v1078 = vmul.f32 %v766, %v982
      %v1079 = vmul.f32 %v771, %v982
      %v1080 = vmul.f32 %v776, %v982
      %v1081 = vmul.f32 %v781, %v982
      %v1082 = vmul.f32 %v786, %v982
      %v1083 = vmul.f32 %v791, %v982
      %v1084 = vmul.f32 %v796, %v982
      %v1085 = vmul.f32 %v801, %v982
      %v1086 = vmul.f32 %v806, %v982
      %v1087 = vmul.f32 %v811, %v982
      %v1088 = vmul.f32 %v816, %v982
      %v1089 = vmul.f32 %v821, %v982
      %v1090 = vmul.f32 %v826, %v982
      %v1091 = vmul.f32 %v831, %v982
      %v1092 = vmul.f32 %v836, %v982
      %v1093 = vmul.f32 %v841, %v982
      %v1094 = vmul.f32 %v846, %v982
      %v1095 = vmul.f32 %v851, %v982
      %v1096 = vmul.f32 %v976, %v982
      %vm1210 = vcmask 1046528
      %v1211 = vrot.slane %v984, 1
      %v1212 = vrot.slane %v985, 1
      %v1213 = vsel %vm1210, %v1211, %v1212
      %v1214 = vrot.slane %v986, 1
      %v1215 = vsel %vm1210, %v1212, %v1214
      %v1216 = vrot.slane %v987, 1
      %v1217 = vsel %vm1210, %v1214, %v1216
      %v1218 = vrot.slane %v988, 1
      %v1219 = vsel %vm1210, %v1216, %v1218
      %v1220 = vrot.slane %v989, 1
      %v1221 = vsel %vm1210, %v1218, %v1220
      %v1222 = vrot.slane %v990, 1
      %v1223 = vsel %vm1210, %v1220, %v1222
      %v1224 = vrot.slane %v991, 1
      %v1225 = vsel %vm1210, %v1222, %v1224
      %v1226 = vrot.slane %v992, 1
      %v1227 = vsel %vm1210, %v1224, %v1226
      %v1228 = vrot.slane %v993, 1
      %v1229 = vsel %vm1210, %v1226, %v1228
      %v1230 = vrot.slane %v994, 1
      %v1231 = vsel %vm1210, %v1228, %v1230
      %v1232 = vrot.slane %v995, 1
      %v1233 = vsel %vm1210, %v1230, %v1232
      %v1234 = vrot.slane %v996, 1
      %v1235 = vsel %vm1210, %v1232, %v1234
      %v1236 = vrot.slane %v997, 1
      %v1237 = vsel %vm1210, %v1234, %v1236
      %v1238 = vrot.slane %v998, 1
      %v1239 = vsel %vm1210, %v1236, %v1238
      %v1240 = vrot.slane %v999, 1
      %v1241 = vsel %vm1210, %v1238, %v1240
      %v1242 = vrot.slane %v1000, 1
      %v1243 = vsel %vm1210, %v1240, %v1242
      %v1244 = vrot.slane %v1001, 1
      %v1245 = vsel %vm1210, %v1242, %v1244
      %v1246 = vrot.slane %v1002, 1
      %v1247 = vsel %vm1210, %v1244, %v1246
      %v1248 = vrot.slane %v1003, 1
      %v1249 = vsel %vm1210, %v1246, %v1248
      %v1250 = vrot.slane %v1004, 1
      %v1251 = vsel %vm1210, %v1248, %v1250
      %v1252 = vrot.slane %v1005, 1
      %v1253 = vsel %vm1210, %v1250, %v1252
      %v1254 = vrot.slane %v1006, 1
      %v1255 = vsel %vm1210, %v1252, %v1254
      %v1256 = vrot.slane %v1007, 1
      %v1257 = vsel %vm1210, %v1254, %v1256
      %v1258 = vrot.slane %v1008, 1
      %v1259 = vsel %vm1210, %v1256, %v1258
      %v1260 = vrot.slane %v1009, 1
      %v1261 = vsel %vm1210, %v1258, %v1260
      %v1262 = vrot.slane %v1010, 1
      %v1263 = vsel %vm1210, %v1260, %v1262
      %v1264 = vrot.slane %v1011, 1
      %v1265 = vsel %vm1210, %v1262, %v1264
      %v1266 = vrot.slane %v1012, 1
      %v1267 = vsel %vm1210, %v1264, %v1266
      %v1268 = vrot.slane %v1013, 1
      %v1269 = vsel %vm1210, %v1266, %v1268
      %v1270 = vrot.slane %v1014, 1
      %v1271 = vsel %vm1210, %v1268, %v1270
      %v1272 = vrot.slane %v1015, 1
      %v1273 = vsel %vm1210, %v1270, %v1272
      %v1274 = vrot.slane %v1016, 1
      %v1275 = vsel %vm1210, %v1272, %v1274
      %v1276 = vrot.slane %v1017, 1
      %v1277 = vsel %vm1210, %v1274, %v1276
      %v1278 = vrot.slane %v1018, 1
      %v1279 = vsel %vm1210, %v1276, %v1278
      %v1280 = vrot.slane %v1019, 1
      %v1281 = vsel %vm1210, %v1278, %v1280
      %v1282 = vrot.slane %v1020, 1
      %v1283 = vsel %vm1210, %v1280, %v1282
      %v1284 = vrot.slane %v1021, 1
      %v1285 = vsel %vm1210, %v1282, %v1284
      %v1286 = vrot.slane %v1022, 1
      %v1287 = vsel %vm1210, %v1284, %v1286
      %v1288 = vrot.slane %v1023, 1
      %v1289 = vsel %vm1210, %v1286, %v1288
      %v1290 = vrot.slane %v1024, 1
      %v1291 = vsel %vm1210, %v1288, %v1290
      %v1292 = vrot.slane %v1025, 1
      %v1293 = vsel %vm1210, %v1290, %v1292
      %v1294 = vrot.slane %v1026, 1
      %v1295 = vsel %vm1210, %v1292, %v1294
      %v1296 = vrot.slane %v1027, 1
      %v1297 = vsel %vm1210, %v1294, %v1296
      %v1298 = vrot.slane %v1028, 1
      %v1299 = vsel %vm1210, %v1296, %v1298
      %v1300 = vrot.slane %v1029, 1
      %v1301 = vsel %vm1210, %v1298, %v1300
      %v1302 = vrot.slane %v1030, 1
      %v1303 = vsel %vm1210, %v1300, %v1302
      %v1304 = vrot.slane %v1031, 1
      %v1305 = vsel %vm1210, %v1302, %v1304
      %v1306 = vrot.slane %v1032, 1
      %v1307 = vsel %vm1210, %v1304, %v1306
      %v1308 = vrot.slane %v1033, 1
      %v1309 = vsel %vm1210, %v1306, %v1308
      %v1310 = vrot.slane %v1034, 1
      %v1311 = vsel %vm1210, %v1308, %v1310
      %v1312 = vrot.slane %v1035, 1
      %v1313 = vsel %vm1210, %v1310, %v1312
      %v1314 = vrot.slane %v1036, 1
      %v1315 = vsel %vm1210, %v1312, %v1314
      %v1316 = vrot.slane %v1037, 1
      %v1317 = vsel %vm1210, %v1314, %v1316
      %v1318 = vrot.slane %v1038, 1
      %v1319 = vsel %vm1210, %v1316, %v1318
      %v1320 = vrot.slane %v1039, 1
      %v1321 = vsel %vm1210, %v1318, %v1320
      %v1322 = vrot.slane %v1040, 1
      %v1323 = vsel %vm1210, %v1320, %v1322
      %v1324 = vrot.slane %v1041, 1
      %v1325 = vsel %vm1210, %v1322, %v1324
      %v1326 = vrot.slane %v1042, 1
      %v1327 = vsel %vm1210, %v1324, %v1326
      %v1328 = vrot.slane %v1043, 1
      %v1329 = vsel %vm1210, %v1326, %v1328
      %v1330 = vrot.slane %v1044, 1
      %v1331 = vsel %vm1210, %v1328, %v1330
      %v1332 = vrot.slane %v1045, 1
      %v1333 = vsel %vm1210, %v1330, %v1332
      %v1334 = vrot.slane %v1046, 1
      %v1335 = vsel %vm1210, %v1332, %v1334
      %v1336 = vrot.slane %v1047, 1
      %v1337 = vsel %vm1210, %v1334, %v1336
      %v1338 = vrot.slane %v1048, 1
      %v1339 = vsel %vm1210, %v1336, %v1338
      %v1340 = vrot.slane %v1049, 1
      %v1341 = vsel %vm1210, %v1338, %v1340
      %v1342 = vrot.slane %v1050, 1
      %v1343 = vsel %vm1210, %v1340, %v1342
      %v1344 = vrot.slane %v1051, 1
      %v1345 = vsel %vm1210, %v1342, %v1344
      %v1346 = vrot.slane %v1052, 1
      %v1347 = vsel %vm1210, %v1344, %v1346
      %v1348 = vrot.slane %v1053, 1
      %v1349 = vsel %vm1210, %v1346, %v1348
      %v1350 = vrot.slane %v1054, 1
      %v1351 = vsel %vm1210, %v1348, %v1350
      %v1352 = vrot.slane %v1055, 1
      %v1353 = vsel %vm1210, %v1350, %v1352
      %v1354 = vrot.slane %v1056, 1
      %v1355 = vsel %vm1210, %v1352, %v1354
      %v1356 = vrot.slane %v1057, 1
      %v1357 = vsel %vm1210, %v1354, %v1356
      %v1358 = vrot.slane %v1058, 1
      %v1359 = vsel %vm1210, %v1356, %v1358
      %v1360 = vrot.slane %v1059, 1
      %v1361 = vsel %vm1210, %v1358, %v1360
      %v1362 = vrot.slane %v1060, 1
      %v1363 = vsel %vm1210, %v1360, %v1362
      %v1364 = vrot.slane %v1061, 1
      %v1365 = vsel %vm1210, %v1362, %v1364
      %v1366 = vrot.slane %v1062, 1
      %v1367 = vsel %vm1210, %v1364, %v1366
      %v1368 = vrot.slane %v1063, 1
      %v1369 = vsel %vm1210, %v1366, %v1368
      %v1370 = vrot.slane %v1064, 1
      %v1371 = vsel %vm1210, %v1368, %v1370
      %v1372 = vrot.slane %v1065, 1
      %v1373 = vsel %vm1210, %v1370, %v1372
      %v1374 = vrot.slane %v1066, 1
      %v1375 = vsel %vm1210, %v1372, %v1374
      %v1376 = vrot.slane %v1067, 1
      %v1377 = vsel %vm1210, %v1374, %v1376
      %v1378 = vrot.slane %v1068, 1
      %v1379 = vsel %vm1210, %v1376, %v1378
      %v1380 = vrot.slane %v1069, 1
      %v1381 = vsel %vm1210, %v1378, %v1380
      %v1382 = vrot.slane %v1070, 1
      %v1383 = vsel %vm1210, %v1380, %v1382
      %v1384 = vrot.slane %v1071, 1
      %v1385 = vsel %vm1210, %v1382, %v1384
      %v1386 = vrot.slane %v1072, 1
      %v1387 = vsel %vm1210, %v1384, %v1386
      %v1388 = vrot.slane %v1073, 1
      %v1389 = vsel %vm1210, %v1386, %v1388
      %v1390 = vrot.slane %v1074, 1
      %v1391 = vsel %vm1210, %v1388, %v1390
      %v1392 = vrot.slane %v1075, 1
      %v1393 = vsel %vm1210, %v1390, %v1392
      %v1394 = vrot.slane %v1076, 1
      %v1395 = vsel %vm1210, %v1392, %v1394
      %v1396 = vrot.slane %v1077, 1
      %v1397 = vsel %vm1210, %v1394, %v1396
      %v1398 = vrot.slane %v1078, 1
      %v1399 = vsel %vm1210, %v1396, %v1398
      %v1400 = vrot.slane %v1079, 1
      %v1401 = vsel %vm1210, %v1398, %v1400
      %v1402 = vrot.slane %v1080, 1
      %v1403 = vsel %vm1210, %v1400, %v1402
      %v1404 = vrot.slane %v1081, 1
      %v1405 = vsel %vm1210, %v1402, %v1404
      %v1406 = vrot.slane %v1082, 1
      %v1407 = vsel %vm1210, %v1404, %v1406
      %v1408 = vrot.slane %v1083, 1
      %v1409 = vsel %vm1210, %v1406, %v1408
      %v1410 = vrot.slane %v1084, 1
      %v1411 = vsel %vm1210, %v1408, %v1410
      %v1412 = vrot.slane %v1085, 1
      %v1413 = vsel %vm1210, %v1410, %v1412
      %v1414 = vrot.slane %v1086, 1
      %v1415 = vsel %vm1210, %v1412, %v1414
      %v1416 = vrot.slane %v1087, 1
      %v1417 = vsel %vm1210, %v1414, %v1416
      %v1418 = vrot.slane %v1088, 1
      %v1419 = vsel %vm1210, %v1416, %v1418
      %v1420 = vrot.slane %v1089, 1
      %v1421 = vsel %vm1210, %v1418, %v1420
      %v1422 = vrot.slane %v1090, 1
      %v1423 = vsel %vm1210, %v1420, %v1422
      %v1424 = vrot.slane %v1091, 1
      %v1425 = vsel %vm1210, %v1422, %v1424
      %v1426 = vrot.slane %v1092, 1
      %v1427 = vsel %vm1210, %v1424, %v1426
      %v1428 = vrot.slane %v1093, 1
      %v1429 = vsel %vm1210, %v1426, %v1428
      %v1430 = vrot.slane %v1094, 1
      %v1431 = vsel %vm1210, %v1428, %v1430
      %v1432 = vrot.slane %v1095, 1
      %v1433 = vsel %vm1210, %v1430, %v1432
      %v1434 = vrot.slane %v1096, 1
      %v1435 = vsel %vm1210, %v1432, %v1434
      %v1548 = vadd.f32 %v859, %v1213
      %v1549 = vadd.f32 %v860, %v1215
      %v1550 = vadd.f32 %v861, %v1217
      %v1551 = vadd.f32 %v862, %v1219
      %v1552 = vadd.f32 %v863, %v1221
      %v1553 = vadd.f32 %v864, %v1223
      %v1554 = vadd.f32 %v865, %v1225
      %v1555 = vadd.f32 %v866, %v1227
      %v1556 = vadd.f32 %v867, %v1229
      %v1557 = vadd.f32 %v868, %v1231
      %v1558 = vadd.f32 %v869, %v1233
      %v1559 = vadd.f32 %v870, %v1235
      %v1560 = vadd.f32 %v871, %v1237
      %v1561 = vadd.f32 %v872, %v1239
      %v1562 = vadd.f32 %v873, %v1241
      %v1563 = vadd.f32 %v874, %v1243
      %v1564 = vadd.f32 %v875, %v1245
      %v1565 = vadd.f32 %v876, %v1247
      %v1566 = vadd.f32 %v877, %v1249
      %v1567 = vadd.f32 %v878, %v1251
      %v1568 = vadd.f32 %v879, %v1253
      %v1569 = vadd.f32 %v880, %v1255
      %v1570 = vadd.f32 %v881, %v1257
      %v1571 = vadd.f32 %v882, %v1259
      %v1572 = vadd.f32 %v883, %v1261
      %v1573 = vadd.f32 %v884, %v1263
      %v1574 = vadd.f32 %v885, %v1265
      %v1575 = vadd.f32 %v886, %v1267
      %v1576 = vadd.f32 %v887, %v1269
      %v1577 = vadd.f32 %v888, %v1271
      %v1578 = vadd.f32 %v889, %v1273
      %v1579 = vadd.f32 %v890, %v1275
      %v1580 = vadd.f32 %v891, %v1277
      %v1581 = vadd.f32 %v892, %v1279
      %v1582 = vadd.f32 %v893, %v1281
      %v1583 = vadd.f32 %v894, %v1283
      %v1584 = vadd.f32 %v895, %v1285
      %v1585 = vadd.f32 %v896, %v1287
      %v1586 = vadd.f32 %v897, %v1289
      %v1587 = vadd.f32 %v898, %v1291
      %v1588 = vadd.f32 %v899, %v1293
      %v1589 = vadd.f32 %v900, %v1295
      %v1590 = vadd.f32 %v901, %v1297
      %v1591 = vadd.f32 %v902, %v1299
      %v1592 = vadd.f32 %v903, %v1301
      %v1593 = vadd.f32 %v904, %v1303
      %v1594 = vadd.f32 %v905, %v1305
      %v1595 = vadd.f32 %v906, %v1307
      %v1596 = vadd.f32 %v907, %v1309
      %v1597 = vadd.f32 %v908, %v1311
      %v1598 = vadd.f32 %v909, %v1313
      %v1599 = vadd.f32 %v910, %v1315
      %v1600 = vadd.f32 %v911, %v1317
      %v1601 = vadd.f32 %v912, %v1319
      %v1602 = vadd.f32 %v913, %v1321
      %v1603 = vadd.f32 %v914, %v1323
      %v1604 = vadd.f32 %v915, %v1325
      %v1605 = vadd.f32 %v916, %v1327
      %v1606 = vadd.f32 %v917, %v1329
      %v1607 = vadd.f32 %v918, %v1331
      %v1608 = vadd.f32 %v919, %v1333
      %v1609 = vadd.f32 %v920, %v1335
      %v1610 = vadd.f32 %v921, %v1337
      %v1611 = vadd.f32 %v922, %v1339
      %v1612 = vadd.f32 %v923, %v1341
      %v1613 = vadd.f32 %v924, %v1343
      %v1614 = vadd.f32 %v925, %v1345
      %v1615 = vadd.f32 %v926, %v1347
      %v1616 = vadd.f32 %v927, %v1349
      %v1617 = vadd.f32 %v928, %v1351
      %v1618 = vadd.f32 %v929, %v1353
      %v1619 = vadd.f32 %v930, %v1355
      %v1620 = vadd.f32 %v931, %v1357
      %v1621 = vadd.f32 %v932, %v1359
      %v1622 = vadd.f32 %v933, %v1361
      %v1623 = vadd.f32 %v934, %v1363
      %v1624 = vadd.f32 %v935, %v1365
      %v1625 = vadd.f32 %v936, %v1367
      %v1626 = vadd.f32 %v937, %v1369
      %v1627 = vadd.f32 %v938, %v1371
      %v1628 = vadd.f32 %v939, %v1373
      %v1629 = vadd.f32 %v940, %v1375
      %v1630 = vadd.f32 %v941, %v1377
      %v1631 = vadd.f32 %v942, %v1379
      %v1632 = vadd.f32 %v943, %v1381
      %v1633 = vadd.f32 %v944, %v1383
      %v1634 = vadd.f32 %v945, %v1385
      %v1635 = vadd.f32 %v946, %v1387
      %v1636 = vadd.f32 %v947, %v1389
      %v1637 = vadd.f32 %v948, %v1391
      %v1638 = vadd.f32 %v949, %v1393
      %v1639 = vadd.f32 %v950, %v1395
      %v1640 = vadd.f32 %v951, %v1397
      %v1641 = vadd.f32 %v952, %v1399
      %v1642 = vadd.f32 %v953, %v1401
      %v1643 = vadd.f32 %v954, %v1403
      %v1644 = vadd.f32 %v955, %v1405
      %v1645 = vadd.f32 %v956, %v1407
      %v1646 = vadd.f32 %v957, %v1409
      %v1647 = vadd.f32 %v958, %v1411
      %v1648 = vadd.f32 %v959, %v1413
      %v1649 = vadd.f32 %v960, %v1415
      %v1650 = vadd.f32 %v961, %v1417
      %v1651 = vadd.f32 %v962, %v1419
      %v1652 = vadd.f32 %v963, %v1421
      %v1653 = vadd.f32 %v964, %v1423
      %v1654 = vadd.f32 %v965, %v1425
      %v1655 = vadd.f32 %v966, %v1427
      %v1656 = vadd.f32 %v967, %v1429
      %v1657 = vadd.f32 %v968, %v1431
      %v1658 = vadd.f32 %v969, %v1433
      %v1659 = vadd.f32 %v970, %v1435
      %s1660 = scalar_lea.vmem %s1, 2
      %v1661 = vld [vmem:[%s1660] sm:$0x1]
      %v1663 = vlaneseq
      %v1664 = vshrl.u32 %v1663, 7
      %v1665 = vsub.s32 0, %v1664
      %v1666 = vrot.slane %v1661, %v1665
      %v1668 = vmul.f32 %v296, %v1666
      %v1669 = vmul.f32 %v301, %v1666
      %v1670 = vmul.f32 %v306, %v1666
      %v1671 = vmul.f32 %v311, %v1666
      %v1672 = vmul.f32 %v316, %v1666
      %v1673 = vmul.f32 %v321, %v1666
      %v1674 = vmul.f32 %v326, %v1666
      %v1675 = vmul.f32 %v331, %v1666
      %v1676 = vmul.f32 %v336, %v1666
      %v1677 = vmul.f32 %v341, %v1666
      %v1678 = vmul.f32 %v346, %v1666
      %v1679 = vmul.f32 %v351, %v1666
      %v1680 = vmul.f32 %v356, %v1666
      %v1681 = vmul.f32 %v361, %v1666
      %v1682 = vmul.f32 %v366, %v1666
      %v1683 = vmul.f32 %v371, %v1666
      %v1684 = vmul.f32 %v376, %v1666
      %v1685 = vmul.f32 %v381, %v1666
      %v1686 = vmul.f32 %v386, %v1666
      %v1687 = vmul.f32 %v391, %v1666
      %v1688 = vmul.f32 %v396, %v1666
      %v1689 = vmul.f32 %v401, %v1666
      %v1690 = vmul.f32 %v406, %v1666
      %v1691 = vmul.f32 %v411, %v1666
      %v1692 = vmul.f32 %v416, %v1666
      %v1693 = vmul.f32 %v421, %v1666
      %v1694 = vmul.f32 %v426, %v1666
      %v1695 = vmul.f32 %v431, %v1666
      %v1696 = vmul.f32 %v436, %v1666
      %v1697 = vmul.f32 %v441, %v1666
      %v1698 = vmul.f32 %v446, %v1666
      %v1699 = vmul.f32 %v451, %v1666
      %v1700 = vmul.f32 %v456, %v1666
      %v1701 = vmul.f32 %v461, %v1666
      %v1702 = vmul.f32 %v466, %v1666
      %v1703 = vmul.f32 %v471, %v1666
      %v1704 = vmul.f32 %v476, %v1666
      %v1705 = vmul.f32 %v481, %v1666
      %v1706 = vmul.f32 %v486, %v1666
      %v1707 = vmul.f32 %v491, %v1666
      %v1708 = vmul.f32 %v496, %v1666
      %v1709 = vmul.f32 %v501, %v1666
      %v1710 = vmul.f32 %v506, %v1666
      %v1711 = vmul.f32 %v511, %v1666
      %v1712 = vmul.f32 %v516, %v1666
      %v1713 = vmul.f32 %v521, %v1666
      %v1714 = vmul.f32 %v526, %v1666
      %v1715 = vmul.f32 %v531, %v1666
      %v1716 = vmul.f32 %v536, %v1666
      %v1717 = vmul.f32 %v541, %v1666
      %v1718 = vmul.f32 %v546, %v1666
      %v1719 = vmul.f32 %v551, %v1666
      %v1720 = vmul.f32 %v556, %v1666
      %v1721 = vmul.f32 %v561, %v1666
      %v1722 = vmul.f32 %v566, %v1666
      %v1723 = vmul.f32 %v571, %v1666
      %v1724 = vmul.f32 %v576, %v1666
      %v1725 = vmul.f32 %v581, %v1666
      %v1726 = vmul.f32 %v586, %v1666
      %v1727 = vmul.f32 %v591, %v1666
      %v1728 = vmul.f32 %v596, %v1666
      %v1729 = vmul.f32 %v601, %v1666
      %v1730 = vmul.f32 %v606, %v1666
      %v1731 = vmul.f32 %v611, %v1666
      %v1732 = vmul.f32 %v616, %v1666
      %v1733 = vmul.f32 %v621, %v1666
      %v1734 = vmul.f32 %v626, %v1666
      %v1735 = vmul.f32 %v631, %v1666
      %v1736 = vmul.f32 %v636, %v1666
      %v1737 = vmul.f32 %v641, %v1666
      %v1738 = vmul.f32 %v646, %v1666
      %v1739 = vmul.f32 %v651, %v1666
      %v1740 = vmul.f32 %v656, %v1666
      %v1741 = vmul.f32 %v661, %v1666
      %v1742 = vmul.f32 %v666, %v1666
      %v1743 = vmul.f32 %v671, %v1666
      %v1744 = vmul.f32 %v676, %v1666
      %v1745 = vmul.f32 %v681, %v1666
      %v1746 = vmul.f32 %v686, %v1666
      %v1747 = vmul.f32 %v691, %v1666
      %v1748 = vmul.f32 %v696, %v1666
      %v1749 = vmul.f32 %v701, %v1666
      %v1750 = vmul.f32 %v706, %v1666
      %v1751 = vmul.f32 %v711, %v1666
      %v1752 = vmul.f32 %v716, %v1666
      %v1753 = vmul.f32 %v721, %v1666
      %v1754 = vmul.f32 %v726, %v1666
      %v1755 = vmul.f32 %v731, %v1666
      %v1756 = vmul.f32 %v736, %v1666
      %v1757 = vmul.f32 %v741, %v1666
      %v1758 = vmul.f32 %v746, %v1666
      %v1759 = vmul.f32 %v751, %v1666
      %v1760 = vmul.f32 %v756, %v1666
      %v1761 = vmul.f32 %v761, %v1666
      %v1762 = vmul.f32 %v766, %v1666
      %v1763 = vmul.f32 %v771, %v1666
      %v1764 = vmul.f32 %v776, %v1666
      %v1765 = vmul.f32 %v781, %v1666
      %v1766 = vmul.f32 %v786, %v1666
      %v1767 = vmul.f32 %v791, %v1666
      %v1768 = vmul.f32 %v796, %v1666
      %v1769 = vmul.f32 %v801, %v1666
      %v1770 = vmul.f32 %v806, %v1666
      %v1771 = vmul.f32 %v811, %v1666
      %v1772 = vmul.f32 %v816, %v1666
      %v1773 = vmul.f32 %v821, %v1666
      %v1774 = vmul.f32 %v826, %v1666
      %v1775 = vmul.f32 %v831, %v1666
      %v1776 = vmul.f32 %v836, %v1666
      %v1777 = vmul.f32 %v841, %v1666
      %v1778 = vmul.f32 %v846, %v1666
      %v1779 = vmul.f32 %v851, %v1666
      %v1780 = vmul.f32 %v976, %v1666
      %vm1894 = vcmask 1045504
      %v1895 = vrot.slane %v1668, 2
      %v1896 = vrot.slane %v1669, 2
      %v1897 = vsel %vm1894, %v1895, %v1896
      %v1898 = vrot.slane %v1670, 2
      %v1899 = vsel %vm1894, %v1896, %v1898
      %v1900 = vrot.slane %v1671, 2
      %v1901 = vsel %vm1894, %v1898, %v1900
      %v1902 = vrot.slane %v1672, 2
      %v1903 = vsel %vm1894, %v1900, %v1902
      %v1904 = vrot.slane %v1673, 2
      %v1905 = vsel %vm1894, %v1902, %v1904
      %v1906 = vrot.slane %v1674, 2
      %v1907 = vsel %vm1894, %v1904, %v1906
      %v1908 = vrot.slane %v1675, 2
      %v1909 = vsel %vm1894, %v1906, %v1908
      %v1910 = vrot.slane %v1676, 2
      %v1911 = vsel %vm1894, %v1908, %v1910
      %v1912 = vrot.slane %v1677, 2
      %v1913 = vsel %vm1894, %v1910, %v1912
      %v1914 = vrot.slane %v1678, 2
      %v1915 = vsel %vm1894, %v1912, %v1914
      %v1916 = vrot.slane %v1679, 2
      %v1917 = vsel %vm1894, %v1914, %v1916
      %v1918 = vrot.slane %v1680, 2
      %v1919 = vsel %vm1894, %v1916, %v1918
      %v1920 = vrot.slane %v1681, 2
      %v1921 = vsel %vm1894, %v1918, %v1920
      %v1922 = vrot.slane %v1682, 2
      %v1923 = vsel %vm1894, %v1920, %v1922
      %v1924 = vrot.slane %v1683, 2
      %v1925 = vsel %vm1894, %v1922, %v1924
      %v1926 = vrot.slane %v1684, 2
      %v1927 = vsel %vm1894, %v1924, %v1926
      %v1928 = vrot.slane %v1685, 2
      %v1929 = vsel %vm1894, %v1926, %v1928
      %v1930 = vrot.slane %v1686, 2
      %v1931 = vsel %vm1894, %v1928, %v1930
      %v1932 = vrot.slane %v1687, 2
      %v1933 = vsel %vm1894, %v1930, %v1932
      %v1934 = vrot.slane %v1688, 2
      %v1935 = vsel %vm1894, %v1932, %v1934
      %v1936 = vrot.slane %v1689, 2
      %v1937 = vsel %vm1894, %v1934, %v1936
      %v1938 = vrot.slane %v1690, 2
      %v1939 = vsel %vm1894, %v1936, %v1938
      %v1940 = vrot.slane %v1691, 2
      %v1941 = vsel %vm1894, %v1938, %v1940
      %v1942 = vrot.slane %v1692, 2
      %v1943 = vsel %vm1894, %v1940, %v1942
      %v1944 = vrot.slane %v1693, 2
      %v1945 = vsel %vm1894, %v1942, %v1944
      %v1946 = vrot.slane %v1694, 2
      %v1947 = vsel %vm1894, %v1944, %v1946
      %v1948 = vrot.slane %v1695, 2
      %v1949 = vsel %vm1894, %v1946, %v1948
      %v1950 = vrot.slane %v1696, 2
      %v1951 = vsel %vm1894, %v1948, %v1950
      %v1952 = vrot.slane %v1697, 2
      %v1953 = vsel %vm1894, %v1950, %v1952
      %v1954 = vrot.slane %v1698, 2
      %v1955 = vsel %vm1894, %v1952, %v1954
      %v1956 = vrot.slane %v1699, 2
      %v1957 = vsel %vm1894, %v1954, %v1956
      %v1958 = vrot.slane %v1700, 2
      %v1959 = vsel %vm1894, %v1956, %v1958
      %v1960 = vrot.slane %v1701, 2
      %v1961 = vsel %vm1894, %v1958, %v1960
      %v1962 = vrot.slane %v1702, 2
      %v1963 = vsel %vm1894, %v1960, %v1962
      %v1964 = vrot.slane %v1703, 2
      %v1965 = vsel %vm1894, %v1962, %v1964
      %v1966 = vrot.slane %v1704, 2
      %v1967 = vsel %vm1894, %v1964, %v1966
      %v1968 = vrot.slane %v1705, 2
      %v1969 = vsel %vm1894, %v1966, %v1968
      %v1970 = vrot.slane %v1706, 2
      %v1971 = vsel %vm1894, %v1968, %v1970
      %v1972 = vrot.slane %v1707, 2
      %v1973 = vsel %vm1894, %v1970, %v1972
      %v1974 = vrot.slane %v1708, 2
      %v1975 = vsel %vm1894, %v1972, %v1974
      %v1976 = vrot.slane %v1709, 2
      %v1977 = vsel %vm1894, %v1974, %v1976
      %v1978 = vrot.slane %v1710, 2
      %v1979 = vsel %vm1894, %v1976, %v1978
      %v1980 = vrot.slane %v1711, 2
      %v1981 = vsel %vm1894, %v1978, %v1980
      %v1982 = vrot.slane %v1712, 2
      %v1983 = vsel %vm1894, %v1980, %v1982
      %v1984 = vrot.slane %v1713, 2
      %v1985 = vsel %vm1894, %v1982, %v1984
      %v1986 = vrot.slane %v1714, 2
      %v1987 = vsel %vm1894, %v1984, %v1986
      %v1988 = vrot.slane %v1715, 2
      %v1989 = vsel %vm1894, %v1986, %v1988
      %v1990 = vrot.slane %v1716, 2
      %v1991 = vsel %vm1894, %v1988, %v1990
      %v1992 = vrot.slane %v1717, 2
      %v1993 = vsel %vm1894, %v1990, %v1992
      %v1994 = vrot.slane %v1718, 2
      %v1995 = vsel %vm1894, %v1992, %v1994
      %v1996 = vrot.slane %v1719, 2
      %v1997 = vsel %vm1894, %v1994, %v1996
      %v1998 = vrot.slane %v1720, 2
      %v1999 = vsel %vm1894, %v1996, %v1998
      %v2000 = vrot.slane %v1721, 2
      %v2001 = vsel %vm1894, %v1998, %v2000
      %v2002 = vrot.slane %v1722, 2
      %v2003 = vsel %vm1894, %v2000, %v2002
      %v2004 = vrot.slane %v1723, 2
      %v2005 = vsel %vm1894, %v2002, %v2004
      %v2006 = vrot.slane %v1724, 2
      %v2007 = vsel %vm1894, %v2004, %v2006
      %v2008 = vrot.slane %v1725, 2
      %v2009 = vsel %vm1894, %v2006, %v2008
      %v2010 = vrot.slane %v1726, 2
      %v2011 = vsel %vm1894, %v2008, %v2010
      %v2012 = vrot.slane %v1727, 2
      %v2013 = vsel %vm1894, %v2010, %v2012
      %v2014 = vrot.slane %v1728, 2
      %v2015 = vsel %vm1894, %v2012, %v2014
      %v2016 = vrot.slane %v1729, 2
      %v2017 = vsel %vm1894, %v2014, %v2016
      %v2018 = vrot.slane %v1730, 2
      %v2019 = vsel %vm1894, %v2016, %v2018
      %v2020 = vrot.slane %v1731, 2
      %v2021 = vsel %vm1894, %v2018, %v2020
      %v2022 = vrot.slane %v1732, 2
      %v2023 = vsel %vm1894, %v2020, %v2022
      %v2024 = vrot.slane %v1733, 2
      %v2025 = vsel %vm1894, %v2022, %v2024
      %v2026 = vrot.slane %v1734, 2
      %v2027 = vsel %vm1894, %v2024, %v2026
      %v2028 = vrot.slane %v1735, 2
      %v2029 = vsel %vm1894, %v2026, %v2028
      %v2030 = vrot.slane %v1736, 2
      %v2031 = vsel %vm1894, %v2028, %v2030
      %v2032 = vrot.slane %v1737, 2
      %v2033 = vsel %vm1894, %v2030, %v2032
      %v2034 = vrot.slane %v1738, 2
      %v2035 = vsel %vm1894, %v2032, %v2034
      %v2036 = vrot.slane %v1739, 2
      %v2037 = vsel %vm1894, %v2034, %v2036
      %v2038 = vrot.slane %v1740, 2
      %v2039 = vsel %vm1894, %v2036, %v2038
      %v2040 = vrot.slane %v1741, 2
      %v2041 = vsel %vm1894, %v2038, %v2040
      %v2042 = vrot.slane %v1742, 2
      %v2043 = vsel %vm1894, %v2040, %v2042
      %v2044 = vrot.slane %v1743, 2
      %v2045 = vsel %vm1894, %v2042, %v2044
      %v2046 = vrot.slane %v1744, 2
      %v2047 = vsel %vm1894, %v2044, %v2046
      %v2048 = vrot.slane %v1745, 2
      %v2049 = vsel %vm1894, %v2046, %v2048
      %v2050 = vrot.slane %v1746, 2
      %v2051 = vsel %vm1894, %v2048, %v2050
      %v2052 = vrot.slane %v1747, 2
      %v2053 = vsel %vm1894, %v2050, %v2052
      %v2054 = vrot.slane %v1748, 2
      %v2055 = vsel %vm1894, %v2052, %v2054
      %v2056 = vrot.slane %v1749, 2
      %v2057 = vsel %vm1894, %v2054, %v2056
      %v2058 = vrot.slane %v1750, 2
      %v2059 = vsel %vm1894, %v2056, %v2058
      %v2060 = vrot.slane %v1751, 2
      %v2061 = vsel %vm1894, %v2058, %v2060
      %v2062 = vrot.slane %v1752, 2
      %v2063 = vsel %vm1894, %v2060, %v2062
      %v2064 = vrot.slane %v1753, 2
      %v2065 = vsel %vm1894, %v2062, %v2064
      %v2066 = vrot.slane %v1754, 2
      %v2067 = vsel %vm1894, %v2064, %v2066
      %v2068 = vrot.slane %v1755, 2
      %v2069 = vsel %vm1894, %v2066, %v2068
      %v2070 = vrot.slane %v1756, 2
      %v2071 = vsel %vm1894, %v2068, %v2070
      %v2072 = vrot.slane %v1757, 2
      %v2073 = vsel %vm1894, %v2070, %v2072
      %v2074 = vrot.slane %v1758, 2
      %v2075 = vsel %vm1894, %v2072, %v2074
      %v2076 = vrot.slane %v1759, 2
      %v2077 = vsel %vm1894, %v2074, %v2076
      %v2078 = vrot.slane %v1760, 2
      %v2079 = vsel %vm1894, %v2076, %v2078
      %v2080 = vrot.slane %v1761, 2
      %v2081 = vsel %vm1894, %v2078, %v2080
      %v2082 = vrot.slane %v1762, 2
      %v2083 = vsel %vm1894, %v2080, %v2082
      %v2084 = vrot.slane %v1763, 2
      %v2085 = vsel %vm1894, %v2082, %v2084
      %v2086 = vrot.slane %v1764, 2
      %v2087 = vsel %vm1894, %v2084, %v2086
      %v2088 = vrot.slane %v1765, 2
      %v2089 = vsel %vm1894, %v2086, %v2088
      %v2090 = vrot.slane %v1766, 2
      %v2091 = vsel %vm1894, %v2088, %v2090
      %v2092 = vrot.slane %v1767, 2
      %v2093 = vsel %vm1894, %v2090, %v2092
      %v2094 = vrot.slane %v1768, 2
      %v2095 = vsel %vm1894, %v2092, %v2094
      %v2096 = vrot.slane %v1769, 2
      %v2097 = vsel %vm1894, %v2094, %v2096
      %v2098 = vrot.slane %v1770, 2
      %v2099 = vsel %vm1894, %v2096, %v2098
      %v2100 = vrot.slane %v1771, 2
      %v2101 = vsel %vm1894, %v2098, %v2100
      %v2102 = vrot.slane %v1772, 2
      %v2103 = vsel %vm1894, %v2100, %v2102
      %v2104 = vrot.slane %v1773, 2
      %v2105 = vsel %vm1894, %v2102, %v2104
      %v2106 = vrot.slane %v1774, 2
      %v2107 = vsel %vm1894, %v2104, %v2106
      %v2108 = vrot.slane %v1775, 2
      %v2109 = vsel %vm1894, %v2106, %v2108
      %v2110 = vrot.slane %v1776, 2
      %v2111 = vsel %vm1894, %v2108, %v2110
      %v2112 = vrot.slane %v1777, 2
      %v2113 = vsel %vm1894, %v2110, %v2112
      %v2114 = vrot.slane %v1778, 2
      %v2115 = vsel %vm1894, %v2112, %v2114
      %v2116 = vrot.slane %v1779, 2
      %v2117 = vsel %vm1894, %v2114, %v2116
      %v2118 = vrot.slane %v1780, 2
      %v2119 = vsel %vm1894, %v2116, %v2118
      %v2232 = vadd.f32 %v1548, %v1897
      %v2233 = vadd.f32 %v1549, %v1899
      %v2234 = vadd.f32 %v1550, %v1901
      %v2235 = vadd.f32 %v1551, %v1903
      %v2236 = vadd.f32 %v1552, %v1905
      %v2237 = vadd.f32 %v1553, %v1907
      %v2238 = vadd.f32 %v1554, %v1909
      %v2239 = vadd.f32 %v1555, %v1911
      %v2240 = vadd.f32 %v1556, %v1913
      %v2241 = vadd.f32 %v1557, %v1915
      %v2242 = vadd.f32 %v1558, %v1917
      %v2243 = vadd.f32 %v1559, %v1919
      %v2244 = vadd.f32 %v1560, %v1921
      %v2245 = vadd.f32 %v1561, %v1923
      %v2246 = vadd.f32 %v1562, %v1925
      %v2247 = vadd.f32 %v1563, %v1927
      %v2248 = vadd.f32 %v1564, %v1929
      %v2249 = vadd.f32 %v1565, %v1931
      %v2250 = vadd.f32 %v1566, %v1933
      %v2251 = vadd.f32 %v1567, %v1935
      %v2252 = vadd.f32 %v1568, %v1937
      %v2253 = vadd.f32 %v1569, %v1939
      %v2254 = vadd.f32 %v1570, %v1941
      %v2255 = vadd.f32 %v1571, %v1943
      %v2256 = vadd.f32 %v1572, %v1945
      %v2257 = vadd.f32 %v1573, %v1947
      %v2258 = vadd.f32 %v1574, %v1949
      %v2259 = vadd.f32 %v1575, %v1951
      %v2260 = vadd.f32 %v1576, %v1953
      %v2261 = vadd.f32 %v1577, %v1955
      %v2262 = vadd.f32 %v1578, %v1957
      %v2263 = vadd.f32 %v1579, %v1959
      %v2264 = vadd.f32 %v1580, %v1961
      %v2265 = vadd.f32 %v1581, %v1963
      %v2266 = vadd.f32 %v1582, %v1965
      %v2267 = vadd.f32 %v1583, %v1967
      %v2268 = vadd.f32 %v1584, %v1969
      %v2269 = vadd.f32 %v1585, %v1971
      %v2270 = vadd.f32 %v1586, %v1973
      %v2271 = vadd.f32 %v1587, %v1975
      %v2272 = vadd.f32 %v1588, %v1977
      %v2273 = vadd.f32 %v1589, %v1979
      %v2274 = vadd.f32 %v1590, %v1981
      %v2275 = vadd.f32 %v1591, %v1983
      %v2276 = vadd.f32 %v1592, %v1985
      %v2277 = vadd.f32 %v1593, %v1987
      %v2278 = vadd.f32 %v1594, %v1989
      %v2279 = vadd.f32 %v1595, %v1991
      %v2280 = vadd.f32 %v1596, %v1993
      %v2281 = vadd.f32 %v1597, %v1995
      %v2282 = vadd.f32 %v1598, %v1997
      %v2283 = vadd.f32 %v1599, %v1999
      %v2284 = vadd.f32 %v1600, %v2001
      %v2285 = vadd.f32 %v1601, %v2003
      %v2286 = vadd.f32 %v1602, %v2005
      %v2287 = vadd.f32 %v1603, %v2007
      %v2288 = vadd.f32 %v1604, %v2009
      %v2289 = vadd.f32 %v1605, %v2011
      %v2290 = vadd.f32 %v1606, %v2013
      %v2291 = vadd.f32 %v1607, %v2015
      %v2292 = vadd.f32 %v1608, %v2017
      %v2293 = vadd.f32 %v1609, %v2019
      %v2294 = vadd.f32 %v1610, %v2021
      %v2295 = vadd.f32 %v1611, %v2023
      %v2296 = vadd.f32 %v1612, %v2025
      %v2297 = vadd.f32 %v1613, %v2027
      %v2298 = vadd.f32 %v1614, %v2029
      %v2299 = vadd.f32 %v1615, %v2031
      %v2300 = vadd.f32 %v1616, %v2033
      %v2301 = vadd.f32 %v1617, %v2035
      %v2302 = vadd.f32 %v1618, %v2037
      %v2303 = vadd.f32 %v1619, %v2039
      %v2304 = vadd.f32 %v1620, %v2041
      %v2305 = vadd.f32 %v1621, %v2043
      %v2306 = vadd.f32 %v1622, %v2045
      %v2307 = vadd.f32 %v1623, %v2047
      %v2308 = vadd.f32 %v1624, %v2049
      %v2309 = vadd.f32 %v1625, %v2051
      %v2310 = vadd.f32 %v1626, %v2053
      %v2311 = vadd.f32 %v1627, %v2055
      %v2312 = vadd.f32 %v1628, %v2057
      %v2313 = vadd.f32 %v1629, %v2059
      %v2314 = vadd.f32 %v1630, %v2061
      %v2315 = vadd.f32 %v1631, %v2063
      %v2316 = vadd.f32 %v1632, %v2065
      %v2317 = vadd.f32 %v1633, %v2067
      %v2318 = vadd.f32 %v1634, %v2069
      %v2319 = vadd.f32 %v1635, %v2071
      %v2320 = vadd.f32 %v1636, %v2073
      %v2321 = vadd.f32 %v1637, %v2075
      %v2322 = vadd.f32 %v1638, %v2077
      %v2323 = vadd.f32 %v1639, %v2079
      %v2324 = vadd.f32 %v1640, %v2081
      %v2325 = vadd.f32 %v1641, %v2083
      %v2326 = vadd.f32 %v1642, %v2085
      %v2327 = vadd.f32 %v1643, %v2087
      %v2328 = vadd.f32 %v1644, %v2089
      %v2329 = vadd.f32 %v1645, %v2091
      %v2330 = vadd.f32 %v1646, %v2093
      %v2331 = vadd.f32 %v1647, %v2095
      %v2332 = vadd.f32 %v1648, %v2097
      %v2333 = vadd.f32 %v1649, %v2099
      %v2334 = vadd.f32 %v1650, %v2101
      %v2335 = vadd.f32 %v1651, %v2103
      %v2336 = vadd.f32 %v1652, %v2105
      %v2337 = vadd.f32 %v1653, %v2107
      %v2338 = vadd.f32 %v1654, %v2109
      %v2339 = vadd.f32 %v1655, %v2111
      %v2340 = vadd.f32 %v1656, %v2113
      %v2341 = vadd.f32 %v1657, %v2115
      %v2342 = vadd.f32 %v1658, %v2117
      %v2343 = vadd.f32 %v1659, %v2119
      %s2344 = scalar_lea.vmem %s1, 3
      %v2345 = vld [vmem:[%s2344] sm:$0x1]
      %2347 = vset.pattern.permute.xlu0 0
      %2348 = vperm.xlu0 %2347, %v284
      %v2349 = vpop.permute.xlu0 %2348
      %2352 = vset.pattern.permute.xlu0 0
      %2353 = vperm.xlu0 %2352, %v285
      %v2354 = vpop.permute.xlu0 %2353
      %2357 = vset.pattern.permute.xlu0 0
      %2358 = vperm.xlu0 %2357, %v286
      %v2359 = vpop.permute.xlu0 %2358
      %v2362 = vlaneseq
      %v2363 = vshrl.u32 %v2362, 7
      %v2364 = vsub.s32 0, %v2363
      %v2365 = vrot.slane %v2345, %v2364
      %v2367 = vmul.f32 %v316, %v2365
      %v2368 = vmul.f32 %v321, %v2365
      %v2369 = vmul.f32 %v326, %v2365
      %v2370 = vmul.f32 %v331, %v2365
      %v2371 = vmul.f32 %v336, %v2365
      %v2372 = vmul.f32 %v341, %v2365
      %v2373 = vmul.f32 %v346, %v2365
      %v2374 = vmul.f32 %v351, %v2365
      %v2375 = vmul.f32 %v356, %v2365
      %v2376 = vmul.f32 %v361, %v2365
      %v2377 = vmul.f32 %v366, %v2365
      %v2378 = vmul.f32 %v371, %v2365
      %v2379 = vmul.f32 %v376, %v2365
      %v2380 = vmul.f32 %v381, %v2365
      %v2381 = vmul.f32 %v386, %v2365
      %v2382 = vmul.f32 %v391, %v2365
      %v2383 = vmul.f32 %v396, %v2365
      %v2384 = vmul.f32 %v401, %v2365
      %v2385 = vmul.f32 %v406, %v2365
      %v2386 = vmul.f32 %v411, %v2365
      %v2387 = vmul.f32 %v416, %v2365
      %v2388 = vmul.f32 %v421, %v2365
      %v2389 = vmul.f32 %v426, %v2365
      %v2390 = vmul.f32 %v431, %v2365
      %v2391 = vmul.f32 %v436, %v2365
      %v2392 = vmul.f32 %v441, %v2365
      %v2393 = vmul.f32 %v446, %v2365
      %v2394 = vmul.f32 %v451, %v2365
      %v2395 = vmul.f32 %v456, %v2365
      %v2396 = vmul.f32 %v461, %v2365
      %v2397 = vmul.f32 %v466, %v2365
      %v2398 = vmul.f32 %v471, %v2365
      %v2399 = vmul.f32 %v476, %v2365
      %v2400 = vmul.f32 %v481, %v2365
      %v2401 = vmul.f32 %v486, %v2365
      %v2402 = vmul.f32 %v491, %v2365
      %v2403 = vmul.f32 %v496, %v2365
      %v2404 = vmul.f32 %v501, %v2365
      %v2405 = vmul.f32 %v506, %v2365
      %v2406 = vmul.f32 %v511, %v2365
      %v2407 = vmul.f32 %v516, %v2365
      %v2408 = vmul.f32 %v521, %v2365
      %v2409 = vmul.f32 %v526, %v2365
      %v2410 = vmul.f32 %v531, %v2365
      %v2411 = vmul.f32 %v536, %v2365
      %v2412 = vmul.f32 %v541, %v2365
      %v2413 = vmul.f32 %v546, %v2365
      %v2414 = vmul.f32 %v551, %v2365
      %v2415 = vmul.f32 %v556, %v2365
      %v2416 = vmul.f32 %v561, %v2365
      %v2417 = vmul.f32 %v566, %v2365
      %v2418 = vmul.f32 %v571, %v2365
      %v2419 = vmul.f32 %v576, %v2365
      %v2420 = vmul.f32 %v581, %v2365
      %v2421 = vmul.f32 %v586, %v2365
      %v2422 = vmul.f32 %v591, %v2365
      %v2423 = vmul.f32 %v596, %v2365
      %v2424 = vmul.f32 %v601, %v2365
      %v2425 = vmul.f32 %v606, %v2365
      %v2426 = vmul.f32 %v611, %v2365
      %v2427 = vmul.f32 %v616, %v2365
      %v2428 = vmul.f32 %v621, %v2365
      %v2429 = vmul.f32 %v626, %v2365
      %v2430 = vmul.f32 %v631, %v2365
      %v2431 = vmul.f32 %v636, %v2365
      %v2432 = vmul.f32 %v641, %v2365
      %v2433 = vmul.f32 %v646, %v2365
      %v2434 = vmul.f32 %v651, %v2365
      %v2435 = vmul.f32 %v656, %v2365
      %v2436 = vmul.f32 %v661, %v2365
      %v2437 = vmul.f32 %v666, %v2365
      %v2438 = vmul.f32 %v671, %v2365
      %v2439 = vmul.f32 %v676, %v2365
      %v2440 = vmul.f32 %v681, %v2365
      %v2441 = vmul.f32 %v686, %v2365
      %v2442 = vmul.f32 %v691, %v2365
      %v2443 = vmul.f32 %v696, %v2365
      %v2444 = vmul.f32 %v701, %v2365
      %v2445 = vmul.f32 %v706, %v2365
      %v2446 = vmul.f32 %v711, %v2365
      %v2447 = vmul.f32 %v716, %v2365
      %v2448 = vmul.f32 %v721, %v2365
      %v2449 = vmul.f32 %v726, %v2365
      %v2450 = vmul.f32 %v731, %v2365
      %v2451 = vmul.f32 %v736, %v2365
      %v2452 = vmul.f32 %v741, %v2365
      %v2453 = vmul.f32 %v746, %v2365
      %v2454 = vmul.f32 %v751, %v2365
      %v2455 = vmul.f32 %v756, %v2365
      %v2456 = vmul.f32 %v761, %v2365
      %v2457 = vmul.f32 %v766, %v2365
      %v2458 = vmul.f32 %v771, %v2365
      %v2459 = vmul.f32 %v776, %v2365
      %v2460 = vmul.f32 %v781, %v2365
      %v2461 = vmul.f32 %v786, %v2365
      %v2462 = vmul.f32 %v791, %v2365
      %v2463 = vmul.f32 %v796, %v2365
      %v2464 = vmul.f32 %v801, %v2365
      %v2465 = vmul.f32 %v806, %v2365
      %v2466 = vmul.f32 %v811, %v2365
      %v2467 = vmul.f32 %v816, %v2365
      %v2468 = vmul.f32 %v821, %v2365
      %v2469 = vmul.f32 %v826, %v2365
      %v2470 = vmul.f32 %v831, %v2365
      %v2471 = vmul.f32 %v836, %v2365
      %v2472 = vmul.f32 %v841, %v2365
      %v2473 = vmul.f32 %v846, %v2365
      %v2474 = vmul.f32 %v851, %v2365
      %v2475 = vmul.f32 %v976, %v2365
      %v2476 = vmul.f32 %v2349, %v2365
      %v2477 = vmul.f32 %v2354, %v2365
      %v2478 = vmul.f32 %v2359, %v2365
      %v2479 = vadd.f32 %v2232, %v2367
      %v2480 = vadd.f32 %v2233, %v2368
      %v2481 = vadd.f32 %v2234, %v2369
      %v2482 = vadd.f32 %v2235, %v2370
      %v2483 = vadd.f32 %v2236, %v2371
      %v2484 = vadd.f32 %v2237, %v2372
      %v2485 = vadd.f32 %v2238, %v2373
      %v2486 = vadd.f32 %v2239, %v2374
      %v2487 = vadd.f32 %v2240, %v2375
      %v2488 = vadd.f32 %v2241, %v2376
      %v2489 = vadd.f32 %v2242, %v2377
      %v2490 = vadd.f32 %v2243, %v2378
      %v2491 = vadd.f32 %v2244, %v2379
      %v2492 = vadd.f32 %v2245, %v2380
      %v2493 = vadd.f32 %v2246, %v2381
      %v2494 = vadd.f32 %v2247, %v2382
      %v2495 = vadd.f32 %v2248, %v2383
      %v2496 = vadd.f32 %v2249, %v2384
      %v2497 = vadd.f32 %v2250, %v2385
      %v2498 = vadd.f32 %v2251, %v2386
      %v2499 = vadd.f32 %v2252, %v2387
      %v2500 = vadd.f32 %v2253, %v2388
      %v2501 = vadd.f32 %v2254, %v2389
      %v2502 = vadd.f32 %v2255, %v2390
      %v2503 = vadd.f32 %v2256, %v2391
      %v2504 = vadd.f32 %v2257, %v2392
      %v2505 = vadd.f32 %v2258, %v2393
      %v2506 = vadd.f32 %v2259, %v2394
      %v2507 = vadd.f32 %v2260, %v2395
      %v2508 = vadd.f32 %v2261, %v2396
      %v2509 = vadd.f32 %v2262, %v2397
      %v2510 = vadd.f32 %v2263, %v2398
      %v2511 = vadd.f32 %v2264, %v2399
      %v2512 = vadd.f32 %v2265, %v2400
      %v2513 = vadd.f32 %v2266, %v2401
      %v2514 = vadd.f32 %v2267, %v2402
      %v2515 = vadd.f32 %v2268, %v2403
      %v2516 = vadd.f32 %v2269, %v2404
      %v2517 = vadd.f32 %v2270, %v2405
      %v2518 = vadd.f32 %v2271, %v2406
      %v2519 = vadd.f32 %v2272, %v2407
      %v2520 = vadd.f32 %v2273, %v2408
      %v2521 = vadd.f32 %v2274, %v2409
      %v2522 = vadd.f32 %v2275, %v2410
      %v2523 = vadd.f32 %v2276, %v2411
      %v2524 = vadd.f32 %v2277, %v2412
      %v2525 = vadd.f32 %v2278, %v2413
      %v2526 = vadd.f32 %v2279, %v2414
      %v2527 = vadd.f32 %v2280, %v2415
      %v2528 = vadd.f32 %v2281, %v2416
      %v2529 = vadd.f32 %v2282, %v2417
      %v2530 = vadd.f32 %v2283, %v2418
      %v2531 = vadd.f32 %v2284, %v2419
      %v2532 = vadd.f32 %v2285, %v2420
      %v2533 = vadd.f32 %v2286, %v2421
      %v2534 = vadd.f32 %v2287, %v2422
      %v2535 = vadd.f32 %v2288, %v2423
      %v2536 = vadd.f32 %v2289, %v2424
      %v2537 = vadd.f32 %v2290, %v2425
      %v2538 = vadd.f32 %v2291, %v2426
      %v2539 = vadd.f32 %v2292, %v2427
      %v2540 = vadd.f32 %v2293, %v2428
      %v2541 = vadd.f32 %v2294, %v2429
      %v2542 = vadd.f32 %v2295, %v2430
      %v2543 = vadd.f32 %v2296, %v2431
      %v2544 = vadd.f32 %v2297, %v2432
      %v2545 = vadd.f32 %v2298, %v2433
      %v2546 = vadd.f32 %v2299, %v2434
      %v2547 = vadd.f32 %v2300, %v2435
      %v2548 = vadd.f32 %v2301, %v2436
      %v2549 = vadd.f32 %v2302, %v2437
      %v2550 = vadd.f32 %v2303, %v2438
      %v2551 = vadd.f32 %v2304, %v2439
      %v2552 = vadd.f32 %v2305, %v2440
      %v2553 = vadd.f32 %v2306, %v2441
      %v2554 = vadd.f32 %v2307, %v2442
      %v2555 = vadd.f32 %v2308, %v2443
      %v2556 = vadd.f32 %v2309, %v2444
      %v2557 = vadd.f32 %v2310, %v2445
      %v2558 = vadd.f32 %v2311, %v2446
      %v2559 = vadd.f32 %v2312, %v2447
      %v2560 = vadd.f32 %v2313, %v2448
      %v2561 = vadd.f32 %v2314, %v2449
      %v2562 = vadd.f32 %v2315, %v2450
      %v2563 = vadd.f32 %v2316, %v2451
      %v2564 = vadd.f32 %v2317, %v2452
      %v2565 = vadd.f32 %v2318, %v2453
      %v2566 = vadd.f32 %v2319, %v2454
      %v2567 = vadd.f32 %v2320, %v2455
      %v2568 = vadd.f32 %v2321, %v2456
      %v2569 = vadd.f32 %v2322, %v2457
      %v2570 = vadd.f32 %v2323, %v2458
      %v2571 = vadd.f32 %v2324, %v2459
      %v2572 = vadd.f32 %v2325, %v2460
      %v2573 = vadd.f32 %v2326, %v2461
      %v2574 = vadd.f32 %v2327, %v2462
      %v2575 = vadd.f32 %v2328, %v2463
      %v2576 = vadd.f32 %v2329, %v2464
      %v2577 = vadd.f32 %v2330, %v2465
      %v2578 = vadd.f32 %v2331, %v2466
      %v2579 = vadd.f32 %v2332, %v2467
      %v2580 = vadd.f32 %v2333, %v2468
      %v2581 = vadd.f32 %v2334, %v2469
      %v2582 = vadd.f32 %v2335, %v2470
      %v2583 = vadd.f32 %v2336, %v2471
      %v2584 = vadd.f32 %v2337, %v2472
      %v2585 = vadd.f32 %v2338, %v2473
      %v2586 = vadd.f32 %v2339, %v2474
      %v2587 = vadd.f32 %v2340, %v2475
      %v2588 = vadd.f32 %v2341, %v2476
      %v2589 = vadd.f32 %v2342, %v2477
      %v2590 = vadd.f32 %v2343, %v2478
      %s2591 = scalar_lea.vmem %s1, 4
      %v2592 = vld [vmem:[%s2591] sm:$0x1]
      %2594 = vset.pattern.permute.xlu0 0
      %2595 = vperm.xlu0 %2594, %v287
      %v2596 = vpop.permute.xlu0 %2595
      %v2599 = vlaneseq
      %v2600 = vshrl.u32 %v2599, 7
      %v2601 = vsub.s32 0, %v2600
      %v2602 = vrot.slane %v2592, %v2601
      %v2604 = vmul.f32 %v316, %v2602
      %v2605 = vmul.f32 %v321, %v2602
      %v2606 = vmul.f32 %v326, %v2602
      %v2607 = vmul.f32 %v331, %v2602
      %v2608 = vmul.f32 %v336, %v2602
      %v2609 = vmul.f32 %v341, %v2602
      %v2610 = vmul.f32 %v346, %v2602
      %v2611 = vmul.f32 %v351, %v2602
      %v2612 = vmul.f32 %v356, %v2602
      %v2613 = vmul.f32 %v361, %v2602
      %v2614 = vmul.f32 %v366, %v2602
      %v2615 = vmul.f32 %v371, %v2602
      %v2616 = vmul.f32 %v376, %v2602
      %v2617 = vmul.f32 %v381, %v2602
      %v2618 = vmul.f32 %v386, %v2602
      %v2619 = vmul.f32 %v391, %v2602
      %v2620 = vmul.f32 %v396, %v2602
      %v2621 = vmul.f32 %v401, %v2602
      %v2622 = vmul.f32 %v406, %v2602
      %v2623 = vmul.f32 %v411, %v2602
      %v2624 = vmul.f32 %v416, %v2602
      %v2625 = vmul.f32 %v421, %v2602
      %v2626 = vmul.f32 %v426, %v2602
      %v2627 = vmul.f32 %v431, %v2602
      %v2628 = vmul.f32 %v436, %v2602
      %v2629 = vmul.f32 %v441, %v2602
      %v2630 = vmul.f32 %v446, %v2602
      %v2631 = vmul.f32 %v451, %v2602
      %v2632 = vmul.f32 %v456, %v2602
      %v2633 = vmul.f32 %v461, %v2602
      %v2634 = vmul.f32 %v466, %v2602
      %v2635 = vmul.f32 %v471, %v2602
      %v2636 = vmul.f32 %v476, %v2602
      %v2637 = vmul.f32 %v481, %v2602
      %v2638 = vmul.f32 %v486, %v2602
      %v2639 = vmul.f32 %v491, %v2602
      %v2640 = vmul.f32 %v496, %v2602
      %v2641 = vmul.f32 %v501, %v2602
      %v2642 = vmul.f32 %v506, %v2602
      %v2643 = vmul.f32 %v511, %v2602
      %v2644 = vmul.f32 %v516, %v2602
      %v2645 = vmul.f32 %v521, %v2602
      %v2646 = vmul.f32 %v526, %v2602
      %v2647 = vmul.f32 %v531, %v2602
      %v2648 = vmul.f32 %v536, %v2602
      %v2649 = vmul.f32 %v541, %v2602
      %v2650 = vmul.f32 %v546, %v2602
      %v2651 = vmul.f32 %v551, %v2602
      %v2652 = vmul.f32 %v556, %v2602
      %v2653 = vmul.f32 %v561, %v2602
      %v2654 = vmul.f32 %v566, %v2602
      %v2655 = vmul.f32 %v571, %v2602
      %v2656 = vmul.f32 %v576, %v2602
      %v2657 = vmul.f32 %v581, %v2602
      %v2658 = vmul.f32 %v586, %v2602
      %v2659 = vmul.f32 %v591, %v2602
      %v2660 = vmul.f32 %v596, %v2602
      %v2661 = vmul.f32 %v601, %v2602
      %v2662 = vmul.f32 %v606, %v2602
      %v2663 = vmul.f32 %v611, %v2602
      %v2664 = vmul.f32 %v616, %v2602
      %v2665 = vmul.f32 %v621, %v2602
      %v2666 = vmul.f32 %v626, %v2602
      %v2667 = vmul.f32 %v631, %v2602
      %v2668 = vmul.f32 %v636, %v2602
      %v2669 = vmul.f32 %v641, %v2602
      %v2670 = vmul.f32 %v646, %v2602
      %v2671 = vmul.f32 %v651, %v2602
      %v2672 = vmul.f32 %v656, %v2602
      %v2673 = vmul.f32 %v661, %v2602
      %v2674 = vmul.f32 %v666, %v2602
      %v2675 = vmul.f32 %v671, %v2602
      %v2676 = vmul.f32 %v676, %v2602
      %v2677 = vmul.f32 %v681, %v2602
      %v2678 = vmul.f32 %v686, %v2602
      %v2679 = vmul.f32 %v691, %v2602
      %v2680 = vmul.f32 %v696, %v2602
      %v2681 = vmul.f32 %v701, %v2602
      %v2682 = vmul.f32 %v706, %v2602
      %v2683 = vmul.f32 %v711, %v2602
      %v2684 = vmul.f32 %v716, %v2602
      %v2685 = vmul.f32 %v721, %v2602
      %v2686 = vmul.f32 %v726, %v2602
      %v2687 = vmul.f32 %v731, %v2602
      %v2688 = vmul.f32 %v736, %v2602
      %v2689 = vmul.f32 %v741, %v2602
      %v2690 = vmul.f32 %v746, %v2602
      %v2691 = vmul.f32 %v751, %v2602
      %v2692 = vmul.f32 %v756, %v2602
      %v2693 = vmul.f32 %v761, %v2602
      %v2694 = vmul.f32 %v766, %v2602
      %v2695 = vmul.f32 %v771, %v2602
      %v2696 = vmul.f32 %v776, %v2602
      %v2697 = vmul.f32 %v781, %v2602
      %v2698 = vmul.f32 %v786, %v2602
      %v2699 = vmul.f32 %v791, %v2602
      %v2700 = vmul.f32 %v796, %v2602
      %v2701 = vmul.f32 %v801, %v2602
      %v2702 = vmul.f32 %v806, %v2602
      %v2703 = vmul.f32 %v811, %v2602
      %v2704 = vmul.f32 %v816, %v2602
      %v2705 = vmul.f32 %v821, %v2602
      %v2706 = vmul.f32 %v826, %v2602
      %v2707 = vmul.f32 %v831, %v2602
      %v2708 = vmul.f32 %v836, %v2602
      %v2709 = vmul.f32 %v841, %v2602
      %v2710 = vmul.f32 %v846, %v2602
      %v2711 = vmul.f32 %v851, %v2602
      %v2712 = vmul.f32 %v976, %v2602
      %v2713 = vmul.f32 %v2349, %v2602
      %v2714 = vmul.f32 %v2354, %v2602
      %v2715 = vmul.f32 %v2359, %v2602
      %v2716 = vmul.f32 %v2596, %v2602
      %v2830 = vrot.slane %v2604, 1
      %v2831 = vrot.slane %v2605, 1
      %v2832 = vsel %vm1210, %v2830, %v2831
      %v2833 = vrot.slane %v2606, 1
      %v2834 = vsel %vm1210, %v2831, %v2833
      %v2835 = vrot.slane %v2607, 1
      %v2836 = vsel %vm1210, %v2833, %v2835
      %v2837 = vrot.slane %v2608, 1
      %v2838 = vsel %vm1210, %v2835, %v2837
      %v2839 = vrot.slane %v2609, 1
      %v2840 = vsel %vm1210, %v2837, %v2839
      %v2841 = vrot.slane %v2610, 1
      %v2842 = vsel %vm1210, %v2839, %v2841
      %v2843 = vrot.slane %v2611, 1
      %v2844 = vsel %vm1210, %v2841, %v2843
      %v2845 = vrot.slane %v2612, 1
      %v2846 = vsel %vm1210, %v2843, %v2845
      %v2847 = vrot.slane %v2613, 1
      %v2848 = vsel %vm1210, %v2845, %v2847
      %v2849 = vrot.slane %v2614, 1
      %v2850 = vsel %vm1210, %v2847, %v2849
      %v2851 = vrot.slane %v2615, 1
      %v2852 = vsel %vm1210, %v2849, %v2851
      %v2853 = vrot.slane %v2616, 1
      %v2854 = vsel %vm1210, %v2851, %v2853
      %v2855 = vrot.slane %v2617, 1
      %v2856 = vsel %vm1210, %v2853, %v2855
      %v2857 = vrot.slane %v2618, 1
      %v2858 = vsel %vm1210, %v2855, %v2857
      %v2859 = vrot.slane %v2619, 1
      %v2860 = vsel %vm1210, %v2857, %v2859
      %v2861 = vrot.slane %v2620, 1
      %v2862 = vsel %vm1210, %v2859, %v2861
      %v2863 = vrot.slane %v2621, 1
      %v2864 = vsel %vm1210, %v2861, %v2863
      %v2865 = vrot.slane %v2622, 1
      %v2866 = vsel %vm1210, %v2863, %v2865
      %v2867 = vrot.slane %v2623, 1
      %v2868 = vsel %vm1210, %v2865, %v2867
      %v2869 = vrot.slane %v2624, 1
      %v2870 = vsel %vm1210, %v2867, %v2869
      %v2871 = vrot.slane %v2625, 1
      %v2872 = vsel %vm1210, %v2869, %v2871
      %v2873 = vrot.slane %v2626, 1
      %v2874 = vsel %vm1210, %v2871, %v2873
      %v2875 = vrot.slane %v2627, 1
      %v2876 = vsel %vm1210, %v2873, %v2875
      %v2877 = vrot.slane %v2628, 1
      %v2878 = vsel %vm1210, %v2875, %v2877
      %v2879 = vrot.slane %v2629, 1
      %v2880 = vsel %vm1210, %v2877, %v2879
      %v2881 = vrot.slane %v2630, 1
      %v2882 = vsel %vm1210, %v2879, %v2881
      %v2883 = vrot.slane %v2631, 1
      %v2884 = vsel %vm1210, %v2881, %v2883
      %v2885 = vrot.slane %v2632, 1
      %v2886 = vsel %vm1210, %v2883, %v2885
      %v2887 = vrot.slane %v2633, 1
      %v2888 = vsel %vm1210, %v2885, %v2887
      %v2889 = vrot.slane %v2634, 1
      %v2890 = vsel %vm1210, %v2887, %v2889
      %v2891 = vrot.slane %v2635, 1
      %v2892 = vsel %vm1210, %v2889, %v2891
      %v2893 = vrot.slane %v2636, 1
      %v2894 = vsel %vm1210, %v2891, %v2893
      %v2895 = vrot.slane %v2637, 1
      %v2896 = vsel %vm1210, %v2893, %v2895
      %v2897 = vrot.slane %v2638, 1
      %v2898 = vsel %vm1210, %v2895, %v2897
      %v2899 = vrot.slane %v2639, 1
      %v2900 = vsel %vm1210, %v2897, %v2899
      %v2901 = vrot.slane %v2640, 1
      %v2902 = vsel %vm1210, %v2899, %v2901
      %v2903 = vrot.slane %v2641, 1
      %v2904 = vsel %vm1210, %v2901, %v2903
      %v2905 = vrot.slane %v2642, 1
      %v2906 = vsel %vm1210, %v2903, %v2905
      %v2907 = vrot.slane %v2643, 1
      %v2908 = vsel %vm1210, %v2905, %v2907
      %v2909 = vrot.slane %v2644, 1
      %v2910 = vsel %vm1210, %v2907, %v2909
      %v2911 = vrot.slane %v2645, 1
      %v2912 = vsel %vm1210, %v2909, %v2911
      %v2913 = vrot.slane %v2646, 1
      %v2914 = vsel %vm1210, %v2911, %v2913
      %v2915 = vrot.slane %v2647, 1
      %v2916 = vsel %vm1210, %v2913, %v2915
      %v2917 = vrot.slane %v2648, 1
      %v2918 = vsel %vm1210, %v2915, %v2917
      %v2919 = vrot.slane %v2649, 1
      %v2920 = vsel %vm1210, %v2917, %v2919
      %v2921 = vrot.slane %v2650, 1
      %v2922 = vsel %vm1210, %v2919, %v2921
      %v2923 = vrot.slane %v2651, 1
      %v2924 = vsel %vm1210, %v2921, %v2923
      %v2925 = vrot.slane %v2652, 1
      %v2926 = vsel %vm1210, %v2923, %v2925
      %v2927 = vrot.slane %v2653, 1
      %v2928 = vsel %vm1210, %v2925, %v2927
      %v2929 = vrot.slane %v2654, 1
      %v2930 = vsel %vm1210, %v2927, %v2929
      %v2931 = vrot.slane %v2655, 1
      %v2932 = vsel %vm1210, %v2929, %v2931
      %v2933 = vrot.slane %v2656, 1
      %v2934 = vsel %vm1210, %v2931, %v2933
      %v2935 = vrot.slane %v2657, 1
      %v2936 = vsel %vm1210, %v2933, %v2935
      %v2937 = vrot.slane %v2658, 1
      %v2938 = vsel %vm1210, %v2935, %v2937
      %v2939 = vrot.slane %v2659, 1
      %v2940 = vsel %vm1210, %v2937, %v2939
      %v2941 = vrot.slane %v2660, 1
      %v2942 = vsel %vm1210, %v2939, %v2941
      %v2943 = vrot.slane %v2661, 1
      %v2944 = vsel %vm1210, %v2941, %v2943
      %v2945 = vrot.slane %v2662, 1
      %v2946 = vsel %vm1210, %v2943, %v2945
      %v2947 = vrot.slane %v2663, 1
      %v2948 = vsel %vm1210, %v2945, %v2947
      %v2949 = vrot.slane %v2664, 1
      %v2950 = vsel %vm1210, %v2947, %v2949
      %v2951 = vrot.slane %v2665, 1
      %v2952 = vsel %vm1210, %v2949, %v2951
      %v2953 = vrot.slane %v2666, 1
      %v2954 = vsel %vm1210, %v2951, %v2953
      %v2955 = vrot.slane %v2667, 1
      %v2956 = vsel %vm1210, %v2953, %v2955
      %v2957 = vrot.slane %v2668, 1
      %v2958 = vsel %vm1210, %v2955, %v2957
      %v2959 = vrot.slane %v2669, 1
      %v2960 = vsel %vm1210, %v2957, %v2959
      %v2961 = vrot.slane %v2670, 1
      %v2962 = vsel %vm1210, %v2959, %v2961
      %v2963 = vrot.slane %v2671, 1
      %v2964 = vsel %vm1210, %v2961, %v2963
      %v2965 = vrot.slane %v2672, 1
      %v2966 = vsel %vm1210, %v2963, %v2965
      %v2967 = vrot.slane %v2673, 1
      %v2968 = vsel %vm1210, %v2965, %v2967
      %v2969 = vrot.slane %v2674, 1
      %v2970 = vsel %vm1210, %v2967, %v2969
      %v2971 = vrot.slane %v2675, 1
      %v2972 = vsel %vm1210, %v2969, %v2971
      %v2973 = vrot.slane %v2676, 1
      %v2974 = vsel %vm1210, %v2971, %v2973
      %v2975 = vrot.slane %v2677, 1
      %v2976 = vsel %vm1210, %v2973, %v2975
      %v2977 = vrot.slane %v2678, 1
      %v2978 = vsel %vm1210, %v2975, %v2977
      %v2979 = vrot.slane %v2679, 1
      %v2980 = vsel %vm1210, %v2977, %v2979
      %v2981 = vrot.slane %v2680, 1
      %v2982 = vsel %vm1210, %v2979, %v2981
      %v2983 = vrot.slane %v2681, 1
      %v2984 = vsel %vm1210, %v2981, %v2983
      %v2985 = vrot.slane %v2682, 1
      %v2986 = vsel %vm1210, %v2983, %v2985
      %v2987 = vrot.slane %v2683, 1
      %v2988 = vsel %vm1210, %v2985, %v2987
      %v2989 = vrot.slane %v2684, 1
      %v2990 = vsel %vm1210, %v2987, %v2989
      %v2991 = vrot.slane %v2685, 1
      %v2992 = vsel %vm1210, %v2989, %v2991
      %v2993 = vrot.slane %v2686, 1
      %v2994 = vsel %vm1210, %v2991, %v2993
      %v2995 = vrot.slane %v2687, 1
      %v2996 = vsel %vm1210, %v2993, %v2995
      %v2997 = vrot.slane %v2688, 1
      %v2998 = vsel %vm1210, %v2995, %v2997
      %v2999 = vrot.slane %v2689, 1
      %v3000 = vsel %vm1210, %v2997, %v2999
      %v3001 = vrot.slane %v2690, 1
      %v3002 = vsel %vm1210, %v2999, %v3001
      %v3003 = vrot.slane %v2691, 1
      %v3004 = vsel %vm1210, %v3001, %v3003
      %v3005 = vrot.slane %v2692, 1
      %v3006 = vsel %vm1210, %v3003, %v3005
      %v3007 = vrot.slane %v2693, 1
      %v3008 = vsel %vm1210, %v3005, %v3007
      %v3009 = vrot.slane %v2694, 1
      %v3010 = vsel %vm1210, %v3007, %v3009
      %v3011 = vrot.slane %v2695, 1
      %v3012 = vsel %vm1210, %v3009, %v3011
      %v3013 = vrot.slane %v2696, 1
      %v3014 = vsel %vm1210, %v3011, %v3013
      %v3015 = vrot.slane %v2697, 1
      %v3016 = vsel %vm1210, %v3013, %v3015
      %v3017 = vrot.slane %v2698, 1
      %v3018 = vsel %vm1210, %v3015, %v3017
      %v3019 = vrot.slane %v2699, 1
      %v3020 = vsel %vm1210, %v3017, %v3019
      %v3021 = vrot.slane %v2700, 1
      %v3022 = vsel %vm1210, %v3019, %v3021
      %v3023 = vrot.slane %v2701, 1
      %v3024 = vsel %vm1210, %v3021, %v3023
      %v3025 = vrot.slane %v2702, 1
      %v3026 = vsel %vm1210, %v3023, %v3025
      %v3027 = vrot.slane %v2703, 1
      %v3028 = vsel %vm1210, %v3025, %v3027
      %v3029 = vrot.slane %v2704, 1
      %v3030 = vsel %vm1210, %v3027, %v3029
      %v3031 = vrot.slane %v2705, 1
      %v3032 = vsel %vm1210, %v3029, %v3031
      %v3033 = vrot.slane %v2706, 1
      %v3034 = vsel %vm1210, %v3031, %v3033
      %v3035 = vrot.slane %v2707, 1
      %v3036 = vsel %vm1210, %v3033, %v3035
      %v3037 = vrot.slane %v2708, 1
      %v3038 = vsel %vm1210, %v3035, %v3037
      %v3039 = vrot.slane %v2709, 1
      %v3040 = vsel %vm1210, %v3037, %v3039
      %v3041 = vrot.slane %v2710, 1
      %v3042 = vsel %vm1210, %v3039, %v3041
      %v3043 = vrot.slane %v2711, 1
      %v3044 = vsel %vm1210, %v3041, %v3043
      %v3045 = vrot.slane %v2712, 1
      %v3046 = vsel %vm1210, %v3043, %v3045
      %v3047 = vrot.slane %v2713, 1
      %v3048 = vsel %vm1210, %v3045, %v3047
      %v3049 = vrot.slane %v2714, 1
      %v3050 = vsel %vm1210, %v3047, %v3049
      %v3051 = vrot.slane %v2715, 1
      %v3052 = vsel %vm1210, %v3049, %v3051
      %v3053 = vrot.slane %v2716, 1
      %v3054 = vsel %vm1210, %v3051, %v3053
      %v3167 = vadd.f32 %v2479, %v2832
      %v3168 = vadd.f32 %v2480, %v2834
      %v3169 = vadd.f32 %v2481, %v2836
      %v3170 = vadd.f32 %v2482, %v2838
      %v3171 = vadd.f32 %v2483, %v2840
      %v3172 = vadd.f32 %v2484, %v2842
      %v3173 = vadd.f32 %v2485, %v2844
      %v3174 = vadd.f32 %v2486, %v2846
      %v3175 = vadd.f32 %v2487, %v2848
      %v3176 = vadd.f32 %v2488, %v2850
      %v3177 = vadd.f32 %v2489, %v2852
      %v3178 = vadd.f32 %v2490, %v2854
      %v3179 = vadd.f32 %v2491, %v2856
      %v3180 = vadd.f32 %v2492, %v2858
      %v3181 = vadd.f32 %v2493, %v2860
      %v3182 = vadd.f32 %v2494, %v2862
      %v3183 = vadd.f32 %v2495, %v2864
      %v3184 = vadd.f32 %v2496, %v2866
      %v3185 = vadd.f32 %v2497, %v2868
      %v3186 = vadd.f32 %v2498, %v2870
      %v3187 = vadd.f32 %v2499, %v2872
      %v3188 = vadd.f32 %v2500, %v2874
      %v3189 = vadd.f32 %v2501, %v2876
      %v3190 = vadd.f32 %v2502, %v2878
      %v3191 = vadd.f32 %v2503, %v2880
      %v3192 = vadd.f32 %v2504, %v2882
      %v3193 = vadd.f32 %v2505, %v2884
      %v3194 = vadd.f32 %v2506, %v2886
      %v3195 = vadd.f32 %v2507, %v2888
      %v3196 = vadd.f32 %v2508, %v2890
      %v3197 = vadd.f32 %v2509, %v2892
      %v3198 = vadd.f32 %v2510, %v2894
      %v3199 = vadd.f32 %v2511, %v2896
      %v3200 = vadd.f32 %v2512, %v2898
      %v3201 = vadd.f32 %v2513, %v2900
      %v3202 = vadd.f32 %v2514, %v2902
      %v3203 = vadd.f32 %v2515, %v2904
      %v3204 = vadd.f32 %v2516, %v2906
      %v3205 = vadd.f32 %v2517, %v2908
      %v3206 = vadd.f32 %v2518, %v2910
      %v3207 = vadd.f32 %v2519, %v2912
      %v3208 = vadd.f32 %v2520, %v2914
      %v3209 = vadd.f32 %v2521, %v2916
      %v3210 = vadd.f32 %v2522, %v2918
      %v3211 = vadd.f32 %v2523, %v2920
      %v3212 = vadd.f32 %v2524, %v2922
      %v3213 = vadd.f32 %v2525, %v2924
      %v3214 = vadd.f32 %v2526, %v2926
      %v3215 = vadd.f32 %v2527, %v2928
      %v3216 = vadd.f32 %v2528, %v2930
      %v3217 = vadd.f32 %v2529, %v2932
      %v3218 = vadd.f32 %v2530, %v2934
      %v3219 = vadd.f32 %v2531, %v2936
      %v3220 = vadd.f32 %v2532, %v2938
      %v3221 = vadd.f32 %v2533, %v2940
      %v3222 = vadd.f32 %v2534, %v2942
      %v3223 = vadd.f32 %v2535, %v2944
      %v3224 = vadd.f32 %v2536, %v2946
      %v3225 = vadd.f32 %v2537, %v2948
      %v3226 = vadd.f32 %v2538, %v2950
      %v3227 = vadd.f32 %v2539, %v2952
      %v3228 = vadd.f32 %v2540, %v2954
      %v3229 = vadd.f32 %v2541, %v2956
      %v3230 = vadd.f32 %v2542, %v2958
      %v3231 = vadd.f32 %v2543, %v2960
      %v3232 = vadd.f32 %v2544, %v2962
      %v3233 = vadd.f32 %v2545, %v2964
      %v3234 = vadd.f32 %v2546, %v2966
      %v3235 = vadd.f32 %v2547, %v2968
      %v3236 = vadd.f32 %v2548, %v2970
      %v3237 = vadd.f32 %v2549, %v2972
      %v3238 = vadd.f32 %v2550, %v2974
      %v3239 = vadd.f32 %v2551, %v2976
      %v3240 = vadd.f32 %v2552, %v2978
      %v3241 = vadd.f32 %v2553, %v2980
      %v3242 = vadd.f32 %v2554, %v2982
      %v3243 = vadd.f32 %v2555, %v2984
      %v3244 = vadd.f32 %v2556, %v2986
      %v3245 = vadd.f32 %v2557, %v2988
      %v3246 = vadd.f32 %v2558, %v2990
      %v3247 = vadd.f32 %v2559, %v2992
      %v3248 = vadd.f32 %v2560, %v2994
      %v3249 = vadd.f32 %v2561, %v2996
      %v3250 = vadd.f32 %v2562, %v2998
      %v3251 = vadd.f32 %v2563, %v3000
      %v3252 = vadd.f32 %v2564, %v3002
      %v3253 = vadd.f32 %v2565, %v3004
      %v3254 = vadd.f32 %v2566, %v3006
      %v3255 = vadd.f32 %v2567, %v3008
      %v3256 = vadd.f32 %v2568, %v3010
      %v3257 = vadd.f32 %v2569, %v3012
      %v3258 = vadd.f32 %v2570, %v3014
      %v3259 = vadd.f32 %v2571, %v3016
      %v3260 = vadd.f32 %v2572, %v3018
      %v3261 = vadd.f32 %v2573, %v3020
      %v3262 = vadd.f32 %v2574, %v3022
      %v3263 = vadd.f32 %v2575, %v3024
      %v3264 = vadd.f32 %v2576, %v3026
      %v3265 = vadd.f32 %v2577, %v3028
      %v3266 = vadd.f32 %v2578, %v3030
      %v3267 = vadd.f32 %v2579, %v3032
      %v3268 = vadd.f32 %v2580, %v3034
      %v3269 = vadd.f32 %v2581, %v3036
      %v3270 = vadd.f32 %v2582, %v3038
      %v3271 = vadd.f32 %v2583, %v3040
      %v3272 = vadd.f32 %v2584, %v3042
      %v3273 = vadd.f32 %v2585, %v3044
      %v3274 = vadd.f32 %v2586, %v3046
      %v3275 = vadd.f32 %v2587, %v3048
      %v3276 = vadd.f32 %v2588, %v3050
      %v3277 = vadd.f32 %v2589, %v3052
      %v3278 = vadd.f32 %v2590, %v3054
      %s3279 = scalar_lea.vmem %s1, 5
      %v3280 = vld [vmem:[%s3279] sm:$0x1]
      %v3282 = vlaneseq
      %v3283 = vshrl.u32 %v3282, 7
      %v3284 = vsub.s32 0, %v3283
      %v3285 = vrot.slane %v3280, %v3284
      %v3287 = vmul.f32 %v316, %v3285
      %v3288 = vmul.f32 %v321, %v3285
      %v3289 = vmul.f32 %v326, %v3285
      %v3290 = vmul.f32 %v331, %v3285
      %v3291 = vmul.f32 %v336, %v3285
      %v3292 = vmul.f32 %v341, %v3285
      %v3293 = vmul.f32 %v346, %v3285
      %v3294 = vmul.f32 %v351, %v3285
      %v3295 = vmul.f32 %v356, %v3285
      %v3296 = vmul.f32 %v361, %v3285
      %v3297 = vmul.f32 %v366, %v3285
      %v3298 = vmul.f32 %v371, %v3285
      %v3299 = vmul.f32 %v376, %v3285
      %v3300 = vmul.f32 %v381, %v3285
      %v3301 = vmul.f32 %v386, %v3285
      %v3302 = vmul.f32 %v391, %v3285
      %v3303 = vmul.f32 %v396, %v3285
      %v3304 = vmul.f32 %v401, %v3285
      %v3305 = vmul.f32 %v406, %v3285
      %v3306 = vmul.f32 %v411, %v3285
      %v3307 = vmul.f32 %v416, %v3285
      %v3308 = vmul.f32 %v421, %v3285
      %v3309 = vmul.f32 %v426, %v3285
      %v3310 = vmul.f32 %v431, %v3285
      %v3311 = vmul.f32 %v436, %v3285
      %v3312 = vmul.f32 %v441, %v3285
      %v3313 = vmul.f32 %v446, %v3285
      %v3314 = vmul.f32 %v451, %v3285
      %v3315 = vmul.f32 %v456, %v3285
      %v3316 = vmul.f32 %v461, %v3285
      %v3317 = vmul.f32 %v466, %v3285
      %v3318 = vmul.f32 %v471, %v3285
      %v3319 = vmul.f32 %v476, %v3285
      %v3320 = vmul.f32 %v481, %v3285
      %v3321 = vmul.f32 %v486, %v3285
      %v3322 = vmul.f32 %v491, %v3285
      %v3323 = vmul.f32 %v496, %v3285
      %v3324 = vmul.f32 %v501, %v3285
      %v3325 = vmul.f32 %v506, %v3285
      %v3326 = vmul.f32 %v511, %v3285
      %v3327 = vmul.f32 %v516, %v3285
      %v3328 = vmul.f32 %v521, %v3285
      %v3329 = vmul.f32 %v526, %v3285
      %v3330 = vmul.f32 %v531, %v3285
      %v3331 = vmul.f32 %v536, %v3285
      %v3332 = vmul.f32 %v541, %v3285
      %v3333 = vmul.f32 %v546, %v3285
      %v3334 = vmul.f32 %v551, %v3285
      %v3335 = vmul.f32 %v556, %v3285
      %v3336 = vmul.f32 %v561, %v3285
      %v3337 = vmul.f32 %v566, %v3285
      %v3338 = vmul.f32 %v571, %v3285
      %v3339 = vmul.f32 %v576, %v3285
      %v3340 = vmul.f32 %v581, %v3285
      %v3341 = vmul.f32 %v586, %v3285
      %v3342 = vmul.f32 %v591, %v3285
      %v3343 = vmul.f32 %v596, %v3285
      %v3344 = vmul.f32 %v601, %v3285
      %v3345 = vmul.f32 %v606, %v3285
      %v3346 = vmul.f32 %v611, %v3285
      %v3347 = vmul.f32 %v616, %v3285
      %v3348 = vmul.f32 %v621, %v3285
      %v3349 = vmul.f32 %v626, %v3285
      %v3350 = vmul.f32 %v631, %v3285
      %v3351 = vmul.f32 %v636, %v3285
      %v3352 = vmul.f32 %v641, %v3285
      %v3353 = vmul.f32 %v646, %v3285
      %v3354 = vmul.f32 %v651, %v3285
      %v3355 = vmul.f32 %v656, %v3285
      %v3356 = vmul.f32 %v661, %v3285
      %v3357 = vmul.f32 %v666, %v3285
      %v3358 = vmul.f32 %v671, %v3285
      %v3359 = vmul.f32 %v676, %v3285
      %v3360 = vmul.f32 %v681, %v3285
      %v3361 = vmul.f32 %v686, %v3285
      %v3362 = vmul.f32 %v691, %v3285
      %v3363 = vmul.f32 %v696, %v3285
      %v3364 = vmul.f32 %v701, %v3285
      %v3365 = vmul.f32 %v706, %v3285
      %v3366 = vmul.f32 %v711, %v3285
      %v3367 = vmul.f32 %v716, %v3285
      %v3368 = vmul.f32 %v721, %v3285
      %v3369 = vmul.f32 %v726, %v3285
      %v3370 = vmul.f32 %v731, %v3285
      %v3371 = vmul.f32 %v736, %v3285
      %v3372 = vmul.f32 %v741, %v3285
      %v3373 = vmul.f32 %v746, %v3285
      %v3374 = vmul.f32 %v751, %v3285
      %v3375 = vmul.f32 %v756, %v3285
      %v3376 = vmul.f32 %v761, %v3285
      %v3377 = vmul.f32 %v766, %v3285
      %v3378 = vmul.f32 %v771, %v3285
      %v3379 = vmul.f32 %v776, %v3285
      %v3380 = vmul.f32 %v781, %v3285
      %v3381 = vmul.f32 %v786, %v3285
      %v3382 = vmul.f32 %v791, %v3285
      %v3383 = vmul.f32 %v796, %v3285
      %v3384 = vmul.f32 %v801, %v3285
      %v3385 = vmul.f32 %v806, %v3285
      %v3386 = vmul.f32 %v811, %v3285
      %v3387 = vmul.f32 %v816, %v3285
      %v3388 = vmul.f32 %v821, %v3285
      %v3389 = vmul.f32 %v826, %v3285
      %v3390 = vmul.f32 %v831, %v3285
      %v3391 = vmul.f32 %v836, %v3285
      %v3392 = vmul.f32 %v841, %v3285
      %v3393 = vmul.f32 %v846, %v3285
      %v3394 = vmul.f32 %v851, %v3285
      %v3395 = vmul.f32 %v976, %v3285
      %v3396 = vmul.f32 %v2349, %v3285
      %v3397 = vmul.f32 %v2354, %v3285
      %v3398 = vmul.f32 %v2359, %v3285
      %v3399 = vmul.f32 %v2596, %v3285
      %v3513 = vrot.slane %v3287, 2
      %v3514 = vrot.slane %v3288, 2
      %v3515 = vsel %vm1894, %v3513, %v3514
      %v3516 = vrot.slane %v3289, 2
      %v3517 = vsel %vm1894, %v3514, %v3516
      %v3518 = vrot.slane %v3290, 2
      %v3519 = vsel %vm1894, %v3516, %v3518
      %v3520 = vrot.slane %v3291, 2
      %v3521 = vsel %vm1894, %v3518, %v3520
      %v3522 = vrot.slane %v3292, 2
      %v3523 = vsel %vm1894, %v3520, %v3522
      %v3524 = vrot.slane %v3293, 2
      %v3525 = vsel %vm1894, %v3522, %v3524
      %v3526 = vrot.slane %v3294, 2
      %v3527 = vsel %vm1894, %v3524, %v3526
      %v3528 = vrot.slane %v3295, 2
      %v3529 = vsel %vm1894, %v3526, %v3528
      %v3530 = vrot.slane %v3296, 2
      %v3531 = vsel %vm1894, %v3528, %v3530
      %v3532 = vrot.slane %v3297, 2
      %v3533 = vsel %vm1894, %v3530, %v3532
      %v3534 = vrot.slane %v3298, 2
      %v3535 = vsel %vm1894, %v3532, %v3534
      %v3536 = vrot.slane %v3299, 2
      %v3537 = vsel %vm1894, %v3534, %v3536
      %v3538 = vrot.slane %v3300, 2
      %v3539 = vsel %vm1894, %v3536, %v3538
      %v3540 = vrot.slane %v3301, 2
      %v3541 = vsel %vm1894, %v3538, %v3540
      %v3542 = vrot.slane %v3302, 2
      %v3543 = vsel %vm1894, %v3540, %v3542
      %v3544 = vrot.slane %v3303, 2
      %v3545 = vsel %vm1894, %v3542, %v3544
      %v3546 = vrot.slane %v3304, 2
      %v3547 = vsel %vm1894, %v3544, %v3546
      %v3548 = vrot.slane %v3305, 2
      %v3549 = vsel %vm1894, %v3546, %v3548
      %v3550 = vrot.slane %v3306, 2
      %v3551 = vsel %vm1894, %v3548, %v3550
      %v3552 = vrot.slane %v3307, 2
      %v3553 = vsel %vm1894, %v3550, %v3552
      %v3554 = vrot.slane %v3308, 2
      %v3555 = vsel %vm1894, %v3552, %v3554
      %v3556 = vrot.slane %v3309, 2
      %v3557 = vsel %vm1894, %v3554, %v3556
      %v3558 = vrot.slane %v3310, 2
      %v3559 = vsel %vm1894, %v3556, %v3558
      %v3560 = vrot.slane %v3311, 2
      %v3561 = vsel %vm1894, %v3558, %v3560
      %v3562 = vrot.slane %v3312, 2
      %v3563 = vsel %vm1894, %v3560, %v3562
      %v3564 = vrot.slane %v3313, 2
      %v3565 = vsel %vm1894, %v3562, %v3564
      %v3566 = vrot.slane %v3314, 2
      %v3567 = vsel %vm1894, %v3564, %v3566
      %v3568 = vrot.slane %v3315, 2
      %v3569 = vsel %vm1894, %v3566, %v3568
      %v3570 = vrot.slane %v3316, 2
      %v3571 = vsel %vm1894, %v3568, %v3570
      %v3572 = vrot.slane %v3317, 2
      %v3573 = vsel %vm1894, %v3570, %v3572
      %v3574 = vrot.slane %v3318, 2
      %v3575 = vsel %vm1894, %v3572, %v3574
      %v3576 = vrot.slane %v3319, 2
      %v3577 = vsel %vm1894, %v3574, %v3576
      %v3578 = vrot.slane %v3320, 2
      %v3579 = vsel %vm1894, %v3576, %v3578
      %v3580 = vrot.slane %v3321, 2
      %v3581 = vsel %vm1894, %v3578, %v3580
      %v3582 = vrot.slane %v3322, 2
      %v3583 = vsel %vm1894, %v3580, %v3582
      %v3584 = vrot.slane %v3323, 2
      %v3585 = vsel %vm1894, %v3582, %v3584
      %v3586 = vrot.slane %v3324, 2
      %v3587 = vsel %vm1894, %v3584, %v3586
      %v3588 = vrot.slane %v3325, 2
      %v3589 = vsel %vm1894, %v3586, %v3588
      %v3590 = vrot.slane %v3326, 2
      %v3591 = vsel %vm1894, %v3588, %v3590
      %v3592 = vrot.slane %v3327, 2
      %v3593 = vsel %vm1894, %v3590, %v3592
      %v3594 = vrot.slane %v3328, 2
      %v3595 = vsel %vm1894, %v3592, %v3594
      %v3596 = vrot.slane %v3329, 2
      %v3597 = vsel %vm1894, %v3594, %v3596
      %v3598 = vrot.slane %v3330, 2
      %v3599 = vsel %vm1894, %v3596, %v3598
      %v3600 = vrot.slane %v3331, 2
      %v3601 = vsel %vm1894, %v3598, %v3600
      %v3602 = vrot.slane %v3332, 2
      %v3603 = vsel %vm1894, %v3600, %v3602
      %v3604 = vrot.slane %v3333, 2
      %v3605 = vsel %vm1894, %v3602, %v3604
      %v3606 = vrot.slane %v3334, 2
      %v3607 = vsel %vm1894, %v3604, %v3606
      %v3608 = vrot.slane %v3335, 2
      %v3609 = vsel %vm1894, %v3606, %v3608
      %v3610 = vrot.slane %v3336, 2
      %v3611 = vsel %vm1894, %v3608, %v3610
      %v3612 = vrot.slane %v3337, 2
      %v3613 = vsel %vm1894, %v3610, %v3612
      %v3614 = vrot.slane %v3338, 2
      %v3615 = vsel %vm1894, %v3612, %v3614
      %v3616 = vrot.slane %v3339, 2
      %v3617 = vsel %vm1894, %v3614, %v3616
      %v3618 = vrot.slane %v3340, 2
      %v3619 = vsel %vm1894, %v3616, %v3618
      %v3620 = vrot.slane %v3341, 2
      %v3621 = vsel %vm1894, %v3618, %v3620
      %v3622 = vrot.slane %v3342, 2
      %v3623 = vsel %vm1894, %v3620, %v3622
      %v3624 = vrot.slane %v3343, 2
      %v3625 = vsel %vm1894, %v3622, %v3624
      %v3626 = vrot.slane %v3344, 2
      %v3627 = vsel %vm1894, %v3624, %v3626
      %v3628 = vrot.slane %v3345, 2
      %v3629 = vsel %vm1894, %v3626, %v3628
      %v3630 = vrot.slane %v3346, 2
      %v3631 = vsel %vm1894, %v3628, %v3630
      %v3632 = vrot.slane %v3347, 2
      %v3633 = vsel %vm1894, %v3630, %v3632
      %v3634 = vrot.slane %v3348, 2
      %v3635 = vsel %vm1894, %v3632, %v3634
      %v3636 = vrot.slane %v3349, 2
      %v3637 = vsel %vm1894, %v3634, %v3636
      %v3638 = vrot.slane %v3350, 2
      %v3639 = vsel %vm1894, %v3636, %v3638
      %v3640 = vrot.slane %v3351, 2
      %v3641 = vsel %vm1894, %v3638, %v3640
      %v3642 = vrot.slane %v3352, 2
      %v3643 = vsel %vm1894, %v3640, %v3642
      %v3644 = vrot.slane %v3353, 2
      %v3645 = vsel %vm1894, %v3642, %v3644
      %v3646 = vrot.slane %v3354, 2
      %v3647 = vsel %vm1894, %v3644, %v3646
      %v3648 = vrot.slane %v3355, 2
      %v3649 = vsel %vm1894, %v3646, %v3648
      %v3650 = vrot.slane %v3356, 2
      %v3651 = vsel %vm1894, %v3648, %v3650
      %v3652 = vrot.slane %v3357, 2
      %v3653 = vsel %vm1894, %v3650, %v3652
      %v3654 = vrot.slane %v3358, 2
      %v3655 = vsel %vm1894, %v3652, %v3654
      %v3656 = vrot.slane %v3359, 2
      %v3657 = vsel %vm1894, %v3654, %v3656
      %v3658 = vrot.slane %v3360, 2
      %v3659 = vsel %vm1894, %v3656, %v3658
      %v3660 = vrot.slane %v3361, 2
      %v3661 = vsel %vm1894, %v3658, %v3660
      %v3662 = vrot.slane %v3362, 2
      %v3663 = vsel %vm1894, %v3660, %v3662
      %v3664 = vrot.slane %v3363, 2
      %v3665 = vsel %vm1894, %v3662, %v3664
      %v3666 = vrot.slane %v3364, 2
      %v3667 = vsel %vm1894, %v3664, %v3666
      %v3668 = vrot.slane %v3365, 2
      %v3669 = vsel %vm1894, %v3666, %v3668
      %v3670 = vrot.slane %v3366, 2
      %v3671 = vsel %vm1894, %v3668, %v3670
      %v3672 = vrot.slane %v3367, 2
      %v3673 = vsel %vm1894, %v3670, %v3672
      %v3674 = vrot.slane %v3368, 2
      %v3675 = vsel %vm1894, %v3672, %v3674
      %v3676 = vrot.slane %v3369, 2
      %v3677 = vsel %vm1894, %v3674, %v3676
      %v3678 = vrot.slane %v3370, 2
      %v3679 = vsel %vm1894, %v3676, %v3678
      %v3680 = vrot.slane %v3371, 2
      %v3681 = vsel %vm1894, %v3678, %v3680
      %v3682 = vrot.slane %v3372, 2
      %v3683 = vsel %vm1894, %v3680, %v3682
      %v3684 = vrot.slane %v3373, 2
      %v3685 = vsel %vm1894, %v3682, %v3684
      %v3686 = vrot.slane %v3374, 2
      %v3687 = vsel %vm1894, %v3684, %v3686
      %v3688 = vrot.slane %v3375, 2
      %v3689 = vsel %vm1894, %v3686, %v3688
      %v3690 = vrot.slane %v3376, 2
      %v3691 = vsel %vm1894, %v3688, %v3690
      %v3692 = vrot.slane %v3377, 2
      %v3693 = vsel %vm1894, %v3690, %v3692
      %v3694 = vrot.slane %v3378, 2
      %v3695 = vsel %vm1894, %v3692, %v3694
      %v3696 = vrot.slane %v3379, 2
      %v3697 = vsel %vm1894, %v3694, %v3696
      %v3698 = vrot.slane %v3380, 2
      %v3699 = vsel %vm1894, %v3696, %v3698
      %v3700 = vrot.slane %v3381, 2
      %v3701 = vsel %vm1894, %v3698, %v3700
      %v3702 = vrot.slane %v3382, 2
      %v3703 = vsel %vm1894, %v3700, %v3702
      %v3704 = vrot.slane %v3383, 2
      %v3705 = vsel %vm1894, %v3702, %v3704
      %v3706 = vrot.slane %v3384, 2
      %v3707 = vsel %vm1894, %v3704, %v3706
      %v3708 = vrot.slane %v3385, 2
      %v3709 = vsel %vm1894, %v3706, %v3708
      %v3710 = vrot.slane %v3386, 2
      %v3711 = vsel %vm1894, %v3708, %v3710
      %v3712 = vrot.slane %v3387, 2
      %v3713 = vsel %vm1894, %v3710, %v3712
      %v3714 = vrot.slane %v3388, 2
      %v3715 = vsel %vm1894, %v3712, %v3714
      %v3716 = vrot.slane %v3389, 2
      %v3717 = vsel %vm1894, %v3714, %v3716
      %v3718 = vrot.slane %v3390, 2
      %v3719 = vsel %vm1894, %v3716, %v3718
      %v3720 = vrot.slane %v3391, 2
      %v3721 = vsel %vm1894, %v3718, %v3720
      %v3722 = vrot.slane %v3392, 2
      %v3723 = vsel %vm1894, %v3720, %v3722
      %v3724 = vrot.slane %v3393, 2
      %v3725 = vsel %vm1894, %v3722, %v3724
      %v3726 = vrot.slane %v3394, 2
      %v3727 = vsel %vm1894, %v3724, %v3726
      %v3728 = vrot.slane %v3395, 2
      %v3729 = vsel %vm1894, %v3726, %v3728
      %v3730 = vrot.slane %v3396, 2
      %v3731 = vsel %vm1894, %v3728, %v3730
      %v3732 = vrot.slane %v3397, 2
      %v3733 = vsel %vm1894, %v3730, %v3732
      %v3734 = vrot.slane %v3398, 2
      %v3735 = vsel %vm1894, %v3732, %v3734
      %v3736 = vrot.slane %v3399, 2
      %v3737 = vsel %vm1894, %v3734, %v3736
      %v3850 = vadd.f32 %v3167, %v3515
      %v3851 = vadd.f32 %v3168, %v3517
      %v3852 = vadd.f32 %v3169, %v3519
      %v3853 = vadd.f32 %v3170, %v3521
      %v3854 = vadd.f32 %v3171, %v3523
      %v3855 = vadd.f32 %v3172, %v3525
      %v3856 = vadd.f32 %v3173, %v3527
      %v3857 = vadd.f32 %v3174, %v3529
      %v3858 = vadd.f32 %v3175, %v3531
      %v3859 = vadd.f32 %v3176, %v3533
      %v3860 = vadd.f32 %v3177, %v3535
      %v3861 = vadd.f32 %v3178, %v3537
      %v3862 = vadd.f32 %v3179, %v3539
      %v3863 = vadd.f32 %v3180, %v3541
      %v3864 = vadd.f32 %v3181, %v3543
      %v3865 = vadd.f32 %v3182, %v3545
      %v3866 = vadd.f32 %v3183, %v3547
      %v3867 = vadd.f32 %v3184, %v3549
      %v3868 = vadd.f32 %v3185, %v3551
      %v3869 = vadd.f32 %v3186, %v3553
      %v3870 = vadd.f32 %v3187, %v3555
      %v3871 = vadd.f32 %v3188, %v3557
      %v3872 = vadd.f32 %v3189, %v3559
      %v3873 = vadd.f32 %v3190, %v3561
      %v3874 = vadd.f32 %v3191, %v3563
      %v3875 = vadd.f32 %v3192, %v3565
      %v3876 = vadd.f32 %v3193, %v3567
      %v3877 = vadd.f32 %v3194, %v3569
      %v3878 = vadd.f32 %v3195, %v3571
      %v3879 = vadd.f32 %v3196, %v3573
      %v3880 = vadd.f32 %v3197, %v3575
      %v3881 = vadd.f32 %v3198, %v3577
      %v3882 = vadd.f32 %v3199, %v3579
      %v3883 = vadd.f32 %v3200, %v3581
      %v3884 = vadd.f32 %v3201, %v3583
      %v3885 = vadd.f32 %v3202, %v3585
      %v3886 = vadd.f32 %v3203, %v3587
      %v3887 = vadd.f32 %v3204, %v3589
      %v3888 = vadd.f32 %v3205, %v3591
      %v3889 = vadd.f32 %v3206, %v3593
      %v3890 = vadd.f32 %v3207, %v3595
      %v3891 = vadd.f32 %v3208, %v3597
      %v3892 = vadd.f32 %v3209, %v3599
      %v3893 = vadd.f32 %v3210, %v3601
      %v3894 = vadd.f32 %v3211, %v3603
      %v3895 = vadd.f32 %v3212, %v3605
      %v3896 = vadd.f32 %v3213, %v3607
      %v3897 = vadd.f32 %v3214, %v3609
      %v3898 = vadd.f32 %v3215, %v3611
      %v3899 = vadd.f32 %v3216, %v3613
      %v3900 = vadd.f32 %v3217, %v3615
      %v3901 = vadd.f32 %v3218, %v3617
      %v3902 = vadd.f32 %v3219, %v3619
      %v3903 = vadd.f32 %v3220, %v3621
      %v3904 = vadd.f32 %v3221, %v3623
      %v3905 = vadd.f32 %v3222, %v3625
      %v3906 = vadd.f32 %v3223, %v3627
      %v3907 = vadd.f32 %v3224, %v3629
      %v3908 = vadd.f32 %v3225, %v3631
      %v3909 = vadd.f32 %v3226, %v3633
      %v3910 = vadd.f32 %v3227, %v3635
      %v3911 = vadd.f32 %v3228, %v3637
      %v3912 = vadd.f32 %v3229, %v3639
      %v3913 = vadd.f32 %v3230, %v3641
      %v3914 = vadd.f32 %v3231, %v3643
      %v3915 = vadd.f32 %v3232, %v3645
      %v3916 = vadd.f32 %v3233, %v3647
      %v3917 = vadd.f32 %v3234, %v3649
      %v3918 = vadd.f32 %v3235, %v3651
      %v3919 = vadd.f32 %v3236, %v3653
      %v3920 = vadd.f32 %v3237, %v3655
      %v3921 = vadd.f32 %v3238, %v3657
      %v3922 = vadd.f32 %v3239, %v3659
      %v3923 = vadd.f32 %v3240, %v3661
      %v3924 = vadd.f32 %v3241, %v3663
      %v3925 = vadd.f32 %v3242, %v3665
      %v3926 = vadd.f32 %v3243, %v3667
      %v3927 = vadd.f32 %v3244, %v3669
      %v3928 = vadd.f32 %v3245, %v3671
      %v3929 = vadd.f32 %v3246, %v3673
      %v3930 = vadd.f32 %v3247, %v3675
      %v3931 = vadd.f32 %v3248, %v3677
      %v3932 = vadd.f32 %v3249, %v3679
      %v3933 = vadd.f32 %v3250, %v3681
      %v3934 = vadd.f32 %v3251, %v3683
      %v3935 = vadd.f32 %v3252, %v3685
      %v3936 = vadd.f32 %v3253, %v3687
      %v3937 = vadd.f32 %v3254, %v3689
      %v3938 = vadd.f32 %v3255, %v3691
      %v3939 = vadd.f32 %v3256, %v3693
      %v3940 = vadd.f32 %v3257, %v3695
      %v3941 = vadd.f32 %v3258, %v3697
      %v3942 = vadd.f32 %v3259, %v3699
      %v3943 = vadd.f32 %v3260, %v3701
      %v3944 = vadd.f32 %v3261, %v3703
      %v3945 = vadd.f32 %v3262, %v3705
      %v3946 = vadd.f32 %v3263, %v3707
      %v3947 = vadd.f32 %v3264, %v3709
      %v3948 = vadd.f32 %v3265, %v3711
      %v3949 = vadd.f32 %v3266, %v3713
      %v3950 = vadd.f32 %v3267, %v3715
      %v3951 = vadd.f32 %v3268, %v3717
      %v3952 = vadd.f32 %v3269, %v3719
      %v3953 = vadd.f32 %v3270, %v3721
      %v3954 = vadd.f32 %v3271, %v3723
      %v3955 = vadd.f32 %v3272, %v3725
      %v3956 = vadd.f32 %v3273, %v3727
      %v3957 = vadd.f32 %v3274, %v3729
      %v3958 = vadd.f32 %v3275, %v3731
      %v3959 = vadd.f32 %v3276, %v3733
      %v3960 = vadd.f32 %v3277, %v3735
      %v3961 = vadd.f32 %v3278, %v3737
      %s3962 = scalar_lea.vmem %s1, 6
      %v3963 = vld [vmem:[%s3962] sm:$0x1]
      %3965 = vset.pattern.permute.xlu0 0
      %3966 = vperm.xlu0 %3965, %v288
      %v3967 = vpop.permute.xlu0 %3966
      %3970 = vset.pattern.permute.xlu0 0
      %3971 = vperm.xlu0 %3970, %v289
      %v3972 = vpop.permute.xlu0 %3971
      %3975 = vset.pattern.permute.xlu0 0
      %3976 = vperm.xlu0 %3975, %v290
      %v3977 = vpop.permute.xlu0 %3976
      %v3980 = vlaneseq
      %v3981 = vshrl.u32 %v3980, 7
      %v3982 = vsub.s32 0, %v3981
      %v3983 = vrot.slane %v3963, %v3982
      %v3985 = vmul.f32 %v336, %v3983
      %v3986 = vmul.f32 %v341, %v3983
      %v3987 = vmul.f32 %v346, %v3983
      %v3988 = vmul.f32 %v351, %v3983
      %v3989 = vmul.f32 %v356, %v3983
      %v3990 = vmul.f32 %v361, %v3983
      %v3991 = vmul.f32 %v366, %v3983
      %v3992 = vmul.f32 %v371, %v3983
      %v3993 = vmul.f32 %v376, %v3983
      %v3994 = vmul.f32 %v381, %v3983
      %v3995 = vmul.f32 %v386, %v3983
      %v3996 = vmul.f32 %v391, %v3983
      %v3997 = vmul.f32 %v396, %v3983
      %v3998 = vmul.f32 %v401, %v3983
      %v3999 = vmul.f32 %v406, %v3983
      %v4000 = vmul.f32 %v411, %v3983
      %v4001 = vmul.f32 %v416, %v3983
      %v4002 = vmul.f32 %v421, %v3983
      %v4003 = vmul.f32 %v426, %v3983
      %v4004 = vmul.f32 %v431, %v3983
      %v4005 = vmul.f32 %v436, %v3983
      %v4006 = vmul.f32 %v441, %v3983
      %v4007 = vmul.f32 %v446, %v3983
      %v4008 = vmul.f32 %v451, %v3983
      %v4009 = vmul.f32 %v456, %v3983
      %v4010 = vmul.f32 %v461, %v3983
      %v4011 = vmul.f32 %v466, %v3983
      %v4012 = vmul.f32 %v471, %v3983
      %v4013 = vmul.f32 %v476, %v3983
      %v4014 = vmul.f32 %v481, %v3983
      %v4015 = vmul.f32 %v486, %v3983
      %v4016 = vmul.f32 %v491, %v3983
      %v4017 = vmul.f32 %v496, %v3983
      %v4018 = vmul.f32 %v501, %v3983
      %v4019 = vmul.f32 %v506, %v3983
      %v4020 = vmul.f32 %v511, %v3983
      %v4021 = vmul.f32 %v516, %v3983
      %v4022 = vmul.f32 %v521, %v3983
      %v4023 = vmul.f32 %v526, %v3983
      %v4024 = vmul.f32 %v531, %v3983
      %v4025 = vmul.f32 %v536, %v3983
      %v4026 = vmul.f32 %v541, %v3983
      %v4027 = vmul.f32 %v546, %v3983
      %v4028 = vmul.f32 %v551, %v3983
      %v4029 = vmul.f32 %v556, %v3983
      %v4030 = vmul.f32 %v561, %v3983
      %v4031 = vmul.f32 %v566, %v3983
      %v4032 = vmul.f32 %v571, %v3983
      %v4033 = vmul.f32 %v576, %v3983
      %v4034 = vmul.f32 %v581, %v3983
      %v4035 = vmul.f32 %v586, %v3983
      %v4036 = vmul.f32 %v591, %v3983
      %v4037 = vmul.f32 %v596, %v3983
      %v4038 = vmul.f32 %v601, %v3983
      %v4039 = vmul.f32 %v606, %v3983
      %v4040 = vmul.f32 %v611, %v3983
      %v4041 = vmul.f32 %v616, %v3983
      %v4042 = vmul.f32 %v621, %v3983
      %v4043 = vmul.f32 %v626, %v3983
      %v4044 = vmul.f32 %v631, %v3983
      %v4045 = vmul.f32 %v636, %v3983
      %v4046 = vmul.f32 %v641, %v3983
      %v4047 = vmul.f32 %v646, %v3983
      %v4048 = vmul.f32 %v651, %v3983
      %v4049 = vmul.f32 %v656, %v3983
      %v4050 = vmul.f32 %v661, %v3983
      %v4051 = vmul.f32 %v666, %v3983
      %v4052 = vmul.f32 %v671, %v3983
      %v4053 = vmul.f32 %v676, %v3983
      %v4054 = vmul.f32 %v681, %v3983
      %v4055 = vmul.f32 %v686, %v3983
      %v4056 = vmul.f32 %v691, %v3983
      %v4057 = vmul.f32 %v696, %v3983
      %v4058 = vmul.f32 %v701, %v3983
      %v4059 = vmul.f32 %v706, %v3983
      %v4060 = vmul.f32 %v711, %v3983
      %v4061 = vmul.f32 %v716, %v3983
      %v4062 = vmul.f32 %v721, %v3983
      %v4063 = vmul.f32 %v726, %v3983
      %v4064 = vmul.f32 %v731, %v3983
      %v4065 = vmul.f32 %v736, %v3983
      %v4066 = vmul.f32 %v741, %v3983
      %v4067 = vmul.f32 %v746, %v3983
      %v4068 = vmul.f32 %v751, %v3983
      %v4069 = vmul.f32 %v756, %v3983
      %v4070 = vmul.f32 %v761, %v3983
      %v4071 = vmul.f32 %v766, %v3983
      %v4072 = vmul.f32 %v771, %v3983
      %v4073 = vmul.f32 %v776, %v3983
      %v4074 = vmul.f32 %v781, %v3983
      %v4075 = vmul.f32 %v786, %v3983
      %v4076 = vmul.f32 %v791, %v3983
      %v4077 = vmul.f32 %v796, %v3983
      %v4078 = vmul.f32 %v801, %v3983
      %v4079 = vmul.f32 %v806, %v3983
      %v4080 = vmul.f32 %v811, %v3983
      %v4081 = vmul.f32 %v816, %v3983
      %v4082 = vmul.f32 %v821, %v3983
      %v4083 = vmul.f32 %v826, %v3983
      %v4084 = vmul.f32 %v831, %v3983
      %v4085 = vmul.f32 %v836, %v3983
      %v4086 = vmul.f32 %v841, %v3983
      %v4087 = vmul.f32 %v846, %v3983
      %v4088 = vmul.f32 %v851, %v3983
      %v4089 = vmul.f32 %v976, %v3983
      %v4090 = vmul.f32 %v2349, %v3983
      %v4091 = vmul.f32 %v2354, %v3983
      %v4092 = vmul.f32 %v2359, %v3983
      %v4093 = vmul.f32 %v2596, %v3983
      %v4094 = vmul.f32 %v3967, %v3983
      %v4095 = vmul.f32 %v3972, %v3983
      %v4096 = vmul.f32 %v3977, %v3983
      %v4097 = vadd.f32 %v3850, %v3985
      %v4098 = vadd.f32 %v3851, %v3986
      %v4099 = vadd.f32 %v3852, %v3987
      %v4100 = vadd.f32 %v3853, %v3988
      %v4101 = vadd.f32 %v3854, %v3989
      %v4102 = vadd.f32 %v3855, %v3990
      %v4103 = vadd.f32 %v3856, %v3991
      %v4104 = vadd.f32 %v3857, %v3992
      %v4105 = vadd.f32 %v3858, %v3993
      %v4106 = vadd.f32 %v3859, %v3994
      %v4107 = vadd.f32 %v3860, %v3995
      %v4108 = vadd.f32 %v3861, %v3996
      %v4109 = vadd.f32 %v3862, %v3997
      %v4110 = vadd.f32 %v3863, %v3998
      %v4111 = vadd.f32 %v3864, %v3999
      %v4112 = vadd.f32 %v3865, %v4000
      %v4113 = vadd.f32 %v3866, %v4001
      %v4114 = vadd.f32 %v3867, %v4002
      %v4115 = vadd.f32 %v3868, %v4003
      %v4116 = vadd.f32 %v3869, %v4004
      %v4117 = vadd.f32 %v3870, %v4005
      %v4118 = vadd.f32 %v3871, %v4006
      %v4119 = vadd.f32 %v3872, %v4007
      %v4120 = vadd.f32 %v3873, %v4008
      %v4121 = vadd.f32 %v3874, %v4009
      %v4122 = vadd.f32 %v3875, %v4010
      %v4123 = vadd.f32 %v3876, %v4011
      %v4124 = vadd.f32 %v3877, %v4012
      %v4125 = vadd.f32 %v3878, %v4013
      %v4126 = vadd.f32 %v3879, %v4014
      %v4127 = vadd.f32 %v3880, %v4015
      %v4128 = vadd.f32 %v3881, %v4016
      %v4129 = vadd.f32 %v3882, %v4017
      %v4130 = vadd.f32 %v3883, %v4018
      %v4131 = vadd.f32 %v3884, %v4019
      %v4132 = vadd.f32 %v3885, %v4020
      %v4133 = vadd.f32 %v3886, %v4021
      %v4134 = vadd.f32 %v3887, %v4022
      %v4135 = vadd.f32 %v3888, %v4023
      %v4136 = vadd.f32 %v3889, %v4024
      %v4137 = vadd.f32 %v3890, %v4025
      %v4138 = vadd.f32 %v3891, %v4026
      %v4139 = vadd.f32 %v3892, %v4027
      %v4140 = vadd.f32 %v3893, %v4028
      %v4141 = vadd.f32 %v3894, %v4029
      %v4142 = vadd.f32 %v3895, %v4030
      %v4143 = vadd.f32 %v3896, %v4031
      %v4144 = vadd.f32 %v3897, %v4032
      %v4145 = vadd.f32 %v3898, %v4033
      %v4146 = vadd.f32 %v3899, %v4034
      %v4147 = vadd.f32 %v3900, %v4035
      %v4148 = vadd.f32 %v3901, %v4036
      %v4149 = vadd.f32 %v3902, %v4037
      %v4150 = vadd.f32 %v3903, %v4038
      %v4151 = vadd.f32 %v3904, %v4039
      %v4152 = vadd.f32 %v3905, %v4040
      %v4153 = vadd.f32 %v3906, %v4041
      %v4154 = vadd.f32 %v3907, %v4042
      %v4155 = vadd.f32 %v3908, %v4043
      %v4156 = vadd.f32 %v3909, %v4044
      %v4157 = vadd.f32 %v3910, %v4045
      %v4158 = vadd.f32 %v3911, %v4046
      %v4159 = vadd.f32 %v3912, %v4047
      %v4160 = vadd.f32 %v3913, %v4048
      %v4161 = vadd.f32 %v3914, %v4049
      %v4162 = vadd.f32 %v3915, %v4050
      %v4163 = vadd.f32 %v3916, %v4051
      %v4164 = vadd.f32 %v3917, %v4052
      %v4165 = vadd.f32 %v3918, %v4053
      %v4166 = vadd.f32 %v3919, %v4054
      %v4167 = vadd.f32 %v3920, %v4055
      %v4168 = vadd.f32 %v3921, %v4056
      %v4169 = vadd.f32 %v3922, %v4057
      %v4170 = vadd.f32 %v3923, %v4058
      %v4171 = vadd.f32 %v3924, %v4059
      %v4172 = vadd.f32 %v3925, %v4060
      %v4173 = vadd.f32 %v3926, %v4061
      %v4174 = vadd.f32 %v3927, %v4062
      %v4175 = vadd.f32 %v3928, %v4063
      %v4176 = vadd.f32 %v3929, %v4064
      %v4177 = vadd.f32 %v3930, %v4065
      %v4178 = vadd.f32 %v3931, %v4066
      %v4179 = vadd.f32 %v3932, %v4067
      %v4180 = vadd.f32 %v3933, %v4068
      %v4181 = vadd.f32 %v3934, %v4069
      %v4182 = vadd.f32 %v3935, %v4070
      %v4183 = vadd.f32 %v3936, %v4071
      %v4184 = vadd.f32 %v3937, %v4072
      %v4185 = vadd.f32 %v3938, %v4073
      %v4186 = vadd.f32 %v3939, %v4074
      %v4187 = vadd.f32 %v3940, %v4075
      %v4188 = vadd.f32 %v3941, %v4076
      %v4189 = vadd.f32 %v3942, %v4077
      %v4190 = vadd.f32 %v3943, %v4078
      %v4191 = vadd.f32 %v3944, %v4079
      %v4192 = vadd.f32 %v3945, %v4080
      %v4193 = vadd.f32 %v3946, %v4081
      %v4194 = vadd.f32 %v3947, %v4082
      %v4195 = vadd.f32 %v3948, %v4083
      %v4196 = vadd.f32 %v3949, %v4084
      %v4197 = vadd.f32 %v3950, %v4085
      %v4198 = vadd.f32 %v3951, %v4086
      %v4199 = vadd.f32 %v3952, %v4087
      %v4200 = vadd.f32 %v3953, %v4088
      %v4201 = vadd.f32 %v3954, %v4089
      %v4202 = vadd.f32 %v3955, %v4090
      %v4203 = vadd.f32 %v3956, %v4091
      %v4204 = vadd.f32 %v3957, %v4092
      %v4205 = vadd.f32 %v3958, %v4093
      %v4206 = vadd.f32 %v3959, %v4094
      %v4207 = vadd.f32 %v3960, %v4095
      %v4208 = vadd.f32 %v3961, %v4096
      %s4209 = scalar_lea.vmem %s1, 7
      %v4210 = vld [vmem:[%s4209] sm:$0x1]
      %4212 = vset.pattern.permute.xlu0 0
      %4213 = vperm.xlu0 %4212, %v291
      %v4214 = vpop.permute.xlu0 %4213
      %v4217 = vlaneseq
      %v4218 = vshrl.u32 %v4217, 7
      %v4219 = vsub.s32 0, %v4218
      %v4220 = vrot.slane %v4210, %v4219
      %v4222 = vmul.f32 %v336, %v4220
      %v4223 = vmul.f32 %v341, %v4220
      %v4224 = vmul.f32 %v346, %v4220
      %v4225 = vmul.f32 %v351, %v4220
      %v4226 = vmul.f32 %v356, %v4220
      %v4227 = vmul.f32 %v361, %v4220
      %v4228 = vmul.f32 %v366, %v4220
      %v4229 = vmul.f32 %v371, %v4220
      %v4230 = vmul.f32 %v376, %v4220
      %v4231 = vmul.f32 %v381, %v4220
      %v4232 = vmul.f32 %v386, %v4220
      %v4233 = vmul.f32 %v391, %v4220
      %v4234 = vmul.f32 %v396, %v4220
      %v4235 = vmul.f32 %v401, %v4220
      %v4236 = vmul.f32 %v406, %v4220
      %v4237 = vmul.f32 %v411, %v4220
      %v4238 = vmul.f32 %v416, %v4220
      %v4239 = vmul.f32 %v421, %v4220
      %v4240 = vmul.f32 %v426, %v4220
      %v4241 = vmul.f32 %v431, %v4220
      %v4242 = vmul.f32 %v436, %v4220
      %v4243 = vmul.f32 %v441, %v4220
      %v4244 = vmul.f32 %v446, %v4220
      %v4245 = vmul.f32 %v451, %v4220
      %v4246 = vmul.f32 %v456, %v4220
      %v4247 = vmul.f32 %v461, %v4220
      %v4248 = vmul.f32 %v466, %v4220
      %v4249 = vmul.f32 %v471, %v4220
      %v4250 = vmul.f32 %v476, %v4220
      %v4251 = vmul.f32 %v481, %v4220
      %v4252 = vmul.f32 %v486, %v4220
      %v4253 = vmul.f32 %v491, %v4220
      %v4254 = vmul.f32 %v496, %v4220
      %v4255 = vmul.f32 %v501, %v4220
      %v4256 = vmul.f32 %v506, %v4220
      %v4257 = vmul.f32 %v511, %v4220
      %v4258 = vmul.f32 %v516, %v4220
      %v4259 = vmul.f32 %v521, %v4220
      %v4260 = vmul.f32 %v526, %v4220
      %v4261 = vmul.f32 %v531, %v4220
      %v4262 = vmul.f32 %v536, %v4220
      %v4263 = vmul.f32 %v541, %v4220
      %v4264 = vmul.f32 %v546, %v4220
      %v4265 = vmul.f32 %v551, %v4220
      %v4266 = vmul.f32 %v556, %v4220
      %v4267 = vmul.f32 %v561, %v4220
      %v4268 = vmul.f32 %v566, %v4220
      %v4269 = vmul.f32 %v571, %v4220
      %v4270 = vmul.f32 %v576, %v4220
      %v4271 = vmul.f32 %v581, %v4220
      %v4272 = vmul.f32 %v586, %v4220
      %v4273 = vmul.f32 %v591, %v4220
      %v4274 = vmul.f32 %v596, %v4220
      %v4275 = vmul.f32 %v601, %v4220
      %v4276 = vmul.f32 %v606, %v4220
      %v4277 = vmul.f32 %v611, %v4220
      %v4278 = vmul.f32 %v616, %v4220
      %v4279 = vmul.f32 %v621, %v4220
      %v4280 = vmul.f32 %v626, %v4220
      %v4281 = vmul.f32 %v631, %v4220
      %v4282 = vmul.f32 %v636, %v4220
      %v4283 = vmul.f32 %v641, %v4220
      %v4284 = vmul.f32 %v646, %v4220
      %v4285 = vmul.f32 %v651, %v4220
      %v4286 = vmul.f32 %v656, %v4220
      %v4287 = vmul.f32 %v661, %v4220
      %v4288 = vmul.f32 %v666, %v4220
      %v4289 = vmul.f32 %v671, %v4220
      %v4290 = vmul.f32 %v676, %v4220
      %v4291 = vmul.f32 %v681, %v4220
      %v4292 = vmul.f32 %v686, %v4220
      %v4293 = vmul.f32 %v691, %v4220
      %v4294 = vmul.f32 %v696, %v4220
      %v4295 = vmul.f32 %v701, %v4220
      %v4296 = vmul.f32 %v706, %v4220
      %v4297 = vmul.f32 %v711, %v4220
      %v4298 = vmul.f32 %v716, %v4220
      %v4299 = vmul.f32 %v721, %v4220
      %v4300 = vmul.f32 %v726, %v4220
      %v4301 = vmul.f32 %v731, %v4220
      %v4302 = vmul.f32 %v736, %v4220
      %v4303 = vmul.f32 %v741, %v4220
      %v4304 = vmul.f32 %v746, %v4220
      %v4305 = vmul.f32 %v751, %v4220
      %v4306 = vmul.f32 %v756, %v4220
      %v4307 = vmul.f32 %v761, %v4220
      %v4308 = vmul.f32 %v766, %v4220
      %v4309 = vmul.f32 %v771, %v4220
      %v4310 = vmul.f32 %v776, %v4220
      %v4311 = vmul.f32 %v781, %v4220
      %v4312 = vmul.f32 %v786, %v4220
      %v4313 = vmul.f32 %v791, %v4220
      %v4314 = vmul.f32 %v796, %v4220
      %v4315 = vmul.f32 %v801, %v4220
      %v4316 = vmul.f32 %v806, %v4220
      %v4317 = vmul.f32 %v811, %v4220
      %v4318 = vmul.f32 %v816, %v4220
      %v4319 = vmul.f32 %v821, %v4220
      %v4320 = vmul.f32 %v826, %v4220
      %v4321 = vmul.f32 %v831, %v4220
      %v4322 = vmul.f32 %v836, %v4220
      %v4323 = vmul.f32 %v841, %v4220
      %v4324 = vmul.f32 %v846, %v4220
      %v4325 = vmul.f32 %v851, %v4220
      %v4326 = vmul.f32 %v976, %v4220
      %v4327 = vmul.f32 %v2349, %v4220
      %v4328 = vmul.f32 %v2354, %v4220
      %v4329 = vmul.f32 %v2359, %v4220
      %v4330 = vmul.f32 %v2596, %v4220
      %v4331 = vmul.f32 %v3967, %v4220
      %v4332 = vmul.f32 %v3972, %v4220
      %v4333 = vmul.f32 %v3977, %v4220
      %v4334 = vmul.f32 %v4214, %v4220
      %v4448 = vrot.slane %v4222, 1
      %v4449 = vrot.slane %v4223, 1
      %v4450 = vsel %vm1210, %v4448, %v4449
      %v4451 = vrot.slane %v4224, 1
      %v4452 = vsel %vm1210, %v4449, %v4451
      %v4453 = vrot.slane %v4225, 1
      %v4454 = vsel %vm1210, %v4451, %v4453
      %v4455 = vrot.slane %v4226, 1
      %v4456 = vsel %vm1210, %v4453, %v4455
      %v4457 = vrot.slane %v4227, 1
      %v4458 = vsel %vm1210, %v4455, %v4457
      %v4459 = vrot.slane %v4228, 1
      %v4460 = vsel %vm1210, %v4457, %v4459
      %v4461 = vrot.slane %v4229, 1
      %v4462 = vsel %vm1210, %v4459, %v4461
      %v4463 = vrot.slane %v4230, 1
      %v4464 = vsel %vm1210, %v4461, %v4463
      %v4465 = vrot.slane %v4231, 1
      %v4466 = vsel %vm1210, %v4463, %v4465
      %v4467 = vrot.slane %v4232, 1
      %v4468 = vsel %vm1210, %v4465, %v4467
      %v4469 = vrot.slane %v4233, 1
      %v4470 = vsel %vm1210, %v4467, %v4469
      %v4471 = vrot.slane %v4234, 1
      %v4472 = vsel %vm1210, %v4469, %v4471
      %v4473 = vrot.slane %v4235, 1
      %v4474 = vsel %vm1210, %v4471, %v4473
      %v4475 = vrot.slane %v4236, 1
      %v4476 = vsel %vm1210, %v4473, %v4475
      %v4477 = vrot.slane %v4237, 1
      %v4478 = vsel %vm1210, %v4475, %v4477
      %v4479 = vrot.slane %v4238, 1
      %v4480 = vsel %vm1210, %v4477, %v4479
      %v4481 = vrot.slane %v4239, 1
      %v4482 = vsel %vm1210, %v4479, %v4481
      %v4483 = vrot.slane %v4240, 1
      %v4484 = vsel %vm1210, %v4481, %v4483
      %v4485 = vrot.slane %v4241, 1
      %v4486 = vsel %vm1210, %v4483, %v4485
      %v4487 = vrot.slane %v4242, 1
      %v4488 = vsel %vm1210, %v4485, %v4487
      %v4489 = vrot.slane %v4243, 1
      %v4490 = vsel %vm1210, %v4487, %v4489
      %v4491 = vrot.slane %v4244, 1
      %v4492 = vsel %vm1210, %v4489, %v4491
      %v4493 = vrot.slane %v4245, 1
      %v4494 = vsel %vm1210, %v4491, %v4493
      %v4495 = vrot.slane %v4246, 1
      %v4496 = vsel %vm1210, %v4493, %v4495
      %v4497 = vrot.slane %v4247, 1
      %v4498 = vsel %vm1210, %v4495, %v4497
      %v4499 = vrot.slane %v4248, 1
      %v4500 = vsel %vm1210, %v4497, %v4499
      %v4501 = vrot.slane %v4249, 1
      %v4502 = vsel %vm1210, %v4499, %v4501
      %v4503 = vrot.slane %v4250, 1
      %v4504 = vsel %vm1210, %v4501, %v4503
      %v4505 = vrot.slane %v4251, 1
      %v4506 = vsel %vm1210, %v4503, %v4505
      %v4507 = vrot.slane %v4252, 1
      %v4508 = vsel %vm1210, %v4505, %v4507
      %v4509 = vrot.slane %v4253, 1
      %v4510 = vsel %vm1210, %v4507, %v4509
      %v4511 = vrot.slane %v4254, 1
      %v4512 = vsel %vm1210, %v4509, %v4511
      %v4513 = vrot.slane %v4255, 1
      %v4514 = vsel %vm1210, %v4511, %v4513
      %v4515 = vrot.slane %v4256, 1
      %v4516 = vsel %vm1210, %v4513, %v4515
      %v4517 = vrot.slane %v4257, 1
      %v4518 = vsel %vm1210, %v4515, %v4517
      %v4519 = vrot.slane %v4258, 1
      %v4520 = vsel %vm1210, %v4517, %v4519
      %v4521 = vrot.slane %v4259, 1
      %v4522 = vsel %vm1210, %v4519, %v4521
      %v4523 = vrot.slane %v4260, 1
      %v4524 = vsel %vm1210, %v4521, %v4523
      %v4525 = vrot.slane %v4261, 1
      %v4526 = vsel %vm1210, %v4523, %v4525
      %v4527 = vrot.slane %v4262, 1
      %v4528 = vsel %vm1210, %v4525, %v4527
      %v4529 = vrot.slane %v4263, 1
      %v4530 = vsel %vm1210, %v4527, %v4529
      %v4531 = vrot.slane %v4264, 1
      %v4532 = vsel %vm1210, %v4529, %v4531
      %v4533 = vrot.slane %v4265, 1
      %v4534 = vsel %vm1210, %v4531, %v4533
      %v4535 = vrot.slane %v4266, 1
      %v4536 = vsel %vm1210, %v4533, %v4535
      %v4537 = vrot.slane %v4267, 1
      %v4538 = vsel %vm1210, %v4535, %v4537
      %v4539 = vrot.slane %v4268, 1
      %v4540 = vsel %vm1210, %v4537, %v4539
      %v4541 = vrot.slane %v4269, 1
      %v4542 = vsel %vm1210, %v4539, %v4541
      %v4543 = vrot.slane %v4270, 1
      %v4544 = vsel %vm1210, %v4541, %v4543
      %v4545 = vrot.slane %v4271, 1
      %v4546 = vsel %vm1210, %v4543, %v4545
      %v4547 = vrot.slane %v4272, 1
      %v4548 = vsel %vm1210, %v4545, %v4547
      %v4549 = vrot.slane %v4273, 1
      %v4550 = vsel %vm1210, %v4547, %v4549
      %v4551 = vrot.slane %v4274, 1
      %v4552 = vsel %vm1210, %v4549, %v4551
      %v4553 = vrot.slane %v4275, 1
      %v4554 = vsel %vm1210, %v4551, %v4553
      %v4555 = vrot.slane %v4276, 1
      %v4556 = vsel %vm1210, %v4553, %v4555
      %v4557 = vrot.slane %v4277, 1
      %v4558 = vsel %vm1210, %v4555, %v4557
      %v4559 = vrot.slane %v4278, 1
      %v4560 = vsel %vm1210, %v4557, %v4559
      %v4561 = vrot.slane %v4279, 1
      %v4562 = vsel %vm1210, %v4559, %v4561
      %v4563 = vrot.slane %v4280, 1
      %v4564 = vsel %vm1210, %v4561, %v4563
      %v4565 = vrot.slane %v4281, 1
      %v4566 = vsel %vm1210, %v4563, %v4565
      %v4567 = vrot.slane %v4282, 1
      %v4568 = vsel %vm1210, %v4565, %v4567
      %v4569 = vrot.slane %v4283, 1
      %v4570 = vsel %vm1210, %v4567, %v4569
      %v4571 = vrot.slane %v4284, 1
      %v4572 = vsel %vm1210, %v4569, %v4571
      %v4573 = vrot.slane %v4285, 1
      %v4574 = vsel %vm1210, %v4571, %v4573
      %v4575 = vrot.slane %v4286, 1
      %v4576 = vsel %vm1210, %v4573, %v4575
      %v4577 = vrot.slane %v4287, 1
      %v4578 = vsel %vm1210, %v4575, %v4577
      %v4579 = vrot.slane %v4288, 1
      %v4580 = vsel %vm1210, %v4577, %v4579
      %v4581 = vrot.slane %v4289, 1
      %v4582 = vsel %vm1210, %v4579, %v4581
      %v4583 = vrot.slane %v4290, 1
      %v4584 = vsel %vm1210, %v4581, %v4583
      %v4585 = vrot.slane %v4291, 1
      %v4586 = vsel %vm1210, %v4583, %v4585
      %v4587 = vrot.slane %v4292, 1
      %v4588 = vsel %vm1210, %v4585, %v4587
      %v4589 = vrot.slane %v4293, 1
      %v4590 = vsel %vm1210, %v4587, %v4589
      %v4591 = vrot.slane %v4294, 1
      %v4592 = vsel %vm1210, %v4589, %v4591
      %v4593 = vrot.slane %v4295, 1
      %v4594 = vsel %vm1210, %v4591, %v4593
      %v4595 = vrot.slane %v4296, 1
      %v4596 = vsel %vm1210, %v4593, %v4595
      %v4597 = vrot.slane %v4297, 1
      %v4598 = vsel %vm1210, %v4595, %v4597
      %v4599 = vrot.slane %v4298, 1
      %v4600 = vsel %vm1210, %v4597, %v4599
      %v4601 = vrot.slane %v4299, 1
      %v4602 = vsel %vm1210, %v4599, %v4601
      %v4603 = vrot.slane %v4300, 1
      %v4604 = vsel %vm1210, %v4601, %v4603
      %v4605 = vrot.slane %v4301, 1
      %v4606 = vsel %vm1210, %v4603, %v4605
      %v4607 = vrot.slane %v4302, 1
      %v4608 = vsel %vm1210, %v4605, %v4607
      %v4609 = vrot.slane %v4303, 1
      %v4610 = vsel %vm1210, %v4607, %v4609
      %v4611 = vrot.slane %v4304, 1
      %v4612 = vsel %vm1210, %v4609, %v4611
      %v4613 = vrot.slane %v4305, 1
      %v4614 = vsel %vm1210, %v4611, %v4613
      %v4615 = vrot.slane %v4306, 1
      %v4616 = vsel %vm1210, %v4613, %v4615
      %v4617 = vrot.slane %v4307, 1
      %v4618 = vsel %vm1210, %v4615, %v4617
      %v4619 = vrot.slane %v4308, 1
      %v4620 = vsel %vm1210, %v4617, %v4619
      %v4621 = vrot.slane %v4309, 1
      %v4622 = vsel %vm1210, %v4619, %v4621
      %v4623 = vrot.slane %v4310, 1
      %v4624 = vsel %vm1210, %v4621, %v4623
      %v4625 = vrot.slane %v4311, 1
      %v4626 = vsel %vm1210, %v4623, %v4625
      %v4627 = vrot.slane %v4312, 1
      %v4628 = vsel %vm1210, %v4625, %v4627
      %v4629 = vrot.slane %v4313, 1
      %v4630 = vsel %vm1210, %v4627, %v4629
      %v4631 = vrot.slane %v4314, 1
      %v4632 = vsel %vm1210, %v4629, %v4631
      %v4633 = vrot.slane %v4315, 1
      %v4634 = vsel %vm1210, %v4631, %v4633
      %v4635 = vrot.slane %v4316, 1
      %v4636 = vsel %vm1210, %v4633, %v4635
      %v4637 = vrot.slane %v4317, 1
      %v4638 = vsel %vm1210, %v4635, %v4637
      %v4639 = vrot.slane %v4318, 1
      %v4640 = vsel %vm1210, %v4637, %v4639
      %v4641 = vrot.slane %v4319, 1
      %v4642 = vsel %vm1210, %v4639, %v4641
      %v4643 = vrot.slane %v4320, 1
      %v4644 = vsel %vm1210, %v4641, %v4643
      %v4645 = vrot.slane %v4321, 1
      %v4646 = vsel %vm1210, %v4643, %v4645
      %v4647 = vrot.slane %v4322, 1
      %v4648 = vsel %vm1210, %v4645, %v4647
      %v4649 = vrot.slane %v4323, 1
      %v4650 = vsel %vm1210, %v4647, %v4649
      %v4651 = vrot.slane %v4324, 1
      %v4652 = vsel %vm1210, %v4649, %v4651
      %v4653 = vrot.slane %v4325, 1
      %v4654 = vsel %vm1210, %v4651, %v4653
      %v4655 = vrot.slane %v4326, 1
      %v4656 = vsel %vm1210, %v4653, %v4655
      %v4657 = vrot.slane %v4327, 1
      %v4658 = vsel %vm1210, %v4655, %v4657
      %v4659 = vrot.slane %v4328, 1
      %v4660 = vsel %vm1210, %v4657, %v4659
      %v4661 = vrot.slane %v4329, 1
      %v4662 = vsel %vm1210, %v4659, %v4661
      %v4663 = vrot.slane %v4330, 1
      %v4664 = vsel %vm1210, %v4661, %v4663
      %v4665 = vrot.slane %v4331, 1
      %v4666 = vsel %vm1210, %v4663, %v4665
      %v4667 = vrot.slane %v4332, 1
      %v4668 = vsel %vm1210, %v4665, %v4667
      %v4669 = vrot.slane %v4333, 1
      %v4670 = vsel %vm1210, %v4667, %v4669
      %v4671 = vrot.slane %v4334, 1
      %v4672 = vsel %vm1210, %v4669, %v4671
      %v4785 = vadd.f32 %v4097, %v4450
      %v4786 = vadd.f32 %v4098, %v4452
      %v4787 = vadd.f32 %v4099, %v4454
      %v4788 = vadd.f32 %v4100, %v4456
      %v4789 = vadd.f32 %v4101, %v4458
      %v4790 = vadd.f32 %v4102, %v4460
      %v4791 = vadd.f32 %v4103, %v4462
      %v4792 = vadd.f32 %v4104, %v4464
      %v4793 = vadd.f32 %v4105, %v4466
      %v4794 = vadd.f32 %v4106, %v4468
      %v4795 = vadd.f32 %v4107, %v4470
      %v4796 = vadd.f32 %v4108, %v4472
      %v4797 = vadd.f32 %v4109, %v4474
      %v4798 = vadd.f32 %v4110, %v4476
      %v4799 = vadd.f32 %v4111, %v4478
      %v4800 = vadd.f32 %v4112, %v4480
      %v4801 = vadd.f32 %v4113, %v4482
      %v4802 = vadd.f32 %v4114, %v4484
      %v4803 = vadd.f32 %v4115, %v4486
      %v4804 = vadd.f32 %v4116, %v4488
      %v4805 = vadd.f32 %v4117, %v4490
      %v4806 = vadd.f32 %v4118, %v4492
      %v4807 = vadd.f32 %v4119, %v4494
      %v4808 = vadd.f32 %v4120, %v4496
      %v4809 = vadd.f32 %v4121, %v4498
      %v4810 = vadd.f32 %v4122, %v4500
      %v4811 = vadd.f32 %v4123, %v4502
      %v4812 = vadd.f32 %v4124, %v4504
      %v4813 = vadd.f32 %v4125, %v4506
      %v4814 = vadd.f32 %v4126, %v4508
      %v4815 = vadd.f32 %v4127, %v4510
      %v4816 = vadd.f32 %v4128, %v4512
      %v4817 = vadd.f32 %v4129, %v4514
      %v4818 = vadd.f32 %v4130, %v4516
      %v4819 = vadd.f32 %v4131, %v4518
      %v4820 = vadd.f32 %v4132, %v4520
      %v4821 = vadd.f32 %v4133, %v4522
      %v4822 = vadd.f32 %v4134, %v4524
      %v4823 = vadd.f32 %v4135, %v4526
      %v4824 = vadd.f32 %v4136, %v4528
      %v4825 = vadd.f32 %v4137, %v4530
      %v4826 = vadd.f32 %v4138, %v4532
      %v4827 = vadd.f32 %v4139, %v4534
      %v4828 = vadd.f32 %v4140, %v4536
      %v4829 = vadd.f32 %v4141, %v4538
      %v4830 = vadd.f32 %v4142, %v4540
      %v4831 = vadd.f32 %v4143, %v4542
      %v4832 = vadd.f32 %v4144, %v4544
      %v4833 = vadd.f32 %v4145, %v4546
      %v4834 = vadd.f32 %v4146, %v4548
      %v4835 = vadd.f32 %v4147, %v4550
      %v4836 = vadd.f32 %v4148, %v4552
      %v4837 = vadd.f32 %v4149, %v4554
      %v4838 = vadd.f32 %v4150, %v4556
      %v4839 = vadd.f32 %v4151, %v4558
      %v4840 = vadd.f32 %v4152, %v4560
      %v4841 = vadd.f32 %v4153, %v4562
      %v4842 = vadd.f32 %v4154, %v4564
      %v4843 = vadd.f32 %v4155, %v4566
      %v4844 = vadd.f32 %v4156, %v4568
      %v4845 = vadd.f32 %v4157, %v4570
      %v4846 = vadd.f32 %v4158, %v4572
      %v4847 = vadd.f32 %v4159, %v4574
      %v4848 = vadd.f32 %v4160, %v4576
      %v4849 = vadd.f32 %v4161, %v4578
      %v4850 = vadd.f32 %v4162, %v4580
      %v4851 = vadd.f32 %v4163, %v4582
      %v4852 = vadd.f32 %v4164, %v4584
      %v4853 = vadd.f32 %v4165, %v4586
      %v4854 = vadd.f32 %v4166, %v4588
      %v4855 = vadd.f32 %v4167, %v4590
      %v4856 = vadd.f32 %v4168, %v4592
      %v4857 = vadd.f32 %v4169, %v4594
      %v4858 = vadd.f32 %v4170, %v4596
      %v4859 = vadd.f32 %v4171, %v4598
      %v4860 = vadd.f32 %v4172, %v4600
      %v4861 = vadd.f32 %v4173, %v4602
      %v4862 = vadd.f32 %v4174, %v4604
      %v4863 = vadd.f32 %v4175, %v4606
      %v4864 = vadd.f32 %v4176, %v4608
      %v4865 = vadd.f32 %v4177, %v4610
      %v4866 = vadd.f32 %v4178, %v4612
      %v4867 = vadd.f32 %v4179, %v4614
      %v4868 = vadd.f32 %v4180, %v4616
      %v4869 = vadd.f32 %v4181, %v4618
      %v4870 = vadd.f32 %v4182, %v4620
      %v4871 = vadd.f32 %v4183, %v4622
      %v4872 = vadd.f32 %v4184, %v4624
      %v4873 = vadd.f32 %v4185, %v4626
      %v4874 = vadd.f32 %v4186, %v4628
      %v4875 = vadd.f32 %v4187, %v4630
      %v4876 = vadd.f32 %v4188, %v4632
      %v4877 = vadd.f32 %v4189, %v4634
      %v4878 = vadd.f32 %v4190, %v4636
      %v4879 = vadd.f32 %v4191, %v4638
      %v4880 = vadd.f32 %v4192, %v4640
      %v4881 = vadd.f32 %v4193, %v4642
      %v4882 = vadd.f32 %v4194, %v4644
      %v4883 = vadd.f32 %v4195, %v4646
      %v4884 = vadd.f32 %v4196, %v4648
      %v4885 = vadd.f32 %v4197, %v4650
      %v4886 = vadd.f32 %v4198, %v4652
      %v4887 = vadd.f32 %v4199, %v4654
      %v4888 = vadd.f32 %v4200, %v4656
      %v4889 = vadd.f32 %v4201, %v4658
      %v4890 = vadd.f32 %v4202, %v4660
      %v4891 = vadd.f32 %v4203, %v4662
      %v4892 = vadd.f32 %v4204, %v4664
      %v4893 = vadd.f32 %v4205, %v4666
      %v4894 = vadd.f32 %v4206, %v4668
      %v4895 = vadd.f32 %v4207, %v4670
      %v4896 = vadd.f32 %v4208, %v4672
      %s4897 = scalar_lea.vmem %s1, 8
      %v4898 = vld [vmem:[%s4897] sm:$0x1]
      %v4900 = vlaneseq
      %v4901 = vshrl.u32 %v4900, 7
      %v4902 = vsub.s32 0, %v4901
      %v4903 = vrot.slane %v4898, %v4902
      %v4905 = vmul.f32 %v336, %v4903
      %v4906 = vmul.f32 %v341, %v4903
      %v4907 = vmul.f32 %v346, %v4903
      %v4908 = vmul.f32 %v351, %v4903
      %v4909 = vmul.f32 %v356, %v4903
      %v4910 = vmul.f32 %v361, %v4903
      %v4911 = vmul.f32 %v366, %v4903
      %v4912 = vmul.f32 %v371, %v4903
      %v4913 = vmul.f32 %v376, %v4903
      %v4914 = vmul.f32 %v381, %v4903
      %v4915 = vmul.f32 %v386, %v4903
      %v4916 = vmul.f32 %v391, %v4903
      %v4917 = vmul.f32 %v396, %v4903
      %v4918 = vmul.f32 %v401, %v4903
      %v4919 = vmul.f32 %v406, %v4903
      %v4920 = vmul.f32 %v411, %v4903
      %v4921 = vmul.f32 %v416, %v4903
      %v4922 = vmul.f32 %v421, %v4903
      %v4923 = vmul.f32 %v426, %v4903
      %v4924 = vmul.f32 %v431, %v4903
      %v4925 = vmul.f32 %v436, %v4903
      %v4926 = vmul.f32 %v441, %v4903
      %v4927 = vmul.f32 %v446, %v4903
      %v4928 = vmul.f32 %v451, %v4903
      %v4929 = vmul.f32 %v456, %v4903
      %v4930 = vmul.f32 %v461, %v4903
      %v4931 = vmul.f32 %v466, %v4903
      %v4932 = vmul.f32 %v471, %v4903
      %v4933 = vmul.f32 %v476, %v4903
      %v4934 = vmul.f32 %v481, %v4903
      %v4935 = vmul.f32 %v486, %v4903
      %v4936 = vmul.f32 %v491, %v4903
      %v4937 = vmul.f32 %v496, %v4903
      %v4938 = vmul.f32 %v501, %v4903
      %v4939 = vmul.f32 %v506, %v4903
      %v4940 = vmul.f32 %v511, %v4903
      %v4941 = vmul.f32 %v516, %v4903
      %v4942 = vmul.f32 %v521, %v4903
      %v4943 = vmul.f32 %v526, %v4903
      %v4944 = vmul.f32 %v531, %v4903
      %v4945 = vmul.f32 %v536, %v4903
      %v4946 = vmul.f32 %v541, %v4903
      %v4947 = vmul.f32 %v546, %v4903
      %v4948 = vmul.f32 %v551, %v4903
      %v4949 = vmul.f32 %v556, %v4903
      %v4950 = vmul.f32 %v561, %v4903
      %v4951 = vmul.f32 %v566, %v4903
      %v4952 = vmul.f32 %v571, %v4903
      %v4953 = vmul.f32 %v576, %v4903
      %v4954 = vmul.f32 %v581, %v4903
      %v4955 = vmul.f32 %v586, %v4903
      %v4956 = vmul.f32 %v591, %v4903
      %v4957 = vmul.f32 %v596, %v4903
      %v4958 = vmul.f32 %v601, %v4903
      %v4959 = vmul.f32 %v606, %v4903
      %v4960 = vmul.f32 %v611, %v4903
      %v4961 = vmul.f32 %v616, %v4903
      %v4962 = vmul.f32 %v621, %v4903
      %v4963 = vmul.f32 %v626, %v4903
      %v4964 = vmul.f32 %v631, %v4903
      %v4965 = vmul.f32 %v636, %v4903
      %v4966 = vmul.f32 %v641, %v4903
      %v4967 = vmul.f32 %v646, %v4903
      %v4968 = vmul.f32 %v651, %v4903
      %v4969 = vmul.f32 %v656, %v4903
      %v4970 = vmul.f32 %v661, %v4903
      %v4971 = vmul.f32 %v666, %v4903
      %v4972 = vmul.f32 %v671, %v4903
      %v4973 = vmul.f32 %v676, %v4903
      %v4974 = vmul.f32 %v681, %v4903
      %v4975 = vmul.f32 %v686, %v4903
      %v4976 = vmul.f32 %v691, %v4903
      %v4977 = vmul.f32 %v696, %v4903
      %v4978 = vmul.f32 %v701, %v4903
      %v4979 = vmul.f32 %v706, %v4903
      %v4980 = vmul.f32 %v711, %v4903
      %v4981 = vmul.f32 %v716, %v4903
      %v4982 = vmul.f32 %v721, %v4903
      %v4983 = vmul.f32 %v726, %v4903
      %v4984 = vmul.f32 %v731, %v4903
      %v4985 = vmul.f32 %v736, %v4903
      %v4986 = vmul.f32 %v741, %v4903
      %v4987 = vmul.f32 %v746, %v4903
      %v4988 = vmul.f32 %v751, %v4903
      %v4989 = vmul.f32 %v756, %v4903
      %v4990 = vmul.f32 %v761, %v4903
      %v4991 = vmul.f32 %v766, %v4903
      %v4992 = vmul.f32 %v771, %v4903
      %v4993 = vmul.f32 %v776, %v4903
      %v4994 = vmul.f32 %v781, %v4903
      %v4995 = vmul.f32 %v786, %v4903
      %v4996 = vmul.f32 %v791, %v4903
      %v4997 = vmul.f32 %v796, %v4903
      %v4998 = vmul.f32 %v801, %v4903
      %v4999 = vmul.f32 %v806, %v4903
      %v5000 = vmul.f32 %v811, %v4903
      %v5001 = vmul.f32 %v816, %v4903
      %v5002 = vmul.f32 %v821, %v4903
      %v5003 = vmul.f32 %v826, %v4903
      %v5004 = vmul.f32 %v831, %v4903
      %v5005 = vmul.f32 %v836, %v4903
      %v5006 = vmul.f32 %v841, %v4903
      %v5007 = vmul.f32 %v846, %v4903
      %v5008 = vmul.f32 %v851, %v4903
      %v5009 = vmul.f32 %v976, %v4903
      %v5010 = vmul.f32 %v2349, %v4903
      %v5011 = vmul.f32 %v2354, %v4903
      %v5012 = vmul.f32 %v2359, %v4903
      %v5013 = vmul.f32 %v2596, %v4903
      %v5014 = vmul.f32 %v3967, %v4903
      %v5015 = vmul.f32 %v3972, %v4903
      %v5016 = vmul.f32 %v3977, %v4903
      %v5017 = vmul.f32 %v4214, %v4903
      %v5131 = vrot.slane %v4905, 2
      %v5132 = vrot.slane %v4906, 2
      %v5133 = vsel %vm1894, %v5131, %v5132
      %v5134 = vrot.slane %v4907, 2
      %v5135 = vsel %vm1894, %v5132, %v5134
      %v5136 = vrot.slane %v4908, 2
      %v5137 = vsel %vm1894, %v5134, %v5136
      %v5138 = vrot.slane %v4909, 2
      %v5139 = vsel %vm1894, %v5136, %v5138
      %v5140 = vrot.slane %v4910, 2
      %v5141 = vsel %vm1894, %v5138, %v5140
      %v5142 = vrot.slane %v4911, 2
      %v5143 = vsel %vm1894, %v5140, %v5142
      %v5144 = vrot.slane %v4912, 2
      %v5145 = vsel %vm1894, %v5142, %v5144
      %v5146 = vrot.slane %v4913, 2
      %v5147 = vsel %vm1894, %v5144, %v5146
      %v5148 = vrot.slane %v4914, 2
      %v5149 = vsel %vm1894, %v5146, %v5148
      %v5150 = vrot.slane %v4915, 2
      %v5151 = vsel %vm1894, %v5148, %v5150
      %v5152 = vrot.slane %v4916, 2
      %v5153 = vsel %vm1894, %v5150, %v5152
      %v5154 = vrot.slane %v4917, 2
      %v5155 = vsel %vm1894, %v5152, %v5154
      %v5156 = vrot.slane %v4918, 2
      %v5157 = vsel %vm1894, %v5154, %v5156
      %v5158 = vrot.slane %v4919, 2
      %v5159 = vsel %vm1894, %v5156, %v5158
      %v5160 = vrot.slane %v4920, 2
      %v5161 = vsel %vm1894, %v5158, %v5160
      %v5162 = vrot.slane %v4921, 2
      %v5163 = vsel %vm1894, %v5160, %v5162
      %v5164 = vrot.slane %v4922, 2
      %v5165 = vsel %vm1894, %v5162, %v5164
      %v5166 = vrot.slane %v4923, 2
      %v5167 = vsel %vm1894, %v5164, %v5166
      %v5168 = vrot.slane %v4924, 2
      %v5169 = vsel %vm1894, %v5166, %v5168
      %v5170 = vrot.slane %v4925, 2
      %v5171 = vsel %vm1894, %v5168, %v5170
      %v5172 = vrot.slane %v4926, 2
      %v5173 = vsel %vm1894, %v5170, %v5172
      %v5174 = vrot.slane %v4927, 2
      %v5175 = vsel %vm1894, %v5172, %v5174
      %v5176 = vrot.slane %v4928, 2
      %v5177 = vsel %vm1894, %v5174, %v5176
      %v5178 = vrot.slane %v4929, 2
      %v5179 = vsel %vm1894, %v5176, %v5178
      %v5180 = vrot.slane %v4930, 2
      %v5181 = vsel %vm1894, %v5178, %v5180
      %v5182 = vrot.slane %v4931, 2
      %v5183 = vsel %vm1894, %v5180, %v5182
      %v5184 = vrot.slane %v4932, 2
      %v5185 = vsel %vm1894, %v5182, %v5184
      %v5186 = vrot.slane %v4933, 2
      %v5187 = vsel %vm1894, %v5184, %v5186
      %v5188 = vrot.slane %v4934, 2
      %v5189 = vsel %vm1894, %v5186, %v5188
      %v5190 = vrot.slane %v4935, 2
      %v5191 = vsel %vm1894, %v5188, %v5190
      %v5192 = vrot.slane %v4936, 2
      %v5193 = vsel %vm1894, %v5190, %v5192
      %v5194 = vrot.slane %v4937, 2
      %v5195 = vsel %vm1894, %v5192, %v5194
      %v5196 = vrot.slane %v4938, 2
      %v5197 = vsel %vm1894, %v5194, %v5196
      %v5198 = vrot.slane %v4939, 2
      %v5199 = vsel %vm1894, %v5196, %v5198
      %v5200 = vrot.slane %v4940, 2
      %v5201 = vsel %vm1894, %v5198, %v5200
      %v5202 = vrot.slane %v4941, 2
      %v5203 = vsel %vm1894, %v5200, %v5202
      %v5204 = vrot.slane %v4942, 2
      %v5205 = vsel %vm1894, %v5202, %v5204
      %v5206 = vrot.slane %v4943, 2
      %v5207 = vsel %vm1894, %v5204, %v5206
      %v5208 = vrot.slane %v4944, 2
      %v5209 = vsel %vm1894, %v5206, %v5208
      %v5210 = vrot.slane %v4945, 2
      %v5211 = vsel %vm1894, %v5208, %v5210
      %v5212 = vrot.slane %v4946, 2
      %v5213 = vsel %vm1894, %v5210, %v5212
      %v5214 = vrot.slane %v4947, 2
      %v5215 = vsel %vm1894, %v5212, %v5214
      %v5216 = vrot.slane %v4948, 2
      %v5217 = vsel %vm1894, %v5214, %v5216
      %v5218 = vrot.slane %v4949, 2
      %v5219 = vsel %vm1894, %v5216, %v5218
      %v5220 = vrot.slane %v4950, 2
      %v5221 = vsel %vm1894, %v5218, %v5220
      %v5222 = vrot.slane %v4951, 2
      %v5223 = vsel %vm1894, %v5220, %v5222
      %v5224 = vrot.slane %v4952, 2
      %v5225 = vsel %vm1894, %v5222, %v5224
      %v5226 = vrot.slane %v4953, 2
      %v5227 = vsel %vm1894, %v5224, %v5226
      %v5228 = vrot.slane %v4954, 2
      %v5229 = vsel %vm1894, %v5226, %v5228
      %v5230 = vrot.slane %v4955, 2
      %v5231 = vsel %vm1894, %v5228, %v5230
      %v5232 = vrot.slane %v4956, 2
      %v5233 = vsel %vm1894, %v5230, %v5232
      %v5234 = vrot.slane %v4957, 2
      %v5235 = vsel %vm1894, %v5232, %v5234
      %v5236 = vrot.slane %v4958, 2
      %v5237 = vsel %vm1894, %v5234, %v5236
      %v5238 = vrot.slane %v4959, 2
      %v5239 = vsel %vm1894, %v5236, %v5238
      %v5240 = vrot.slane %v4960, 2
      %v5241 = vsel %vm1894, %v5238, %v5240
      %v5242 = vrot.slane %v4961, 2
      %v5243 = vsel %vm1894, %v5240, %v5242
      %v5244 = vrot.slane %v4962, 2
      %v5245 = vsel %vm1894, %v5242, %v5244
      %v5246 = vrot.slane %v4963, 2
      %v5247 = vsel %vm1894, %v5244, %v5246
      %v5248 = vrot.slane %v4964, 2
      %v5249 = vsel %vm1894, %v5246, %v5248
      %v5250 = vrot.slane %v4965, 2
      %v5251 = vsel %vm1894, %v5248, %v5250
      %v5252 = vrot.slane %v4966, 2
      %v5253 = vsel %vm1894, %v5250, %v5252
      %v5254 = vrot.slane %v4967, 2
      %v5255 = vsel %vm1894, %v5252, %v5254
      %v5256 = vrot.slane %v4968, 2
      %v5257 = vsel %vm1894, %v5254, %v5256
      %v5258 = vrot.slane %v4969, 2
      %v5259 = vsel %vm1894, %v5256, %v5258
      %v5260 = vrot.slane %v4970, 2
      %v5261 = vsel %vm1894, %v5258, %v5260
      %v5262 = vrot.slane %v4971, 2
      %v5263 = vsel %vm1894, %v5260, %v5262
      %v5264 = vrot.slane %v4972, 2
      %v5265 = vsel %vm1894, %v5262, %v5264
      %v5266 = vrot.slane %v4973, 2
      %v5267 = vsel %vm1894, %v5264, %v5266
      %v5268 = vrot.slane %v4974, 2
      %v5269 = vsel %vm1894, %v5266, %v5268
      %v5270 = vrot.slane %v4975, 2
      %v5271 = vsel %vm1894, %v5268, %v5270
      %v5272 = vrot.slane %v4976, 2
      %v5273 = vsel %vm1894, %v5270, %v5272
      %v5274 = vrot.slane %v4977, 2
      %v5275 = vsel %vm1894, %v5272, %v5274
      %v5276 = vrot.slane %v4978, 2
      %v5277 = vsel %vm1894, %v5274, %v5276
      %v5278 = vrot.slane %v4979, 2
      %v5279 = vsel %vm1894, %v5276, %v5278
      %v5280 = vrot.slane %v4980, 2
      %v5281 = vsel %vm1894, %v5278, %v5280
      %v5282 = vrot.slane %v4981, 2
      %v5283 = vsel %vm1894, %v5280, %v5282
      %v5284 = vrot.slane %v4982, 2
      %v5285 = vsel %vm1894, %v5282, %v5284
      %v5286 = vrot.slane %v4983, 2
      %v5287 = vsel %vm1894, %v5284, %v5286
      %v5288 = vrot.slane %v4984, 2
      %v5289 = vsel %vm1894, %v5286, %v5288
      %v5290 = vrot.slane %v4985, 2
      %v5291 = vsel %vm1894, %v5288, %v5290
      %v5292 = vrot.slane %v4986, 2
      %v5293 = vsel %vm1894, %v5290, %v5292
      %v5294 = vrot.slane %v4987, 2
      %v5295 = vsel %vm1894, %v5292, %v5294
      %v5296 = vrot.slane %v4988, 2
      %v5297 = vsel %vm1894, %v5294, %v5296
      %v5298 = vrot.slane %v4989, 2
      %v5299 = vsel %vm1894, %v5296, %v5298
      %v5300 = vrot.slane %v4990, 2
      %v5301 = vsel %vm1894, %v5298, %v5300
      %v5302 = vrot.slane %v4991, 2
      %v5303 = vsel %vm1894, %v5300, %v5302
      %v5304 = vrot.slane %v4992, 2
      %v5305 = vsel %vm1894, %v5302, %v5304
      %v5306 = vrot.slane %v4993, 2
      %v5307 = vsel %vm1894, %v5304, %v5306
      %v5308 = vrot.slane %v4994, 2
      %v5309 = vsel %vm1894, %v5306, %v5308
      %v5310 = vrot.slane %v4995, 2
      %v5311 = vsel %vm1894, %v5308, %v5310
      %v5312 = vrot.slane %v4996, 2
      %v5313 = vsel %vm1894, %v5310, %v5312
      %v5314 = vrot.slane %v4997, 2
      %v5315 = vsel %vm1894, %v5312, %v5314
      %v5316 = vrot.slane %v4998, 2
      %v5317 = vsel %vm1894, %v5314, %v5316
      %v5318 = vrot.slane %v4999, 2
      %v5319 = vsel %vm1894, %v5316, %v5318
      %v5320 = vrot.slane %v5000, 2
      %v5321 = vsel %vm1894, %v5318, %v5320
      %v5322 = vrot.slane %v5001, 2
      %v5323 = vsel %vm1894, %v5320, %v5322
      %v5324 = vrot.slane %v5002, 2
      %v5325 = vsel %vm1894, %v5322, %v5324
      %v5326 = vrot.slane %v5003, 2
      %v5327 = vsel %vm1894, %v5324, %v5326
      %v5328 = vrot.slane %v5004, 2
      %v5329 = vsel %vm1894, %v5326, %v5328
      %v5330 = vrot.slane %v5005, 2
      %v5331 = vsel %vm1894, %v5328, %v5330
      %v5332 = vrot.slane %v5006, 2
      %v5333 = vsel %vm1894, %v5330, %v5332
      %v5334 = vrot.slane %v5007, 2
      %v5335 = vsel %vm1894, %v5332, %v5334
      %v5336 = vrot.slane %v5008, 2
      %v5337 = vsel %vm1894, %v5334, %v5336
      %v5338 = vrot.slane %v5009, 2
      %v5339 = vsel %vm1894, %v5336, %v5338
      %v5340 = vrot.slane %v5010, 2
      %v5341 = vsel %vm1894, %v5338, %v5340
      %v5342 = vrot.slane %v5011, 2
      %v5343 = vsel %vm1894, %v5340, %v5342
      %v5344 = vrot.slane %v5012, 2
      %v5345 = vsel %vm1894, %v5342, %v5344
      %v5346 = vrot.slane %v5013, 2
      %v5347 = vsel %vm1894, %v5344, %v5346
      %v5348 = vrot.slane %v5014, 2
      %v5349 = vsel %vm1894, %v5346, %v5348
      %v5350 = vrot.slane %v5015, 2
      %v5351 = vsel %vm1894, %v5348, %v5350
      %v5352 = vrot.slane %v5016, 2
      %v5353 = vsel %vm1894, %v5350, %v5352
      %v5354 = vrot.slane %v5017, 2
      %v5355 = vsel %vm1894, %v5352, %v5354
      %v5468 = vadd.f32 %v4785, %v5133
      %v5469 = vadd.f32 %v4786, %v5135
      %v5470 = vadd.f32 %v4787, %v5137
      %v5471 = vadd.f32 %v4788, %v5139
      %v5472 = vadd.f32 %v4789, %v5141
      %v5473 = vadd.f32 %v4790, %v5143
      %v5474 = vadd.f32 %v4791, %v5145
      %v5475 = vadd.f32 %v4792, %v5147
      %v5476 = vadd.f32 %v4793, %v5149
      %v5477 = vadd.f32 %v4794, %v5151
      %v5478 = vadd.f32 %v4795, %v5153
      %v5479 = vadd.f32 %v4796, %v5155
      %v5480 = vadd.f32 %v4797, %v5157
      %v5481 = vadd.f32 %v4798, %v5159
      %v5482 = vadd.f32 %v4799, %v5161
      %v5483 = vadd.f32 %v4800, %v5163
      %v5484 = vadd.f32 %v4801, %v5165
      %v5485 = vadd.f32 %v4802, %v5167
      %v5486 = vadd.f32 %v4803, %v5169
      %v5487 = vadd.f32 %v4804, %v5171
      %v5488 = vadd.f32 %v4805, %v5173
      %v5489 = vadd.f32 %v4806, %v5175
      %v5490 = vadd.f32 %v4807, %v5177
      %v5491 = vadd.f32 %v4808, %v5179
      %v5492 = vadd.f32 %v4809, %v5181
      %v5493 = vadd.f32 %v4810, %v5183
      %v5494 = vadd.f32 %v4811, %v5185
      %v5495 = vadd.f32 %v4812, %v5187
      %v5496 = vadd.f32 %v4813, %v5189
      %v5497 = vadd.f32 %v4814, %v5191
      %v5498 = vadd.f32 %v4815, %v5193
      %v5499 = vadd.f32 %v4816, %v5195
      %v5500 = vadd.f32 %v4817, %v5197
      %v5501 = vadd.f32 %v4818, %v5199
      %v5502 = vadd.f32 %v4819, %v5201
      %v5503 = vadd.f32 %v4820, %v5203
      %v5504 = vadd.f32 %v4821, %v5205
      %v5505 = vadd.f32 %v4822, %v5207
      %v5506 = vadd.f32 %v4823, %v5209
      %v5507 = vadd.f32 %v4824, %v5211
      %v5508 = vadd.f32 %v4825, %v5213
      %v5509 = vadd.f32 %v4826, %v5215
      %v5510 = vadd.f32 %v4827, %v5217
      %v5511 = vadd.f32 %v4828, %v5219
      %v5512 = vadd.f32 %v4829, %v5221
      %v5513 = vadd.f32 %v4830, %v5223
      %v5514 = vadd.f32 %v4831, %v5225
      %v5515 = vadd.f32 %v4832, %v5227
      %v5516 = vadd.f32 %v4833, %v5229
      %v5517 = vadd.f32 %v4834, %v5231
      %v5518 = vadd.f32 %v4835, %v5233
      %v5519 = vadd.f32 %v4836, %v5235
      %v5520 = vadd.f32 %v4837, %v5237
      %v5521 = vadd.f32 %v4838, %v5239
      %v5522 = vadd.f32 %v4839, %v5241
      %v5523 = vadd.f32 %v4840, %v5243
      %v5524 = vadd.f32 %v4841, %v5245
      %v5525 = vadd.f32 %v4842, %v5247
      %v5526 = vadd.f32 %v4843, %v5249
      %v5527 = vadd.f32 %v4844, %v5251
      %v5528 = vadd.f32 %v4845, %v5253
      %v5529 = vadd.f32 %v4846, %v5255
      %v5530 = vadd.f32 %v4847, %v5257
      %v5531 = vadd.f32 %v4848, %v5259
      %v5532 = vadd.f32 %v4849, %v5261
      %v5533 = vadd.f32 %v4850, %v5263
      %v5534 = vadd.f32 %v4851, %v5265
      %v5535 = vadd.f32 %v4852, %v5267
      %v5536 = vadd.f32 %v4853, %v5269
      %v5537 = vadd.f32 %v4854, %v5271
      %v5538 = vadd.f32 %v4855, %v5273
      %v5539 = vadd.f32 %v4856, %v5275
      %v5540 = vadd.f32 %v4857, %v5277
      %v5541 = vadd.f32 %v4858, %v5279
      %v5542 = vadd.f32 %v4859, %v5281
      %v5543 = vadd.f32 %v4860, %v5283
      %v5544 = vadd.f32 %v4861, %v5285
      %v5545 = vadd.f32 %v4862, %v5287
      %v5546 = vadd.f32 %v4863, %v5289
      %v5547 = vadd.f32 %v4864, %v5291
      %v5548 = vadd.f32 %v4865, %v5293
      %v5549 = vadd.f32 %v4866, %v5295
      %v5550 = vadd.f32 %v4867, %v5297
      %v5551 = vadd.f32 %v4868, %v5299
      %v5552 = vadd.f32 %v4869, %v5301
      %v5553 = vadd.f32 %v4870, %v5303
      %v5554 = vadd.f32 %v4871, %v5305
      %v5555 = vadd.f32 %v4872, %v5307
      %v5556 = vadd.f32 %v4873, %v5309
      %v5557 = vadd.f32 %v4874, %v5311
      %v5558 = vadd.f32 %v4875, %v5313
      %v5559 = vadd.f32 %v4876, %v5315
      %v5560 = vadd.f32 %v4877, %v5317
      %v5561 = vadd.f32 %v4878, %v5319
      %v5562 = vadd.f32 %v4879, %v5321
      %v5563 = vadd.f32 %v4880, %v5323
      %v5564 = vadd.f32 %v4881, %v5325
      %v5565 = vadd.f32 %v4882, %v5327
      %v5566 = vadd.f32 %v4883, %v5329
      %v5567 = vadd.f32 %v4884, %v5331
      %v5568 = vadd.f32 %v4885, %v5333
      %v5569 = vadd.f32 %v4886, %v5335
      %v5570 = vadd.f32 %v4887, %v5337
      %v5571 = vadd.f32 %v4888, %v5339
      %v5572 = vadd.f32 %v4889, %v5341
      %v5573 = vadd.f32 %v4890, %v5343
      %v5574 = vadd.f32 %v4891, %v5345
      %v5575 = vadd.f32 %v4892, %v5347
      %v5576 = vadd.f32 %v4893, %v5349
      %v5577 = vadd.f32 %v4894, %v5351
      %v5578 = vadd.f32 %v4895, %v5353
      %v5579 = vadd.f32 %v4896, %v5355
      %v5580 = vld [vmem:[%s2] sm:$0x1]
      %v5582 = vlaneseq
      %v5583 = vshrl.u32 %v5582, 7
      %v5584 = vsub.s32 0, %v5583
      %v5585 = vrot.slane %v5580, %v5584
      %v5587 = vadd.f32 %v5468, %v5585
      %v5588 = vadd.f32 %v5469, %v5585
      %v5589 = vadd.f32 %v5470, %v5585
      %v5590 = vadd.f32 %v5471, %v5585
      %v5591 = vadd.f32 %v5472, %v5585
      %v5592 = vadd.f32 %v5473, %v5585
      %v5593 = vadd.f32 %v5474, %v5585
      %v5594 = vadd.f32 %v5475, %v5585
      %v5595 = vadd.f32 %v5476, %v5585
      %v5596 = vadd.f32 %v5477, %v5585
      %v5597 = vadd.f32 %v5478, %v5585
      %v5598 = vadd.f32 %v5479, %v5585
      %v5599 = vadd.f32 %v5480, %v5585
      %v5600 = vadd.f32 %v5481, %v5585
      %v5601 = vadd.f32 %v5482, %v5585
      %v5602 = vadd.f32 %v5483, %v5585
      %v5603 = vadd.f32 %v5484, %v5585
      %v5604 = vadd.f32 %v5485, %v5585
      %v5605 = vadd.f32 %v5486, %v5585
      %v5606 = vadd.f32 %v5487, %v5585
      %v5607 = vadd.f32 %v5488, %v5585
      %v5608 = vadd.f32 %v5489, %v5585
      %v5609 = vadd.f32 %v5490, %v5585
      %v5610 = vadd.f32 %v5491, %v5585
      %v5611 = vadd.f32 %v5492, %v5585
      %v5612 = vadd.f32 %v5493, %v5585
      %v5613 = vadd.f32 %v5494, %v5585
      %v5614 = vadd.f32 %v5495, %v5585
      %v5615 = vadd.f32 %v5496, %v5585
      %v5616 = vadd.f32 %v5497, %v5585
      %v5617 = vadd.f32 %v5498, %v5585
      %v5618 = vadd.f32 %v5499, %v5585
      %v5619 = vadd.f32 %v5500, %v5585
      %v5620 = vadd.f32 %v5501, %v5585
      %v5621 = vadd.f32 %v5502, %v5585
      %v5622 = vadd.f32 %v5503, %v5585
      %v5623 = vadd.f32 %v5504, %v5585
      %v5624 = vadd.f32 %v5505, %v5585
      %v5625 = vadd.f32 %v5506, %v5585
      %v5626 = vadd.f32 %v5507, %v5585
      %v5627 = vadd.f32 %v5508, %v5585
      %v5628 = vadd.f32 %v5509, %v5585
      %v5629 = vadd.f32 %v5510, %v5585
      %v5630 = vadd.f32 %v5511, %v5585
      %v5631 = vadd.f32 %v5512, %v5585
      %v5632 = vadd.f32 %v5513, %v5585
      %v5633 = vadd.f32 %v5514, %v5585
      %v5634 = vadd.f32 %v5515, %v5585
      %v5635 = vadd.f32 %v5516, %v5585
      %v5636 = vadd.f32 %v5517, %v5585
      %v5637 = vadd.f32 %v5518, %v5585
      %v5638 = vadd.f32 %v5519, %v5585
      %v5639 = vadd.f32 %v5520, %v5585
      %v5640 = vadd.f32 %v5521, %v5585
      %v5641 = vadd.f32 %v5522, %v5585
      %v5642 = vadd.f32 %v5523, %v5585
      %v5643 = vadd.f32 %v5524, %v5585
      %v5644 = vadd.f32 %v5525, %v5585
      %v5645 = vadd.f32 %v5526, %v5585
      %v5646 = vadd.f32 %v5527, %v5585
      %v5647 = vadd.f32 %v5528, %v5585
      %v5648 = vadd.f32 %v5529, %v5585
      %v5649 = vadd.f32 %v5530, %v5585
      %v5650 = vadd.f32 %v5531, %v5585
      %v5651 = vadd.f32 %v5532, %v5585
      %v5652 = vadd.f32 %v5533, %v5585
      %v5653 = vadd.f32 %v5534, %v5585
      %v5654 = vadd.f32 %v5535, %v5585
      %v5655 = vadd.f32 %v5536, %v5585
      %v5656 = vadd.f32 %v5537, %v5585
      %v5657 = vadd.f32 %v5538, %v5585
      %v5658 = vadd.f32 %v5539, %v5585
      %v5659 = vadd.f32 %v5540, %v5585
      %v5660 = vadd.f32 %v5541, %v5585
      %v5661 = vadd.f32 %v5542, %v5585
      %v5662 = vadd.f32 %v5543, %v5585
      %v5663 = vadd.f32 %v5544, %v5585
      %v5664 = vadd.f32 %v5545, %v5585
      %v5665 = vadd.f32 %v5546, %v5585
      %v5666 = vadd.f32 %v5547, %v5585
      %v5667 = vadd.f32 %v5548, %v5585
      %v5668 = vadd.f32 %v5549, %v5585
      %v5669 = vadd.f32 %v5550, %v5585
      %v5670 = vadd.f32 %v5551, %v5585
      %v5671 = vadd.f32 %v5552, %v5585
      %v5672 = vadd.f32 %v5553, %v5585
      %v5673 = vadd.f32 %v5554, %v5585
      %v5674 = vadd.f32 %v5555, %v5585
      %v5675 = vadd.f32 %v5556, %v5585
      %v5676 = vadd.f32 %v5557, %v5585
      %v5677 = vadd.f32 %v5558, %v5585
      %v5678 = vadd.f32 %v5559, %v5585
      %v5679 = vadd.f32 %v5560, %v5585
      %v5680 = vadd.f32 %v5561, %v5585
      %v5681 = vadd.f32 %v5562, %v5585
      %v5682 = vadd.f32 %v5563, %v5585
      %v5683 = vadd.f32 %v5564, %v5585
      %v5684 = vadd.f32 %v5565, %v5585
      %v5685 = vadd.f32 %v5566, %v5585
      %v5686 = vadd.f32 %v5567, %v5585
      %v5687 = vadd.f32 %v5568, %v5585
      %v5688 = vadd.f32 %v5569, %v5585
      %v5689 = vadd.f32 %v5570, %v5585
      %v5690 = vadd.f32 %v5571, %v5585
      %v5691 = vadd.f32 %v5572, %v5585
      %v5692 = vadd.f32 %v5573, %v5585
      %v5693 = vadd.f32 %v5574, %v5585
      %v5694 = vadd.f32 %v5575, %v5585
      %v5695 = vadd.f32 %v5576, %v5585
      %v5696 = vadd.f32 %v5577, %v5585
      %v5697 = vadd.f32 %v5578, %v5585
      %v5698 = vadd.f32 %v5579, %v5585
      %v5699 = vmax.f32 %v5587, 0.0
      %v5700 = vmax.f32 %v5588, 0.0
      %v5701 = vmax.f32 %v5589, 0.0
      %v5702 = vmax.f32 %v5590, 0.0
      %v5703 = vmax.f32 %v5591, 0.0
      %v5704 = vmax.f32 %v5592, 0.0
      %v5705 = vmax.f32 %v5593, 0.0
      %v5706 = vmax.f32 %v5594, 0.0
      %v5707 = vmax.f32 %v5595, 0.0
      %v5708 = vmax.f32 %v5596, 0.0
      %v5709 = vmax.f32 %v5597, 0.0
      %v5710 = vmax.f32 %v5598, 0.0
      %v5711 = vmax.f32 %v5599, 0.0
      %v5712 = vmax.f32 %v5600, 0.0
      %v5713 = vmax.f32 %v5601, 0.0
      %v5714 = vmax.f32 %v5602, 0.0
      %v5715 = vmax.f32 %v5603, 0.0
      %v5716 = vmax.f32 %v5604, 0.0
      %v5717 = vmax.f32 %v5605, 0.0
      %v5718 = vmax.f32 %v5606, 0.0
      %v5719 = vmax.f32 %v5607, 0.0
      %v5720 = vmax.f32 %v5608, 0.0
      %v5721 = vmax.f32 %v5609, 0.0
      %v5722 = vmax.f32 %v5610, 0.0
      %v5723 = vmax.f32 %v5611, 0.0
      %v5724 = vmax.f32 %v5612, 0.0
      %v5725 = vmax.f32 %v5613, 0.0
      %v5726 = vmax.f32 %v5614, 0.0
      %v5727 = vmax.f32 %v5615, 0.0
      %v5728 = vmax.f32 %v5616, 0.0
      %v5729 = vmax.f32 %v5617, 0.0
      %v5730 = vmax.f32 %v5618, 0.0
      %v5731 = vmax.f32 %v5619, 0.0
      %v5732 = vmax.f32 %v5620, 0.0
      %v5733 = vmax.f32 %v5621, 0.0
      %v5734 = vmax.f32 %v5622, 0.0
      %v5735 = vmax.f32 %v5623, 0.0
      %v5736 = vmax.f32 %v5624, 0.0
      %v5737 = vmax.f32 %v5625, 0.0
      %v5738 = vmax.f32 %v5626, 0.0
      %v5739 = vmax.f32 %v5627, 0.0
      %v5740 = vmax.f32 %v5628, 0.0
      %v5741 = vmax.f32 %v5629, 0.0
      %v5742 = vmax.f32 %v5630, 0.0
      %v5743 = vmax.f32 %v5631, 0.0
      %v5744 = vmax.f32 %v5632, 0.0
      %v5745 = vmax.f32 %v5633, 0.0
      %v5746 = vmax.f32 %v5634, 0.0
      %v5747 = vmax.f32 %v5635, 0.0
      %v5748 = vmax.f32 %v5636, 0.0
      %v5749 = vmax.f32 %v5637, 0.0
      %v5750 = vmax.f32 %v5638, 0.0
      %v5751 = vmax.f32 %v5639, 0.0
      %v5752 = vmax.f32 %v5640, 0.0
      %v5753 = vmax.f32 %v5641, 0.0
      %v5754 = vmax.f32 %v5642, 0.0
      %v5755 = vmax.f32 %v5643, 0.0
      %v5756 = vmax.f32 %v5644, 0.0
      %v5757 = vmax.f32 %v5645, 0.0
      %v5758 = vmax.f32 %v5646, 0.0
      %v5759 = vmax.f32 %v5647, 0.0
      %v5760 = vmax.f32 %v5648, 0.0
      %v5761 = vmax.f32 %v5649, 0.0
      %v5762 = vmax.f32 %v5650, 0.0
      %v5763 = vmax.f32 %v5651, 0.0
      %v5764 = vmax.f32 %v5652, 0.0
      %v5765 = vmax.f32 %v5653, 0.0
      %v5766 = vmax.f32 %v5654, 0.0
      %v5767 = vmax.f32 %v5655, 0.0
      %v5768 = vmax.f32 %v5656, 0.0
      %v5769 = vmax.f32 %v5657, 0.0
      %v5770 = vmax.f32 %v5658, 0.0
      %v5771 = vmax.f32 %v5659, 0.0
      %v5772 = vmax.f32 %v5660, 0.0
      %v5773 = vmax.f32 %v5661, 0.0
      %v5774 = vmax.f32 %v5662, 0.0
      %v5775 = vmax.f32 %v5663, 0.0
      %v5776 = vmax.f32 %v5664, 0.0
      %v5777 = vmax.f32 %v5665, 0.0
      %v5778 = vmax.f32 %v5666, 0.0
      %v5779 = vmax.f32 %v5667, 0.0
      %v5780 = vmax.f32 %v5668, 0.0
      %v5781 = vmax.f32 %v5669, 0.0
      %v5782 = vmax.f32 %v5670, 0.0
      %v5783 = vmax.f32 %v5671, 0.0
      %v5784 = vmax.f32 %v5672, 0.0
      %v5785 = vmax.f32 %v5673, 0.0
      %v5786 = vmax.f32 %v5674, 0.0
      %v5787 = vmax.f32 %v5675, 0.0
      %v5788 = vmax.f32 %v5676, 0.0
      %v5789 = vmax.f32 %v5677, 0.0
      %v5790 = vmax.f32 %v5678, 0.0
      %v5791 = vmax.f32 %v5679, 0.0
      %v5792 = vmax.f32 %v5680, 0.0
      %v5793 = vmax.f32 %v5681, 0.0
      %v5794 = vmax.f32 %v5682, 0.0
      %v5795 = vmax.f32 %v5683, 0.0
      %v5796 = vmax.f32 %v5684, 0.0
      %v5797 = vmax.f32 %v5685, 0.0
      %v5798 = vmax.f32 %v5686, 0.0
      %v5799 = vmax.f32 %v5687, 0.0
      %v5800 = vmax.f32 %v5688, 0.0
      %v5801 = vmax.f32 %v5689, 0.0
      %v5802 = vmax.f32 %v5690, 0.0
      %v5803 = vmax.f32 %v5691, 0.0
      %v5804 = vmax.f32 %v5692, 0.0
      %v5805 = vmax.f32 %v5693, 0.0
      %v5806 = vmax.f32 %v5694, 0.0
      %v5807 = vmax.f32 %v5695, 0.0
      %v5808 = vmax.f32 %v5696, 0.0
      %v5809 = vmax.f32 %v5697, 0.0
      %v5810 = vmax.f32 %v5698, 0.0
      %v5919 = vrot.slane %v5699, 1
      %v5920 = vrot.slane %v5700, 1
      %v5921 = vsel %vm1210, %v5919, %v5920
      %v5922 = vrot.slane %v5701, 1
      %v5923 = vsel %vm1210, %v5920, %v5922
      %v5924 = vrot.slane %v5702, 1
      %v5925 = vsel %vm1210, %v5922, %v5924
      %v5926 = vrot.slane %v5703, 1
      %v5927 = vsel %vm1210, %v5924, %v5926
      %v5928 = vrot.slane %v5704, 1
      %v5929 = vsel %vm1210, %v5926, %v5928
      %v5930 = vrot.slane %v5705, 1
      %v5931 = vsel %vm1210, %v5928, %v5930
      %v5932 = vrot.slane %v5706, 1
      %v5933 = vsel %vm1210, %v5930, %v5932
      %v5934 = vrot.slane %v5707, 1
      %v5935 = vsel %vm1210, %v5932, %v5934
      %v5936 = vrot.slane %v5708, 1
      %v5937 = vsel %vm1210, %v5934, %v5936
      %v5938 = vrot.slane %v5709, 1
      %v5939 = vsel %vm1210, %v5936, %v5938
      %v5940 = vrot.slane %v5710, 1
      %v5941 = vsel %vm1210, %v5938, %v5940
      %v5942 = vrot.slane %v5711, 1
      %v5943 = vsel %vm1210, %v5940, %v5942
      %v5944 = vrot.slane %v5712, 1
      %v5945 = vsel %vm1210, %v5942, %v5944
      %v5946 = vrot.slane %v5713, 1
      %v5947 = vsel %vm1210, %v5944, %v5946
      %v5948 = vrot.slane %v5714, 1
      %v5949 = vsel %vm1210, %v5946, %v5948
      %v5950 = vrot.slane %v5715, 1
      %v5951 = vsel %vm1210, %v5948, %v5950
      %v5952 = vrot.slane %v5716, 1
      %v5953 = vsel %vm1210, %v5950, %v5952
      %v5954 = vrot.slane %v5717, 1
      %v5955 = vsel %vm1210, %v5952, %v5954
      %v5956 = vrot.slane %v5718, 1
      %v5957 = vsel %vm1210, %v5954, %v5956
      %v5958 = vrot.slane %v5719, 1
      %v5959 = vsel %vm1210, %v5956, %v5958
      %v5960 = vrot.slane %v5720, 1
      %v5961 = vsel %vm1210, %v5958, %v5960
      %v5962 = vrot.slane %v5721, 1
      %v5963 = vsel %vm1210, %v5960, %v5962
      %v5964 = vrot.slane %v5722, 1
      %v5965 = vsel %vm1210, %v5962, %v5964
      %v5966 = vrot.slane %v5723, 1
      %v5967 = vsel %vm1210, %v5964, %v5966
      %v5968 = vrot.slane %v5724, 1
      %v5969 = vsel %vm1210, %v5966, %v5968
      %v5970 = vrot.slane %v5725, 1
      %v5971 = vsel %vm1210, %v5968, %v5970
      %v5972 = vrot.slane %v5726, 1
      %v5973 = vsel %vm1210, %v5970, %v5972
      %v5974 = vrot.slane %v5727, 1
      %v5975 = vsel %vm1210, %v5972, %v5974
      %v5976 = vrot.slane %v5728, 1
      %v5977 = vsel %vm1210, %v5974, %v5976
      %v5978 = vrot.slane %v5729, 1
      %v5979 = vsel %vm1210, %v5976, %v5978
      %v5980 = vrot.slane %v5730, 1
      %v5981 = vsel %vm1210, %v5978, %v5980
      %v5982 = vrot.slane %v5731, 1
      %v5983 = vsel %vm1210, %v5980, %v5982
      %v5984 = vrot.slane %v5732, 1
      %v5985 = vsel %vm1210, %v5982, %v5984
      %v5986 = vrot.slane %v5733, 1
      %v5987 = vsel %vm1210, %v5984, %v5986
      %v5988 = vrot.slane %v5734, 1
      %v5989 = vsel %vm1210, %v5986, %v5988
      %v5990 = vrot.slane %v5735, 1
      %v5991 = vsel %vm1210, %v5988, %v5990
      %v5992 = vrot.slane %v5736, 1
      %v5993 = vsel %vm1210, %v5990, %v5992
      %v5994 = vrot.slane %v5737, 1
      %v5995 = vsel %vm1210, %v5992, %v5994
      %v5996 = vrot.slane %v5738, 1
      %v5997 = vsel %vm1210, %v5994, %v5996
      %v5998 = vrot.slane %v5739, 1
      %v5999 = vsel %vm1210, %v5996, %v5998
      %v6000 = vrot.slane %v5740, 1
      %v6001 = vsel %vm1210, %v5998, %v6000
      %v6002 = vrot.slane %v5741, 1
      %v6003 = vsel %vm1210, %v6000, %v6002
      %v6004 = vrot.slane %v5742, 1
      %v6005 = vsel %vm1210, %v6002, %v6004
      %v6006 = vrot.slane %v5743, 1
      %v6007 = vsel %vm1210, %v6004, %v6006
      %v6008 = vrot.slane %v5744, 1
      %v6009 = vsel %vm1210, %v6006, %v6008
      %v6010 = vrot.slane %v5745, 1
      %v6011 = vsel %vm1210, %v6008, %v6010
      %v6012 = vrot.slane %v5746, 1
      %v6013 = vsel %vm1210, %v6010, %v6012
      %v6014 = vrot.slane %v5747, 1
      %v6015 = vsel %vm1210, %v6012, %v6014
      %v6016 = vrot.slane %v5748, 1
      %v6017 = vsel %vm1210, %v6014, %v6016
      %v6018 = vrot.slane %v5749, 1
      %v6019 = vsel %vm1210, %v6016, %v6018
      %v6020 = vrot.slane %v5750, 1
      %v6021 = vsel %vm1210, %v6018, %v6020
      %v6022 = vrot.slane %v5751, 1
      %v6023 = vsel %vm1210, %v6020, %v6022
      %v6024 = vrot.slane %v5752, 1
      %v6025 = vsel %vm1210, %v6022, %v6024
      %v6026 = vrot.slane %v5753, 1
      %v6027 = vsel %vm1210, %v6024, %v6026
      %v6028 = vrot.slane %v5754, 1
      %v6029 = vsel %vm1210, %v6026, %v6028
      %v6030 = vrot.slane %v5755, 1
      %v6031 = vsel %vm1210, %v6028, %v6030
      %v6032 = vrot.slane %v5756, 1
      %v6033 = vsel %vm1210, %v6030, %v6032
      %v6034 = vrot.slane %v5757, 1
      %v6035 = vsel %vm1210, %v6032, %v6034
      %v6036 = vrot.slane %v5758, 1
      %v6037 = vsel %vm1210, %v6034, %v6036
      %v6038 = vrot.slane %v5759, 1
      %v6039 = vsel %vm1210, %v6036, %v6038
      %v6040 = vrot.slane %v5760, 1
      %v6041 = vsel %vm1210, %v6038, %v6040
      %v6042 = vrot.slane %v5761, 1
      %v6043 = vsel %vm1210, %v6040, %v6042
      %v6044 = vrot.slane %v5762, 1
      %v6045 = vsel %vm1210, %v6042, %v6044
      %v6046 = vrot.slane %v5763, 1
      %v6047 = vsel %vm1210, %v6044, %v6046
      %v6048 = vrot.slane %v5764, 1
      %v6049 = vsel %vm1210, %v6046, %v6048
      %v6050 = vrot.slane %v5765, 1
      %v6051 = vsel %vm1210, %v6048, %v6050
      %v6052 = vrot.slane %v5766, 1
      %v6053 = vsel %vm1210, %v6050, %v6052
      %v6054 = vrot.slane %v5767, 1
      %v6055 = vsel %vm1210, %v6052, %v6054
      %v6056 = vrot.slane %v5768, 1
      %v6057 = vsel %vm1210, %v6054, %v6056
      %v6058 = vrot.slane %v5769, 1
      %v6059 = vsel %vm1210, %v6056, %v6058
      %v6060 = vrot.slane %v5770, 1
      %v6061 = vsel %vm1210, %v6058, %v6060
      %v6062 = vrot.slane %v5771, 1
      %v6063 = vsel %vm1210, %v6060, %v6062
      %v6064 = vrot.slane %v5772, 1
      %v6065 = vsel %vm1210, %v6062, %v6064
      %v6066 = vrot.slane %v5773, 1
      %v6067 = vsel %vm1210, %v6064, %v6066
      %v6068 = vrot.slane %v5774, 1
      %v6069 = vsel %vm1210, %v6066, %v6068
      %v6070 = vrot.slane %v5775, 1
      %v6071 = vsel %vm1210, %v6068, %v6070
      %v6072 = vrot.slane %v5776, 1
      %v6073 = vsel %vm1210, %v6070, %v6072
      %v6074 = vrot.slane %v5777, 1
      %v6075 = vsel %vm1210, %v6072, %v6074
      %v6076 = vrot.slane %v5778, 1
      %v6077 = vsel %vm1210, %v6074, %v6076
      %v6078 = vrot.slane %v5779, 1
      %v6079 = vsel %vm1210, %v6076, %v6078
      %v6080 = vrot.slane %v5780, 1
      %v6081 = vsel %vm1210, %v6078, %v6080
      %v6082 = vrot.slane %v5781, 1
      %v6083 = vsel %vm1210, %v6080, %v6082
      %v6084 = vrot.slane %v5782, 1
      %v6085 = vsel %vm1210, %v6082, %v6084
      %v6086 = vrot.slane %v5783, 1
      %v6087 = vsel %vm1210, %v6084, %v6086
      %v6088 = vrot.slane %v5784, 1
      %v6089 = vsel %vm1210, %v6086, %v6088
      %v6090 = vrot.slane %v5785, 1
      %v6091 = vsel %vm1210, %v6088, %v6090
      %v6092 = vrot.slane %v5786, 1
      %v6093 = vsel %vm1210, %v6090, %v6092
      %v6094 = vrot.slane %v5787, 1
      %v6095 = vsel %vm1210, %v6092, %v6094
      %v6096 = vrot.slane %v5788, 1
      %v6097 = vsel %vm1210, %v6094, %v6096
      %v6098 = vrot.slane %v5789, 1
      %v6099 = vsel %vm1210, %v6096, %v6098
      %v6100 = vrot.slane %v5790, 1
      %v6101 = vsel %vm1210, %v6098, %v6100
      %v6102 = vrot.slane %v5791, 1
      %v6103 = vsel %vm1210, %v6100, %v6102
      %v6104 = vrot.slane %v5792, 1
      %v6105 = vsel %vm1210, %v6102, %v6104
      %v6106 = vrot.slane %v5793, 1
      %v6107 = vsel %vm1210, %v6104, %v6106
      %v6108 = vrot.slane %v5794, 1
      %v6109 = vsel %vm1210, %v6106, %v6108
      %v6110 = vrot.slane %v5795, 1
      %v6111 = vsel %vm1210, %v6108, %v6110
      %v6112 = vrot.slane %v5796, 1
      %v6113 = vsel %vm1210, %v6110, %v6112
      %v6114 = vrot.slane %v5797, 1
      %v6115 = vsel %vm1210, %v6112, %v6114
      %v6116 = vrot.slane %v5798, 1
      %v6117 = vsel %vm1210, %v6114, %v6116
      %v6118 = vrot.slane %v5799, 1
      %v6119 = vsel %vm1210, %v6116, %v6118
      %v6120 = vrot.slane %v5800, 1
      %v6121 = vsel %vm1210, %v6118, %v6120
      %v6122 = vrot.slane %v5801, 1
      %v6123 = vsel %vm1210, %v6120, %v6122
      %v6124 = vrot.slane %v5802, 1
      %v6125 = vsel %vm1210, %v6122, %v6124
      %v6126 = vrot.slane %v5803, 1
      %v6127 = vsel %vm1210, %v6124, %v6126
      %v6128 = vrot.slane %v5804, 1
      %v6129 = vsel %vm1210, %v6126, %v6128
      %v6130 = vrot.slane %v5805, 1
      %v6131 = vsel %vm1210, %v6128, %v6130
      %v6132 = vrot.slane %v5806, 1
      %v6133 = vsel %vm1210, %v6130, %v6132
      %v6242 = vmax.f32 %v5699, %v5921
      %v6243 = vmax.f32 %v5700, %v5923
      %v6244 = vmax.f32 %v5701, %v5925
      %v6245 = vmax.f32 %v5702, %v5927
      %v6246 = vmax.f32 %v5703, %v5929
      %v6247 = vmax.f32 %v5704, %v5931
      %v6248 = vmax.f32 %v5705, %v5933
      %v6249 = vmax.f32 %v5706, %v5935
      %v6250 = vmax.f32 %v5707, %v5937
      %v6251 = vmax.f32 %v5708, %v5939
      %v6252 = vmax.f32 %v5709, %v5941
      %v6253 = vmax.f32 %v5710, %v5943
      %v6254 = vmax.f32 %v5711, %v5945
      %v6255 = vmax.f32 %v5712, %v5947
      %v6256 = vmax.f32 %v5713, %v5949
      %v6257 = vmax.f32 %v5714, %v5951
      %v6258 = vmax.f32 %v5715, %v5953
      %v6259 = vmax.f32 %v5716, %v5955
      %v6260 = vmax.f32 %v5717, %v5957
      %v6261 = vmax.f32 %v5718, %v5959
      %v6262 = vmax.f32 %v5719, %v5961
      %v6263 = vmax.f32 %v5720, %v5963
      %v6264 = vmax.f32 %v5721, %v5965
      %v6265 = vmax.f32 %v5722, %v5967
      %v6266 = vmax.f32 %v5723, %v5969
      %v6267 = vmax.f32 %v5724, %v5971
      %v6268 = vmax.f32 %v5725, %v5973
      %v6269 = vmax.f32 %v5726, %v5975
      %v6270 = vmax.f32 %v5727, %v5977
      %v6271 = vmax.f32 %v5728, %v5979
      %v6272 = vmax.f32 %v5729, %v5981
      %v6273 = vmax.f32 %v5730, %v5983
      %v6274 = vmax.f32 %v5731, %v5985
      %v6275 = vmax.f32 %v5732, %v5987
      %v6276 = vmax.f32 %v5733, %v5989
      %v6277 = vmax.f32 %v5734, %v5991
      %v6278 = vmax.f32 %v5735, %v5993
      %v6279 = vmax.f32 %v5736, %v5995
      %v6280 = vmax.f32 %v5737, %v5997
      %v6281 = vmax.f32 %v5738, %v5999
      %v6282 = vmax.f32 %v5739, %v6001
      %v6283 = vmax.f32 %v5740, %v6003
      %v6284 = vmax.f32 %v5741, %v6005
      %v6285 = vmax.f32 %v5742, %v6007
      %v6286 = vmax.f32 %v5743, %v6009
      %v6287 = vmax.f32 %v5744, %v6011
      %v6288 = vmax.f32 %v5745, %v6013
      %v6289 = vmax.f32 %v5746, %v6015
      %v6290 = vmax.f32 %v5747, %v6017
      %v6291 = vmax.f32 %v5748, %v6019
      %v6292 = vmax.f32 %v5749, %v6021
      %v6293 = vmax.f32 %v5750, %v6023
      %v6294 = vmax.f32 %v5751, %v6025
      %v6295 = vmax.f32 %v5752, %v6027
      %v6296 = vmax.f32 %v5753, %v6029
      %v6297 = vmax.f32 %v5754, %v6031
      %v6298 = vmax.f32 %v5755, %v6033
      %v6299 = vmax.f32 %v5756, %v6035
      %v6300 = vmax.f32 %v5757, %v6037
      %v6301 = vmax.f32 %v5758, %v6039
      %v6302 = vmax.f32 %v5759, %v6041
      %v6303 = vmax.f32 %v5760, %v6043
      %v6304 = vmax.f32 %v5761, %v6045
      %v6305 = vmax.f32 %v5762, %v6047
      %v6306 = vmax.f32 %v5763, %v6049
      %v6307 = vmax.f32 %v5764, %v6051
      %v6308 = vmax.f32 %v5765, %v6053
      %v6309 = vmax.f32 %v5766, %v6055
      %v6310 = vmax.f32 %v5767, %v6057
      %v6311 = vmax.f32 %v5768, %v6059
      %v6312 = vmax.f32 %v5769, %v6061
      %v6313 = vmax.f32 %v5770, %v6063
      %v6314 = vmax.f32 %v5771, %v6065
      %v6315 = vmax.f32 %v5772, %v6067
      %v6316 = vmax.f32 %v5773, %v6069
      %v6317 = vmax.f32 %v5774, %v6071
      %v6318 = vmax.f32 %v5775, %v6073
      %v6319 = vmax.f32 %v5776, %v6075
      %v6320 = vmax.f32 %v5777, %v6077
      %v6321 = vmax.f32 %v5778, %v6079
      %v6322 = vmax.f32 %v5779, %v6081
      %v6323 = vmax.f32 %v5780, %v6083
      %v6324 = vmax.f32 %v5781, %v6085
      %v6325 = vmax.f32 %v5782, %v6087
      %v6326 = vmax.f32 %v5783, %v6089
      %v6327 = vmax.f32 %v5784, %v6091
      %v6328 = vmax.f32 %v5785, %v6093
      %v6329 = vmax.f32 %v5786, %v6095
      %v6330 = vmax.f32 %v5787, %v6097
      %v6331 = vmax.f32 %v5788, %v6099
      %v6332 = vmax.f32 %v5789, %v6101
      %v6333 = vmax.f32 %v5790, %v6103
      %v6334 = vmax.f32 %v5791, %v6105
      %v6335 = vmax.f32 %v5792, %v6107
      %v6336 = vmax.f32 %v5793, %v6109
      %v6337 = vmax.f32 %v5794, %v6111
      %v6338 = vmax.f32 %v5795, %v6113
      %v6339 = vmax.f32 %v5796, %v6115
      %v6340 = vmax.f32 %v5797, %v6117
      %v6341 = vmax.f32 %v5798, %v6119
      %v6342 = vmax.f32 %v5799, %v6121
      %v6343 = vmax.f32 %v5800, %v6123
      %v6344 = vmax.f32 %v5801, %v6125
      %v6345 = vmax.f32 %v5802, %v6127
      %v6346 = vmax.f32 %v5803, %v6129
      %v6347 = vmax.f32 %v5804, %v6131
      %v6348 = vmax.f32 %v5805, %v6133
      %v6349 = vmax.f32 %v5806, %v6132
      %v6354 = vrot.slane %v5807, 1
      %v6355 = vsel %vm1210, %v6132, %v6354
      %v6356 = vrot.slane %v5808, 1
      %v6357 = vsel %vm1210, %v6354, %v6356
      %v6358 = vrot.slane %v5809, 1
      %v6359 = vsel %vm1210, %v6356, %v6358
      %v6360 = vrot.slane %v5810, 1
      %v6361 = vsel %vm1210, %v6358, %v6360
      %v6367 = vmax.f32 %v5806, %v6355
      %v6368 = vmax.f32 %v5807, %v6357
      %v6369 = vmax.f32 %v5808, %v6359
      %v6370 = vmax.f32 %v5809, %v6361
      %v6371 = vmax.f32 %v5810, %v6360
      %v6372 = vmax.f32 %v6242, %v6246
      %v6373 = vmax.f32 %v6243, %v6247
      %v6374 = vmax.f32 %v6244, %v6248
      %v6375 = vmax.f32 %v6245, %v6249
      %v6376 = vmax.f32 %v6246, %v6250
      %v6377 = vmax.f32 %v6247, %v6251
      %v6378 = vmax.f32 %v6248, %v6252
      %v6379 = vmax.f32 %v6249, %v6253
      %v6380 = vmax.f32 %v6250, %v6254
      %v6381 = vmax.f32 %v6251, %v6255
      %v6382 = vmax.f32 %v6252, %v6256
      %v6383 = vmax.f32 %v6253, %v6257
      %v6384 = vmax.f32 %v6254, %v6258
      %v6385 = vmax.f32 %v6255, %v6259
      %v6386 = vmax.f32 %v6256, %v6260
      %v6387 = vmax.f32 %v6257, %v6261
      %v6388 = vmax.f32 %v6258, %v6262
      %v6389 = vmax.f32 %v6259, %v6263
      %v6390 = vmax.f32 %v6260, %v6264
      %v6391 = vmax.f32 %v6261, %v6265
      %v6392 = vmax.f32 %v6262, %v6266
      %v6393 = vmax.f32 %v6263, %v6267
      %v6394 = vmax.f32 %v6264, %v6268
      %v6395 = vmax.f32 %v6265, %v6269
      %v6396 = vmax.f32 %v6266, %v6270
      %v6397 = vmax.f32 %v6267, %v6271
      %v6398 = vmax.f32 %v6268, %v6272
      %v6399 = vmax.f32 %v6269, %v6273
      %v6400 = vmax.f32 %v6270, %v6274
      %v6401 = vmax.f32 %v6271, %v6275
      %v6402 = vmax.f32 %v6272, %v6276
      %v6403 = vmax.f32 %v6273, %v6277
      %v6404 = vmax.f32 %v6274, %v6278
      %v6405 = vmax.f32 %v6275, %v6279
      %v6406 = vmax.f32 %v6276, %v6280
      %v6407 = vmax.f32 %v6277, %v6281
      %v6408 = vmax.f32 %v6278, %v6282
      %v6409 = vmax.f32 %v6279, %v6283
      %v6410 = vmax.f32 %v6280, %v6284
      %v6411 = vmax.f32 %v6281, %v6285
      %v6412 = vmax.f32 %v6282, %v6286
      %v6413 = vmax.f32 %v6283, %v6287
      %v6414 = vmax.f32 %v6284, %v6288
      %v6415 = vmax.f32 %v6285, %v6289
      %v6416 = vmax.f32 %v6286, %v6290
      %v6417 = vmax.f32 %v6287, %v6291
      %v6418 = vmax.f32 %v6288, %v6292
      %v6419 = vmax.f32 %v6289, %v6293
      %v6420 = vmax.f32 %v6290, %v6294
      %v6421 = vmax.f32 %v6291, %v6295
      %v6422 = vmax.f32 %v6292, %v6296
      %v6423 = vmax.f32 %v6293, %v6297
      %v6424 = vmax.f32 %v6294, %v6298
      %v6425 = vmax.f32 %v6295, %v6299
      %v6426 = vmax.f32 %v6296, %v6300
      %v6427 = vmax.f32 %v6297, %v6301
      %v6428 = vmax.f32 %v6298, %v6302
      %v6429 = vmax.f32 %v6299, %v6303
      %v6430 = vmax.f32 %v6300, %v6304
      %v6431 = vmax.f32 %v6301, %v6305
      %v6432 = vmax.f32 %v6302, %v6306
      %v6433 = vmax.f32 %v6303, %v6307
      %v6434 = vmax.f32 %v6304, %v6308
      %v6435 = vmax.f32 %v6305, %v6309
      %v6436 = vmax.f32 %v6306, %v6310
      %v6437 = vmax.f32 %v6307, %v6311
      %v6438 = vmax.f32 %v6308, %v6312
      %v6439 = vmax.f32 %v6309, %v6313
      %v6440 = vmax.f32 %v6310, %v6314
      %v6441 = vmax.f32 %v6311, %v6315
      %v6442 = vmax.f32 %v6312, %v6316
      %v6443 = vmax.f32 %v6313, %v6317
      %v6444 = vmax.f32 %v6314, %v6318
      %v6445 = vmax.f32 %v6315, %v6319
      %v6446 = vmax.f32 %v6316, %v6320
      %v6447 = vmax.f32 %v6317, %v6321
      %v6448 = vmax.f32 %v6318, %v6322
      %v6449 = vmax.f32 %v6319, %v6323
      %v6450 = vmax.f32 %v6320, %v6324
      %v6451 = vmax.f32 %v6321, %v6325
      %v6452 = vmax.f32 %v6322, %v6326
      %v6453 = vmax.f32 %v6323, %v6327
      %v6454 = vmax.f32 %v6324, %v6328
      %v6455 = vmax.f32 %v6325, %v6329
      %v6456 = vmax.f32 %v6326, %v6330
      %v6457 = vmax.f32 %v6327, %v6331
      %v6458 = vmax.f32 %v6328, %v6332
      %v6459 = vmax.f32 %v6329, %v6333
      %v6460 = vmax.f32 %v6330, %v6334
      %v6461 = vmax.f32 %v6331, %v6335
      %v6462 = vmax.f32 %v6332, %v6336
      %v6463 = vmax.f32 %v6333, %v6337
      %v6464 = vmax.f32 %v6334, %v6338
      %v6465 = vmax.f32 %v6335, %v6339
      %v6466 = vmax.f32 %v6336, %v6340
      %v6467 = vmax.f32 %v6337, %v6341
      %v6468 = vmax.f32 %v6338, %v6342
      %v6469 = vmax.f32 %v6339, %v6343
      %v6470 = vmax.f32 %v6340, %v6344
      %v6471 = vmax.f32 %v6341, %v6345
      %v6472 = vmax.f32 %v6342, %v6346
      %v6473 = vmax.f32 %v6343, %v6347
      %v6474 = vmax.f32 %v6344, %v6348
      %v6475 = vmax.f32 %v6345, %v6367
      %v6476 = vmax.f32 %v6346, %v6368
      %v6477 = vmax.f32 %v6347, %v6369
      %v6478 = vmax.f32 %v6348, %v6370
      %v6479 = vmax.f32 %v6349, %v6371
      %vm6480 = vcmask 261120
      %6481 = vst.msk [vmem:[#allocation2 + $0x35f] sm:$0xff] %vm6480, 0.0
      %6482 = vst.msk [vmem:[#allocation2 + $0x367] sm:$0xff] %vm6480, 0.0
      %6483 = vst.msk [vmem:[#allocation2 + $0x36f] sm:$0xff] %vm6480, 0.0
      %6484 = vst.msk [vmem:[#allocation2 + $0x377] sm:$0xff] %vm6480, 0.0
      %vm6485 = vcmask 253952
      %6486 = vst.msk [vmem:[#allocation2 + $0x37f] sm:$0x1] %vm6485, 0.0
      %6487 = vst.msk [vmem:[#allocation2] sm:$0xff] %vm6480, %v6372
      %6488 = vst.msk [vmem:[#allocation2 + $0x8] sm:$0xff] %vm6480, %v6373
      %6489 = vst.msk [vmem:[#allocation2 + $0x10] sm:$0xff] %vm6480, %v6374
      %6490 = vst.msk [vmem:[#allocation2 + $0x18] sm:$0xff] %vm6480, %v6375
      %6491 = vst.msk [vmem:[#allocation2 + $0x20] sm:$0xff] %vm6480, %v6376
      %6492 = vst.msk [vmem:[#allocation2 + $0x28] sm:$0xff] %vm6480, %v6377
      %6493 = vst.msk [vmem:[#allocation2 + $0x30] sm:$0xff] %vm6480, %v6378
      %6494 = vst.msk [vmem:[#allocation2 + $0x38] sm:$0xff] %vm6480, %v6379
      %6495 = vst.msk [vmem:[#allocation2 + $0x40] sm:$0xff] %vm6480, %v6380
      %6496 = vst.msk [vmem:[#allocation2 + $0x48] sm:$0xff] %vm6480, %v6381
      %6497 = vst.msk [vmem:[#allocation2 + $0x50] sm:$0xff] %vm6480, %v6382
      %6498 = vst.msk [vmem:[#allocation2 + $0x58] sm:$0xff] %vm6480, %v6383
      %6499 = vst.msk [vmem:[#allocation2 + $0x60] sm:$0xff] %vm6480, %v6384
      %6500 = vst.msk [vmem:[#allocation2 + $0x68] sm:$0xff] %vm6480, %v6385
      %6501 = vst.msk [vmem:[#allocation2 + $0x70] sm:$0xff] %vm6480, %v6386
      %6502 = vst.msk [vmem:[#allocation2 + $0x78] sm:$0xff] %vm6480, %v6387
      %6503 = vst.msk [vmem:[#allocation2 + $0x80] sm:$0xff] %vm6480, %v6388
      %6504 = vst.msk [vmem:[#allocation2 + $0x88] sm:$0xff] %vm6480, %v6389
      %6505 = vst.msk [vmem:[#allocation2 + $0x90] sm:$0xff] %vm6480, %v6390
      %6506 = vst.msk [vmem:[#allocation2 + $0x98] sm:$0xff] %vm6480, %v6391
      %6507 = vst.msk [vmem:[#allocation2 + $0xa0] sm:$0xff] %vm6480, %v6392
      %6508 = vst.msk [vmem:[#allocation2 + $0xa8] sm:$0xff] %vm6480, %v6393
      %6509 = vst.msk [vmem:[#allocation2 + $0xb0] sm:$0xff] %vm6480, %v6394
      %6510 = vst.msk [vmem:[#allocation2 + $0xb8] sm:$0xff] %vm6480, %v6395
      %6511 = vst.msk [vmem:[#allocation2 + $0xc0] sm:$0xff] %vm6480, %v6396
      %6512 = vst.msk [vmem:[#allocation2 + $0xc8] sm:$0xff] %vm6480, %v6397
      %6513 = vst.msk [vmem:[#allocation2 + $0xd0] sm:$0xff] %vm6480, %v6398
      %6514 = vst.msk [vmem:[#allocation2 + $0xd8] sm:$0xff] %vm6480, %v6399
      %6515 = vst.msk [vmem:[#allocation2 + $0xe0] sm:$0xff] %vm6480, %v6400
      %6516 = vst.msk [vmem:[#allocation2 + $0xe8] sm:$0xff] %vm6480, %v6401
      %6517 = vst.msk [vmem:[#allocation2 + $0xf0] sm:$0xff] %vm6480, %v6402
      %6518 = vst.msk [vmem:[#allocation2 + $0xf8] sm:$0xff] %vm6480, %v6403
      %6519 = vst.msk [vmem:[#allocation2 + $0x100] sm:$0xff] %vm6480, %v6404
      %6520 = vst.msk [vmem:[#allocation2 + $0x108] sm:$0xff] %vm6480, %v6405
      %6521 = vst.msk [vmem:[#allocation2 + $0x110] sm:$0xff] %vm6480, %v6406
      %6522 = vst.msk [vmem:[#allocation2 + $0x118] sm:$0xff] %vm6480, %v6407
      %6523 = vst.msk [vmem:[#allocation2 + $0x120] sm:$0xff] %vm6480, %v6408
      %6524 = vst.msk [vmem:[#allocation2 + $0x128] sm:$0xff] %vm6480, %v6409
      %6525 = vst.msk [vmem:[#allocation2 + $0x130] sm:$0xff] %vm6480, %v6410
      %6526 = vst.msk [vmem:[#allocation2 + $0x138] sm:$0xff] %vm6480, %v6411
      %6527 = vst.msk [vmem:[#allocation2 + $0x140] sm:$0xff] %vm6480, %v6412
      %6528 = vst.msk [vmem:[#allocation2 + $0x148] sm:$0xff] %vm6480, %v6413
      %6529 = vst.msk [vmem:[#allocation2 + $0x150] sm:$0xff] %vm6480, %v6414
      %6530 = vst.msk [vmem:[#allocation2 + $0x158] sm:$0xff] %vm6480, %v6415
      %6531 = vst.msk [vmem:[#allocation2 + $0x160] sm:$0xff] %vm6480, %v6416
      %6532 = vst.msk [vmem:[#allocation2 + $0x168] sm:$0xff] %vm6480, %v6417
      %6533 = vst.msk [vmem:[#allocation2 + $0x170] sm:$0xff] %vm6480, %v6418
      %6534 = vst.msk [vmem:[#allocation2 + $0x178] sm:$0xff] %vm6480, %v6419
      %6535 = vst.msk [vmem:[#allocation2 + $0x180] sm:$0xff] %vm6480, %v6420
      %6536 = vst.msk [vmem:[#allocation2 + $0x188] sm:$0xff] %vm6480, %v6421
      %6537 = vst.msk [vmem:[#allocation2 + $0x190] sm:$0xff] %vm6480, %v6422
      %6538 = vst.msk [vmem:[#allocation2 + $0x198] sm:$0xff] %vm6480, %v6423
      %6539 = vst.msk [vmem:[#allocation2 + $0x1a0] sm:$0xff] %vm6480, %v6424
      %6540 = vst.msk [vmem:[#allocation2 + $0x1a8] sm:$0xff] %vm6480, %v6425
      %6541 = vst.msk [vmem:[#allocation2 + $0x1b0] sm:$0xff] %vm6480, %v6426
      %6542 = vst.msk [vmem:[#allocation2 + $0x1b8] sm:$0xff] %vm6480, %v6427
      %6543 = vst.msk [vmem:[#allocation2 + $0x1c0] sm:$0xff] %vm6480, %v6428
      %6544 = vst.msk [vmem:[#allocation2 + $0x1c8] sm:$0xff] %vm6480, %v6429
      %6545 = vst.msk [vmem:[#allocation2 + $0x1d0] sm:$0xff] %vm6480, %v6430
      %6546 = vst.msk [vmem:[#allocation2 + $0x1d8] sm:$0xff] %vm6480, %v6431
      %6547 = vst.msk [vmem:[#allocation2 + $0x1e0] sm:$0xff] %vm6480, %v6432
      %6548 = vst.msk [vmem:[#allocation2 + $0x1e8] sm:$0xff] %vm6480, %v6433
      %6549 = vst.msk [vmem:[#allocation2 + $0x1f0] sm:$0xff] %vm6480, %v6434
      %6550 = vst.msk [vmem:[#allocation2 + $0x1f8] sm:$0xff] %vm6480, %v6435
      %6551 = vst.msk [vmem:[#allocation2 + $0x200] sm:$0xff] %vm6480, %v6436
      %6552 = vst.msk [vmem:[#allocation2 + $0x208] sm:$0xff] %vm6480, %v6437
      %6553 = vst.msk [vmem:[#allocation2 + $0x210] sm:$0xff] %vm6480, %v6438
      %6554 = vst.msk [vmem:[#allocation2 + $0x218] sm:$0xff] %vm6480, %v6439
      %6555 = vst.msk [vmem:[#allocation2 + $0x220] sm:$0xff] %vm6480, %v6440
      %6556 = vst.msk [vmem:[#allocation2 + $0x228] sm:$0xff] %vm6480, %v6441
      %6557 = vst.msk [vmem:[#allocation2 + $0x230] sm:$0xff] %vm6480, %v6442
      %6558 = vst.msk [vmem:[#allocation2 + $0x238] sm:$0xff] %vm6480, %v6443
      %6559 = vst.msk [vmem:[#allocation2 + $0x240] sm:$0xff] %vm6480, %v6444
      %6560 = vst.msk [vmem:[#allocation2 + $0x248] sm:$0xff] %vm6480, %v6445
      %6561 = vst.msk [vmem:[#allocation2 + $0x250] sm:$0xff] %vm6480, %v6446
      %6562 = vst.msk [vmem:[#allocation2 + $0x258] sm:$0xff] %vm6480, %v6447
      %6563 = vst.msk [vmem:[#allocation2 + $0x260] sm:$0xff] %vm6480, %v6448
      %6564 = vst.msk [vmem:[#allocation2 + $0x268] sm:$0xff] %vm6480, %v6449
      %6565 = vst.msk [vmem:[#allocation2 + $0x270] sm:$0xff] %vm6480, %v6450
      %6566 = vst.msk [vmem:[#allocation2 + $0x278] sm:$0xff] %vm6480, %v6451
      %6567 = vst.msk [vmem:[#allocation2 + $0x280] sm:$0xff] %vm6480, %v6452
      %6568 = vst.msk [vmem:[#allocation2 + $0x288] sm:$0xff] %vm6480, %v6453
      %6569 = vst.msk [vmem:[#allocation2 + $0x290] sm:$0xff] %vm6480, %v6454
      %6570 = vst.msk [vmem:[#allocation2 + $0x298] sm:$0xff] %vm6480, %v6455
      %6571 = vst.msk [vmem:[#allocation2 + $0x2a0] sm:$0xff] %vm6480, %v6456
      %6572 = vst.msk [vmem:[#allocation2 + $0x2a8] sm:$0xff] %vm6480, %v6457
      %6573 = vst.msk [vmem:[#allocation2 + $0x2b0] sm:$0xff] %vm6480, %v6458
      %6574 = vst.msk [vmem:[#allocation2 + $0x2b8] sm:$0xff] %vm6480, %v6459
      %6575 = vst.msk [vmem:[#allocation2 + $0x2c0] sm:$0xff] %vm6480, %v6460
      %6576 = vst.msk [vmem:[#allocation2 + $0x2c8] sm:$0xff] %vm6480, %v6461
      %6577 = vst.msk [vmem:[#allocation2 + $0x2d0] sm:$0xff] %vm6480, %v6462
      %6578 = vst.msk [vmem:[#allocation2 + $0x2d8] sm:$0xff] %vm6480, %v6463
      %6579 = vst.msk [vmem:[#allocation2 + $0x2e0] sm:$0xff] %vm6480, %v6464
      %6580 = vst.msk [vmem:[#allocation2 + $0x2e8] sm:$0xff] %vm6480, %v6465
      %6581 = vst.msk [vmem:[#allocation2 + $0x2f0] sm:$0xff] %vm6480, %v6466
      %6582 = vst.msk [vmem:[#allocation2 + $0x2f8] sm:$0xff] %vm6480, %v6467
      %6583 = vst.msk [vmem:[#allocation2 + $0x300] sm:$0xff] %vm6480, %v6468
      %6584 = vst.msk [vmem:[#allocation2 + $0x308] sm:$0xff] %vm6480, %v6469
      %6585 = vst.msk [vmem:[#allocation2 + $0x310] sm:$0xff] %vm6480, %v6470
      %6586 = vst.msk [vmem:[#allocation2 + $0x318] sm:$0xff] %vm6480, %v6471
      %6587 = vst.msk [vmem:[#allocation2 + $0x320] sm:$0xff] %vm6480, %v6472
      %6588 = vst.msk [vmem:[#allocation2 + $0x328] sm:$0xff] %vm6480, %v6473
      %6589 = vst.msk [vmem:[#allocation2 + $0x330] sm:$0xff] %vm6480, %v6474
      %6590 = vst.msk [vmem:[#allocation2 + $0x338] sm:$0xff] %vm6480, %v6475
      %6591 = vst.msk [vmem:[#allocation2 + $0x340] sm:$0xff] %vm6480, %v6476
      %6592 = vst.msk [vmem:[#allocation2 + $0x348] sm:$0xff] %vm6480, %v6477
      %6593 = vst.msk [vmem:[#allocation2 + $0x350] sm:$0xff] %vm6480, %v6478
      %vm6594 = vcmask 260096
      %6595 = vst.msk [vmem:[#allocation2 + $0x358] sm:$0x7f] %vm6594, %v6479
      %v6596 = vld [vmem:[#allocation2] ss:$2 sm:$0xff]
      %s6597 = scalar_lea.vmem [#allocation2], 16
      %v6598 = vld [vmem:[%s6597] ss:$2 sm:$0xff]
      %s6599 = scalar_lea.vmem [#allocation2], 64
      %v6600 = vld [vmem:[%s6599] ss:$2 sm:$0xff]
      %s6601 = scalar_lea.vmem [#allocation2], 80
      %v6602 = vld [vmem:[%s6601] ss:$2 sm:$0xff]
      %s6603 = scalar_lea.vmem [#allocation2], 128
      %v6604 = vld [vmem:[%s6603] ss:$2 sm:$0xff]
      %s6605 = scalar_lea.vmem [#allocation2], 144
      %v6606 = vld [vmem:[%s6605] ss:$2 sm:$0xff]
      %s6607 = scalar_lea.vmem [#allocation2], 192
      %v6608 = vld [vmem:[%s6607] ss:$2 sm:$0xff]
      %s6609 = scalar_lea.vmem [#allocation2], 208
      %v6610 = vld [vmem:[%s6609] ss:$2 sm:$0xff]
      %s6611 = scalar_lea.vmem [#allocation2], 256
      %v6612 = vld [vmem:[%s6611] ss:$2 sm:$0xff]
      %s6613 = scalar_lea.vmem [#allocation2], 272
      %v6614 = vld [vmem:[%s6613] ss:$2 sm:$0xff]
      %s6615 = scalar_lea.vmem [#allocation2], 320
      %v6616 = vld [vmem:[%s6615] ss:$2 sm:$0xff]
      %s6617 = scalar_lea.vmem [#allocation2], 336
      %v6618 = vld [vmem:[%s6617] ss:$2 sm:$0xff]
      %s6619 = scalar_lea.vmem [#allocation2], 384
      %v6620 = vld [vmem:[%s6619] ss:$2 sm:$0xff]
      %s6621 = scalar_lea.vmem [#allocation2], 400
      %v6622 = vld [vmem:[%s6621] ss:$2 sm:$0xff]
      %s6623 = scalar_lea.vmem [#allocation2], 448
      %v6624 = vld [vmem:[%s6623] ss:$2 sm:$0xff]
      %s6625 = scalar_lea.vmem [#allocation2], 464
      %v6626 = vld [vmem:[%s6625] ss:$2 sm:$0xff]
      %s6627 = scalar_lea.vmem [#allocation2], 512
      %v6628 = vld [vmem:[%s6627] ss:$2 sm:$0xff]
      %s6629 = scalar_lea.vmem [#allocation2], 528
      %v6630 = vld [vmem:[%s6629] ss:$2 sm:$0xff]
      %s6631 = scalar_lea.vmem [#allocation2], 576
      %v6632 = vld [vmem:[%s6631] ss:$2 sm:$0xff]
      %s6633 = scalar_lea.vmem [#allocation2], 592
      %v6634 = vld [vmem:[%s6633] ss:$2 sm:$0xff]
      %s6635 = scalar_lea.vmem [#allocation2], 640
      %v6636 = vld [vmem:[%s6635] ss:$2 sm:$0xff]
      %s6637 = scalar_lea.vmem [#allocation2], 656
      %v6638 = vld [vmem:[%s6637] ss:$2 sm:$0xff]
      %s6639 = scalar_lea.vmem [#allocation2], 704
      %v6640 = vld [vmem:[%s6639] ss:$2 sm:$0xff]
      %s6641 = scalar_lea.vmem [#allocation2], 720
      %v6642 = vld [vmem:[%s6641] ss:$2 sm:$0xff]
      %s6643 = scalar_lea.vmem [#allocation2], 768
      %v6644 = vld [vmem:[%s6643] ss:$2 sm:$0xff]
      %s6645 = scalar_lea.vmem [#allocation2], 784
      %v6646 = vld [vmem:[%s6645] ss:$2 sm:$0xff]
      %s6647 = scalar_lea.vmem [#allocation2], 832
      %v6648 = vld [vmem:[%s6647] ss:$2 sm:$0xff]
      %s6649 = scalar_lea.vmem [#allocation2], 848
      %v6650 = vld [vmem:[%s6649] ss:$2 sm:$0xff]
      %6651 = vst.msk [vmem:[%s170] sm:$0xff] %vm6480, %v6596
      %vm6652 = vcmask 259072
      %6653 = vst.msk [vmem:[%s170 + $0x8] sm:$0x3f] %vm6652, %v6598
      %6654 = vst.msk [vmem:[%s170 + $0x10] sm:$0xff] %vm6480, %v6600
      %6655 = vst.msk [vmem:[%s170 + $0x18] sm:$0x3f] %vm6652, %v6602
      %6656 = vst.msk [vmem:[%s170 + $0x20] sm:$0xff] %vm6480, %v6604
      %6657 = vst.msk [vmem:[%s170 + $0x28] sm:$0x3f] %vm6652, %v6606
      %6658 = vst.msk [vmem:[%s170 + $0x30] sm:$0xff] %vm6480, %v6608
      %6659 = vst.msk [vmem:[%s170 + $0x38] sm:$0x3f] %vm6652, %v6610
      %6660 = vst.msk [vmem:[%s170 + $0x40] sm:$0xff] %vm6480, %v6612
      %6661 = vst.msk [vmem:[%s170 + $0x48] sm:$0x3f] %vm6652, %v6614
      %6662 = vst.msk [vmem:[%s170 + $0x50] sm:$0xff] %vm6480, %v6616
      %6663 = vst.msk [vmem:[%s170 + $0x58] sm:$0x3f] %vm6652, %v6618
      %6664 = vst.msk [vmem:[%s170 + $0x60] sm:$0xff] %vm6480, %v6620
      %6665 = vst.msk [vmem:[%s170 + $0x68] sm:$0x3f] %vm6652, %v6622
      %6666 = vst.msk [vmem:[%s170 + $0x70] sm:$0xff] %vm6480, %v6624
      %6667 = vst.msk [vmem:[%s170 + $0x78] sm:$0x3f] %vm6652, %v6626
      %6668 = vst.msk [vmem:[%s170 + $0x80] sm:$0xff] %vm6480, %v6628
      %6669 = vst.msk [vmem:[%s170 + $0x88] sm:$0x3f] %vm6652, %v6630
      %6670 = vst.msk [vmem:[%s170 + $0x90] sm:$0xff] %vm6480, %v6632
      %6671 = vst.msk [vmem:[%s170 + $0x98] sm:$0x3f] %vm6652, %v6634
      %6672 = vst.msk [vmem:[%s170 + $0xa0] sm:$0xff] %vm6480, %v6636
      %6673 = vst.msk [vmem:[%s170 + $0xa8] sm:$0x3f] %vm6652, %v6638
      %6674 = vst.msk [vmem:[%s170 + $0xb0] sm:$0xff] %vm6480, %v6640
      %6675 = vst.msk [vmem:[%s170 + $0xb8] sm:$0x3f] %vm6652, %v6642
      %6676 = vst.msk [vmem:[%s170 + $0xc0] sm:$0xff] %vm6480, %v6644
      %6677 = vst.msk [vmem:[%s170 + $0xc8] sm:$0x3f] %vm6652, %v6646
      %6678 = vst.msk [vmem:[%s170 + $0xd0] sm:$0xff] %vm6480, %v6648
      %6679 = vst.msk [vmem:[%s170 + $0xd8] sm:$0x3f] %vm6652, %v6650
      %p6680 = scmp.lt.s32.totalorder %s14, 1
      %s6681 = scalar_select %p6680, %s14, 1
      %s6682 = smul.addr %s6681, 28
      %s6683 = smul.addr %s6682, 8
      %s6684 = scalar_lea.vmem %s3, %s6683
      // Predicated region
      $region33: #{simple_cnn_forward.3} parent=31 // pred_check
        %p6685 = pneg %p100
      $region34: #{simple_cnn_forward.3} parent=31 // pred_check_branch
        %6687 = sbr.rel (%p6685) target = $region36
      $region35: #{simple_cnn_forward.3} parent=31 // pred_region
        _
      $region36: #{simple_cnn_forward.3} parent=31 // pred_fallthru
        _
    $region32: #{simple_cnn_forward.3} parent=5 // pred_fallthru
      _
    %p6688 = scmp.le.s32.totalorder 2, %s9
    // Predicated region
    $region37: #{simple_cnn_forward.3} parent=5 // pred_check
      %p6689 = pneg %p6688
    $region38: #{simple_cnn_forward.3} parent=5 // pred_check_branch
      %6691 = sbr.rel (%p6689) target = $region40
    $region39: #{simple_cnn_forward.3} parent=5 // pred_region
      %s6692 = ssub.s32 %s9, 2
      // Predicated region
      $region41: #{simple_cnn_forward.3} parent=39 // pred_check
        %p6693 = pneg %p106
      $region42: #{simple_cnn_forward.3} parent=39 // pred_check_branch
        %6695 = sbr.rel (%p6693) target = $region44
      $region43: #{simple_cnn_forward.3} parent=39 // pred_region
        %p6696 = scmp.lt.s32.totalorder %s15, 1
        %s6697 = scalar_select %p6696, %s15, 1
        %s6698 = smul.addr %s6697, 28
        %s6699 = smul.addr %s6698, 8
        %s6700 = scalar_lea.vmem %s3, %s6699
      $region44: #{simple_cnn_forward.3} parent=39 // pred_fallthru
        _
    $region40: #{simple_cnn_forward.3} parent=5 // pred_fallthru
      _
  $region6: #{simple_cnn_forward.3} parent=0 // loop_footer
    %s13 = sadd.s32 1, %s9
  $region7: #{simple_cnn_forward.3} parent=0 // loop_footer_branch
    %8 = sbr.rel target = $region3
  $region8: #{simple_cnn_forward.3} parent=0 // loop_exit
    _

</llo_original>
